<compile_context>
chip_gen: v7x
topology: tpu7x:2x2x1
jax: 0.10.0
libtpu: 0.0.40
codegen_flags: <defaults>
</compile_context>

<pallas_src>
import math
import numpy as np
import jax
import jax.numpy as jnp
from jax import lax
from jax.experimental import pallas as pl
from jax.experimental.pallas import tpu as pltpu

_EPS = 1e-5      # BatchNorm2d default eps
_SLOPE = 0.1     # LeakyReLU negative_slope
_PADL = 8        # left pad (W axis) of the conv scratch -> interior is sublane-aligned


def _round_up(x, m):
    return ((x + m - 1) // m) * m


# ----------------------------- in-kernel helpers -----------------------------
def _bn_leaky(x2d, inv_n, gamma, beta):
    """Training-mode BatchNorm (biased batch stats) + LeakyReLU(0.1).

    Two-pass (mean, then centered sum of squares) variance for numerical safety.
    x2d: (n_pix, C) f32; gamma/beta: (1, C) f32.
    """
    mean = jnp.sum(x2d, axis=0, keepdims=True) * inv_n
    xc = x2d - mean
    var = jnp.sum(xc * xc, axis=0, keepdims=True) * inv_n
    y = xc * lax.rsqrt(var + _EPS) * gamma + beta
    return jnp.where(y >= 0, y, _SLOPE * y)


def _conv3x3_shifted(xp_ref, w_ref, act2d, acc, N, H, W, cin, cout):
    """3x3 / stride-1 / pad-1 conv via 9 accumulating shifted-window MXU dots.

    xp_ref : (N, H+2, Wp, cin) f32 VMEM scratch.  Interior lives at rows
             [1, H+1), cols [_PADL, _PADL+W); the 1-px halo around it is zero.
    w_ref  : (9, cin, cout) bf16, taps flattened row-major (kh*3 + kw).
    act2d  : (N*H*W, cin) f32 activation to convolve.
    acc    : optional (N*H*W, cout) f32 accumulator init (fused shortcut).
    """
    Wp = xp_ref.shape[2]

    # ---- zero ONLY the halo, with aligned strips (no full-buffer fill) ----
    zrow = jnp.zeros((N, 1, Wp, cin), jnp.float32)
    xp_ref[:, 0:1, :, :] = zrow                                # top halo row
    xp_ref[:, H + 1:H + 2, :, :] = zrow                        # bottom halo row
    zcol = jnp.zeros((N, H, 8, cin), jnp.float32)
    xp_ref[:, 1:H + 1, _PADL - 8:_PADL, :] = zcol              # covers left halo col (_PADL-1)
    xp_ref[:, 1:H + 1, _PADL + W:_PADL + W + 8, :] = zcol      # covers right halo col (_PADL+W)
    # (columns outside [ _PADL-8, _PADL+W+8 ) are never read -> left untouched)

    # ---- sublane-aligned, unmasked interior store ----
    xp_ref[:, 1:H + 1, _PADL:_PADL + W, :] = act2d.reshape(N, H, W, cin)

    if acc is None:
        acc = jnp.zeros((N * H * W, cout), jnp.float32)
    for kh in range(3):
        for kw in range(3):
            c0 = _PADL - 1 + kw
            tap = xp_ref[:, kh:kh + H, c0:c0 + W, :]
            tap = tap.reshape(N * H * W, cin).astype(jnp.bfloat16)
            acc = acc + jnp.dot(tap, w_ref[kh * 3 + kw],
                                preferred_element_type=jnp.float32)
    return acc


def _make_fused_kernel(N, H, W, Cin, Cout, pre_res_act, has_down):
    n_pix = N * H * W
    inv_n = 1.0 / n_pix

    def kernel(*refs):
        if has_down:
            (x_ref, w1_ref, w2_ref, wd_ref,
             g1_ref, b1_ref, g2_ref, b2_ref,
             o_ref, xp1_ref, xp2_ref) = refs
        else:
            (x_ref, w1_ref, w2_ref,
             g1_ref, b1_ref, g2_ref, b2_ref,
             o_ref, xp1_ref, xp2_ref) = refs
            wd_ref = None

        # ---- BN1 (batch stats) + LeakyReLU ----
        x2d = x_ref[...].reshape(n_pix, Cin)
        act1 = _bn_leaky(x2d, inv_n, g1_ref[...], b1_ref[...])

        # ---- shortcut: computed while act1/x are hot; it becomes conv2's
        #      accumulator init, so act1 dies after the conv1 scratch store ----
        sc_src = act1 if pre_res_act else x2d
        if wd_ref is not None:                               # 1x1 downsample
            sc = jnp.dot(sc_src.astype(jnp.bfloat16), wd_ref[...],
                         preferred_element_type=jnp.float32)
        else:                                                # identity (Cin == Cout)
            sc = sc_src

        # ---- conv1 (9 accumulating shifted dots) ----
        res1 = _conv3x3_shifted(xp1_ref, w1_ref, act1, None, N, H, W, Cin, Cout)

        # ---- BN2 + LeakyReLU ----
        act2 = _bn_leaky(res1, inv_n, g2_ref[...], b2_ref[...])

        # ---- conv2 with the shortcut folded in via the accumulator ----
        out = _conv3x3_shifted(xp2_ref, w2_ref, act2, sc, N, H, W, Cout, Cout)
        o_ref[...] = out.reshape(N, H, W, Cout)

    return kernel


# ------------------------------- block wrapper --------------------------------
def basic_block_preact(x_nchw, params, *, pre_res_act=False):
    """Forward of BasicBlockPreAct (stride=1, no dropout).  NCHW in / NCHW out."""
    N, Cin, H, W = x_nchw.shape
    if H % 8 or W % 8:
        raise NotImplementedError("spatial dims must be multiples of 8")
    w1 = params["w1"]                                        # (3, 3, Cin, Cout) HWIO
    Cout = w1.shape[-1]
    wd = params.get("wd")
    has_down = wd is not None
    if not has_down and Cin != Cout:
        raise ValueError("identity shortcut requires in_chan == out_chan")

    # TODO(synk): boundary NCHW<->NHWC conversions done by XLA; an NHWC-resident
    #             network would not need them (Mosaic cannot relayout the minor
    #             dim in-kernel yet).
    x = jnp.transpose(x_nchw, (0, 2, 3, 1)).astype(jnp.float32)

    w1r = jnp.asarray(w1, jnp.float32).reshape(9, Cin, Cout).astype(jnp.bfloat16)
    w2r = jnp.asarray(params["w2"], jnp.float32).reshape(9, Cout, Cout).astype(jnp.bfloat16)

    inputs = [x, w1r, w2r]
    if has_down:
        inputs.append(jnp.asarray(wd, jnp.float32).astype(jnp.bfloat16))  # (Cin, Cout)
    inputs += [jnp.asarray(params["g1"], jnp.float32).reshape(1, Cin),
               jnp.asarray(params["b1"], jnp.float32).reshape(1, Cin),
               jnp.asarray(params["g2"], jnp.float32).reshape(1, Cout),
               jnp.asarray(params["b2"], jnp.float32).reshape(1, Cout)]

    Wp = _round_up(_PADL + W + 8, 8)           # halo strips stay in-bounds & aligned
    vmem = pl.BlockSpec(memory_space=pltpu.MemorySpace.VMEM)
    kernel = _make_fused_kernel(N, H, W, Cin, Cout, pre_res_act, has_down)

    out = pl.pallas_call(
        kernel,
        out_shape=jax.ShapeDtypeStruct((N, H, W, Cout), jnp.float32),
        in_specs=[vmem] * len(inputs),
        out_specs=vmem,
        scratch_shapes=[
            pltpu.VMEM((N, H + 2, Wp, Cin), jnp.float32),     # padded act1
            pltpu.VMEM((N, H + 2, Wp, Cout), jnp.float32),    # padded act2
        ],
    )(*inputs)
    return jnp.transpose(out, (0, 3, 1, 2))                   # -> NCHW


# ----------------------------- pure-JAX reference ------------------------------
def _reference_block(x_nchw, p, pre_res_act=False):
    x = jnp.transpose(x_nchw, (0, 2, 3, 1)).astype(jnp.float32)

    def bn_act(v, g, b):
        mean = jnp.mean(v, axis=(0, 1, 2), keepdims=True)
        var = jnp.mean((v - mean) ** 2, axis=(0, 1, 2), keepdims=True)
        y = (v - mean) * jax.lax.rsqrt(var + _EPS) * g.reshape(1, 1, 1, -1) \
            + b.reshape(1, 1, 1, -1)
        return jnp.where(y >= 0, y, _SLOPE * y)

    def conv(v, w):
        return jax.lax.conv_general_dilated(
            v, w, (1, 1), "SAME",
            dimension_numbers=("NHWC", "HWIO", "NHWC"),
            precision=jax.lax.Precision.HIGHEST)

    act1 = bn_act(x, p["g1"], p["b1"])
    res = conv(act1, p["w1"])
    act2 = bn_act(res, p["g2"], p["b2"])
    res = conv(act2, p["w2"])
    sc = act1 if pre_res_act else x
    if p.get("wd") is not None:
        sc = conv(sc, p["wd"].reshape(1, 1, *p["wd"].shape))
    return jnp.transpose(sc + res, (0, 3, 1, 2))


if __name__ == "__main__":
    key = jax.random.PRNGKey(0)
    N, Cin, H, W = 2, 4, 16, 16
    Cout = 8                                  # in_chan != out_chan -> 1x1 downsample
    k_x, k_w1, k_w2, k_wd = jax.random.split(key, 4)

    x = jax.random.normal(k_x, (N, Cin, H, W), jnp.float32)

    def kaiming(k, shape, fan_in):            # kaiming_normal_, fan_in, a=0
        return jax.random.normal(k, shape, jnp.float32) * math.sqrt(2.0 / fan_in)

    params = {
        # conv weights in HWIO layout (kh, kw, Cin, Cout)
        "w1": kaiming(k_w1, (3, 3, Cin, Cout), 9 * Cin),
        "w2": kaiming(k_w2, (3, 3, Cout, Cout), 9 * Cout),
        "wd": kaiming(k_wd, (Cin, Cout), Cin),            # 1x1 downsample
        # BatchNorm affine params (PyTorch default init: weight=1, bias=0)
        "g1": jnp.ones((1, Cin), jnp.float32),
        "b1": jnp.zeros((1, Cin), jnp.float32),
        "g2": jnp.ones((1, Cout), jnp.float32),
        "b2": jnp.zeros((1, Cout), jnp.float32),
    }

    out = basic_block_preact(x, params, pre_res_act=False)
    out = jax.block_until_ready(out)
    assert out.shape == (N, Cout, H, W), out.shape

    ref = jax.block_until_ready(_reference_block(x, params, pre_res_act=False))
    # bf16 MXU operands vs f32-HIGHEST reference -> slightly looser tolerance.
    np.testing.assert_allclose(np.asarray(out), np.asarray(ref),
                               rtol=2e-2, atol=2e-2)

    print("KERNEL_OK")
</pallas_src>

<mosaic_0001>
module attributes {stable_mosaic.version = 11 : i64} {
  func.func @kernel(%arg0: memref<2x16x16x4xf32, #tpu.memory_space<vmem>>, %arg1: memref<9x4x8xbf16, #tpu.memory_space<vmem>>, %arg2: memref<9x8x8xbf16, #tpu.memory_space<vmem>>, %arg3: memref<4x8xbf16, #tpu.memory_space<vmem>>, %arg4: memref<1x4xf32, #tpu.memory_space<vmem>>, %arg5: memref<1x4xf32, #tpu.memory_space<vmem>>, %arg6: memref<1x8xf32, #tpu.memory_space<vmem>>, %arg7: memref<1x8xf32, #tpu.memory_space<vmem>>, %arg8: memref<2x16x16x8xf32, #tpu.memory_space<vmem>>, %arg9: memref<2x18x32x4xf32, #tpu.memory_space<vmem>>, %arg10: memref<2x18x32x8xf32, #tpu.memory_space<vmem>>) attributes {dimension_semantics = [], scalar_prefetch = 0 : i64, scratch_operands = 2 : i64, tpu.core_type = #tpu.core_type<tc>} {
    %c0 = arith.constant 0 : index
    %c0_0 = arith.constant 0 : index
    %c0_1 = arith.constant 0 : index
    %c0_2 = arith.constant 0 : index
    %0 = vector.load %arg0[%c0, %c0_0, %c0_1, %c0_2] : memref<2x16x16x4xf32, #tpu.memory_space<vmem>>, vector<2x16x16x4xf32>
    %1 = vector.shape_cast %0 : vector<2x16x16x4xf32> to vector<512x4xf32>
    %c0_3 = arith.constant 0 : index
    %c0_4 = arith.constant 0 : index
    %2 = vector.load %arg4[%c0_3, %c0_4] : memref<1x4xf32, #tpu.memory_space<vmem>>, vector<1x4xf32>
    %c0_5 = arith.constant 0 : index
    %c0_6 = arith.constant 0 : index
    %3 = vector.load %arg5[%c0_5, %c0_6] : memref<1x4xf32, #tpu.memory_space<vmem>>, vector<1x4xf32>
    %cst = arith.constant dense<0.000000e+00> : vector<4xf32>
    %4 = vector.multi_reduction <add>, %1, %cst [0] : vector<512x4xf32> to vector<4xf32>
    %5 = vector.shape_cast %4 : vector<4xf32> to vector<1x4xf32>
    %cst_7 = arith.constant 0.001953125 : f32
    %6 = vector.broadcast %cst_7 : f32 to vector<1x4xf32>
    %7 = arith.mulf %5, %6 : vector<1x4xf32>
    %8 = vector.broadcast %7 : vector<1x4xf32> to vector<512x4xf32>
    %9 = arith.subf %1, %8 : vector<512x4xf32>
    %10 = arith.mulf %9, %9 : vector<512x4xf32>
    %cst_8 = arith.constant dense<0.000000e+00> : vector<4xf32>
    %11 = vector.multi_reduction <add>, %10, %cst_8 [0] : vector<512x4xf32> to vector<4xf32>
    %12 = vector.shape_cast %11 : vector<4xf32> to vector<1x4xf32>
    %cst_9 = arith.constant 0.001953125 : f32
    %13 = vector.broadcast %cst_9 : f32 to vector<1x4xf32>
    %14 = arith.mulf %12, %13 : vector<1x4xf32>
    %cst_10 = arith.constant 9.99999974E-6 : f32
    %15 = vector.broadcast %cst_10 : f32 to vector<1x4xf32>
    %16 = arith.addf %14, %15 : vector<1x4xf32>
    %17 = math.rsqrt %16 : vector<1x4xf32>
    %18 = vector.broadcast %17 : vector<1x4xf32> to vector<512x4xf32>
    %19 = arith.mulf %9, %18 : vector<512x4xf32>
    %20 = vector.broadcast %2 : vector<1x4xf32> to vector<512x4xf32>
    %21 = arith.mulf %19, %20 : vector<512x4xf32>
    %22 = vector.broadcast %3 : vector<1x4xf32> to vector<512x4xf32>
    %23 = arith.addf %21, %22 : vector<512x4xf32>
    %cst_11 = arith.constant 0.000000e+00 : f32
    %24 = vector.broadcast %cst_11 : f32 to vector<512x4xf32>
    %25 = arith.cmpf oge, %23, %24 : vector<512x4xf32>
    %cst_12 = arith.constant 1.000000e-01 : f32
    %26 = vector.broadcast %cst_12 : f32 to vector<512x4xf32>
    %27 = arith.mulf %26, %23 : vector<512x4xf32>
    %28 = arith.select %25, %23, %27 : vector<512x4xi1>, vector<512x4xf32>
    %29 = arith.truncf %1 : vector<512x4xf32> to vector<512x4xbf16>
    %c0_13 = arith.constant 0 : index
    %c0_14 = arith.constant 0 : index
    %30 = vector.load %arg3[%c0_13, %c0_14] : memref<4x8xbf16, #tpu.memory_space<vmem>>, vector<4x8xbf16>
    %cst_15 = arith.constant dense<0.000000e+00> : vector<512x8xf32>
    %31 = tpu.matmul %29, %30, %cst_15 {dimension_numbers = #tpu.dot_dimension_numbers<[1], [0], [0], [1], [0, 0, 1, 1], [], []>} : vector<512x4xbf16>, vector<4x8xbf16>, vector<512x8xf32> -> vector<512x8xf32>
    %cst_16 = arith.constant 0.000000e+00 : f32
    %32 = vector.broadcast %cst_16 : f32 to vector<2x1x32x4xf32>
    %c0_17 = arith.constant 0 : index
    %c0_18 = arith.constant 0 : index
    %c0_19 = arith.constant 0 : index
    %c0_20 = arith.constant 0 : index
    %33 = vector.load %arg9[%c0_17, %c0_18, %c0_19, %c0_20] : memref<2x18x32x4xf32, #tpu.memory_space<vmem>>, vector<2x1x32x4xf32>
    tpu.vector_store %arg9[%c0_17, %c0_18, %c0_19, %c0_20], %32 {strides = array<i32>} : memref<2x18x32x4xf32, #tpu.memory_space<vmem>>, vector<2x1x32x4xf32>,
    %c0_21 = arith.constant 0 : index
    %c17 = arith.constant 17 : index
    %c0_22 = arith.constant 0 : index
    %c0_23 = arith.constant 0 : index
    %34 = vector.load %arg9[%c0_21, %c17, %c0_22, %c0_23] : memref<2x18x32x4xf32, #tpu.memory_space<vmem>>, vector<2x1x32x4xf32>
    tpu.vector_store %arg9[%c0_21, %c17, %c0_22, %c0_23], %32 {strides = array<i32>} : memref<2x18x32x4xf32, #tpu.memory_space<vmem>>, vector<2x1x32x4xf32>,
    %cst_24 = arith.constant 0.000000e+00 : f32
    %35 = vector.broadcast %cst_24 : f32 to vector<2x16x8x4xf32>
    %c0_25 = arith.constant 0 : index
    %c1 = arith.constant 1 : index
    %c0_26 = arith.constant 0 : index
    %c0_27 = arith.constant 0 : index
    %36 = vector.load %arg9[%c0_25, %c1, %c0_26, %c0_27] : memref<2x18x32x4xf32, #tpu.memory_space<vmem>>, vector<2x16x8x4xf32>
    tpu.vector_store %arg9[%c0_25, %c1, %c0_26, %c0_27], %35 {strides = array<i32>} : memref<2x18x32x4xf32, #tpu.memory_space<vmem>>, vector<2x16x8x4xf32>,
    %c0_28 = arith.constant 0 : index
    %c1_29 = arith.constant 1 : index
    %c24 = arith.constant 24 : index
    %c0_30 = arith.constant 0 : index
    %37 = vector.load %arg9[%c0_28, %c1_29, %c24, %c0_30] : memref<2x18x32x4xf32, #tpu.memory_space<vmem>>, vector<2x16x8x4xf32>
    tpu.vector_store %arg9[%c0_28, %c1_29, %c24, %c0_30], %35 {strides = array<i32>} : memref<2x18x32x4xf32, #tpu.memory_space<vmem>>, vector<2x16x8x4xf32>,
    %38 = vector.shape_cast %28 : vector<512x4xf32> to vector<2x16x16x4xf32>
    %c0_31 = arith.constant 0 : index
    %c1_32 = arith.constant 1 : index
    %c8 = arith.constant 8 : index
    %c0_33 = arith.constant 0 : index
    %39 = vector.load %arg9[%c0_31, %c1_32, %c8, %c0_33] : memref<2x18x32x4xf32, #tpu.memory_space<vmem>>, vector<2x16x16x4xf32>
    tpu.vector_store %arg9[%c0_31, %c1_32, %c8, %c0_33], %38 {strides = array<i32>} : memref<2x18x32x4xf32, #tpu.memory_space<vmem>>, vector<2x16x16x4xf32>,
    %cst_34 = arith.constant 0.000000e+00 : f32
    %40 = vector.broadcast %cst_34 : f32 to vector<512x8xf32>
    %c0_35 = arith.constant 0 : index
    %c0_36 = arith.constant 0 : index
    %c7 = arith.constant 7 : index
    %c0_37 = arith.constant 0 : index
    %41 = vector.load %arg9[%c0_35, %c0_36, %c7, %c0_37] : memref<2x18x32x4xf32, #tpu.memory_space<vmem>>, vector<2x16x16x4xf32>
    %42 = vector.shape_cast %41 : vector<2x16x16x4xf32> to vector<512x4xf32>
    %43 = arith.truncf %42 : vector<512x4xf32> to vector<512x4xbf16>
    %c0_38 = arith.constant 0 : index
    %c0_39 = arith.constant 0 : index
    %c0_40 = arith.constant 0 : index
    %44 = vector.load %arg1[%c0_38, %c0_39, %c0_40] : memref<9x4x8xbf16, #tpu.memory_space<vmem>>, vector<1x4x8xbf16>
    %45 = vector.shape_cast %44 : vector<1x4x8xbf16> to vector<4x8xbf16>
    %cst_41 = arith.constant dense<0.000000e+00> : vector<512x8xf32>
    %46 = tpu.matmul %43, %45, %cst_41 {dimension_numbers = #tpu.dot_dimension_numbers<[1], [0], [0], [1], [0, 0, 1, 1], [], []>} : vector<512x4xbf16>, vector<4x8xbf16>, vector<512x8xf32> -> vector<512x8xf32>
    %47 = arith.addf %40, %46 : vector<512x8xf32>
    %c0_42 = arith.constant 0 : index
    %c0_43 = arith.constant 0 : index
    %c8_44 = arith.constant 8 : index
    %c0_45 = arith.constant 0 : index
    %48 = vector.load %arg9[%c0_42, %c0_43, %c8_44, %c0_45] : memref<2x18x32x4xf32, #tpu.memory_space<vmem>>, vector<2x16x16x4xf32>
    %49 = vector.shape_cast %48 : vector<2x16x16x4xf32> to vector<512x4xf32>
    %50 = arith.truncf %49 : vector<512x4xf32> to vector<512x4xbf16>
    %c1_46 = arith.constant 1 : index
    %c0_47 = arith.constant 0 : index
    %c0_48 = arith.constant 0 : index
    %51 = vector.load %arg1[%c1_46, %c0_47, %c0_48] : memref<9x4x8xbf16, #tpu.memory_space<vmem>>, vector<1x4x8xbf16>
    %52 = vector.shape_cast %51 : vector<1x4x8xbf16> to vector<4x8xbf16>
    %cst_49 = arith.constant dense<0.000000e+00> : vector<512x8xf32>
    %53 = tpu.matmul %50, %52, %cst_49 {dimension_numbers = #tpu.dot_dimension_numbers<[1], [0], [0], [1], [0, 0, 1, 1], [], []>} : vector<512x4xbf16>, vector<4x8xbf16>, vector<512x8xf32> -> vector<512x8xf32>
    %54 = arith.addf %47, %53 : vector<512x8xf32>
    %c0_50 = arith.constant 0 : index
    %c0_51 = arith.constant 0 : index
    %c9 = arith.constant 9 : index
    %c0_52 = arith.constant 0 : index
    %55 = vector.load %arg9[%c0_50, %c0_51, %c9, %c0_52] : memref<2x18x32x4xf32, #tpu.memory_space<vmem>>, vector<2x16x16x4xf32>
    %56 = vector.shape_cast %55 : vector<2x16x16x4xf32> to vector<512x4xf32>
    %57 = arith.truncf %56 : vector<512x4xf32> to vector<512x4xbf16>
    %c2 = arith.constant 2 : index
    %c0_53 = arith.constant 0 : index
    %c0_54 = arith.constant 0 : index
    %58 = vector.load %arg1[%c2, %c0_53, %c0_54] : memref<9x4x8xbf16, #tpu.memory_space<vmem>>, vector<1x4x8xbf16>
    %59 = vector.shape_cast %58 : vector<1x4x8xbf16> to vector<4x8xbf16>
    %cst_55 = arith.constant dense<0.000000e+00> : vector<512x8xf32>
    %60 = tpu.matmul %57, %59, %cst_55 {dimension_numbers = #tpu.dot_dimension_numbers<[1], [0], [0], [1], [0, 0, 1, 1], [], []>} : vector<512x4xbf16>, vector<4x8xbf16>, vector<512x8xf32> -> vector<512x8xf32>
    %61 = arith.addf %54, %60 : vector<512x8xf32>
    %c0_56 = arith.constant 0 : index
    %c1_57 = arith.constant 1 : index
    %c7_58 = arith.constant 7 : index
    %c0_59 = arith.constant 0 : index
    %62 = vector.load %arg9[%c0_56, %c1_57, %c7_58, %c0_59] : memref<2x18x32x4xf32, #tpu.memory_space<vmem>>, vector<2x16x16x4xf32>
    %63 = vector.shape_cast %62 : vector<2x16x16x4xf32> to vector<512x4xf32>
    %64 = arith.truncf %63 : vector<512x4xf32> to vector<512x4xbf16>
    %c3 = arith.constant 3 : index
    %c0_60 = arith.constant 0 : index
    %c0_61 = arith.constant 0 : index
    %65 = vector.load %arg1[%c3, %c0_60, %c0_61] : memref<9x4x8xbf16, #tpu.memory_space<vmem>>, vector<1x4x8xbf16>
    %66 = vector.shape_cast %65 : vector<1x4x8xbf16> to vector<4x8xbf16>
    %cst_62 = arith.constant dense<0.000000e+00> : vector<512x8xf32>
    %67 = tpu.matmul %64, %66, %cst_62 {dimension_numbers = #tpu.dot_dimension_numbers<[1], [0], [0], [1], [0, 0, 1, 1], [], []>} : vector<512x4xbf16>, vector<4x8xbf16>, vector<512x8xf32> -> vector<512x8xf32>
    %68 = arith.addf %61, %67 : vector<512x8xf32>
    %c0_63 = arith.constant 0 : index
    %c1_64 = arith.constant 1 : index
    %c8_65 = arith.constant 8 : index
    %c0_66 = arith.constant 0 : index
    %69 = vector.load %arg9[%c0_63, %c1_64, %c8_65, %c0_66] : memref<2x18x32x4xf32, #tpu.memory_space<vmem>>, vector<2x16x16x4xf32>
    %70 = vector.shape_cast %69 : vector<2x16x16x4xf32> to vector<512x4xf32>
    %71 = arith.truncf %70 : vector<512x4xf32> to vector<512x4xbf16>
    %c4 = arith.constant 4 : index
    %c0_67 = arith.constant 0 : index
    %c0_68 = arith.constant 0 : index
    %72 = vector.load %arg1[%c4, %c0_67, %c0_68] : memref<9x4x8xbf16, #tpu.memory_space<vmem>>, vector<1x4x8xbf16>
    %73 = vector.shape_cast %72 : vector<1x4x8xbf16> to vector<4x8xbf16>
    %cst_69 = arith.constant dense<0.000000e+00> : vector<512x8xf32>
    %74 = tpu.matmul %71, %73, %cst_69 {dimension_numbers = #tpu.dot_dimension_numbers<[1], [0], [0], [1], [0, 0, 1, 1], [], []>} : vector<512x4xbf16>, vector<4x8xbf16>, vector<512x8xf32> -> vector<512x8xf32>
    %75 = arith.addf %68, %74 : vector<512x8xf32>
    %c0_70 = arith.constant 0 : index
    %c1_71 = arith.constant 1 : index
    %c9_72 = arith.constant 9 : index
    %c0_73 = arith.constant 0 : index
    %76 = vector.load %arg9[%c0_70, %c1_71, %c9_72, %c0_73] : memref<2x18x32x4xf32, #tpu.memory_space<vmem>>, vector<2x16x16x4xf32>
    %77 = vector.shape_cast %76 : vector<2x16x16x4xf32> to vector<512x4xf32>
    %78 = arith.truncf %77 : vector<512x4xf32> to vector<512x4xbf16>
    %c5 = arith.constant 5 : index
    %c0_74 = arith.constant 0 : index
    %c0_75 = arith.constant 0 : index
    %79 = vector.load %arg1[%c5, %c0_74, %c0_75] : memref<9x4x8xbf16, #tpu.memory_space<vmem>>, vector<1x4x8xbf16>
    %80 = vector.shape_cast %79 : vector<1x4x8xbf16> to vector<4x8xbf16>
    %cst_76 = arith.constant dense<0.000000e+00> : vector<512x8xf32>
    %81 = tpu.matmul %78, %80, %cst_76 {dimension_numbers = #tpu.dot_dimension_numbers<[1], [0], [0], [1], [0, 0, 1, 1], [], []>} : vector<512x4xbf16>, vector<4x8xbf16>, vector<512x8xf32> -> vector<512x8xf32>
    %82 = arith.addf %75, %81 : vector<512x8xf32>
    %c0_77 = arith.constant 0 : index
    %c2_78 = arith.constant 2 : index
    %c7_79 = arith.constant 7 : index
    %c0_80 = arith.constant 0 : index
    %83 = vector.load %arg9[%c0_77, %c2_78, %c7_79, %c0_80] : memref<2x18x32x4xf32, #tpu.memory_space<vmem>>, vector<2x16x16x4xf32>
    %84 = vector.shape_cast %83 : vector<2x16x16x4xf32> to vector<512x4xf32>
    %85 = arith.truncf %84 : vector<512x4xf32> to vector<512x4xbf16>
    %c6 = arith.constant 6 : index
    %c0_81 = arith.constant 0 : index
    %c0_82 = arith.constant 0 : index
    %86 = vector.load %arg1[%c6, %c0_81, %c0_82] : memref<9x4x8xbf16, #tpu.memory_space<vmem>>, vector<1x4x8xbf16>
    %87 = vector.shape_cast %86 : vector<1x4x8xbf16> to vector<4x8xbf16>
    %cst_83 = arith.constant dense<0.000000e+00> : vector<512x8xf32>
    %88 = tpu.matmul %85, %87, %cst_83 {dimension_numbers = #tpu.dot_dimension_numbers<[1], [0], [0], [1], [0, 0, 1, 1], [], []>} : vector<512x4xbf16>, vector<4x8xbf16>, vector<512x8xf32> -> vector<512x8xf32>
    %89 = arith.addf %82, %88 : vector<512x8xf32>
    %c0_84 = arith.constant 0 : index
    %c2_85 = arith.constant 2 : index
    %c8_86 = arith.constant 8 : index
    %c0_87 = arith.constant 0 : index
    %90 = vector.load %arg9[%c0_84, %c2_85, %c8_86, %c0_87] : memref<2x18x32x4xf32, #tpu.memory_space<vmem>>, vector<2x16x16x4xf32>
    %91 = vector.shape_cast %90 : vector<2x16x16x4xf32> to vector<512x4xf32>
    %92 = arith.truncf %91 : vector<512x4xf32> to vector<512x4xbf16>
    %c7_88 = arith.constant 7 : index
    %c0_89 = arith.constant 0 : index
    %c0_90 = arith.constant 0 : index
    %93 = vector.load %arg1[%c7_88, %c0_89, %c0_90] : memref<9x4x8xbf16, #tpu.memory_space<vmem>>, vector<1x4x8xbf16>
    %94 = vector.shape_cast %93 : vector<1x4x8xbf16> to vector<4x8xbf16>
    %cst_91 = arith.constant dense<0.000000e+00> : vector<512x8xf32>
    %95 = tpu.matmul %92, %94, %cst_91 {dimension_numbers = #tpu.dot_dimension_numbers<[1], [0], [0], [1], [0, 0, 1, 1], [], []>} : vector<512x4xbf16>, vector<4x8xbf16>, vector<512x8xf32> -> vector<512x8xf32>
    %96 = arith.addf %89, %95 : vector<512x8xf32>
    %c0_92 = arith.constant 0 : index
    %c2_93 = arith.constant 2 : index
    %c9_94 = arith.constant 9 : index
    %c0_95 = arith.constant 0 : index
    %97 = vector.load %arg9[%c0_92, %c2_93, %c9_94, %c0_95] : memref<2x18x32x4xf32, #tpu.memory_space<vmem>>, vector<2x16x16x4xf32>
    %98 = vector.shape_cast %97 : vector<2x16x16x4xf32> to vector<512x4xf32>
    %99 = arith.truncf %98 : vector<512x4xf32> to vector<512x4xbf16>
    %c8_96 = arith.constant 8 : index
    %c0_97 = arith.constant 0 : index
    %c0_98 = arith.constant 0 : index
    %100 = vector.load %arg1[%c8_96, %c0_97, %c0_98] : memref<9x4x8xbf16, #tpu.memory_space<vmem>>, vector<1x4x8xbf16>
    %101 = vector.shape_cast %100 : vector<1x4x8xbf16> to vector<4x8xbf16>
    %cst_99 = arith.constant dense<0.000000e+00> : vector<512x8xf32>
    %102 = tpu.matmul %99, %101, %cst_99 {dimension_numbers = #tpu.dot_dimension_numbers<[1], [0], [0], [1], [0, 0, 1, 1], [], []>} : vector<512x4xbf16>, vector<4x8xbf16>, vector<512x8xf32> -> vector<512x8xf32>
    %103 = arith.addf %96, %102 : vector<512x8xf32>
    %c0_100 = arith.constant 0 : index
    %c0_101 = arith.constant 0 : index
    %104 = vector.load %arg6[%c0_100, %c0_101] : memref<1x8xf32, #tpu.memory_space<vmem>>, vector<1x8xf32>
    %c0_102 = arith.constant 0 : index
    %c0_103 = arith.constant 0 : index
    %105 = vector.load %arg7[%c0_102, %c0_103] : memref<1x8xf32, #tpu.memory_space<vmem>>, vector<1x8xf32>
    %cst_104 = arith.constant dense<0.000000e+00> : vector<8xf32>
    %106 = vector.multi_reduction <add>, %103, %cst_104 [0] : vector<512x8xf32> to vector<8xf32>
    %107 = vector.shape_cast %106 : vector<8xf32> to vector<1x8xf32>
    %cst_105 = arith.constant 0.001953125 : f32
    %108 = vector.broadcast %cst_105 : f32 to vector<1x8xf32>
    %109 = arith.mulf %107, %108 : vector<1x8xf32>
    %110 = vector.broadcast %109 : vector<1x8xf32> to vector<512x8xf32>
    %111 = arith.subf %103, %110 : vector<512x8xf32>
    %112 = arith.mulf %111, %111 : vector<512x8xf32>
    %cst_106 = arith.constant dense<0.000000e+00> : vector<8xf32>
    %113 = vector.multi_reduction <add>, %112, %cst_106 [0] : vector<512x8xf32> to vector<8xf32>
    %114 = vector.shape_cast %113 : vector<8xf32> to vector<1x8xf32>
    %cst_107 = arith.constant 0.001953125 : f32
    %115 = vector.broadcast %cst_107 : f32 to vector<1x8xf32>
    %116 = arith.mulf %114, %115 : vector<1x8xf32>
    %cst_108 = arith.constant 9.99999974E-6 : f32
    %117 = vector.broadcast %cst_108 : f32 to vector<1x8xf32>
    %118 = arith.addf %116, %117 : vector<1x8xf32>
    %119 = math.rsqrt %118 : vector<1x8xf32>
    %120 = vector.broadcast %119 : vector<1x8xf32> to vector<512x8xf32>
    %121 = arith.mulf %111, %120 : vector<512x8xf32>
    %122 = vector.broadcast %104 : vector<1x8xf32> to vector<512x8xf32>
    %123 = arith.mulf %121, %122 : vector<512x8xf32>
    %124 = vector.broadcast %105 : vector<1x8xf32> to vector<512x8xf32>
    %125 = arith.addf %123, %124 : vector<512x8xf32>
    %cst_109 = arith.constant 0.000000e+00 : f32
    %126 = vector.broadcast %cst_109 : f32 to vector<512x8xf32>
    %127 = arith.cmpf oge, %125, %126 : vector<512x8xf32>
    %cst_110 = arith.constant 1.000000e-01 : f32
    %128 = vector.broadcast %cst_110 : f32 to vector<512x8xf32>
    %129 = arith.mulf %128, %125 : vector<512x8xf32>
    %130 = arith.select %127, %125, %129 : vector<512x8xi1>, vector<512x8xf32>
    %cst_111 = arith.constant 0.000000e+00 : f32
    %131 = vector.broadcast %cst_111 : f32 to vector<2x1x32x8xf32>
    %c0_112 = arith.constant 0 : index
    %c0_113 = arith.constant 0 : index
    %c0_114 = arith.constant 0 : index
    %c0_115 = arith.constant 0 : index
    %132 = vector.load %arg10[%c0_112, %c0_113, %c0_114, %c0_115] : memref<2x18x32x8xf32, #tpu.memory_space<vmem>>, vector<2x1x32x8xf32>
    tpu.vector_store %arg10[%c0_112, %c0_113, %c0_114, %c0_115], %131 {strides = array<i32>} : memref<2x18x32x8xf32, #tpu.memory_space<vmem>>, vector<2x1x32x8xf32>,
    %c0_116 = arith.constant 0 : index
    %c17_117 = arith.constant 17 : index
    %c0_118 = arith.constant 0 : index
    %c0_119 = arith.constant 0 : index
    %133 = vector.load %arg10[%c0_116, %c17_117, %c0_118, %c0_119] : memref<2x18x32x8xf32, #tpu.memory_space<vmem>>, vector<2x1x32x8xf32>
    tpu.vector_store %arg10[%c0_116, %c17_117, %c0_118, %c0_119], %131 {strides = array<i32>} : memref<2x18x32x8xf32, #tpu.memory_space<vmem>>, vector<2x1x32x8xf32>,
    %cst_120 = arith.constant 0.000000e+00 : f32
    %134 = vector.broadcast %cst_120 : f32 to vector<2x16x8x8xf32>
    %c0_121 = arith.constant 0 : index
    %c1_122 = arith.constant 1 : index
    %c0_123 = arith.constant 0 : index
    %c0_124 = arith.constant 0 : index
    %135 = vector.load %arg10[%c0_121, %c1_122, %c0_123, %c0_124] : memref<2x18x32x8xf32, #tpu.memory_space<vmem>>, vector<2x16x8x8xf32>
    tpu.vector_store %arg10[%c0_121, %c1_122, %c0_123, %c0_124], %134 {strides = array<i32>} : memref<2x18x32x8xf32, #tpu.memory_space<vmem>>, vector<2x16x8x8xf32>,
    %c0_125 = arith.constant 0 : index
    %c1_126 = arith.constant 1 : index
    %c24_127 = arith.constant 24 : index
    %c0_128 = arith.constant 0 : index
    %136 = vector.load %arg10[%c0_125, %c1_126, %c24_127, %c0_128] : memref<2x18x32x8xf32, #tpu.memory_space<vmem>>, vector<2x16x8x8xf32>
    tpu.vector_store %arg10[%c0_125, %c1_126, %c24_127, %c0_128], %134 {strides = array<i32>} : memref<2x18x32x8xf32, #tpu.memory_space<vmem>>, vector<2x16x8x8xf32>,
    %137 = vector.shape_cast %130 : vector<512x8xf32> to vector<2x16x16x8xf32>
    %c0_129 = arith.constant 0 : index
    %c1_130 = arith.constant 1 : index
    %c8_131 = arith.constant 8 : index
    %c0_132 = arith.constant 0 : index
    %138 = vector.load %arg10[%c0_129, %c1_130, %c8_131, %c0_132] : memref<2x18x32x8xf32, #tpu.memory_space<vmem>>, vector<2x16x16x8xf32>
    tpu.vector_store %arg10[%c0_129, %c1_130, %c8_131, %c0_132], %137 {strides = array<i32>} : memref<2x18x32x8xf32, #tpu.memory_space<vmem>>, vector<2x16x16x8xf32>,
    %c0_133 = arith.constant 0 : index
    %c0_134 = arith.constant 0 : index
    %c7_135 = arith.constant 7 : index
    %c0_136 = arith.constant 0 : index
    %139 = vector.load %arg10[%c0_133, %c0_134, %c7_135, %c0_136] : memref<2x18x32x8xf32, #tpu.memory_space<vmem>>, vector<2x16x16x8xf32>
    %140 = vector.shape_cast %139 : vector<2x16x16x8xf32> to vector<512x8xf32>
    %141 = arith.truncf %140 : vector<512x8xf32> to vector<512x8xbf16>
    %c0_137 = arith.constant 0 : index
    %c0_138 = arith.constant 0 : index
    %c0_139 = arith.constant 0 : index
    %142 = vector.load %arg2[%c0_137, %c0_138, %c0_139] : memref<9x8x8xbf16, #tpu.memory_space<vmem>>, vector<1x8x8xbf16>
    %143 = vector.shape_cast %142 : vector<1x8x8xbf16> to vector<8x8xbf16>
    %cst_140 = arith.constant dense<0.000000e+00> : vector<512x8xf32>
    %144 = tpu.matmul %141, %143, %cst_140 {dimension_numbers = #tpu.dot_dimension_numbers<[1], [0], [0], [1], [0, 0, 1, 1], [], []>} : vector<512x8xbf16>, vector<8x8xbf16>, vector<512x8xf32> -> vector<512x8xf32>
    %145 = arith.addf %31, %144 : vector<512x8xf32>
    %c0_141 = arith.constant 0 : index
    %c0_142 = arith.constant 0 : index
    %c8_143 = arith.constant 8 : index
    %c0_144 = arith.constant 0 : index
    %146 = vector.load %arg10[%c0_141, %c0_142, %c8_143, %c0_144] : memref<2x18x32x8xf32, #tpu.memory_space<vmem>>, vector<2x16x16x8xf32>
    %147 = vector.shape_cast %146 : vector<2x16x16x8xf32> to vector<512x8xf32>
    %148 = arith.truncf %147 : vector<512x8xf32> to vector<512x8xbf16>
    %c1_145 = arith.constant 1 : index
    %c0_146 = arith.constant 0 : index
    %c0_147 = arith.constant 0 : index
    %149 = vector.load %arg2[%c1_145, %c0_146, %c0_147] : memref<9x8x8xbf16, #tpu.memory_space<vmem>>, vector<1x8x8xbf16>
    %150 = vector.shape_cast %149 : vector<1x8x8xbf16> to vector<8x8xbf16>
    %cst_148 = arith.constant dense<0.000000e+00> : vector<512x8xf32>
    %151 = tpu.matmul %148, %150, %cst_148 {dimension_numbers = #tpu.dot_dimension_numbers<[1], [0], [0], [1], [0, 0, 1, 1], [], []>} : vector<512x8xbf16>, vector<8x8xbf16>, vector<512x8xf32> -> vector<512x8xf32>
    %152 = arith.addf %145, %151 : vector<512x8xf32>
    %c0_149 = arith.constant 0 : index
    %c0_150 = arith.constant 0 : index
    %c9_151 = arith.constant 9 : index
    %c0_152 = arith.constant 0 : index
    %153 = vector.load %arg10[%c0_149, %c0_150, %c9_151, %c0_152] : memref<2x18x32x8xf32, #tpu.memory_space<vmem>>, vector<2x16x16x8xf32>
    %154 = vector.shape_cast %153 : vector<2x16x16x8xf32> to vector<512x8xf32>
    %155 = arith.truncf %154 : vector<512x8xf32> to vector<512x8xbf16>
    %c2_153 = arith.constant 2 : index
    %c0_154 = arith.constant 0 : index
    %c0_155 = arith.constant 0 : index
    %156 = vector.load %arg2[%c2_153, %c0_154, %c0_155] : memref<9x8x8xbf16, #tpu.memory_space<vmem>>, vector<1x8x8xbf16>
    %157 = vector.shape_cast %156 : vector<1x8x8xbf16> to vector<8x8xbf16>
    %cst_156 = arith.constant dense<0.000000e+00> : vector<512x8xf32>
    %158 = tpu.matmul %155, %157, %cst_156 {dimension_numbers = #tpu.dot_dimension_numbers<[1], [0], [0], [1], [0, 0, 1, 1], [], []>} : vector<512x8xbf16>, vector<8x8xbf16>, vector<512x8xf32> -> vector<512x8xf32>
    %159 = arith.addf %152, %158 : vector<512x8xf32>
    %c0_157 = arith.constant 0 : index
    %c1_158 = arith.constant 1 : index
    %c7_159 = arith.constant 7 : index
    %c0_160 = arith.constant 0 : index
    %160 = vector.load %arg10[%c0_157, %c1_158, %c7_159, %c0_160] : memref<2x18x32x8xf32, #tpu.memory_space<vmem>>, vector<2x16x16x8xf32>
    %161 = vector.shape_cast %160 : vector<2x16x16x8xf32> to vector<512x8xf32>
    %162 = arith.truncf %161 : vector<512x8xf32> to vector<512x8xbf16>
    %c3_161 = arith.constant 3 : index
    %c0_162 = arith.constant 0 : index
    %c0_163 = arith.constant 0 : index
    %163 = vector.load %arg2[%c3_161, %c0_162, %c0_163] : memref<9x8x8xbf16, #tpu.memory_space<vmem>>, vector<1x8x8xbf16>
    %164 = vector.shape_cast %163 : vector<1x8x8xbf16> to vector<8x8xbf16>
    %cst_164 = arith.constant dense<0.000000e+00> : vector<512x8xf32>
    %165 = tpu.matmul %162, %164, %cst_164 {dimension_numbers = #tpu.dot_dimension_numbers<[1], [0], [0], [1], [0, 0, 1, 1], [], []>} : vector<512x8xbf16>, vector<8x8xbf16>, vector<512x8xf32> -> vector<512x8xf32>
    %166 = arith.addf %159, %165 : vector<512x8xf32>
    %c0_165 = arith.constant 0 : index
    %c1_166 = arith.constant 1 : index
    %c8_167 = arith.constant 8 : index
    %c0_168 = arith.constant 0 : index
    %167 = vector.load %arg10[%c0_165, %c1_166, %c8_167, %c0_168] : memref<2x18x32x8xf32, #tpu.memory_space<vmem>>, vector<2x16x16x8xf32>
    %168 = vector.shape_cast %167 : vector<2x16x16x8xf32> to vector<512x8xf32>
    %169 = arith.truncf %168 : vector<512x8xf32> to vector<512x8xbf16>
    %c4_169 = arith.constant 4 : index
    %c0_170 = arith.constant 0 : index
    %c0_171 = arith.constant 0 : index
    %170 = vector.load %arg2[%c4_169, %c0_170, %c0_171] : memref<9x8x8xbf16, #tpu.memory_space<vmem>>, vector<1x8x8xbf16>
    %171 = vector.shape_cast %170 : vector<1x8x8xbf16> to vector<8x8xbf16>
    %cst_172 = arith.constant dense<0.000000e+00> : vector<512x8xf32>
    %172 = tpu.matmul %169, %171, %cst_172 {dimension_numbers = #tpu.dot_dimension_numbers<[1], [0], [0], [1], [0, 0, 1, 1], [], []>} : vector<512x8xbf16>, vector<8x8xbf16>, vector<512x8xf32> -> vector<512x8xf32>
    %173 = arith.addf %166, %172 : vector<512x8xf32>
    %c0_173 = arith.constant 0 : index
    %c1_174 = arith.constant 1 : index
    %c9_175 = arith.constant 9 : index
    %c0_176 = arith.constant 0 : index
    %174 = vector.load %arg10[%c0_173, %c1_174, %c9_175, %c0_176] : memref<2x18x32x8xf32, #tpu.memory_space<vmem>>, vector<2x16x16x8xf32>
    %175 = vector.shape_cast %174 : vector<2x16x16x8xf32> to vector<512x8xf32>
    %176 = arith.truncf %175 : vector<512x8xf32> to vector<512x8xbf16>
    %c5_177 = arith.constant 5 : index
    %c0_178 = arith.constant 0 : index
    %c0_179 = arith.constant 0 : index
    %177 = vector.load %arg2[%c5_177, %c0_178, %c0_179] : memref<9x8x8xbf16, #tpu.memory_space<vmem>>, vector<1x8x8xbf16>
    %178 = vector.shape_cast %177 : vector<1x8x8xbf16> to vector<8x8xbf16>
    %cst_180 = arith.constant dense<0.000000e+00> : vector<512x8xf32>
    %179 = tpu.matmul %176, %178, %cst_180 {dimension_numbers = #tpu.dot_dimension_numbers<[1], [0], [0], [1], [0, 0, 1, 1], [], []>} : vector<512x8xbf16>, vector<8x8xbf16>, vector<512x8xf32> -> vector<512x8xf32>
    %180 = arith.addf %173, %179 : vector<512x8xf32>
    %c0_181 = arith.constant 0 : index
    %c2_182 = arith.constant 2 : index
    %c7_183 = arith.constant 7 : index
    %c0_184 = arith.constant 0 : index
    %181 = vector.load %arg10[%c0_181, %c2_182, %c7_183, %c0_184] : memref<2x18x32x8xf32, #tpu.memory_space<vmem>>, vector<2x16x16x8xf32>
    %182 = vector.shape_cast %181 : vector<2x16x16x8xf32> to vector<512x8xf32>
    %183 = arith.truncf %182 : vector<512x8xf32> to vector<512x8xbf16>
    %c6_185 = arith.constant 6 : index
    %c0_186 = arith.constant 0 : index
    %c0_187 = arith.constant 0 : index
    %184 = vector.load %arg2[%c6_185, %c0_186, %c0_187] : memref<9x8x8xbf16, #tpu.memory_space<vmem>>, vector<1x8x8xbf16>
    %185 = vector.shape_cast %184 : vector<1x8x8xbf16> to vector<8x8xbf16>
    %cst_188 = arith.constant dense<0.000000e+00> : vector<512x8xf32>
    %186 = tpu.matmul %183, %185, %cst_188 {dimension_numbers = #tpu.dot_dimension_numbers<[1], [0], [0], [1], [0, 0, 1, 1], [], []>} : vector<512x8xbf16>, vector<8x8xbf16>, vector<512x8xf32> -> vector<512x8xf32>
    %187 = arith.addf %180, %186 : vector<512x8xf32>
    %c0_189 = arith.constant 0 : index
    %c2_190 = arith.constant 2 : index
    %c8_191 = arith.constant 8 : index
    %c0_192 = arith.constant 0 : index
    %188 = vector.load %arg10[%c0_189, %c2_190, %c8_191, %c0_192] : memref<2x18x32x8xf32, #tpu.memory_space<vmem>>, vector<2x16x16x8xf32>
    %189 = vector.shape_cast %188 : vector<2x16x16x8xf32> to vector<512x8xf32>
    %190 = arith.truncf %189 : vector<512x8xf32> to vector<512x8xbf16>
    %c7_193 = arith.constant 7 : index
    %c0_194 = arith.constant 0 : index
    %c0_195 = arith.constant 0 : index
    %191 = vector.load %arg2[%c7_193, %c0_194, %c0_195] : memref<9x8x8xbf16, #tpu.memory_space<vmem>>, vector<1x8x8xbf16>
    %192 = vector.shape_cast %191 : vector<1x8x8xbf16> to vector<8x8xbf16>
    %cst_196 = arith.constant dense<0.000000e+00> : vector<512x8xf32>
    %193 = tpu.matmul %190, %192, %cst_196 {dimension_numbers = #tpu.dot_dimension_numbers<[1], [0], [0], [1], [0, 0, 1, 1], [], []>} : vector<512x8xbf16>, vector<8x8xbf16>, vector<512x8xf32> -> vector<512x8xf32>
    %194 = arith.addf %187, %193 : vector<512x8xf32>
    %c0_197 = arith.constant 0 : index
    %c2_198 = arith.constant 2 : index
    %c9_199 = arith.constant 9 : index
    %c0_200 = arith.constant 0 : index
    %195 = vector.load %arg10[%c0_197, %c2_198, %c9_199, %c0_200] : memref<2x18x32x8xf32, #tpu.memory_space<vmem>>, vector<2x16x16x8xf32>
    %196 = vector.shape_cast %195 : vector<2x16x16x8xf32> to vector<512x8xf32>
    %197 = arith.truncf %196 : vector<512x8xf32> to vector<512x8xbf16>
    %c8_201 = arith.constant 8 : index
    %c0_202 = arith.constant 0 : index
    %c0_203 = arith.constant 0 : index
    %198 = vector.load %arg2[%c8_201, %c0_202, %c0_203] : memref<9x8x8xbf16, #tpu.memory_space<vmem>>, vector<1x8x8xbf16>
    %199 = vector.shape_cast %198 : vector<1x8x8xbf16> to vector<8x8xbf16>
    %cst_204 = arith.constant dense<0.000000e+00> : vector<512x8xf32>
    %200 = tpu.matmul %197, %199, %cst_204 {dimension_numbers = #tpu.dot_dimension_numbers<[1], [0], [0], [1], [0, 0, 1, 1], [], []>} : vector<512x8xbf16>, vector<8x8xbf16>, vector<512x8xf32> -> vector<512x8xf32>
    %201 = arith.addf %194, %200 : vector<512x8xf32>
    %202 = vector.shape_cast %201 : vector<512x8xf32> to vector<2x16x16x8xf32>
    %c0_205 = arith.constant 0 : index
    %c0_206 = arith.constant 0 : index
    %c0_207 = arith.constant 0 : index
    %c0_208 = arith.constant 0 : index
    %203 = vector.load %arg8[%c0_205, %c0_206, %c0_207, %c0_208] : memref<2x16x16x8xf32, #tpu.memory_space<vmem>>, vector<2x16x16x8xf32>
    tpu.vector_store %arg8[%c0_205, %c0_206, %c0_207, %c0_208], %202 {strides = array<i32>} : memref<2x16x16x8xf32, #tpu.memory_space<vmem>>, vector<2x16x16x8xf32>,
    return
  }
}

</mosaic_0001>

<llo_original>
// kernel: tpu_custom_call.1
$region0: #{tpu_custom_call.1}
  #allocation0 [shape = 'u32[]', space=smem, size = 0x4, offset = 0x4, fixed_abs, tag = 'smem constant byte address 0x4 - core index']
  #allocation1 [shape = 'u32[144,128]{1,0:T(1,128)}', space=vmem, size = 0x12000, scoped, tag = 'internal scratch']
  #allocation2 [shape = 'f32[2,18,32,4]{3,2,1,0:T(8,128)}', space=vmem, size = 0x90000, scoped, tag = 'scratch operand']
  #allocation3 [shape = 'f32[2,18,32,8]{3,2,1,0:T(8,128)}', space=vmem, size = 0x90000, scoped, tag = 'scratch operand']
  %s0 = inlined_call_operand.vmem [shape: f32[2,16,16,4], index: 0, kind: input, shape index: {}]
  %s1 = inlined_call_operand.vmem [shape: bf16[9,4,8], index: 1, kind: input, shape index: {}]
  %s2 = inlined_call_operand.vmem [shape: bf16[9,8,8], index: 2, kind: input, shape index: {}]
  %s3 = inlined_call_operand.vmem [shape: bf16[4,8], index: 3, kind: input, shape index: {}]
  %s4 = inlined_call_operand.vmem [shape: f32[1,4], index: 4, kind: input, shape index: {}]
  %s5 = inlined_call_operand.vmem [shape: f32[1,4], index: 5, kind: input, shape index: {}]
  %s6 = inlined_call_operand.vmem [shape: f32[1,8], index: 6, kind: input, shape index: {}]
  %s7 = inlined_call_operand.vmem [shape: f32[1,8], index: 7, kind: input, shape index: {}]
  %s8 = inlined_call_operand.vmem [shape: f32[2,16,16,8], index: 8, kind: output, shape index: {}]
  %s9 = sld [smem:[#allocation0]]
  $region42: #{tpu_custom_call.1} parent=0
    _
  %s11 = ssub.s32 1, %s9
  %s12 = scalar_select 0, %s11, %s9
  // Predicated region
  $region2: #{tpu_custom_call.1} parent=0 // pred_check
    _
  $region3: #{tpu_custom_call.1} parent=0 // pred_check_branch
    %14 = sbr.rel (0) target = $region5
  $region4: #{tpu_custom_call.1} parent=0 // pred_region
    _
  $region5: #{tpu_custom_call.1} parent=0 // pred_fallthru
    _
  // Predicated region
  $region6: #{tpu_custom_call.1} parent=0 // pred_check
    _
  $region7: #{tpu_custom_call.1} parent=0 // pred_check_branch
    %16 = sbr.rel (0) target = $region9
  $region8: #{tpu_custom_call.1} parent=0 // pred_region
    _
  $region9: #{tpu_custom_call.1} parent=0 // pred_fallthru
    _
  // Predicated region
  $region10: #{tpu_custom_call.1} parent=0 // pred_check
    _
  $region11: #{tpu_custom_call.1} parent=0 // pred_check_branch
    %18 = sbr.rel (0) target = $region13
  $region12: #{tpu_custom_call.1} parent=0 // pred_region
    _
  $region13: #{tpu_custom_call.1} parent=0 // pred_fallthru
    _
  // Predicated region
  $region14: #{tpu_custom_call.1} parent=0 // pred_check
    _
  $region15: #{tpu_custom_call.1} parent=0 // pred_check_branch
    %20 = sbr.rel (0) target = $region17
  $region16: #{tpu_custom_call.1} parent=0 // pred_region
    _
  $region17: #{tpu_custom_call.1} parent=0 // pred_fallthru
    _
  // Predicated region
  $region18: #{tpu_custom_call.1} parent=0 // pred_check
    _
  $region19: #{tpu_custom_call.1} parent=0 // pred_check_branch
    %22 = sbr.rel (0) target = $region21
  $region20: #{tpu_custom_call.1} parent=0 // pred_region
    _
  $region21: #{tpu_custom_call.1} parent=0 // pred_fallthru
    _
  // Predicated region
  $region22: #{tpu_custom_call.1} parent=0 // pred_check
    _
  $region23: #{tpu_custom_call.1} parent=0 // pred_check_branch
    %24 = sbr.rel (0) target = $region25
  $region24: #{tpu_custom_call.1} parent=0 // pred_region
    _
  $region25: #{tpu_custom_call.1} parent=0 // pred_fallthru
    _
  // Predicated region
  $region26: #{tpu_custom_call.1} parent=0 // pred_check
    _
  $region27: #{tpu_custom_call.1} parent=0 // pred_check_branch
    %26 = sbr.rel (0) target = $region29
  $region28: #{tpu_custom_call.1} parent=0 // pred_region
    _
  $region29: #{tpu_custom_call.1} parent=0 // pred_fallthru
    _
  // Predicated region
  $region30: #{tpu_custom_call.1} parent=0 // pred_check
    _
  $region31: #{tpu_custom_call.1} parent=0 // pred_check_branch
    %28 = sbr.rel (0) target = $region33
  $region32: #{tpu_custom_call.1} parent=0 // pred_region
    _
  $region33: #{tpu_custom_call.1} parent=0 // pred_fallthru
    _
  %v30 = vld [vmem:[%s0] sm:$0xff]
  %v31 = vld [vmem:[%s0 + $0x8] sm:$0xff]
  %v32 = vld [vmem:[%s0 + $0x10] sm:$0xff]
  %v33 = vld [vmem:[%s0 + $0x18] sm:$0xff]
  %v34 = vld [vmem:[%s0 + $0x20] sm:$0xff]
  %v35 = vld [vmem:[%s0 + $0x28] sm:$0xff]
  %v36 = vld [vmem:[%s0 + $0x30] sm:$0xff]
  %v37 = vld [vmem:[%s0 + $0x38] sm:$0xff]
  %v38 = vld [vmem:[%s0 + $0x40] sm:$0xff]
  %v39 = vld [vmem:[%s0 + $0x48] sm:$0xff]
  %v40 = vld [vmem:[%s0 + $0x50] sm:$0xff]
  %v41 = vld [vmem:[%s0 + $0x58] sm:$0xff]
  %v42 = vld [vmem:[%s0 + $0x60] sm:$0xff]
  %v43 = vld [vmem:[%s0 + $0x68] sm:$0xff]
  %v44 = vld [vmem:[%s0 + $0x70] sm:$0xff]
  %v45 = vld [vmem:[%s0 + $0x78] sm:$0xff]
  %v46 = vld [vmem:[%s0 + $0x80] sm:$0xff]
  %v47 = vld [vmem:[%s0 + $0x88] sm:$0xff]
  %v48 = vld [vmem:[%s0 + $0x90] sm:$0xff]
  %v49 = vld [vmem:[%s0 + $0x98] sm:$0xff]
  %v50 = vld [vmem:[%s0 + $0xa0] sm:$0xff]
  %v51 = vld [vmem:[%s0 + $0xa8] sm:$0xff]
  %v52 = vld [vmem:[%s0 + $0xb0] sm:$0xff]
  %v53 = vld [vmem:[%s0 + $0xb8] sm:$0xff]
  %v54 = vld [vmem:[%s0 + $0xc0] sm:$0xff]
  %v55 = vld [vmem:[%s0 + $0xc8] sm:$0xff]
  %v56 = vld [vmem:[%s0 + $0xd0] sm:$0xff]
  %v57 = vld [vmem:[%s0 + $0xd8] sm:$0xff]
  %v58 = vld [vmem:[%s0 + $0xe0] sm:$0xff]
  %v59 = vld [vmem:[%s0 + $0xe8] sm:$0xff]
  %v60 = vld [vmem:[%s0 + $0xf0] sm:$0xff]
  %v61 = vld [vmem:[%s0 + $0xf8] sm:$0xff]
  %v62 = vld [vmem:[%s0 + $0x100] sm:$0xff]
  %v63 = vld [vmem:[%s0 + $0x108] sm:$0xff]
  %v64 = vld [vmem:[%s0 + $0x110] sm:$0xff]
  %v65 = vld [vmem:[%s0 + $0x118] sm:$0xff]
  %v66 = vld [vmem:[%s0 + $0x120] sm:$0xff]
  %v67 = vld [vmem:[%s0 + $0x128] sm:$0xff]
  %v68 = vld [vmem:[%s0 + $0x130] sm:$0xff]
  %v69 = vld [vmem:[%s0 + $0x138] sm:$0xff]
  %v70 = vld [vmem:[%s0 + $0x140] sm:$0xff]
  %v71 = vld [vmem:[%s0 + $0x148] sm:$0xff]
  %v72 = vld [vmem:[%s0 + $0x150] sm:$0xff]
  %v73 = vld [vmem:[%s0 + $0x158] sm:$0xff]
  %v74 = vld [vmem:[%s0 + $0x160] sm:$0xff]
  %v75 = vld [vmem:[%s0 + $0x168] sm:$0xff]
  %v76 = vld [vmem:[%s0 + $0x170] sm:$0xff]
  %v77 = vld [vmem:[%s0 + $0x178] sm:$0xff]
  %v78 = vld [vmem:[%s0 + $0x180] sm:$0xff]
  %v79 = vld [vmem:[%s0 + $0x188] sm:$0xff]
  %v80 = vld [vmem:[%s0 + $0x190] sm:$0xff]
  %v81 = vld [vmem:[%s0 + $0x198] sm:$0xff]
  %v82 = vld [vmem:[%s0 + $0x1a0] sm:$0xff]
  %v83 = vld [vmem:[%s0 + $0x1a8] sm:$0xff]
  %v84 = vld [vmem:[%s0 + $0x1b0] sm:$0xff]
  %v85 = vld [vmem:[%s0 + $0x1b8] sm:$0xff]
  %v86 = vld [vmem:[%s0 + $0x1c0] sm:$0xff]
  %v87 = vld [vmem:[%s0 + $0x1c8] sm:$0xff]
  %v88 = vld [vmem:[%s0 + $0x1d0] sm:$0xff]
  %v89 = vld [vmem:[%s0 + $0x1d8] sm:$0xff]
  %v90 = vld [vmem:[%s0 + $0x1e0] sm:$0xff]
  %v91 = vld [vmem:[%s0 + $0x1e8] sm:$0xff]
  %v92 = vld [vmem:[%s0 + $0x1f0] sm:$0xff]
  %v93 = vld [vmem:[%s0 + $0x1f8] sm:$0xff]
  %v94 = vld [vmem:[%s4] sm:$0x1]
  %v95 = vld [vmem:[%s5] sm:$0x1]
  %vm96 = vcmask 31744
  %v97 = vsel %vm96, %v30, 0.0
  %v98 = vsel %vm96, %v31, 0.0
  %v99 = vadd.f32 %v97, %v98
  %v100 = vsel %vm96, %v32, 0.0
  %v101 = vadd.f32 %v99, %v100
  %v102 = vsel %vm96, %v33, 0.0
  %v103 = vadd.f32 %v101, %v102
  %v104 = vsel %vm96, %v34, 0.0
  %v105 = vadd.f32 %v103, %v104
  %v106 = vsel %vm96, %v35, 0.0
  %v107 = vadd.f32 %v105, %v106
  %v108 = vsel %vm96, %v36, 0.0
  %v109 = vadd.f32 %v107, %v108
  %v110 = vsel %vm96, %v37, 0.0
  %v111 = vadd.f32 %v109, %v110
  %v112 = vsel %vm96, %v38, 0.0
  %v113 = vadd.f32 %v111, %v112
  %v114 = vsel %vm96, %v39, 0.0
  %v115 = vadd.f32 %v113, %v114
  %v116 = vsel %vm96, %v40, 0.0
  %v117 = vadd.f32 %v115, %v116
  %v118 = vsel %vm96, %v41, 0.0
  %v119 = vadd.f32 %v117, %v118
  %v120 = vsel %vm96, %v42, 0.0
  %v121 = vadd.f32 %v119, %v120
  %v122 = vsel %vm96, %v43, 0.0
  %v123 = vadd.f32 %v121, %v122
  %v124 = vsel %vm96, %v44, 0.0
  %v125 = vadd.f32 %v123, %v124
  %v126 = vsel %vm96, %v45, 0.0
  %v127 = vadd.f32 %v125, %v126
  %v128 = vsel %vm96, %v46, 0.0
  %v129 = vadd.f32 %v127, %v128
  %v130 = vsel %vm96, %v47, 0.0
  %v131 = vadd.f32 %v129, %v130
  %v132 = vsel %vm96, %v48, 0.0
  %v133 = vadd.f32 %v131, %v132
  %v134 = vsel %vm96, %v49, 0.0
  %v135 = vadd.f32 %v133, %v134
  %v136 = vsel %vm96, %v50, 0.0
  %v137 = vadd.f32 %v135, %v136
  %v138 = vsel %vm96, %v51, 0.0
  %v139 = vadd.f32 %v137, %v138
  %v140 = vsel %vm96, %v52, 0.0
  %v141 = vadd.f32 %v139, %v140
  %v142 = vsel %vm96, %v53, 0.0
  %v143 = vadd.f32 %v141, %v142
  %v144 = vsel %vm96, %v54, 0.0
  %v145 = vadd.f32 %v143, %v144
  %v146 = vsel %vm96, %v55, 0.0
  %v147 = vadd.f32 %v145, %v146
  %v148 = vsel %vm96, %v56, 0.0
  %v149 = vadd.f32 %v147, %v148
  %v150 = vsel %vm96, %v57, 0.0
  %v151 = vadd.f32 %v149, %v150
  %v152 = vsel %vm96, %v58, 0.0
  %v153 = vadd.f32 %v151, %v152
  %v154 = vsel %vm96, %v59, 0.0
  %v155 = vadd.f32 %v153, %v154
  %v156 = vsel %vm96, %v60, 0.0
  %v157 = vadd.f32 %v155, %v156
  %v158 = vsel %vm96, %v61, 0.0
  %v159 = vadd.f32 %v157, %v158
  %v160 = vsel %vm96, %v62, 0.0
  %v161 = vadd.f32 %v159, %v160
  %v162 = vsel %vm96, %v63, 0.0
  %v163 = vadd.f32 %v161, %v162
  %v164 = vsel %vm96, %v64, 0.0
  %v165 = vadd.f32 %v163, %v164
  %v166 = vsel %vm96, %v65, 0.0
  %v167 = vadd.f32 %v165, %v166
  %v168 = vsel %vm96, %v66, 0.0
  %v169 = vadd.f32 %v167, %v168
  %v170 = vsel %vm96, %v67, 0.0
  %v171 = vadd.f32 %v169, %v170
  %v172 = vsel %vm96, %v68, 0.0
  %v173 = vadd.f32 %v171, %v172
  %v174 = vsel %vm96, %v69, 0.0
  %v175 = vadd.f32 %v173, %v174
  %v176 = vsel %vm96, %v70, 0.0
  %v177 = vadd.f32 %v175, %v176
  %v178 = vsel %vm96, %v71, 0.0
  %v179 = vadd.f32 %v177, %v178
  %v180 = vsel %vm96, %v72, 0.0
  %v181 = vadd.f32 %v179, %v180
  %v182 = vsel %vm96, %v73, 0.0
  %v183 = vadd.f32 %v181, %v182
  %v184 = vsel %vm96, %v74, 0.0
  %v185 = vadd.f32 %v183, %v184
  %v186 = vsel %vm96, %v75, 0.0
  %v187 = vadd.f32 %v185, %v186
  %v188 = vsel %vm96, %v76, 0.0
  %v189 = vadd.f32 %v187, %v188
  %v190 = vsel %vm96, %v77, 0.0
  %v191 = vadd.f32 %v189, %v190
  %v192 = vsel %vm96, %v78, 0.0
  %v193 = vadd.f32 %v191, %v192
  %v194 = vsel %vm96, %v79, 0.0
  %v195 = vadd.f32 %v193, %v194
  %v196 = vsel %vm96, %v80, 0.0
  %v197 = vadd.f32 %v195, %v196
  %v198 = vsel %vm96, %v81, 0.0
  %v199 = vadd.f32 %v197, %v198
  %v200 = vsel %vm96, %v82, 0.0
  %v201 = vadd.f32 %v199, %v200
  %v202 = vsel %vm96, %v83, 0.0
  %v203 = vadd.f32 %v201, %v202
  %v204 = vsel %vm96, %v84, 0.0
  %v205 = vadd.f32 %v203, %v204
  %v206 = vsel %vm96, %v85, 0.0
  %v207 = vadd.f32 %v205, %v206
  %v208 = vsel %vm96, %v86, 0.0
  %v209 = vadd.f32 %v207, %v208
  %v210 = vsel %vm96, %v87, 0.0
  %v211 = vadd.f32 %v209, %v210
  %v212 = vsel %vm96, %v88, 0.0
  %v213 = vadd.f32 %v211, %v212
  %v214 = vsel %vm96, %v89, 0.0
  %v215 = vadd.f32 %v213, %v214
  %v216 = vsel %vm96, %v90, 0.0
  %v217 = vadd.f32 %v215, %v216
  %v218 = vsel %vm96, %v91, 0.0
  %v219 = vadd.f32 %v217, %v218
  %v220 = vsel %vm96, %v92, 0.0
  %v221 = vadd.f32 %v219, %v220
  %v222 = vsel %vm96, %v93, 0.0
  %v223 = vadd.f32 %v221, %v222
  %v224 = vrot.slane %v223, 4
  %v225 = vadd.f32 %v223, %v224
  %v226 = vrot.slane %v225, 2
  %v227 = vadd.f32 %v225, %v226
  %v228 = vrot.slane %v227, 1
  %v229 = vadd.f32 %v227, %v228
  %v230 = vmul.f32 %v229, 0.001953125
  %v231 = vsub.f32 %v30, %v230
  %v232 = vsub.f32 %v31, %v230
  %v233 = vsub.f32 %v32, %v230
  %v234 = vsub.f32 %v33, %v230
  %v235 = vsub.f32 %v34, %v230
  %v236 = vsub.f32 %v35, %v230
  %v237 = vsub.f32 %v36, %v230
  %v238 = vsub.f32 %v37, %v230
  %v239 = vsub.f32 %v38, %v230
  %v240 = vsub.f32 %v39, %v230
  %v241 = vsub.f32 %v40, %v230
  %v242 = vsub.f32 %v41, %v230
  %v243 = vsub.f32 %v42, %v230
  %v244 = vsub.f32 %v43, %v230
  %v245 = vsub.f32 %v44, %v230
  %v246 = vsub.f32 %v45, %v230
  %v247 = vsub.f32 %v46, %v230
  %v248 = vsub.f32 %v47, %v230
  %v249 = vsub.f32 %v48, %v230
  %v250 = vsub.f32 %v49, %v230
  %v251 = vsub.f32 %v50, %v230
  %v252 = vsub.f32 %v51, %v230
  %v253 = vsub.f32 %v52, %v230
  %v254 = vsub.f32 %v53, %v230
  %v255 = vsub.f32 %v54, %v230
  %v256 = vsub.f32 %v55, %v230
  %v257 = vsub.f32 %v56, %v230
  %v258 = vsub.f32 %v57, %v230
  %v259 = vsub.f32 %v58, %v230
  %v260 = vsub.f32 %v59, %v230
  %v261 = vsub.f32 %v60, %v230
  %v262 = vsub.f32 %v61, %v230
  %v263 = vsub.f32 %v62, %v230
  %v264 = vsub.f32 %v63, %v230
  %v265 = vsub.f32 %v64, %v230
  %v266 = vsub.f32 %v65, %v230
  %v267 = vsub.f32 %v66, %v230
  %v268 = vsub.f32 %v67, %v230
  %v269 = vsub.f32 %v68, %v230
  %v270 = vsub.f32 %v69, %v230
  %v271 = vsub.f32 %v70, %v230
  %v272 = vsub.f32 %v71, %v230
  %v273 = vsub.f32 %v72, %v230
  %v274 = vsub.f32 %v73, %v230
  %v275 = vsub.f32 %v74, %v230
  %v276 = vsub.f32 %v75, %v230
  %v277 = vsub.f32 %v76, %v230
  %v278 = vsub.f32 %v77, %v230
  %v279 = vsub.f32 %v78, %v230
  %v280 = vsub.f32 %v79, %v230
  %v281 = vsub.f32 %v80, %v230
  %v282 = vsub.f32 %v81, %v230
  %v283 = vsub.f32 %v82, %v230
  %v284 = vsub.f32 %v83, %v230
  %v285 = vsub.f32 %v84, %v230
  %v286 = vsub.f32 %v85, %v230
  %v287 = vsub.f32 %v86, %v230
  %v288 = vsub.f32 %v87, %v230
  %v289 = vsub.f32 %v88, %v230
  %v290 = vsub.f32 %v89, %v230
  %v291 = vsub.f32 %v90, %v230
  %v292 = vsub.f32 %v91, %v230
  %v293 = vsub.f32 %v92, %v230
  %v294 = vsub.f32 %v93, %v230
  %v295 = vmul.f32 %v231, %v231
  %v296 = vmul.f32 %v232, %v232
  %v297 = vmul.f32 %v233, %v233
  %v298 = vmul.f32 %v234, %v234
  %v299 = vmul.f32 %v235, %v235
  %v300 = vmul.f32 %v236, %v236
  %v301 = vmul.f32 %v237, %v237
  %v302 = vmul.f32 %v238, %v238
  %v303 = vmul.f32 %v239, %v239
  %v304 = vmul.f32 %v240, %v240
  %v305 = vmul.f32 %v241, %v241
  %v306 = vmul.f32 %v242, %v242
  %v307 = vmul.f32 %v243, %v243
  %v308 = vmul.f32 %v244, %v244
  %v309 = vmul.f32 %v245, %v245
  %v310 = vmul.f32 %v246, %v246
  %v311 = vmul.f32 %v247, %v247
  %v312 = vmul.f32 %v248, %v248
  %v313 = vmul.f32 %v249, %v249
  %v314 = vmul.f32 %v250, %v250
  %v315 = vmul.f32 %v251, %v251
  %v316 = vmul.f32 %v252, %v252
  %v317 = vmul.f32 %v253, %v253
  %v318 = vmul.f32 %v254, %v254
  %v319 = vmul.f32 %v255, %v255
  %v320 = vmul.f32 %v256, %v256
  %v321 = vmul.f32 %v257, %v257
  %v322 = vmul.f32 %v258, %v258
  %v323 = vmul.f32 %v259, %v259
  %v324 = vmul.f32 %v260, %v260
  %v325 = vmul.f32 %v261, %v261
  %v326 = vmul.f32 %v262, %v262
  %v327 = vmul.f32 %v263, %v263
  %v328 = vmul.f32 %v264, %v264
  %v329 = vmul.f32 %v265, %v265
  %v330 = vmul.f32 %v266, %v266
  %v331 = vmul.f32 %v267, %v267
  %v332 = vmul.f32 %v268, %v268
  %v333 = vmul.f32 %v269, %v269
  %v334 = vmul.f32 %v270, %v270
  %v335 = vmul.f32 %v271, %v271
  %v336 = vmul.f32 %v272, %v272
  %v337 = vmul.f32 %v273, %v273
  %v338 = vmul.f32 %v274, %v274
  %v339 = vmul.f32 %v275, %v275
  %v340 = vmul.f32 %v276, %v276
  %v341 = vmul.f32 %v277, %v277
  %v342 = vmul.f32 %v278, %v278
  %v343 = vmul.f32 %v279, %v279
  %v344 = vmul.f32 %v280, %v280
  %v345 = vmul.f32 %v281, %v281
  %v346 = vmul.f32 %v282, %v282
  %v347 = vmul.f32 %v283, %v283
  %v348 = vmul.f32 %v284, %v284
  %v349 = vmul.f32 %v285, %v285
  %v350 = vmul.f32 %v286, %v286
  %v351 = vmul.f32 %v287, %v287
  %v352 = vmul.f32 %v288, %v288
  %v353 = vmul.f32 %v289, %v289
  %v354 = vmul.f32 %v290, %v290
  %v355 = vmul.f32 %v291, %v291
  %v356 = vmul.f32 %v292, %v292
  %v357 = vmul.f32 %v293, %v293
  %v358 = vmul.f32 %v294, %v294
  %v359 = vsel %vm96, %v295, 0.0
  %v360 = vsel %vm96, %v296, 0.0
  %v361 = vadd.f32 %v359, %v360
  %v362 = vsel %vm96, %v297, 0.0
  %v363 = vadd.f32 %v361, %v362
  %v364 = vsel %vm96, %v298, 0.0
  %v365 = vadd.f32 %v363, %v364
  %v366 = vsel %vm96, %v299, 0.0
  %v367 = vadd.f32 %v365, %v366
  %v368 = vsel %vm96, %v300, 0.0
  %v369 = vadd.f32 %v367, %v368
  %v370 = vsel %vm96, %v301, 0.0
  %v371 = vadd.f32 %v369, %v370
  %v372 = vsel %vm96, %v302, 0.0
  %v373 = vadd.f32 %v371, %v372
  %v374 = vsel %vm96, %v303, 0.0
  %v375 = vadd.f32 %v373, %v374
  %v376 = vsel %vm96, %v304, 0.0
  %v377 = vadd.f32 %v375, %v376
  %v378 = vsel %vm96, %v305, 0.0
  %v379 = vadd.f32 %v377, %v378
  %v380 = vsel %vm96, %v306, 0.0
  %v381 = vadd.f32 %v379, %v380
  %v382 = vsel %vm96, %v307, 0.0
  %v383 = vadd.f32 %v381, %v382
  %v384 = vsel %vm96, %v308, 0.0
  %v385 = vadd.f32 %v383, %v384
  %v386 = vsel %vm96, %v309, 0.0
  %v387 = vadd.f32 %v385, %v386
  %v388 = vsel %vm96, %v310, 0.0
  %v389 = vadd.f32 %v387, %v388
  %v390 = vsel %vm96, %v311, 0.0
  %v391 = vadd.f32 %v389, %v390
  %v392 = vsel %vm96, %v312, 0.0
  %v393 = vadd.f32 %v391, %v392
  %v394 = vsel %vm96, %v313, 0.0
  %v395 = vadd.f32 %v393, %v394
  %v396 = vsel %vm96, %v314, 0.0
  %v397 = vadd.f32 %v395, %v396
  %v398 = vsel %vm96, %v315, 0.0
  %v399 = vadd.f32 %v397, %v398
  %v400 = vsel %vm96, %v316, 0.0
  %v401 = vadd.f32 %v399, %v400
  %v402 = vsel %vm96, %v317, 0.0
  %v403 = vadd.f32 %v401, %v402
  %v404 = vsel %vm96, %v318, 0.0
  %v405 = vadd.f32 %v403, %v404
  %v406 = vsel %vm96, %v319, 0.0
  %v407 = vadd.f32 %v405, %v406
  %v408 = vsel %vm96, %v320, 0.0
  %v409 = vadd.f32 %v407, %v408
  %v410 = vsel %vm96, %v321, 0.0
  %v411 = vadd.f32 %v409, %v410
  %v412 = vsel %vm96, %v322, 0.0
  %v413 = vadd.f32 %v411, %v412
  %v414 = vsel %vm96, %v323, 0.0
  %v415 = vadd.f32 %v413, %v414
  %v416 = vsel %vm96, %v324, 0.0
  %v417 = vadd.f32 %v415, %v416
  %v418 = vsel %vm96, %v325, 0.0
  %v419 = vadd.f32 %v417, %v418
  %v420 = vsel %vm96, %v326, 0.0
  %v421 = vadd.f32 %v419, %v420
  %v422 = vsel %vm96, %v327, 0.0
  %v423 = vadd.f32 %v421, %v422
  %v424 = vsel %vm96, %v328, 0.0
  %v425 = vadd.f32 %v423, %v424
  %v426 = vsel %vm96, %v329, 0.0
  %v427 = vadd.f32 %v425, %v426
  %v428 = vsel %vm96, %v330, 0.0
  %v429 = vadd.f32 %v427, %v428
  %v430 = vsel %vm96, %v331, 0.0
  %v431 = vadd.f32 %v429, %v430
  %v432 = vsel %vm96, %v332, 0.0
  %v433 = vadd.f32 %v431, %v432
  %v434 = vsel %vm96, %v333, 0.0
  %v435 = vadd.f32 %v433, %v434
  %v436 = vsel %vm96, %v334, 0.0
  %v437 = vadd.f32 %v435, %v436
  %v438 = vsel %vm96, %v335, 0.0
  %v439 = vadd.f32 %v437, %v438
  %v440 = vsel %vm96, %v336, 0.0
  %v441 = vadd.f32 %v439, %v440
  %v442 = vsel %vm96, %v337, 0.0
  %v443 = vadd.f32 %v441, %v442
  %v444 = vsel %vm96, %v338, 0.0
  %v445 = vadd.f32 %v443, %v444
  %v446 = vsel %vm96, %v339, 0.0
  %v447 = vadd.f32 %v445, %v446
  %v448 = vsel %vm96, %v340, 0.0
  %v449 = vadd.f32 %v447, %v448
  %v450 = vsel %vm96, %v341, 0.0
  %v451 = vadd.f32 %v449, %v450
  %v452 = vsel %vm96, %v342, 0.0
  %v453 = vadd.f32 %v451, %v452
  %v454 = vsel %vm96, %v343, 0.0
  %v455 = vadd.f32 %v453, %v454
  %v456 = vsel %vm96, %v344, 0.0
  %v457 = vadd.f32 %v455, %v456
  %v458 = vsel %vm96, %v345, 0.0
  %v459 = vadd.f32 %v457, %v458
  %v460 = vsel %vm96, %v346, 0.0
  %v461 = vadd.f32 %v459, %v460
  %v462 = vsel %vm96, %v347, 0.0
  %v463 = vadd.f32 %v461, %v462
  %v464 = vsel %vm96, %v348, 0.0
  %v465 = vadd.f32 %v463, %v464
  %v466 = vsel %vm96, %v349, 0.0
  %v467 = vadd.f32 %v465, %v466
  %v468 = vsel %vm96, %v350, 0.0
  %v469 = vadd.f32 %v467, %v468
  %v470 = vsel %vm96, %v351, 0.0
  %v471 = vadd.f32 %v469, %v470
  %v472 = vsel %vm96, %v352, 0.0
  %v473 = vadd.f32 %v471, %v472
  %v474 = vsel %vm96, %v353, 0.0
  %v475 = vadd.f32 %v473, %v474
  %v476 = vsel %vm96, %v354, 0.0
  %v477 = vadd.f32 %v475, %v476
  %v478 = vsel %vm96, %v355, 0.0
  %v479 = vadd.f32 %v477, %v478
  %v480 = vsel %vm96, %v356, 0.0
  %v481 = vadd.f32 %v479, %v480
  %v482 = vsel %vm96, %v357, 0.0
  %v483 = vadd.f32 %v481, %v482
  %v484 = vsel %vm96, %v358, 0.0
  %v485 = vadd.f32 %v483, %v484
  %v486 = vrot.slane %v485, 4
  %v487 = vadd.f32 %v485, %v486
  %v488 = vrot.slane %v487, 2
  %v489 = vadd.f32 %v487, %v488
  %v490 = vrot.slane %v489, 1
  %v491 = vadd.f32 %v489, %v490
  %v492 = vmul.f32 %v491, 0.001953125
  %v493 = vadd.f32 %v492, 1e-05
  %v494 = vrsqrt.pop %v493
  %v495 = vmul.f32 %v231, %v494
  %v496 = vmul.f32 %v232, %v494
  %v497 = vmul.f32 %v233, %v494
  %v498 = vmul.f32 %v234, %v494
  %v499 = vmul.f32 %v235, %v494
  %v500 = vmul.f32 %v236, %v494
  %v501 = vmul.f32 %v237, %v494
  %v502 = vmul.f32 %v238, %v494
  %v503 = vmul.f32 %v239, %v494
  %v504 = vmul.f32 %v240, %v494
  %v505 = vmul.f32 %v241, %v494
  %v506 = vmul.f32 %v242, %v494
  %v507 = vmul.f32 %v243, %v494
  %v508 = vmul.f32 %v244, %v494
  %v509 = vmul.f32 %v245, %v494
  %v510 = vmul.f32 %v246, %v494
  %v511 = vmul.f32 %v247, %v494
  %v512 = vmul.f32 %v248, %v494
  %v513 = vmul.f32 %v249, %v494
  %v514 = vmul.f32 %v250, %v494
  %v515 = vmul.f32 %v251, %v494
  %v516 = vmul.f32 %v252, %v494
  %v517 = vmul.f32 %v253, %v494
  %v518 = vmul.f32 %v254, %v494
  %v519 = vmul.f32 %v255, %v494
  %v520 = vmul.f32 %v256, %v494
  %v521 = vmul.f32 %v257, %v494
  %v522 = vmul.f32 %v258, %v494
  %v523 = vmul.f32 %v259, %v494
  %v524 = vmul.f32 %v260, %v494
  %v525 = vmul.f32 %v261, %v494
  %v526 = vmul.f32 %v262, %v494
  %v527 = vmul.f32 %v263, %v494
  %v528 = vmul.f32 %v264, %v494
  %v529 = vmul.f32 %v265, %v494
  %v530 = vmul.f32 %v266, %v494
  %v531 = vmul.f32 %v267, %v494
  %v532 = vmul.f32 %v268, %v494
  %v533 = vmul.f32 %v269, %v494
  %v534 = vmul.f32 %v270, %v494
  %v535 = vmul.f32 %v271, %v494
  %v536 = vmul.f32 %v272, %v494
  %v537 = vmul.f32 %v273, %v494
  %v538 = vmul.f32 %v274, %v494
  %v539 = vmul.f32 %v275, %v494
  %v540 = vmul.f32 %v276, %v494
  %v541 = vmul.f32 %v277, %v494
  %v542 = vmul.f32 %v278, %v494
  %v543 = vmul.f32 %v279, %v494
  %v544 = vmul.f32 %v280, %v494
  %v545 = vmul.f32 %v281, %v494
  %v546 = vmul.f32 %v282, %v494
  %v547 = vmul.f32 %v283, %v494
  %v548 = vmul.f32 %v284, %v494
  %v549 = vmul.f32 %v285, %v494
  %v550 = vmul.f32 %v286, %v494
  %v551 = vmul.f32 %v287, %v494
  %v552 = vmul.f32 %v288, %v494
  %v553 = vmul.f32 %v289, %v494
  %v554 = vmul.f32 %v290, %v494
  %v555 = vmul.f32 %v291, %v494
  %v556 = vmul.f32 %v292, %v494
  %v557 = vmul.f32 %v293, %v494
  %v558 = vmul.f32 %v294, %v494
  %v560 = vlaneseq
  %v561 = vshrl.u32 %v560, 7
  %v562 = vsub.s32 0, %v561
  %v563 = vrot.slane %v94, %v562
  %v565 = vmul.f32 %v495, %v563
  %v566 = vmul.f32 %v496, %v563
  %v567 = vmul.f32 %v497, %v563
  %v568 = vmul.f32 %v498, %v563
  %v569 = vmul.f32 %v499, %v563
  %v570 = vmul.f32 %v500, %v563
  %v571 = vmul.f32 %v501, %v563
  %v572 = vmul.f32 %v502, %v563
  %v573 = vmul.f32 %v503, %v563
  %v574 = vmul.f32 %v504, %v563
  %v575 = vmul.f32 %v505, %v563
  %v576 = vmul.f32 %v506, %v563
  %v577 = vmul.f32 %v507, %v563
  %v578 = vmul.f32 %v508, %v563
  %v579 = vmul.f32 %v509, %v563
  %v580 = vmul.f32 %v510, %v563
  %v581 = vmul.f32 %v511, %v563
  %v582 = vmul.f32 %v512, %v563
  %v583 = vmul.f32 %v513, %v563
  %v584 = vmul.f32 %v514, %v563
  %v585 = vmul.f32 %v515, %v563
  %v586 = vmul.f32 %v516, %v563
  %v587 = vmul.f32 %v517, %v563
  %v588 = vmul.f32 %v518, %v563
  %v589 = vmul.f32 %v519, %v563
  %v590 = vmul.f32 %v520, %v563
  %v591 = vmul.f32 %v521, %v563
  %v592 = vmul.f32 %v522, %v563
  %v593 = vmul.f32 %v523, %v563
  %v594 = vmul.f32 %v524, %v563
  %v595 = vmul.f32 %v525, %v563
  %v596 = vmul.f32 %v526, %v563
  %v597 = vmul.f32 %v527, %v563
  %v598 = vmul.f32 %v528, %v563
  %v599 = vmul.f32 %v529, %v563
  %v600 = vmul.f32 %v530, %v563
  %v601 = vmul.f32 %v531, %v563
  %v602 = vmul.f32 %v532, %v563
  %v603 = vmul.f32 %v533, %v563
  %v604 = vmul.f32 %v534, %v563
  %v605 = vmul.f32 %v535, %v563
  %v606 = vmul.f32 %v536, %v563
  %v607 = vmul.f32 %v537, %v563
  %v608 = vmul.f32 %v538, %v563
  %v609 = vmul.f32 %v539, %v563
  %v610 = vmul.f32 %v540, %v563
  %v611 = vmul.f32 %v541, %v563
  %v612 = vmul.f32 %v542, %v563
  %v613 = vmul.f32 %v543, %v563
  %v614 = vmul.f32 %v544, %v563
  %v615 = vmul.f32 %v545, %v563
  %v616 = vmul.f32 %v546, %v563
  %v617 = vmul.f32 %v547, %v563
  %v618 = vmul.f32 %v548, %v563
  %v619 = vmul.f32 %v549, %v563
  %v620 = vmul.f32 %v550, %v563
  %v621 = vmul.f32 %v551, %v563
  %v622 = vmul.f32 %v552, %v563
  %v623 = vmul.f32 %v553, %v563
  %v624 = vmul.f32 %v554, %v563
  %v625 = vmul.f32 %v555, %v563
  %v626 = vmul.f32 %v556, %v563
  %v627 = vmul.f32 %v557, %v563
  %v628 = vmul.f32 %v558, %v563
  %v630 = vlaneseq
  %v631 = vshrl.u32 %v630, 7
  %v632 = vsub.s32 0, %v631
  %v633 = vrot.slane %v95, %v632
  %v635 = vadd.f32 %v565, %v633
  %v636 = vadd.f32 %v566, %v633
  %v637 = vadd.f32 %v567, %v633
  %v638 = vadd.f32 %v568, %v633
  %v639 = vadd.f32 %v569, %v633
  %v640 = vadd.f32 %v570, %v633
  %v641 = vadd.f32 %v571, %v633
  %v642 = vadd.f32 %v572, %v633
  %v643 = vadd.f32 %v573, %v633
  %v644 = vadd.f32 %v574, %v633
  %v645 = vadd.f32 %v575, %v633
  %v646 = vadd.f32 %v576, %v633
  %v647 = vadd.f32 %v577, %v633
  %v648 = vadd.f32 %v578, %v633
  %v649 = vadd.f32 %v579, %v633
  %v650 = vadd.f32 %v580, %v633
  %v651 = vadd.f32 %v581, %v633
  %v652 = vadd.f32 %v582, %v633
  %v653 = vadd.f32 %v583, %v633
  %v654 = vadd.f32 %v584, %v633
  %v655 = vadd.f32 %v585, %v633
  %v656 = vadd.f32 %v586, %v633
  %v657 = vadd.f32 %v587, %v633
  %v658 = vadd.f32 %v588, %v633
  %v659 = vadd.f32 %v589, %v633
  %v660 = vadd.f32 %v590, %v633
  %v661 = vadd.f32 %v591, %v633
  %v662 = vadd.f32 %v592, %v633
  %v663 = vadd.f32 %v593, %v633
  %v664 = vadd.f32 %v594, %v633
  %v665 = vadd.f32 %v595, %v633
  %v666 = vadd.f32 %v596, %v633
  %v667 = vadd.f32 %v597, %v633
  %v668 = vadd.f32 %v598, %v633
  %v669 = vadd.f32 %v599, %v633
  %v670 = vadd.f32 %v600, %v633
  %v671 = vadd.f32 %v601, %v633
  %v672 = vadd.f32 %v602, %v633
  %v673 = vadd.f32 %v603, %v633
  %v674 = vadd.f32 %v604, %v633
  %v675 = vadd.f32 %v605, %v633
  %v676 = vadd.f32 %v606, %v633
  %v677 = vadd.f32 %v607, %v633
  %v678 = vadd.f32 %v608, %v633
  %v679 = vadd.f32 %v609, %v633
  %v680 = vadd.f32 %v610, %v633
  %v681 = vadd.f32 %v611, %v633
  %v682 = vadd.f32 %v612, %v633
  %v683 = vadd.f32 %v613, %v633
  %v684 = vadd.f32 %v614, %v633
  %v685 = vadd.f32 %v615, %v633
  %v686 = vadd.f32 %v616, %v633
  %v687 = vadd.f32 %v617, %v633
  %v688 = vadd.f32 %v618, %v633
  %v689 = vadd.f32 %v619, %v633
  %v690 = vadd.f32 %v620, %v633
  %v691 = vadd.f32 %v621, %v633
  %v692 = vadd.f32 %v622, %v633
  %v693 = vadd.f32 %v623, %v633
  %v694 = vadd.f32 %v624, %v633
  %v695 = vadd.f32 %v625, %v633
  %v696 = vadd.f32 %v626, %v633
  %v697 = vadd.f32 %v627, %v633
  %v698 = vadd.f32 %v628, %v633
  %vm699 = vcmp.ge.f32.partialorder %v635, 0.0
  %vm700 = vcmp.ge.f32.partialorder %v636, 0.0
  %vm701 = vcmp.ge.f32.partialorder %v637, 0.0
  %vm702 = vcmp.ge.f32.partialorder %v638, 0.0
  %vm703 = vcmp.ge.f32.partialorder %v639, 0.0
  %vm704 = vcmp.ge.f32.partialorder %v640, 0.0
  %vm705 = vcmp.ge.f32.partialorder %v641, 0.0
  %vm706 = vcmp.ge.f32.partialorder %v642, 0.0
  %vm707 = vcmp.ge.f32.partialorder %v643, 0.0
  %vm708 = vcmp.ge.f32.partialorder %v644, 0.0
  %vm709 = vcmp.ge.f32.partialorder %v645, 0.0
  %vm710 = vcmp.ge.f32.partialorder %v646, 0.0
  %vm711 = vcmp.ge.f32.partialorder %v647, 0.0
  %vm712 = vcmp.ge.f32.partialorder %v648, 0.0
  %vm713 = vcmp.ge.f32.partialorder %v649, 0.0
  %vm714 = vcmp.ge.f32.partialorder %v650, 0.0
  %vm715 = vcmp.ge.f32.partialorder %v651, 0.0
  %vm716 = vcmp.ge.f32.partialorder %v652, 0.0
  %vm717 = vcmp.ge.f32.partialorder %v653, 0.0
  %vm718 = vcmp.ge.f32.partialorder %v654, 0.0
  %vm719 = vcmp.ge.f32.partialorder %v655, 0.0
  %vm720 = vcmp.ge.f32.partialorder %v656, 0.0
  %vm721 = vcmp.ge.f32.partialorder %v657, 0.0
  %vm722 = vcmp.ge.f32.partialorder %v658, 0.0
  %vm723 = vcmp.ge.f32.partialorder %v659, 0.0
  %vm724 = vcmp.ge.f32.partialorder %v660, 0.0
  %vm725 = vcmp.ge.f32.partialorder %v661, 0.0
  %vm726 = vcmp.ge.f32.partialorder %v662, 0.0
  %vm727 = vcmp.ge.f32.partialorder %v663, 0.0
  %vm728 = vcmp.ge.f32.partialorder %v664, 0.0
  %vm729 = vcmp.ge.f32.partialorder %v665, 0.0
  %vm730 = vcmp.ge.f32.partialorder %v666, 0.0
  %vm731 = vcmp.ge.f32.partialorder %v667, 0.0
  %vm732 = vcmp.ge.f32.partialorder %v668, 0.0
  %vm733 = vcmp.ge.f32.partialorder %v669, 0.0
  %vm734 = vcmp.ge.f32.partialorder %v670, 0.0
  %vm735 = vcmp.ge.f32.partialorder %v671, 0.0
  %vm736 = vcmp.ge.f32.partialorder %v672, 0.0
  %vm737 = vcmp.ge.f32.partialorder %v673, 0.0
  %vm738 = vcmp.ge.f32.partialorder %v674, 0.0
  %vm739 = vcmp.ge.f32.partialorder %v675, 0.0
  %vm740 = vcmp.ge.f32.partialorder %v676, 0.0
  %vm741 = vcmp.ge.f32.partialorder %v677, 0.0
  %vm742 = vcmp.ge.f32.partialorder %v678, 0.0
  %vm743 = vcmp.ge.f32.partialorder %v679, 0.0
  %vm744 = vcmp.ge.f32.partialorder %v680, 0.0
  %vm745 = vcmp.ge.f32.partialorder %v681, 0.0
  %vm746 = vcmp.ge.f32.partialorder %v682, 0.0
  %vm747 = vcmp.ge.f32.partialorder %v683, 0.0
  %vm748 = vcmp.ge.f32.partialorder %v684, 0.0
  %vm749 = vcmp.ge.f32.partialorder %v685, 0.0
  %vm750 = vcmp.ge.f32.partialorder %v686, 0.0
  %vm751 = vcmp.ge.f32.partialorder %v687, 0.0
  %vm752 = vcmp.ge.f32.partialorder %v688, 0.0
  %vm753 = vcmp.ge.f32.partialorder %v689, 0.0
  %vm754 = vcmp.ge.f32.partialorder %v690, 0.0
  %vm755 = vcmp.ge.f32.partialorder %v691, 0.0
  %vm756 = vcmp.ge.f32.partialorder %v692, 0.0
  %vm757 = vcmp.ge.f32.partialorder %v693, 0.0
  %vm758 = vcmp.ge.f32.partialorder %v694, 0.0
  %vm759 = vcmp.ge.f32.partialorder %v695, 0.0
  %vm760 = vcmp.ge.f32.partialorder %v696, 0.0
  %vm761 = vcmp.ge.f32.partialorder %v697, 0.0
  %vm762 = vcmp.ge.f32.partialorder %v698, 0.0
  %v763 = vmul.f32 %v635, 0.1
  %v764 = vmul.f32 %v636, 0.1
  %v765 = vmul.f32 %v637, 0.1
  %v766 = vmul.f32 %v638, 0.1
  %v767 = vmul.f32 %v639, 0.1
  %v768 = vmul.f32 %v640, 0.1
  %v769 = vmul.f32 %v641, 0.1
  %v770 = vmul.f32 %v642, 0.1
  %v771 = vmul.f32 %v643, 0.1
  %v772 = vmul.f32 %v644, 0.1
  %v773 = vmul.f32 %v645, 0.1
  %v774 = vmul.f32 %v646, 0.1
  %v775 = vmul.f32 %v647, 0.1
  %v776 = vmul.f32 %v648, 0.1
  %v777 = vmul.f32 %v649, 0.1
  %v778 = vmul.f32 %v650, 0.1
  %v779 = vmul.f32 %v651, 0.1
  %v780 = vmul.f32 %v652, 0.1
  %v781 = vmul.f32 %v653, 0.1
  %v782 = vmul.f32 %v654, 0.1
  %v783 = vmul.f32 %v655, 0.1
  %v784 = vmul.f32 %v656, 0.1
  %v785 = vmul.f32 %v657, 0.1
  %v786 = vmul.f32 %v658, 0.1
  %v787 = vmul.f32 %v659, 0.1
  %v788 = vmul.f32 %v660, 0.1
  %v789 = vmul.f32 %v661, 0.1
  %v790 = vmul.f32 %v662, 0.1
  %v791 = vmul.f32 %v663, 0.1
  %v792 = vmul.f32 %v664, 0.1
  %v793 = vmul.f32 %v665, 0.1
  %v794 = vmul.f32 %v666, 0.1
  %v795 = vmul.f32 %v667, 0.1
  %v796 = vmul.f32 %v668, 0.1
  %v797 = vmul.f32 %v669, 0.1
  %v798 = vmul.f32 %v670, 0.1
  %v799 = vmul.f32 %v671, 0.1
  %v800 = vmul.f32 %v672, 0.1
  %v801 = vmul.f32 %v673, 0.1
  %v802 = vmul.f32 %v674, 0.1
  %v803 = vmul.f32 %v675, 0.1
  %v804 = vmul.f32 %v676, 0.1
  %v805 = vmul.f32 %v677, 0.1
  %v806 = vmul.f32 %v678, 0.1
  %v807 = vmul.f32 %v679, 0.1
  %v808 = vmul.f32 %v680, 0.1
  %v809 = vmul.f32 %v681, 0.1
  %v810 = vmul.f32 %v682, 0.1
  %v811 = vmul.f32 %v683, 0.1
  %v812 = vmul.f32 %v684, 0.1
  %v813 = vmul.f32 %v685, 0.1
  %v814 = vmul.f32 %v686, 0.1
  %v815 = vmul.f32 %v687, 0.1
  %v816 = vmul.f32 %v688, 0.1
  %v817 = vmul.f32 %v689, 0.1
  %v818 = vmul.f32 %v690, 0.1
  %v819 = vmul.f32 %v691, 0.1
  %v820 = vmul.f32 %v692, 0.1
  %v821 = vmul.f32 %v693, 0.1
  %v822 = vmul.f32 %v694, 0.1
  %v823 = vmul.f32 %v695, 0.1
  %v824 = vmul.f32 %v696, 0.1
  %v825 = vmul.f32 %v697, 0.1
  %v826 = vmul.f32 %v698, 0.1
  %v827 = vsel %vm699, %v635, %v763
  %v828 = vsel %vm700, %v636, %v764
  %v829 = vsel %vm701, %v637, %v765
  %v830 = vsel %vm702, %v638, %v766
  %v831 = vsel %vm703, %v639, %v767
  %v832 = vsel %vm704, %v640, %v768
  %v833 = vsel %vm705, %v641, %v769
  %v834 = vsel %vm706, %v642, %v770
  %v835 = vsel %vm707, %v643, %v771
  %v836 = vsel %vm708, %v644, %v772
  %v837 = vsel %vm709, %v645, %v773
  %v838 = vsel %vm710, %v646, %v774
  %v839 = vsel %vm711, %v647, %v775
  %v840 = vsel %vm712, %v648, %v776
  %v841 = vsel %vm713, %v649, %v777
  %v842 = vsel %vm714, %v650, %v778
  %v843 = vsel %vm715, %v651, %v779
  %v844 = vsel %vm716, %v652, %v780
  %v845 = vsel %vm717, %v653, %v781
  %v846 = vsel %vm718, %v654, %v782
  %v847 = vsel %vm719, %v655, %v783
  %v848 = vsel %vm720, %v656, %v784
  %v849 = vsel %vm721, %v657, %v785
  %v850 = vsel %vm722, %v658, %v786
  %v851 = vsel %vm723, %v659, %v787
  %v852 = vsel %vm724, %v660, %v788
  %v853 = vsel %vm725, %v661, %v789
  %v854 = vsel %vm726, %v662, %v790
  %v855 = vsel %vm727, %v663, %v791
  %v856 = vsel %vm728, %v664, %v792
  %v857 = vsel %vm729, %v665, %v793
  %v858 = vsel %vm730, %v666, %v794
  %v859 = vsel %vm731, %v667, %v795
  %v860 = vsel %vm732, %v668, %v796
  %v861 = vsel %vm733, %v669, %v797
  %v862 = vsel %vm734, %v670, %v798
  %v863 = vsel %vm735, %v671, %v799
  %v864 = vsel %vm736, %v672, %v800
  %v865 = vsel %vm737, %v673, %v801
  %v866 = vsel %vm738, %v674, %v802
  %v867 = vsel %vm739, %v675, %v803
  %v868 = vsel %vm740, %v676, %v804
  %v869 = vsel %vm741, %v677, %v805
  %v870 = vsel %vm742, %v678, %v806
  %v871 = vsel %vm743, %v679, %v807
  %v872 = vsel %vm744, %v680, %v808
  %v873 = vsel %vm745, %v681, %v809
  %v874 = vsel %vm746, %v682, %v810
  %v875 = vsel %vm747, %v683, %v811
  %v876 = vsel %vm748, %v684, %v812
  %v877 = vsel %vm749, %v685, %v813
  %v878 = vsel %vm750, %v686, %v814
  %v879 = vsel %vm751, %v687, %v815
  %v880 = vsel %vm752, %v688, %v816
  %v881 = vsel %vm753, %v689, %v817
  %v882 = vsel %vm754, %v690, %v818
  %v883 = vsel %vm755, %v691, %v819
  %v884 = vsel %vm756, %v692, %v820
  %v885 = vsel %vm757, %v693, %v821
  %v886 = vsel %vm758, %v694, %v822
  %v887 = vsel %vm759, %v695, %v823
  %v888 = vsel %vm760, %v696, %v824
  %v889 = vsel %vm761, %v697, %v825
  %v890 = vsel %vm762, %v698, %v826
  %v891 = vpack.c.bf16 %v31, %v30
  %v892 = vpack.c.bf16 %v33, %v32
  %v893 = vpack.c.bf16 %v35, %v34
  %v894 = vpack.c.bf16 %v37, %v36
  %v895 = vpack.c.bf16 %v39, %v38
  %v896 = vpack.c.bf16 %v41, %v40
  %v897 = vpack.c.bf16 %v43, %v42
  %v898 = vpack.c.bf16 %v45, %v44
  %v899 = vpack.c.bf16 %v47, %v46
  %v900 = vpack.c.bf16 %v49, %v48
  %v901 = vpack.c.bf16 %v51, %v50
  %v902 = vpack.c.bf16 %v53, %v52
  %v903 = vpack.c.bf16 %v55, %v54
  %v904 = vpack.c.bf16 %v57, %v56
  %v905 = vpack.c.bf16 %v59, %v58
  %v906 = vpack.c.bf16 %v61, %v60
  %v907 = vpack.c.bf16 %v63, %v62
  %v908 = vpack.c.bf16 %v65, %v64
  %v909 = vpack.c.bf16 %v67, %v66
  %v910 = vpack.c.bf16 %v69, %v68
  %v911 = vpack.c.bf16 %v71, %v70
  %v912 = vpack.c.bf16 %v73, %v72
  %v913 = vpack.c.bf16 %v75, %v74
  %v914 = vpack.c.bf16 %v77, %v76
  %v915 = vpack.c.bf16 %v79, %v78
  %v916 = vpack.c.bf16 %v81, %v80
  %v917 = vpack.c.bf16 %v83, %v82
  %v918 = vpack.c.bf16 %v85, %v84
  %v919 = vpack.c.bf16 %v87, %v86
  %v920 = vpack.c.bf16 %v89, %v88
  %v921 = vpack.c.bf16 %v91, %v90
  %v922 = vpack.c.bf16 %v93, %v92
  %v923 = vld [vmem:[%s3] sm:$0x3]
  %924 = vst.msk [vmem:[#allocation2] sm:$0xff] %vm96, 0.0
  %925 = vst.msk [vmem:[#allocation2 + $0x8] sm:$0xff] %vm96, 0.0
  %926 = vst.msk [vmem:[#allocation2 + $0x10] sm:$0xff] %vm96, 0.0
  %927 = vst.msk [vmem:[#allocation2 + $0x18] sm:$0xff] %vm96, 0.0
  %928 = vst.msk [vmem:[#allocation2 + $0x240] sm:$0xff] %vm96, 0.0
  %929 = vst.msk [vmem:[#allocation2 + $0x248] sm:$0xff] %vm96, 0.0
  %930 = vst.msk [vmem:[#allocation2 + $0x250] sm:$0xff] %vm96, 0.0
  %931 = vst.msk [vmem:[#allocation2 + $0x258] sm:$0xff] %vm96, 0.0
  %s932 = scalar_lea.vmem [#allocation2], 544
  %933 = vst.msk [vmem:[%s932] sm:$0xff] %vm96, 0.0
  %934 = vst.msk [vmem:[%s932 + $0x8] sm:$0xff] %vm96, 0.0
  %935 = vst.msk [vmem:[%s932 + $0x10] sm:$0xff] %vm96, 0.0
  %936 = vst.msk [vmem:[%s932 + $0x18] sm:$0xff] %vm96, 0.0
  %937 = vst.msk [vmem:[%s932 + $0x240] sm:$0xff] %vm96, 0.0
  %938 = vst.msk [vmem:[%s932 + $0x248] sm:$0xff] %vm96, 0.0
  %939 = vst.msk [vmem:[%s932 + $0x250] sm:$0xff] %vm96, 0.0
  %940 = vst.msk [vmem:[%s932 + $0x258] sm:$0xff] %vm96, 0.0
  %s941 = scalar_lea.vmem [#allocation2], 32
  %942 = vst.msk [vmem:[%s941] sm:$0xff] %vm96, 0.0
  %943 = vst.msk [vmem:[%s941 + $0x20] sm:$0xff] %vm96, 0.0
  %944 = vst.msk [vmem:[%s941 + $0x40] sm:$0xff] %vm96, 0.0
  %945 = vst.msk [vmem:[%s941 + $0x60] sm:$0xff] %vm96, 0.0
  %946 = vst.msk [vmem:[%s941 + $0x80] sm:$0xff] %vm96, 0.0
  %947 = vst.msk [vmem:[%s941 + $0xa0] sm:$0xff] %vm96, 0.0
  %948 = vst.msk [vmem:[%s941 + $0xc0] sm:$0xff] %vm96, 0.0
  %949 = vst.msk [vmem:[%s941 + $0xe0] sm:$0xff] %vm96, 0.0
  %950 = vst.msk [vmem:[%s941 + $0x100] sm:$0xff] %vm96, 0.0
  %951 = vst.msk [vmem:[%s941 + $0x120] sm:$0xff] %vm96, 0.0
  %952 = vst.msk [vmem:[%s941 + $0x140] sm:$0xff] %vm96, 0.0
  %953 = vst.msk [vmem:[%s941 + $0x160] sm:$0xff] %vm96, 0.0
  %954 = vst.msk [vmem:[%s941 + $0x180] sm:$0xff] %vm96, 0.0
  %955 = vst.msk [vmem:[%s941 + $0x1a0] sm:$0xff] %vm96, 0.0
  %956 = vst.msk [vmem:[%s941 + $0x1c0] sm:$0xff] %vm96, 0.0
  %957 = vst.msk [vmem:[%s941 + $0x1e0] sm:$0xff] %vm96, 0.0
  %958 = vst.msk [vmem:[%s941 + $0x240] sm:$0xff] %vm96, 0.0
  %959 = vst.msk [vmem:[%s941 + $0x260] sm:$0xff] %vm96, 0.0
  %960 = vst.msk [vmem:[%s941 + $0x280] sm:$0xff] %vm96, 0.0
  %961 = vst.msk [vmem:[%s941 + $0x2a0] sm:$0xff] %vm96, 0.0
  %962 = vst.msk [vmem:[%s941 + $0x2c0] sm:$0xff] %vm96, 0.0
  %963 = vst.msk [vmem:[%s941 + $0x2e0] sm:$0xff] %vm96, 0.0
  %964 = vst.msk [vmem:[%s941 + $0x300] sm:$0xff] %vm96, 0.0
  %965 = vst.msk [vmem:[%s941 + $0x320] sm:$0xff] %vm96, 0.0
  %966 = vst.msk [vmem:[%s941 + $0x340] sm:$0xff] %vm96, 0.0
  %967 = vst.msk [vmem:[%s941 + $0x360] sm:$0xff] %vm96, 0.0
  %968 = vst.msk [vmem:[%s941 + $0x380] sm:$0xff] %vm96, 0.0
  %969 = vst.msk [vmem:[%s941 + $0x3a0] sm:$0xff] %vm96, 0.0
  %970 = vst.msk [vmem:[%s941 + $0x3c0] sm:$0xff] %vm96, 0.0
  %971 = vst.msk [vmem:[%s941 + $0x3e0] sm:$0xff] %vm96, 0.0
  %972 = vst.msk [vmem:[%s941 + $0x400] sm:$0xff] %vm96, 0.0
  %973 = vst.msk [vmem:[%s941 + $0x420] sm:$0xff] %vm96, 0.0
  %974 = vst.msk [vmem:[%s941 + $0x18] sm:$0xff] %vm96, 0.0
  %975 = vst.msk [vmem:[%s941 + $0x38] sm:$0xff] %vm96, 0.0
  %976 = vst.msk [vmem:[%s941 + $0x58] sm:$0xff] %vm96, 0.0
  %977 = vst.msk [vmem:[%s941 + $0x78] sm:$0xff] %vm96, 0.0
  %978 = vst.msk [vmem:[%s941 + $0x98] sm:$0xff] %vm96, 0.0
  %979 = vst.msk [vmem:[%s941 + $0xb8] sm:$0xff] %vm96, 0.0
  %980 = vst.msk [vmem:[%s941 + $0xd8] sm:$0xff] %vm96, 0.0
  %981 = vst.msk [vmem:[%s941 + $0xf8] sm:$0xff] %vm96, 0.0
  %982 = vst.msk [vmem:[%s941 + $0x118] sm:$0xff] %vm96, 0.0
  %983 = vst.msk [vmem:[%s941 + $0x138] sm:$0xff] %vm96, 0.0
  %984 = vst.msk [vmem:[%s941 + $0x158] sm:$0xff] %vm96, 0.0
  %985 = vst.msk [vmem:[%s941 + $0x178] sm:$0xff] %vm96, 0.0
  %986 = vst.msk [vmem:[%s941 + $0x198] sm:$0xff] %vm96, 0.0
  %987 = vst.msk [vmem:[%s941 + $0x1b8] sm:$0xff] %vm96, 0.0
  %988 = vst.msk [vmem:[%s941 + $0x1d8] sm:$0xff] %vm96, 0.0
  %989 = vst.msk [vmem:[%s941 + $0x1f8] sm:$0xff] %vm96, 0.0
  %990 = vst.msk [vmem:[%s941 + $0x258] sm:$0xff] %vm96, 0.0
  %991 = vst.msk [vmem:[%s941 + $0x278] sm:$0xff] %vm96, 0.0
  %992 = vst.msk [vmem:[%s941 + $0x298] sm:$0xff] %vm96, 0.0
  %993 = vst.msk [vmem:[%s941 + $0x2b8] sm:$0xff] %vm96, 0.0
  %994 = vst.msk [vmem:[%s941 + $0x2d8] sm:$0xff] %vm96, 0.0
  %995 = vst.msk [vmem:[%s941 + $0x2f8] sm:$0xff] %vm96, 0.0
  %996 = vst.msk [vmem:[%s941 + $0x318] sm:$0xff] %vm96, 0.0
  %997 = vst.msk [vmem:[%s941 + $0x338] sm:$0xff] %vm96, 0.0
  %998 = vst.msk [vmem:[%s941 + $0x358] sm:$0xff] %vm96, 0.0
  %999 = vst.msk [vmem:[%s941 + $0x378] sm:$0xff] %vm96, 0.0
  %1000 = vst.msk [vmem:[%s941 + $0x398] sm:$0xff] %vm96, 0.0
  %1001 = vst.msk [vmem:[%s941 + $0x3b8] sm:$0xff] %vm96, 0.0
  %1002 = vst.msk [vmem:[%s941 + $0x3d8] sm:$0xff] %vm96, 0.0
  %1003 = vst.msk [vmem:[%s941 + $0x3f8] sm:$0xff] %vm96, 0.0
  %1004 = vst.msk [vmem:[%s941 + $0x418] sm:$0xff] %vm96, 0.0
  %1005 = vst.msk [vmem:[%s941 + $0x438] sm:$0xff] %vm96, 0.0
  %1006 = vst.msk [vmem:[%s941 + $0x8] sm:$0xff] %vm96, %v827
  %1007 = vst.msk [vmem:[%s941 + $0x10] sm:$0xff] %vm96, %v828
  %1008 = vst.msk [vmem:[%s941 + $0x28] sm:$0xff] %vm96, %v829
  %1009 = vst.msk [vmem:[%s941 + $0x30] sm:$0xff] %vm96, %v830
  %1010 = vst.msk [vmem:[%s941 + $0x48] sm:$0xff] %vm96, %v831
  %1011 = vst.msk [vmem:[%s941 + $0x50] sm:$0xff] %vm96, %v832
  %1012 = vst.msk [vmem:[%s941 + $0x68] sm:$0xff] %vm96, %v833
  %1013 = vst.msk [vmem:[%s941 + $0x70] sm:$0xff] %vm96, %v834
  %1014 = vst.msk [vmem:[%s941 + $0x88] sm:$0xff] %vm96, %v835
  %1015 = vst.msk [vmem:[%s941 + $0x90] sm:$0xff] %vm96, %v836
  %1016 = vst.msk [vmem:[%s941 + $0xa8] sm:$0xff] %vm96, %v837
  %1017 = vst.msk [vmem:[%s941 + $0xb0] sm:$0xff] %vm96, %v838
  %1018 = vst.msk [vmem:[%s941 + $0xc8] sm:$0xff] %vm96, %v839
  %1019 = vst.msk [vmem:[%s941 + $0xd0] sm:$0xff] %vm96, %v840
  %1020 = vst.msk [vmem:[%s941 + $0xe8] sm:$0xff] %vm96, %v841
  %1021 = vst.msk [vmem:[%s941 + $0xf0] sm:$0xff] %vm96, %v842
  %1022 = vst.msk [vmem:[%s941 + $0x108] sm:$0xff] %vm96, %v843
  %1023 = vst.msk [vmem:[%s941 + $0x110] sm:$0xff] %vm96, %v844
  %1024 = vst.msk [vmem:[%s941 + $0x128] sm:$0xff] %vm96, %v845
  %1025 = vst.msk [vmem:[%s941 + $0x130] sm:$0xff] %vm96, %v846
  %1026 = vst.msk [vmem:[%s941 + $0x148] sm:$0xff] %vm96, %v847
  %1027 = vst.msk [vmem:[%s941 + $0x150] sm:$0xff] %vm96, %v848
  %1028 = vst.msk [vmem:[%s941 + $0x168] sm:$0xff] %vm96, %v849
  %1029 = vst.msk [vmem:[%s941 + $0x170] sm:$0xff] %vm96, %v850
  %1030 = vst.msk [vmem:[%s941 + $0x188] sm:$0xff] %vm96, %v851
  %1031 = vst.msk [vmem:[%s941 + $0x190] sm:$0xff] %vm96, %v852
  %1032 = vst.msk [vmem:[%s941 + $0x1a8] sm:$0xff] %vm96, %v853
  %1033 = vst.msk [vmem:[%s941 + $0x1b0] sm:$0xff] %vm96, %v854
  %1034 = vst.msk [vmem:[%s941 + $0x1c8] sm:$0xff] %vm96, %v855
  %1035 = vst.msk [vmem:[%s941 + $0x1d0] sm:$0xff] %vm96, %v856
  %1036 = vst.msk [vmem:[%s941 + $0x1e8] sm:$0xff] %vm96, %v857
  %1037 = vst.msk [vmem:[%s941 + $0x1f0] sm:$0xff] %vm96, %v858
  %1038 = vst.msk [vmem:[%s941 + $0x248] sm:$0xff] %vm96, %v859
  %1039 = vst.msk [vmem:[%s941 + $0x250] sm:$0xff] %vm96, %v860
  %1040 = vst.msk [vmem:[%s941 + $0x268] sm:$0xff] %vm96, %v861
  %1041 = vst.msk [vmem:[%s941 + $0x270] sm:$0xff] %vm96, %v862
  %1042 = vst.msk [vmem:[%s941 + $0x288] sm:$0xff] %vm96, %v863
  %1043 = vst.msk [vmem:[%s941 + $0x290] sm:$0xff] %vm96, %v864
  %1044 = vst.msk [vmem:[%s941 + $0x2a8] sm:$0xff] %vm96, %v865
  %1045 = vst.msk [vmem:[%s941 + $0x2b0] sm:$0xff] %vm96, %v866
  %1046 = vst.msk [vmem:[%s941 + $0x2c8] sm:$0xff] %vm96, %v867
  %1047 = vst.msk [vmem:[%s941 + $0x2d0] sm:$0xff] %vm96, %v868
  %1048 = vst.msk [vmem:[%s941 + $0x2e8] sm:$0xff] %vm96, %v869
  %1049 = vst.msk [vmem:[%s941 + $0x2f0] sm:$0xff] %vm96, %v870
  %1050 = vst.msk [vmem:[%s941 + $0x308] sm:$0xff] %vm96, %v871
  %1051 = vst.msk [vmem:[%s941 + $0x310] sm:$0xff] %vm96, %v872
  %1052 = vst.msk [vmem:[%s941 + $0x328] sm:$0xff] %vm96, %v873
  %1053 = vst.msk [vmem:[%s941 + $0x330] sm:$0xff] %vm96, %v874
  %1054 = vst.msk [vmem:[%s941 + $0x348] sm:$0xff] %vm96, %v875
  %1055 = vst.msk [vmem:[%s941 + $0x350] sm:$0xff] %vm96, %v876
  %1056 = vst.msk [vmem:[%s941 + $0x368] sm:$0xff] %vm96, %v877
  %1057 = vst.msk [vmem:[%s941 + $0x370] sm:$0xff] %vm96, %v878
  %1058 = vst.msk [vmem:[%s941 + $0x388] sm:$0xff] %vm96, %v879
  %1059 = vst.msk [vmem:[%s941 + $0x390] sm:$0xff] %vm96, %v880
  %1060 = vst.msk [vmem:[%s941 + $0x3a8] sm:$0xff] %vm96, %v881
  %1061 = vst.msk [vmem:[%s941 + $0x3b0] sm:$0xff] %vm96, %v882
  %1062 = vst.msk [vmem:[%s941 + $0x3c8] sm:$0xff] %vm96, %v883
  %1063 = vst.msk [vmem:[%s941 + $0x3d0] sm:$0xff] %vm96, %v884
  %1064 = vst.msk [vmem:[%s941 + $0x3e8] sm:$0xff] %vm96, %v885
  %1065 = vst.msk [vmem:[%s941 + $0x3f0] sm:$0xff] %vm96, %v886
  %1066 = vst.msk [vmem:[%s941 + $0x408] sm:$0xff] %vm96, %v887
  %1067 = vst.msk [vmem:[%s941 + $0x410] sm:$0xff] %vm96, %v888
  %1068 = vst.msk [vmem:[%s941 + $0x428] sm:$0xff] %vm96, %v889
  %1069 = vst.msk [vmem:[%s941 + $0x430] sm:$0xff] %vm96, %v890
  %v1070 = vld [vmem:[#allocation2 + $0x7] sm:$0xff]
  %v1071 = vld [vmem:[#allocation2 + $0xf] sm:$0xff]
  %v1072 = vld [vmem:[#allocation2 + $0x27] sm:$0xff]
  %v1073 = vld [vmem:[#allocation2 + $0x2f] sm:$0xff]
  %v1074 = vld [vmem:[#allocation2 + $0x47] sm:$0xff]
  %v1075 = vld [vmem:[#allocation2 + $0x4f] sm:$0xff]
  %v1076 = vld [vmem:[#allocation2 + $0x67] sm:$0xff]
  %v1077 = vld [vmem:[#allocation2 + $0x6f] sm:$0xff]
  %v1078 = vld [vmem:[#allocation2 + $0x87] sm:$0xff]
  %v1079 = vld [vmem:[#allocation2 + $0x8f] sm:$0xff]
  %v1080 = vld [vmem:[#allocation2 + $0xa7] sm:$0xff]
  %v1081 = vld [vmem:[#allocation2 + $0xaf] sm:$0xff]
  %v1082 = vld [vmem:[#allocation2 + $0xc7] sm:$0xff]
  %v1083 = vld [vmem:[#allocation2 + $0xcf] sm:$0xff]
  %v1084 = vld [vmem:[#allocation2 + $0xe7] sm:$0xff]
  %v1085 = vld [vmem:[#allocation2 + $0xef] sm:$0xff]
  %v1086 = vld [vmem:[#allocation2 + $0x107] sm:$0xff]
  %v1087 = vld [vmem:[#allocation2 + $0x10f] sm:$0xff]
  %v1088 = vld [vmem:[#allocation2 + $0x127] sm:$0xff]
  %v1089 = vld [vmem:[#allocation2 + $0x12f] sm:$0xff]
  %v1090 = vld [vmem:[#allocation2 + $0x147] sm:$0xff]
  %v1091 = vld [vmem:[#allocation2 + $0x14f] sm:$0xff]
  %v1092 = vld [vmem:[#allocation2 + $0x167] sm:$0xff]
  %v1093 = vld [vmem:[#allocation2 + $0x16f] sm:$0xff]
  %v1094 = vld [vmem:[#allocation2 + $0x187] sm:$0xff]
  %v1095 = vld [vmem:[#allocation2 + $0x18f] sm:$0xff]
  %v1096 = vld [vmem:[#allocation2 + $0x1a7] sm:$0xff]
  %v1097 = vld [vmem:[#allocation2 + $0x1af] sm:$0xff]
  %v1098 = vld [vmem:[#allocation2 + $0x1c7] sm:$0xff]
  %v1099 = vld [vmem:[#allocation2 + $0x1cf] sm:$0xff]
  %v1100 = vld [vmem:[#allocation2 + $0x1e7] sm:$0xff]
  %v1101 = vld [vmem:[#allocation2 + $0x1ef] sm:$0xff]
  %v1102 = vld [vmem:[#allocation2 + $0x247] sm:$0xff]
  %v1103 = vld [vmem:[#allocation2 + $0x24f] sm:$0xff]
  %v1104 = vld [vmem:[#allocation2 + $0x267] sm:$0xff]
  %v1105 = vld [vmem:[#allocation2 + $0x26f] sm:$0xff]
  %v1106 = vld [vmem:[#allocation2 + $0x287] sm:$0xff]
  %v1107 = vld [vmem:[#allocation2 + $0x28f] sm:$0xff]
  %v1108 = vld [vmem:[#allocation2 + $0x2a7] sm:$0xff]
  %v1109 = vld [vmem:[#allocation2 + $0x2af] sm:$0xff]
  %v1110 = vld [vmem:[#allocation2 + $0x2c7] sm:$0xff]
  %v1111 = vld [vmem:[#allocation2 + $0x2cf] sm:$0xff]
  %v1112 = vld [vmem:[#allocation2 + $0x2e7] sm:$0xff]
  %v1113 = vld [vmem:[#allocation2 + $0x2ef] sm:$0xff]
  %v1114 = vld [vmem:[#allocation2 + $0x307] sm:$0xff]
  %v1115 = vld [vmem:[#allocation2 + $0x30f] sm:$0xff]
  %v1116 = vld [vmem:[#allocation2 + $0x327] sm:$0xff]
  %v1117 = vld [vmem:[#allocation2 + $0x32f] sm:$0xff]
  %v1118 = vld [vmem:[#allocation2 + $0x347] sm:$0xff]
  %v1119 = vld [vmem:[#allocation2 + $0x34f] sm:$0xff]
  %v1120 = vld [vmem:[#allocation2 + $0x367] sm:$0xff]
  %v1121 = vld [vmem:[#allocation2 + $0x36f] sm:$0xff]
  %v1122 = vld [vmem:[#allocation2 + $0x387] sm:$0xff]
  %v1123 = vld [vmem:[#allocation2 + $0x38f] sm:$0xff]
  %v1124 = vld [vmem:[#allocation2 + $0x3a7] sm:$0xff]
  %v1125 = vld [vmem:[#allocation2 + $0x3af] sm:$0xff]
  %v1126 = vld [vmem:[#allocation2 + $0x3c7] sm:$0xff]
  %v1127 = vld [vmem:[#allocation2 + $0x3cf] sm:$0xff]
  %v1128 = vld [vmem:[#allocation2 + $0x3e7] sm:$0xff]
  %v1129 = vld [vmem:[#allocation2 + $0x3ef] sm:$0xff]
  %v1130 = vld [vmem:[#allocation2 + $0x407] sm:$0xff]
  %v1131 = vld [vmem:[#allocation2 + $0x40f] sm:$0xff]
  %v1132 = vld [vmem:[#allocation2 + $0x427] sm:$0xff]
  %v1133 = vld [vmem:[#allocation2 + $0x42f] sm:$0xff]
  %v1134 = vpack.c.bf16 %v1071, %v1070
  %v1135 = vpack.c.bf16 %v1073, %v1072
  %v1136 = vpack.c.bf16 %v1075, %v1074
  %v1137 = vpack.c.bf16 %v1077, %v1076
  %v1138 = vpack.c.bf16 %v1079, %v1078
  %v1139 = vpack.c.bf16 %v1081, %v1080
  %v1140 = vpack.c.bf16 %v1083, %v1082
  %v1141 = vpack.c.bf16 %v1085, %v1084
  %v1142 = vpack.c.bf16 %v1087, %v1086
  %v1143 = vpack.c.bf16 %v1089, %v1088
  %v1144 = vpack.c.bf16 %v1091, %v1090
  %v1145 = vpack.c.bf16 %v1093, %v1092
  %v1146 = vpack.c.bf16 %v1095, %v1094
  %v1147 = vpack.c.bf16 %v1097, %v1096
  %v1148 = vpack.c.bf16 %v1099, %v1098
  %v1149 = vpack.c.bf16 %v1101, %v1100
  %v1150 = vpack.c.bf16 %v1103, %v1102
  %v1151 = vpack.c.bf16 %v1105, %v1104
  %v1152 = vpack.c.bf16 %v1107, %v1106
  %v1153 = vpack.c.bf16 %v1109, %v1108
  %v1154 = vpack.c.bf16 %v1111, %v1110
  %v1155 = vpack.c.bf16 %v1113, %v1112
  %v1156 = vpack.c.bf16 %v1115, %v1114
  %v1157 = vpack.c.bf16 %v1117, %v1116
  %v1158 = vpack.c.bf16 %v1119, %v1118
  %v1159 = vpack.c.bf16 %v1121, %v1120
  %v1160 = vpack.c.bf16 %v1123, %v1122
  %v1161 = vpack.c.bf16 %v1125, %v1124
  %v1162 = vpack.c.bf16 %v1127, %v1126
  %v1163 = vpack.c.bf16 %v1129, %v1128
  %v1164 = vpack.c.bf16 %v1131, %v1130
  %v1165 = vpack.c.bf16 %v1133, %v1132
  %v1166 = vld [vmem:[%s1] sm:$0x3]
  %v1167 = vld [vmem:[#allocation2 + $0x8] sm:$0xff]
  %v1168 = vld [vmem:[#allocation2 + $0x10] sm:$0xff]
  %v1169 = vld [vmem:[#allocation2 + $0x28] sm:$0xff]
  %v1170 = vld [vmem:[#allocation2 + $0x30] sm:$0xff]
  %v1171 = vld [vmem:[#allocation2 + $0x48] sm:$0xff]
  %v1172 = vld [vmem:[#allocation2 + $0x50] sm:$0xff]
  %v1173 = vld [vmem:[#allocation2 + $0x68] sm:$0xff]
  %v1174 = vld [vmem:[#allocation2 + $0x70] sm:$0xff]
  %v1175 = vld [vmem:[#allocation2 + $0x88] sm:$0xff]
  %v1176 = vld [vmem:[#allocation2 + $0x90] sm:$0xff]
  %v1177 = vld [vmem:[#allocation2 + $0xa8] sm:$0xff]
  %v1178 = vld [vmem:[#allocation2 + $0xb0] sm:$0xff]
  %v1179 = vld [vmem:[#allocation2 + $0xc8] sm:$0xff]
  %v1180 = vld [vmem:[#allocation2 + $0xd0] sm:$0xff]
  %v1181 = vld [vmem:[#allocation2 + $0xe8] sm:$0xff]
  %v1182 = vld [vmem:[#allocation2 + $0xf0] sm:$0xff]
  %v1183 = vld [vmem:[#allocation2 + $0x108] sm:$0xff]
  %v1184 = vld [vmem:[#allocation2 + $0x110] sm:$0xff]
  %v1185 = vld [vmem:[#allocation2 + $0x128] sm:$0xff]
  %v1186 = vld [vmem:[#allocation2 + $0x130] sm:$0xff]
  %v1187 = vld [vmem:[#allocation2 + $0x148] sm:$0xff]
  %v1188 = vld [vmem:[#allocation2 + $0x150] sm:$0xff]
  %v1189 = vld [vmem:[#allocation2 + $0x168] sm:$0xff]
  %v1190 = vld [vmem:[#allocation2 + $0x170] sm:$0xff]
  %v1191 = vld [vmem:[#allocation2 + $0x188] sm:$0xff]
  %v1192 = vld [vmem:[#allocation2 + $0x190] sm:$0xff]
  %v1193 = vld [vmem:[#allocation2 + $0x1a8] sm:$0xff]
  %v1194 = vld [vmem:[#allocation2 + $0x1b0] sm:$0xff]
  %v1195 = vld [vmem:[#allocation2 + $0x1c8] sm:$0xff]
  %v1196 = vld [vmem:[#allocation2 + $0x1d0] sm:$0xff]
  %v1197 = vld [vmem:[#allocation2 + $0x1e8] sm:$0xff]
  %v1198 = vld [vmem:[#allocation2 + $0x1f0] sm:$0xff]
  %v1199 = vld [vmem:[#allocation2 + $0x248] sm:$0xff]
  %v1200 = vld [vmem:[#allocation2 + $0x250] sm:$0xff]
  %v1201 = vld [vmem:[#allocation2 + $0x268] sm:$0xff]
  %v1202 = vld [vmem:[#allocation2 + $0x270] sm:$0xff]
  %v1203 = vld [vmem:[#allocation2 + $0x288] sm:$0xff]
  %v1204 = vld [vmem:[#allocation2 + $0x290] sm:$0xff]
  %v1205 = vld [vmem:[#allocation2 + $0x2a8] sm:$0xff]
  %v1206 = vld [vmem:[#allocation2 + $0x2b0] sm:$0xff]
  %v1207 = vld [vmem:[#allocation2 + $0x2c8] sm:$0xff]
  %v1208 = vld [vmem:[#allocation2 + $0x2d0] sm:$0xff]
  %v1209 = vld [vmem:[#allocation2 + $0x2e8] sm:$0xff]
  %v1210 = vld [vmem:[#allocation2 + $0x2f0] sm:$0xff]
  %v1211 = vld [vmem:[#allocation2 + $0x308] sm:$0xff]
  %v1212 = vld [vmem:[#allocation2 + $0x310] sm:$0xff]
  %v1213 = vld [vmem:[#allocation2 + $0x328] sm:$0xff]
  %v1214 = vld [vmem:[#allocation2 + $0x330] sm:$0xff]
  %v1215 = vld [vmem:[#allocation2 + $0x348] sm:$0xff]
  %v1216 = vld [vmem:[#allocation2 + $0x350] sm:$0xff]
  %v1217 = vld [vmem:[#allocation2 + $0x368] sm:$0xff]
  %v1218 = vld [vmem:[#allocation2 + $0x370] sm:$0xff]
  %v1219 = vld [vmem:[#allocation2 + $0x388] sm:$0xff]
  %v1220 = vld [vmem:[#allocation2 + $0x390] sm:$0xff]
  %v1221 = vld [vmem:[#allocation2 + $0x3a8] sm:$0xff]
  %v1222 = vld [vmem:[#allocation2 + $0x3b0] sm:$0xff]
  %v1223 = vld [vmem:[#allocation2 + $0x3c8] sm:$0xff]
  %v1224 = vld [vmem:[#allocation2 + $0x3d0] sm:$0xff]
  %v1225 = vld [vmem:[#allocation2 + $0x3e8] sm:$0xff]
  %v1226 = vld [vmem:[#allocation2 + $0x3f0] sm:$0xff]
  %v1227 = vld [vmem:[#allocation2 + $0x408] sm:$0xff]
  %v1228 = vld [vmem:[#allocation2 + $0x410] sm:$0xff]
  %v1229 = vld [vmem:[#allocation2 + $0x428] sm:$0xff]
  %v1230 = vld [vmem:[#allocation2 + $0x430] sm:$0xff]
  %v1231 = vpack.c.bf16 %v1168, %v1167
  %v1232 = vpack.c.bf16 %v1170, %v1169
  %v1233 = vpack.c.bf16 %v1172, %v1171
  %v1234 = vpack.c.bf16 %v1174, %v1173
  %v1235 = vpack.c.bf16 %v1176, %v1175
  %v1236 = vpack.c.bf16 %v1178, %v1177
  %v1237 = vpack.c.bf16 %v1180, %v1179
  %v1238 = vpack.c.bf16 %v1182, %v1181
  %v1239 = vpack.c.bf16 %v1184, %v1183
  %v1240 = vpack.c.bf16 %v1186, %v1185
  %v1241 = vpack.c.bf16 %v1188, %v1187
  %v1242 = vpack.c.bf16 %v1190, %v1189
  %v1243 = vpack.c.bf16 %v1192, %v1191
  %v1244 = vpack.c.bf16 %v1194, %v1193
  %v1245 = vpack.c.bf16 %v1196, %v1195
  %v1246 = vpack.c.bf16 %v1198, %v1197
  %v1247 = vpack.c.bf16 %v1200, %v1199
  %v1248 = vpack.c.bf16 %v1202, %v1201
  %v1249 = vpack.c.bf16 %v1204, %v1203
  %v1250 = vpack.c.bf16 %v1206, %v1205
  %v1251 = vpack.c.bf16 %v1208, %v1207
  %v1252 = vpack.c.bf16 %v1210, %v1209
  %v1253 = vpack.c.bf16 %v1212, %v1211
  %v1254 = vpack.c.bf16 %v1214, %v1213
  %v1255 = vpack.c.bf16 %v1216, %v1215
  %v1256 = vpack.c.bf16 %v1218, %v1217
  %v1257 = vpack.c.bf16 %v1220, %v1219
  %v1258 = vpack.c.bf16 %v1222, %v1221
  %v1259 = vpack.c.bf16 %v1224, %v1223
  %v1260 = vpack.c.bf16 %v1226, %v1225
  %v1261 = vpack.c.bf16 %v1228, %v1227
  %v1262 = vpack.c.bf16 %v1230, %v1229
  %s1263 = scalar_lea.vmem %s1, 2
  %v1264 = vld [vmem:[%s1263] sm:$0x3]
  %v1266 = vsel %vm96, %v1231, 0
  %v1269 = vsel %vm96, %v1232, 0
  %v1272 = vsel %vm96, %v1233, 0
  %v1275 = vsel %vm96, %v1234, 0
  %v1278 = vsel %vm96, %v1235, 0
  %v1281 = vsel %vm96, %v1236, 0
  %v1284 = vsel %vm96, %v1237, 0
  %v1287 = vsel %vm96, %v1238, 0
  %v1290 = vsel %vm96, %v1239, 0
  %v1293 = vsel %vm96, %v1240, 0
  %v1296 = vsel %vm96, %v1241, 0
  %v1299 = vsel %vm96, %v1242, 0
  %v1302 = vsel %vm96, %v1243, 0
  %v1305 = vsel %vm96, %v1244, 0
  %v1308 = vsel %vm96, %v1245, 0
  %v1311 = vsel %vm96, %v1246, 0
  %v1314 = vsel %vm96, %v1247, 0
  %v1317 = vsel %vm96, %v1248, 0
  %v1320 = vsel %vm96, %v1249, 0
  %v1323 = vsel %vm96, %v1250, 0
  %v1326 = vsel %vm96, %v1251, 0
  %v1329 = vsel %vm96, %v1252, 0
  %v1332 = vsel %vm96, %v1253, 0
  %v1335 = vsel %vm96, %v1254, 0
  %v1338 = vsel %vm96, %v1255, 0
  %v1341 = vsel %vm96, %v1256, 0
  %v1344 = vsel %vm96, %v1257, 0
  %v1347 = vsel %vm96, %v1258, 0
  %v1350 = vsel %vm96, %v1259, 0
  %v1353 = vsel %vm96, %v1260, 0
  %v1356 = vsel %vm96, %v1261, 0
  %v1359 = vsel %vm96, %v1262, 0
  %vm1361 = vcmask 1041408
  %v1363 = vsel %vm1361, %v1264, 0
  %1365 = vmatprep.subr.bf16.mxu0 0
  %1366 = vmatpush1.bf16.msra.mxu0 %v1363
  %1367 = vmatprep.subr.bf16.mxu0 0
  %1368 = vmatpush1.bf16.msra.mxu0 0
  %1369 = vmatprep.subr.bf16.mxu0 0
  %1370 = vmatpush1.bf16.msra.mxu0 0
  %1371 = vmatprep.subr.bf16.mxu0 0
  %1372 = vmatpush1.bf16.msra.mxu0 0
  %1373 = vmatprep.subr.bf16.mxu0 0
  %1374 = vmatpush1.bf16.msra.mxu0 0
  %1375 = vmatprep.subr.bf16.mxu0 0
  %1376 = vmatpush1.bf16.msra.mxu0 0
  %1377 = vmatprep.subr.bf16.mxu0 0
  %1378 = vmatpush1.bf16.msra.mxu0 0
  %1379 = vmatprep.subr.bf16.mxu0 0
  %1380 = vmatpush1.bf16.msra.mxu0 0
  %1381 = vmatprep.subr.bf16.mxu0 0
  %1382 = vmatpush1.bf16.msra.mxu0 0
  %1383 = vmatprep.subr.bf16.mxu0 0
  %1384 = vmatpush1.bf16.msra.mxu0 0
  %1385 = vmatprep.subr.bf16.mxu0 0
  %1386 = vmatpush1.bf16.msra.mxu0 0
  %1387 = vmatprep.subr.bf16.mxu0 0
  %1388 = vmatpush1.bf16.msra.mxu0 0
  %1389 = vmatprep.subr.bf16.mxu0 0
  %1390 = vmatpush1.bf16.msra.mxu0 0
  %1391 = vmatprep.subr.bf16.mxu0 0
  %1392 = vmatpush1.bf16.msra.mxu0 0
  %1393 = vmatprep.subr.bf16.mxu0 0
  %1394 = vmatpush1.bf16.msra.mxu0 0
  %1395 = vmatprep.subr.bf16.mxu0 0
  %1396 = vmatpush1.bf16.msra.mxu0 0
  %1397 = vmatprep.mubr.bf16.mxu0 0
  %1398 = vmatmul.mubr.bf16.gmra.mrb[0].mxu0 %v1266
  %v1399 = vpop.f32.mrb[0].mxu0
  %v1400 = vadd.f32 0.0, %v1399
  %v1401 = vpop.f32.mrb[0].mxu0
  %v1402 = vpop.f32.mrb[0].mxu0
  %v1403 = vadd.f32 0.0, %v1402
  %v1404 = vpop.f32.mrb[0].mxu0
  %1405 = vmatprep.mubr.bf16.mxu0 0
  %1406 = vmatmul.mubr.bf16.gmra.mrb[0].mxu0 %v1269
  %v1407 = vpop.f32.mrb[0].mxu0
  %v1408 = vadd.f32 0.0, %v1407
  %v1409 = vpop.f32.mrb[0].mxu0
  %v1410 = vpop.f32.mrb[0].mxu0
  %v1411 = vadd.f32 0.0, %v1410
  %v1412 = vpop.f32.mrb[0].mxu0
  %1413 = vmatprep.mubr.bf16.mxu0 0
  %1414 = vmatmul.mubr.bf16.gmra.mrb[0].mxu0 %v1272
  %v1415 = vpop.f32.mrb[0].mxu0
  %v1416 = vadd.f32 0.0, %v1415
  %v1417 = vpop.f32.mrb[0].mxu0
  %v1418 = vpop.f32.mrb[0].mxu0
  %v1419 = vadd.f32 0.0, %v1418
  %v1420 = vpop.f32.mrb[0].mxu0
  %1421 = vmatprep.mubr.bf16.mxu0 0
  %1422 = vmatmul.mubr.bf16.gmra.mrb[0].mxu0 %v1275
  %v1423 = vpop.f32.mrb[0].mxu0
  %v1424 = vadd.f32 0.0, %v1423
  %v1425 = vpop.f32.mrb[0].mxu0
  %v1426 = vpop.f32.mrb[0].mxu0
  %v1427 = vadd.f32 0.0, %v1426
  %v1428 = vpop.f32.mrb[0].mxu0
  %1429 = vmatprep.mubr.bf16.mxu0 0
  %1430 = vmatmul.mubr.bf16.gmra.mrb[0].mxu0 %v1278
  %v1431 = vpop.f32.mrb[0].mxu0
  %v1432 = vadd.f32 0.0, %v1431
  %v1433 = vpop.f32.mrb[0].mxu0
  %v1434 = vpop.f32.mrb[0].mxu0
  %v1435 = vadd.f32 0.0, %v1434
  %v1436 = vpop.f32.mrb[0].mxu0
  %1437 = vmatprep.mubr.bf16.mxu0 0
  %1438 = vmatmul.mubr.bf16.gmra.mrb[0].mxu0 %v1281
  %v1439 = vpop.f32.mrb[0].mxu0
  %v1440 = vadd.f32 0.0, %v1439
  %v1441 = vpop.f32.mrb[0].mxu0
  %v1442 = vpop.f32.mrb[0].mxu0
  %v1443 = vadd.f32 0.0, %v1442
  %v1444 = vpop.f32.mrb[0].mxu0
  %1445 = vmatprep.mubr.bf16.mxu0 0
  %1446 = vmatmul.mubr.bf16.gmra.mrb[0].mxu0 %v1284
  %v1447 = vpop.f32.mrb[0].mxu0
  %v1448 = vadd.f32 0.0, %v1447
  %v1449 = vpop.f32.mrb[0].mxu0
  %v1450 = vpop.f32.mrb[0].mxu0
  %v1451 = vadd.f32 0.0, %v1450
  %v1452 = vpop.f32.mrb[0].mxu0
  %1453 = vmatprep.mubr.bf16.mxu0 0
  %1454 = vmatmul.mubr.bf16.gmra.mrb[0].mxu0 %v1287
  %v1455 = vpop.f32.mrb[0].mxu0
  %v1456 = vadd.f32 0.0, %v1455
  %v1457 = vpop.f32.mrb[0].mxu0
  %v1458 = vpop.f32.mrb[0].mxu0
  %v1459 = vadd.f32 0.0, %v1458
  %v1460 = vpop.f32.mrb[0].mxu0
  %1461 = vmatprep.mubr.bf16.mxu0 0
  %1462 = vmatmul.mubr.bf16.gmra.mrb[0].mxu0 %v1290
  %v1463 = vpop.f32.mrb[0].mxu0
  %v1464 = vadd.f32 0.0, %v1463
  %v1465 = vpop.f32.mrb[0].mxu0
  %v1466 = vpop.f32.mrb[0].mxu0
  %v1467 = vadd.f32 0.0, %v1466
  %v1468 = vpop.f32.mrb[0].mxu0
  %1469 = vmatprep.mubr.bf16.mxu0 0
  %1470 = vmatmul.mubr.bf16.gmra.mrb[0].mxu0 %v1293
  %v1471 = vpop.f32.mrb[0].mxu0
  %v1472 = vadd.f32 0.0, %v1471
  %v1473 = vpop.f32.mrb[0].mxu0
  %v1474 = vpop.f32.mrb[0].mxu0
  %v1475 = vadd.f32 0.0, %v1474
  %v1476 = vpop.f32.mrb[0].mxu0
  %1477 = vmatprep.mubr.bf16.mxu0 0
  %1478 = vmatmul.mubr.bf16.gmra.mrb[0].mxu0 %v1296
  %v1479 = vpop.f32.mrb[0].mxu0
  %v1480 = vadd.f32 0.0, %v1479
  %v1481 = vpop.f32.mrb[0].mxu0
  %v1482 = vpop.f32.mrb[0].mxu0
  %v1483 = vadd.f32 0.0, %v1482
  %v1484 = vpop.f32.mrb[0].mxu0
  %1485 = vmatprep.mubr.bf16.mxu0 0
  %1486 = vmatmul.mubr.bf16.gmra.mrb[0].mxu0 %v1299
  %v1487 = vpop.f32.mrb[0].mxu0
  %v1488 = vadd.f32 0.0, %v1487
  %v1489 = vpop.f32.mrb[0].mxu0
  %v1490 = vpop.f32.mrb[0].mxu0
  %v1491 = vadd.f32 0.0, %v1490
  %v1492 = vpop.f32.mrb[0].mxu0
  %1493 = vmatprep.mubr.bf16.mxu0 0
  %1494 = vmatmul.mubr.bf16.gmra.mrb[0].mxu0 %v1302
  %v1495 = vpop.f32.mrb[0].mxu0
  %v1496 = vadd.f32 0.0, %v1495
  %v1497 = vpop.f32.mrb[0].mxu0
  %v1498 = vpop.f32.mrb[0].mxu0
  %v1499 = vadd.f32 0.0, %v1498
  %v1500 = vpop.f32.mrb[0].mxu0
  %1501 = vmatprep.mubr.bf16.mxu0 0
  %1502 = vmatmul.mubr.bf16.gmra.mrb[0].mxu0 %v1305
  %v1503 = vpop.f32.mrb[0].mxu0
  %v1504 = vadd.f32 0.0, %v1503
  %v1505 = vpop.f32.mrb[0].mxu0
  %v1506 = vpop.f32.mrb[0].mxu0
  %v1507 = vadd.f32 0.0, %v1506
  %v1508 = vpop.f32.mrb[0].mxu0
  %1509 = vmatprep.mubr.bf16.mxu0 0
  %1510 = vmatmul.mubr.bf16.gmra.mrb[0].mxu0 %v1308
  %v1511 = vpop.f32.mrb[0].mxu0
  %v1512 = vadd.f32 0.0, %v1511
  %v1513 = vpop.f32.mrb[0].mxu0
  %v1514 = vpop.f32.mrb[0].mxu0
  %v1515 = vadd.f32 0.0, %v1514
  %v1516 = vpop.f32.mrb[0].mxu0
  %1517 = vmatprep.mubr.bf16.mxu0 0
  %1518 = vmatmul.mubr.bf16.gmra.mrb[0].mxu0 %v1311
  %v1519 = vpop.f32.mrb[0].mxu0
  %v1520 = vadd.f32 0.0, %v1519
  %v1521 = vpop.f32.mrb[0].mxu0
  %v1522 = vpop.f32.mrb[0].mxu0
  %v1523 = vadd.f32 0.0, %v1522
  %v1524 = vpop.f32.mrb[0].mxu0
  %1525 = vmatprep.mubr.bf16.mxu0 0
  %1526 = vmatmul.mubr.bf16.gmra.mrb[0].mxu0 %v1314
  %v1527 = vpop.f32.mrb[0].mxu0
  %v1528 = vadd.f32 0.0, %v1527
  %v1529 = vpop.f32.mrb[0].mxu0
  %v1530 = vpop.f32.mrb[0].mxu0
  %v1531 = vadd.f32 0.0, %v1530
  %v1532 = vpop.f32.mrb[0].mxu0
  %1533 = vmatprep.mubr.bf16.mxu0 0
  %1534 = vmatmul.mubr.bf16.gmra.mrb[0].mxu0 %v1317
  %v1535 = vpop.f32.mrb[0].mxu0
  %v1536 = vadd.f32 0.0, %v1535
  %v1537 = vpop.f32.mrb[0].mxu0
  %v1538 = vpop.f32.mrb[0].mxu0
  %v1539 = vadd.f32 0.0, %v1538
  %v1540 = vpop.f32.mrb[0].mxu0
  %1541 = vmatprep.mubr.bf16.mxu0 0
  %1542 = vmatmul.mubr.bf16.gmra.mrb[0].mxu0 %v1320
  %v1543 = vpop.f32.mrb[0].mxu0
  %v1544 = vadd.f32 0.0, %v1543
  %v1545 = vpop.f32.mrb[0].mxu0
  %v1546 = vpop.f32.mrb[0].mxu0
  %v1547 = vadd.f32 0.0, %v1546
  %v1548 = vpop.f32.mrb[0].mxu0
  %1549 = vmatprep.mubr.bf16.mxu0 0
  %1550 = vmatmul.mubr.bf16.gmra.mrb[0].mxu0 %v1323
  %v1551 = vpop.f32.mrb[0].mxu0
  %v1552 = vadd.f32 0.0, %v1551
  %v1553 = vpop.f32.mrb[0].mxu0
  %v1554 = vpop.f32.mrb[0].mxu0
  %v1555 = vadd.f32 0.0, %v1554
  %v1556 = vpop.f32.mrb[0].mxu0
  %1557 = vmatprep.mubr.bf16.mxu0 0
  %1558 = vmatmul.mubr.bf16.gmra.mrb[0].mxu0 %v1326
  %v1559 = vpop.f32.mrb[0].mxu0
  %v1560 = vadd.f32 0.0, %v1559
  %v1561 = vpop.f32.mrb[0].mxu0
  %v1562 = vpop.f32.mrb[0].mxu0
  %v1563 = vadd.f32 0.0, %v1562
  %v1564 = vpop.f32.mrb[0].mxu0
  %1565 = vmatprep.mubr.bf16.mxu0 0
  %1566 = vmatmul.mubr.bf16.gmra.mrb[0].mxu0 %v1329
  %v1567 = vpop.f32.mrb[0].mxu0
  %v1568 = vadd.f32 0.0, %v1567
  %v1569 = vpop.f32.mrb[0].mxu0
  %v1570 = vpop.f32.mrb[0].mxu0
  %v1571 = vadd.f32 0.0, %v1570
  %v1572 = vpop.f32.mrb[0].mxu0
  %1573 = vmatprep.mubr.bf16.mxu0 0
  %1574 = vmatmul.mubr.bf16.gmra.mrb[0].mxu0 %v1332
  %v1575 = vpop.f32.mrb[0].mxu0
  %v1576 = vadd.f32 0.0, %v1575
  %v1577 = vpop.f32.mrb[0].mxu0
  %v1578 = vpop.f32.mrb[0].mxu0
  %v1579 = vadd.f32 0.0, %v1578
  %v1580 = vpop.f32.mrb[0].mxu0
  %1581 = vmatprep.mubr.bf16.mxu0 0
  %1582 = vmatmul.mubr.bf16.gmra.mrb[0].mxu0 %v1335
  %v1583 = vpop.f32.mrb[0].mxu0
  %v1584 = vadd.f32 0.0, %v1583
  %v1585 = vpop.f32.mrb[0].mxu0
  %v1586 = vpop.f32.mrb[0].mxu0
  %v1587 = vadd.f32 0.0, %v1586
  %v1588 = vpop.f32.mrb[0].mxu0
  %1589 = vmatprep.mubr.bf16.mxu0 0
  %1590 = vmatmul.mubr.bf16.gmra.mrb[0].mxu0 %v1338
  %v1591 = vpop.f32.mrb[0].mxu0
  %v1592 = vadd.f32 0.0, %v1591
  %v1593 = vpop.f32.mrb[0].mxu0
  %v1594 = vpop.f32.mrb[0].mxu0
  %v1595 = vadd.f32 0.0, %v1594
  %v1596 = vpop.f32.mrb[0].mxu0
  %1597 = vmatprep.mubr.bf16.mxu0 0
  %1598 = vmatmul.mubr.bf16.gmra.mrb[0].mxu0 %v1341
  %v1599 = vpop.f32.mrb[0].mxu0
  %v1600 = vadd.f32 0.0, %v1599
  %v1601 = vpop.f32.mrb[0].mxu0
  %v1602 = vpop.f32.mrb[0].mxu0
  %v1603 = vadd.f32 0.0, %v1602
  %v1604 = vpop.f32.mrb[0].mxu0
  %1605 = vmatprep.mubr.bf16.mxu0 0
  %1606 = vmatmul.mubr.bf16.gmra.mrb[0].mxu0 %v1344
  %v1607 = vpop.f32.mrb[0].mxu0
  %v1608 = vadd.f32 0.0, %v1607
  %v1609 = vpop.f32.mrb[0].mxu0
  %v1610 = vpop.f32.mrb[0].mxu0
  %v1611 = vadd.f32 0.0, %v1610
  %v1612 = vpop.f32.mrb[0].mxu0
  %1613 = vmatprep.mubr.bf16.mxu0 0
  %1614 = vmatmul.mubr.bf16.gmra.mrb[0].mxu0 %v1347
  %v1615 = vpop.f32.mrb[0].mxu0
  %v1616 = vadd.f32 0.0, %v1615
  %v1617 = vpop.f32.mrb[0].mxu0
  %v1618 = vpop.f32.mrb[0].mxu0
  %v1619 = vadd.f32 0.0, %v1618
  %v1620 = vpop.f32.mrb[0].mxu0
  %1621 = vmatprep.mubr.bf16.mxu0 0
  %1622 = vmatmul.mubr.bf16.gmra.mrb[0].mxu0 %v1350
  %v1623 = vpop.f32.mrb[0].mxu0
  %v1624 = vadd.f32 0.0, %v1623
  %v1625 = vpop.f32.mrb[0].mxu0
  %v1626 = vpop.f32.mrb[0].mxu0
  %v1627 = vadd.f32 0.0, %v1626
  %v1628 = vpop.f32.mrb[0].mxu0
  %1629 = vmatprep.mubr.bf16.mxu0 0
  %1630 = vmatmul.mubr.bf16.gmra.mrb[0].mxu0 %v1353
  %v1631 = vpop.f32.mrb[0].mxu0
  %v1632 = vadd.f32 0.0, %v1631
  %v1633 = vpop.f32.mrb[0].mxu0
  %v1634 = vpop.f32.mrb[0].mxu0
  %v1635 = vadd.f32 0.0, %v1634
  %v1636 = vpop.f32.mrb[0].mxu0
  %1637 = vmatprep.mubr.bf16.mxu0 0
  %1638 = vmatmul.mubr.bf16.gmra.mrb[0].mxu0 %v1356
  %v1639 = vpop.f32.mrb[0].mxu0
  %v1640 = vadd.f32 0.0, %v1639
  %v1641 = vpop.f32.mrb[0].mxu0
  %v1642 = vpop.f32.mrb[0].mxu0
  %v1643 = vadd.f32 0.0, %v1642
  %v1644 = vpop.f32.mrb[0].mxu0
  %1645 = vmatprep.mubr.bf16.mxu0 0
  %1646 = vmatmul.mubr.bf16.gmra.mrb[0].mxu0 %v1359
  %v1647 = vpop.f32.mrb[0].mxu0
  %v1648 = vadd.f32 0.0, %v1647
  %v1649 = vpop.f32.mrb[0].mxu0
  %v1650 = vpop.f32.mrb[0].mxu0
  %v1651 = vadd.f32 0.0, %v1650
  %v1652 = vpop.f32.mrb[0].mxu0
  %1653 = vdwg.mxu0
  %v1655 = vsel %vm96, %v1134, 0
  %v1658 = vsel %vm96, %v1135, 0
  %v1661 = vsel %vm96, %v1136, 0
  %v1664 = vsel %vm96, %v1137, 0
  %v1667 = vsel %vm96, %v1138, 0
  %v1670 = vsel %vm96, %v1139, 0
  %v1673 = vsel %vm96, %v1140, 0
  %v1676 = vsel %vm96, %v1141, 0
  %v1679 = vsel %vm96, %v1142, 0
  %v1682 = vsel %vm96, %v1143, 0
  %v1685 = vsel %vm96, %v1144, 0
  %v1688 = vsel %vm96, %v1145, 0
  %v1691 = vsel %vm96, %v1146, 0
  %v1694 = vsel %vm96, %v1147, 0
  %v1697 = vsel %vm96, %v1148, 0
  %v1700 = vsel %vm96, %v1149, 0
  %v1703 = vsel %vm96, %v1150, 0
  %v1706 = vsel %vm96, %v1151, 0
  %v1709 = vsel %vm96, %v1152, 0
  %v1712 = vsel %vm96, %v1153, 0
  %v1715 = vsel %vm96, %v1154, 0
  %v1718 = vsel %vm96, %v1155, 0
  %v1721 = vsel %vm96, %v1156, 0
  %v1724 = vsel %vm96, %v1157, 0
  %v1727 = vsel %vm96, %v1158, 0
  %v1730 = vsel %vm96, %v1159, 0
  %v1733 = vsel %vm96, %v1160, 0
  %v1736 = vsel %vm96, %v1161, 0
  %v1739 = vsel %vm96, %v1162, 0
  %v1742 = vsel %vm96, %v1163, 0
  %v1745 = vsel %vm96, %v1164, 0
  %v1748 = vsel %vm96, %v1165, 0
  %v1751 = vsel %vm1361, %v1166, 0
  %1753 = vmatprep.subr.bf16.mxu0 0
  %1754 = vmatpush1.bf16.msra.mxu0 %v1751
  %1755 = vmatprep.subr.bf16.mxu0 0
  %1756 = vmatpush1.bf16.msra.mxu0 0
  %1757 = vmatprep.subr.bf16.mxu0 0
  %1758 = vmatpush1.bf16.msra.mxu0 0
  %1759 = vmatprep.subr.bf16.mxu0 0
  %1760 = vmatpush1.bf16.msra.mxu0 0
  %1761 = vmatprep.subr.bf16.mxu0 0
  %1762 = vmatpush1.bf16.msra.mxu0 0
  %1763 = vmatprep.subr.bf16.mxu0 0
  %1764 = vmatpush1.bf16.msra.mxu0 0
  %1765 = vmatprep.subr.bf16.mxu0 0
  %1766 = vmatpush1.bf16.msra.mxu0 0
  %1767 = vmatprep.subr.bf16.mxu0 0
  %1768 = vmatpush1.bf16.msra.mxu0 0
  %1769 = vmatprep.subr.bf16.mxu0 0
  %1770 = vmatpush1.bf16.msra.mxu0 0
  %1771 = vmatprep.subr.bf16.mxu0 0
  %1772 = vmatpush1.bf16.msra.mxu0 0
  %1773 = vmatprep.subr.bf16.mxu0 0
  %1774 = vmatpush1.bf16.msra.mxu0 0
  %1775 = vmatprep.subr.bf16.mxu0 0
  %1776 = vmatpush1.bf16.msra.mxu0 0
  %1777 = vmatprep.subr.bf16.mxu0 0
  %1778 = vmatpush1.bf16.msra.mxu0 0
  %1779 = vmatprep.subr.bf16.mxu0 0
  %1780 = vmatpush1.bf16.msra.mxu0 0
  %1781 = vmatprep.subr.bf16.mxu0 0
  %1782 = vmatpush1.bf16.msra.mxu0 0
  %1783 = vmatprep.subr.bf16.mxu0 0
  %1784 = vmatpush1.bf16.msra.mxu0 0
  %1785 = vmatprep.mubr.bf16.mxu0 0
  %1786 = vmatmul.mubr.bf16.gmra.mrb[0].mxu0 %v1655
  %v1787 = vpop.f32.mrb[0].mxu0
  %v1788 = vadd.f32 %v1400, %v1787
  %v1789 = vpop.f32.mrb[0].mxu0
  %v1790 = vpop.f32.mrb[0].mxu0
  %v1791 = vadd.f32 %v1403, %v1790
  %v1792 = vpop.f32.mrb[0].mxu0
  %1793 = vmatprep.mubr.bf16.mxu0 0
  %1794 = vmatmul.mubr.bf16.gmra.mrb[0].mxu0 %v1658
  %v1795 = vpop.f32.mrb[0].mxu0
  %v1796 = vadd.f32 %v1408, %v1795
  %v1797 = vpop.f32.mrb[0].mxu0
  %v1798 = vpop.f32.mrb[0].mxu0
  %v1799 = vadd.f32 %v1411, %v1798
  %v1800 = vpop.f32.mrb[0].mxu0
  %1801 = vmatprep.mubr.bf16.mxu0 0
  %1802 = vmatmul.mubr.bf16.gmra.mrb[0].mxu0 %v1661
  %v1803 = vpop.f32.mrb[0].mxu0
  %v1804 = vadd.f32 %v1416, %v1803
  %v1805 = vpop.f32.mrb[0].mxu0
  %v1806 = vpop.f32.mrb[0].mxu0
  %v1807 = vadd.f32 %v1419, %v1806
  %v1808 = vpop.f32.mrb[0].mxu0
  %1809 = vmatprep.mubr.bf16.mxu0 0
  %1810 = vmatmul.mubr.bf16.gmra.mrb[0].mxu0 %v1664
  %v1811 = vpop.f32.mrb[0].mxu0
  %v1812 = vadd.f32 %v1424, %v1811
  %v1813 = vpop.f32.mrb[0].mxu0
  %v1814 = vpop.f32.mrb[0].mxu0
  %v1815 = vadd.f32 %v1427, %v1814
  %v1816 = vpop.f32.mrb[0].mxu0
  %1817 = vmatprep.mubr.bf16.mxu0 0
  %1818 = vmatmul.mubr.bf16.gmra.mrb[0].mxu0 %v1667
  %v1819 = vpop.f32.mrb[0].mxu0
  %v1820 = vadd.f32 %v1432, %v1819
  %v1821 = vpop.f32.mrb[0].mxu0
  %v1822 = vpop.f32.mrb[0].mxu0
  %v1823 = vadd.f32 %v1435, %v1822
  %v1824 = vpop.f32.mrb[0].mxu0
  %1825 = vmatprep.mubr.bf16.mxu0 0
  %1826 = vmatmul.mubr.bf16.gmra.mrb[0].mxu0 %v1670
  %v1827 = vpop.f32.mrb[0].mxu0
  %v1828 = vadd.f32 %v1440, %v1827
  %v1829 = vpop.f32.mrb[0].mxu0
  %v1830 = vpop.f32.mrb[0].mxu0
  %v1831 = vadd.f32 %v1443, %v1830
  %v1832 = vpop.f32.mrb[0].mxu0
  %1833 = vmatprep.mubr.bf16.mxu0 0
  %1834 = vmatmul.mubr.bf16.gmra.mrb[0].mxu0 %v1673
  %v1835 = vpop.f32.mrb[0].mxu0
  %v1836 = vadd.f32 %v1448, %v1835
  %v1837 = vpop.f32.mrb[0].mxu0
  %v1838 = vpop.f32.mrb[0].mxu0
  %v1839 = vadd.f32 %v1451, %v1838
  %v1840 = vpop.f32.mrb[0].mxu0
  %1841 = vmatprep.mubr.bf16.mxu0 0
  %1842 = vmatmul.mubr.bf16.gmra.mrb[0].mxu0 %v1676
  %v1843 = vpop.f32.mrb[0].mxu0
  %v1844 = vadd.f32 %v1456, %v1843
  %v1845 = vpop.f32.mrb[0].mxu0
  %v1846 = vpop.f32.mrb[0].mxu0
  %v1847 = vadd.f32 %v1459, %v1846
  %v1848 = vpop.f32.mrb[0].mxu0
  %1849 = vmatprep.mubr.bf16.mxu0 0
  %1850 = vmatmul.mubr.bf16.gmra.mrb[0].mxu0 %v1679
  %v1851 = vpop.f32.mrb[0].mxu0
  %v1852 = vadd.f32 %v1464, %v1851
  %v1853 = vpop.f32.mrb[0].mxu0
  %v1854 = vpop.f32.mrb[0].mxu0
  %v1855 = vadd.f32 %v1467, %v1854
  %v1856 = vpop.f32.mrb[0].mxu0
  %1857 = vmatprep.mubr.bf16.mxu0 0
  %1858 = vmatmul.mubr.bf16.gmra.mrb[0].mxu0 %v1682
  %v1859 = vpop.f32.mrb[0].mxu0
  %v1860 = vadd.f32 %v1472, %v1859
  %v1861 = vpop.f32.mrb[0].mxu0
  %v1862 = vpop.f32.mrb[0].mxu0
  %v1863 = vadd.f32 %v1475, %v1862
  %v1864 = vpop.f32.mrb[0].mxu0
  %1865 = vmatprep.mubr.bf16.mxu0 0
  %1866 = vmatmul.mubr.bf16.gmra.mrb[0].mxu0 %v1685
  %v1867 = vpop.f32.mrb[0].mxu0
  %v1868 = vadd.f32 %v1480, %v1867
  %v1869 = vpop.f32.mrb[0].mxu0
  %v1870 = vpop.f32.mrb[0].mxu0
  %v1871 = vadd.f32 %v1483, %v1870
  %v1872 = vpop.f32.mrb[0].mxu0
  %1873 = vmatprep.mubr.bf16.mxu0 0
  %1874 = vmatmul.mubr.bf16.gmra.mrb[0].mxu0 %v1688
  %v1875 = vpop.f32.mrb[0].mxu0
  %v1876 = vadd.f32 %v1488, %v1875
  %v1877 = vpop.f32.mrb[0].mxu0
  %v1878 = vpop.f32.mrb[0].mxu0
  %v1879 = vadd.f32 %v1491, %v1878
  %v1880 = vpop.f32.mrb[0].mxu0
  %1881 = vmatprep.mubr.bf16.mxu0 0
  %1882 = vmatmul.mubr.bf16.gmra.mrb[0].mxu0 %v1691
  %v1883 = vpop.f32.mrb[0].mxu0
  %v1884 = vadd.f32 %v1496, %v1883
  %v1885 = vpop.f32.mrb[0].mxu0
  %v1886 = vpop.f32.mrb[0].mxu0
  %v1887 = vadd.f32 %v1499, %v1886
  %v1888 = vpop.f32.mrb[0].mxu0
  %1889 = vmatprep.mubr.bf16.mxu0 0
  %1890 = vmatmul.mubr.bf16.gmra.mrb[0].mxu0 %v1694
  %v1891 = vpop.f32.mrb[0].mxu0
  %v1892 = vadd.f32 %v1504, %v1891
  %v1893 = vpop.f32.mrb[0].mxu0
  %v1894 = vpop.f32.mrb[0].mxu0
  %v1895 = vadd.f32 %v1507, %v1894
  %v1896 = vpop.f32.mrb[0].mxu0
  %1897 = vmatprep.mubr.bf16.mxu0 0
  %1898 = vmatmul.mubr.bf16.gmra.mrb[0].mxu0 %v1697
  %v1899 = vpop.f32.mrb[0].mxu0
  %v1900 = vadd.f32 %v1512, %v1899
  %v1901 = vpop.f32.mrb[0].mxu0
  %v1902 = vpop.f32.mrb[0].mxu0
  %v1903 = vadd.f32 %v1515, %v1902
  %v1904 = vpop.f32.mrb[0].mxu0
  %1905 = vmatprep.mubr.bf16.mxu0 0
  %1906 = vmatmul.mubr.bf16.gmra.mrb[0].mxu0 %v1700
  %v1907 = vpop.f32.mrb[0].mxu0
  %v1908 = vadd.f32 %v1520, %v1907
  %v1909 = vpop.f32.mrb[0].mxu0
  %v1910 = vpop.f32.mrb[0].mxu0
  %v1911 = vadd.f32 %v1523, %v1910
  %v1912 = vpop.f32.mrb[0].mxu0
  %1913 = vmatprep.mubr.bf16.mxu0 0
  %1914 = vmatmul.mubr.bf16.gmra.mrb[0].mxu0 %v1703
  %v1915 = vpop.f32.mrb[0].mxu0
  %v1916 = vadd.f32 %v1528, %v1915
  %v1917 = vpop.f32.mrb[0].mxu0
  %v1918 = vpop.f32.mrb[0].mxu0
  %v1919 = vadd.f32 %v1531, %v1918
  %v1920 = vpop.f32.mrb[0].mxu0
  %1921 = vmatprep.mubr.bf16.mxu0 0
  %1922 = vmatmul.mubr.bf16.gmra.mrb[0].mxu0 %v1706
  %v1923 = vpop.f32.mrb[0].mxu0
  %v1924 = vadd.f32 %v1536, %v1923
  %v1925 = vpop.f32.mrb[0].mxu0
  %v1926 = vpop.f32.mrb[0].mxu0
  %v1927 = vadd.f32 %v1539, %v1926
  %v1928 = vpop.f32.mrb[0].mxu0
  %1929 = vmatprep.mubr.bf16.mxu0 0
  %1930 = vmatmul.mubr.bf16.gmra.mrb[0].mxu0 %v1709
  %v1931 = vpop.f32.mrb[0].mxu0
  %v1932 = vadd.f32 %v1544, %v1931
  %v1933 = vpop.f32.mrb[0].mxu0
  %v1934 = vpop.f32.mrb[0].mxu0
  %v1935 = vadd.f32 %v1547, %v1934
  %v1936 = vpop.f32.mrb[0].mxu0
  %1937 = vmatprep.mubr.bf16.mxu0 0
  %1938 = vmatmul.mubr.bf16.gmra.mrb[0].mxu0 %v1712
  %v1939 = vpop.f32.mrb[0].mxu0
  %v1940 = vadd.f32 %v1552, %v1939
  %v1941 = vpop.f32.mrb[0].mxu0
  %v1942 = vpop.f32.mrb[0].mxu0
  %v1943 = vadd.f32 %v1555, %v1942
  %v1944 = vpop.f32.mrb[0].mxu0
  %1945 = vmatprep.mubr.bf16.mxu0 0
  %1946 = vmatmul.mubr.bf16.gmra.mrb[0].mxu0 %v1715
  %v1947 = vpop.f32.mrb[0].mxu0
  %v1948 = vadd.f32 %v1560, %v1947
  %v1949 = vpop.f32.mrb[0].mxu0
  %v1950 = vpop.f32.mrb[0].mxu0
  %v1951 = vadd.f32 %v1563, %v1950
  %v1952 = vpop.f32.mrb[0].mxu0
  %1953 = vmatprep.mubr.bf16.mxu0 0
  %1954 = vmatmul.mubr.bf16.gmra.mrb[0].mxu0 %v1718
  %v1955 = vpop.f32.mrb[0].mxu0
  %v1956 = vadd.f32 %v1568, %v1955
  %v1957 = vpop.f32.mrb[0].mxu0
  %v1958 = vpop.f32.mrb[0].mxu0
  %v1959 = vadd.f32 %v1571, %v1958
  %v1960 = vpop.f32.mrb[0].mxu0
  %1961 = vmatprep.mubr.bf16.mxu0 0
  %1962 = vmatmul.mubr.bf16.gmra.mrb[0].mxu0 %v1721
  %v1963 = vpop.f32.mrb[0].mxu0
  %v1964 = vadd.f32 %v1576, %v1963
  %v1965 = vpop.f32.mrb[0].mxu0
  %v1966 = vpop.f32.mrb[0].mxu0
  %v1967 = vadd.f32 %v1579, %v1966
  %v1968 = vpop.f32.mrb[0].mxu0
  %1969 = vmatprep.mubr.bf16.mxu0 0
  %1970 = vmatmul.mubr.bf16.gmra.mrb[0].mxu0 %v1724
  %v1971 = vpop.f32.mrb[0].mxu0
  %v1972 = vadd.f32 %v1584, %v1971
  %v1973 = vpop.f32.mrb[0].mxu0
  %v1974 = vpop.f32.mrb[0].mxu0
  %v1975 = vadd.f32 %v1587, %v1974
  %v1976 = vpop.f32.mrb[0].mxu0
  %1977 = vmatprep.mubr.bf16.mxu0 0
  %1978 = vmatmul.mubr.bf16.gmra.mrb[0].mxu0 %v1727
  %v1979 = vpop.f32.mrb[0].mxu0
  %v1980 = vadd.f32 %v1592, %v1979
  %v1981 = vpop.f32.mrb[0].mxu0
  %v1982 = vpop.f32.mrb[0].mxu0
  %v1983 = vadd.f32 %v1595, %v1982
  %v1984 = vpop.f32.mrb[0].mxu0
  %1985 = vmatprep.mubr.bf16.mxu0 0
  %1986 = vmatmul.mubr.bf16.gmra.mrb[0].mxu0 %v1730
  %v1987 = vpop.f32.mrb[0].mxu0
  %v1988 = vadd.f32 %v1600, %v1987
  %v1989 = vpop.f32.mrb[0].mxu0
  %v1990 = vpop.f32.mrb[0].mxu0
  %v1991 = vadd.f32 %v1603, %v1990
  %v1992 = vpop.f32.mrb[0].mxu0
  %1993 = vmatprep.mubr.bf16.mxu0 0
  %1994 = vmatmul.mubr.bf16.gmra.mrb[0].mxu0 %v1733
  %v1995 = vpop.f32.mrb[0].mxu0
  %v1996 = vadd.f32 %v1608, %v1995
  %v1997 = vpop.f32.mrb[0].mxu0
  %v1998 = vpop.f32.mrb[0].mxu0
  %v1999 = vadd.f32 %v1611, %v1998
  %v2000 = vpop.f32.mrb[0].mxu0
  %2001 = vmatprep.mubr.bf16.mxu0 0
  %2002 = vmatmul.mubr.bf16.gmra.mrb[0].mxu0 %v1736
  %v2003 = vpop.f32.mrb[0].mxu0
  %v2004 = vadd.f32 %v1616, %v2003
  %v2005 = vpop.f32.mrb[0].mxu0
  %v2006 = vpop.f32.mrb[0].mxu0
  %v2007 = vadd.f32 %v1619, %v2006
  %v2008 = vpop.f32.mrb[0].mxu0
  %2009 = vmatprep.mubr.bf16.mxu0 0
  %2010 = vmatmul.mubr.bf16.gmra.mrb[0].mxu0 %v1739
  %v2011 = vpop.f32.mrb[0].mxu0
  %v2012 = vadd.f32 %v1624, %v2011
  %v2013 = vpop.f32.mrb[0].mxu0
  %v2014 = vpop.f32.mrb[0].mxu0
  %v2015 = vadd.f32 %v1627, %v2014
  %v2016 = vpop.f32.mrb[0].mxu0
  %2017 = vmatprep.mubr.bf16.mxu0 0
  %2018 = vmatmul.mubr.bf16.gmra.mrb[0].mxu0 %v1742
  %v2019 = vpop.f32.mrb[0].mxu0
  %v2020 = vadd.f32 %v1632, %v2019
  %v2021 = vpop.f32.mrb[0].mxu0
  %v2022 = vpop.f32.mrb[0].mxu0
  %v2023 = vadd.f32 %v1635, %v2022
  %v2024 = vpop.f32.mrb[0].mxu0
  %2025 = vmatprep.mubr.bf16.mxu0 0
  %2026 = vmatmul.mubr.bf16.gmra.mrb[0].mxu0 %v1745
  %v2027 = vpop.f32.mrb[0].mxu0
  %v2028 = vadd.f32 %v1640, %v2027
  %v2029 = vpop.f32.mrb[0].mxu0
  %v2030 = vpop.f32.mrb[0].mxu0
  %v2031 = vadd.f32 %v1643, %v2030
  %v2032 = vpop.f32.mrb[0].mxu0
  %2033 = vmatprep.mubr.bf16.mxu0 0
  %2034 = vmatmul.mubr.bf16.gmra.mrb[0].mxu0 %v1748
  %v2035 = vpop.f32.mrb[0].mxu0
  %v2036 = vadd.f32 %v1648, %v2035
  %v2037 = vpop.f32.mrb[0].mxu0
  %v2038 = vpop.f32.mrb[0].mxu0
  %v2039 = vadd.f32 %v1651, %v2038
  %v2040 = vpop.f32.mrb[0].mxu0
  %2041 = vdwg.mxu0
  %v2042 = vld [vmem:[#allocation2 + $0x9] sm:$0xff]
  %v2043 = vld [vmem:[#allocation2 + $0x11] sm:$0xff]
  %v2044 = vld [vmem:[#allocation2 + $0x29] sm:$0xff]
  %v2045 = vld [vmem:[#allocation2 + $0x31] sm:$0xff]
  %v2046 = vld [vmem:[#allocation2 + $0x49] sm:$0xff]
  %v2047 = vld [vmem:[#allocation2 + $0x51] sm:$0xff]
  %v2048 = vld [vmem:[#allocation2 + $0x69] sm:$0xff]
  %v2049 = vld [vmem:[#allocation2 + $0x71] sm:$0xff]
  %v2050 = vld [vmem:[#allocation2 + $0x89] sm:$0xff]
  %v2051 = vld [vmem:[#allocation2 + $0x91] sm:$0xff]
  %v2052 = vld [vmem:[#allocation2 + $0xa9] sm:$0xff]
  %v2053 = vld [vmem:[#allocation2 + $0xb1] sm:$0xff]
  %v2054 = vld [vmem:[#allocation2 + $0xc9] sm:$0xff]
  %v2055 = vld [vmem:[#allocation2 + $0xd1] sm:$0xff]
  %v2056 = vld [vmem:[#allocation2 + $0xe9] sm:$0xff]
  %v2057 = vld [vmem:[#allocation2 + $0xf1] sm:$0xff]
  %v2058 = vld [vmem:[#allocation2 + $0x109] sm:$0xff]
  %v2059 = vld [vmem:[#allocation2 + $0x111] sm:$0xff]
  %v2060 = vld [vmem:[#allocation2 + $0x129] sm:$0xff]
  %v2061 = vld [vmem:[#allocation2 + $0x131] sm:$0xff]
  %v2062 = vld [vmem:[#allocation2 + $0x149] sm:$0xff]
  %v2063 = vld [vmem:[#allocation2 + $0x151] sm:$0xff]
  %v2064 = vld [vmem:[#allocation2 + $0x169] sm:$0xff]
  %v2065 = vld [vmem:[#allocation2 + $0x171] sm:$0xff]
  %v2066 = vld [vmem:[#allocation2 + $0x189] sm:$0xff]
  %v2067 = vld [vmem:[#allocation2 + $0x191] sm:$0xff]
  %v2068 = vld [vmem:[#allocation2 + $0x1a9] sm:$0xff]
  %v2069 = vld [vmem:[#allocation2 + $0x1b1] sm:$0xff]
  %v2070 = vld [vmem:[#allocation2 + $0x1c9] sm:$0xff]
  %v2071 = vld [vmem:[#allocation2 + $0x1d1] sm:$0xff]
  %v2072 = vld [vmem:[#allocation2 + $0x1e9] sm:$0xff]
  %v2073 = vld [vmem:[#allocation2 + $0x1f1] sm:$0xff]
  %v2074 = vld [vmem:[#allocation2 + $0x249] sm:$0xff]
  %v2075 = vld [vmem:[#allocation2 + $0x251] sm:$0xff]
  %v2076 = vld [vmem:[#allocation2 + $0x269] sm:$0xff]
  %v2077 = vld [vmem:[#allocation2 + $0x271] sm:$0xff]
  %v2078 = vld [vmem:[#allocation2 + $0x289] sm:$0xff]
  %v2079 = vld [vmem:[#allocation2 + $0x291] sm:$0xff]
  %v2080 = vld [vmem:[#allocation2 + $0x2a9] sm:$0xff]
  %v2081 = vld [vmem:[#allocation2 + $0x2b1] sm:$0xff]
  %v2082 = vld [vmem:[#allocation2 + $0x2c9] sm:$0xff]
  %v2083 = vld [vmem:[#allocation2 + $0x2d1] sm:$0xff]
  %v2084 = vld [vmem:[#allocation2 + $0x2e9] sm:$0xff]
  %v2085 = vld [vmem:[#allocation2 + $0x2f1] sm:$0xff]
  %v2086 = vld [vmem:[#allocation2 + $0x309] sm:$0xff]
  %v2087 = vld [vmem:[#allocation2 + $0x311] sm:$0xff]
  %v2088 = vld [vmem:[#allocation2 + $0x329] sm:$0xff]
  %v2089 = vld [vmem:[#allocation2 + $0x331] sm:$0xff]
  %v2090 = vld [vmem:[#allocation2 + $0x349] sm:$0xff]
  %v2091 = vld [vmem:[#allocation2 + $0x351] sm:$0xff]
  %v2092 = vld [vmem:[#allocation2 + $0x369] sm:$0xff]
  %v2093 = vld [vmem:[#allocation2 + $0x371] sm:$0xff]
  %v2094 = vld [vmem:[#allocation2 + $0x389] sm:$0xff]
  %v2095 = vld [vmem:[#allocation2 + $0x391] sm:$0xff]
  %v2096 = vld [vmem:[#allocation2 + $0x3a9] sm:$0xff]
  %v2097 = vld [vmem:[#allocation2 + $0x3b1] sm:$0xff]
  %v2098 = vld [vmem:[#allocation2 + $0x3c9] sm:$0xff]
  %v2099 = vld [vmem:[#allocation2 + $0x3d1] sm:$0xff]
  %v2100 = vld [vmem:[#allocation2 + $0x3e9] sm:$0xff]
  %v2101 = vld [vmem:[#allocation2 + $0x3f1] sm:$0xff]
  %v2102 = vld [vmem:[#allocation2 + $0x409] sm:$0xff]
  %v2103 = vld [vmem:[#allocation2 + $0x411] sm:$0xff]
  %v2104 = vld [vmem:[#allocation2 + $0x429] sm:$0xff]
  %v2105 = vld [vmem:[#allocation2 + $0x431] sm:$0xff]
  %v2106 = vpack.c.bf16 %v2043, %v2042
  %v2107 = vpack.c.bf16 %v2045, %v2044
  %v2108 = vpack.c.bf16 %v2047, %v2046
  %v2109 = vpack.c.bf16 %v2049, %v2048
  %v2110 = vpack.c.bf16 %v2051, %v2050
  %v2111 = vpack.c.bf16 %v2053, %v2052
  %v2112 = vpack.c.bf16 %v2055, %v2054
  %v2113 = vpack.c.bf16 %v2057, %v2056
  %v2114 = vpack.c.bf16 %v2059, %v2058
  %v2115 = vpack.c.bf16 %v2061, %v2060
  %v2116 = vpack.c.bf16 %v2063, %v2062
  %v2117 = vpack.c.bf16 %v2065, %v2064
  %v2118 = vpack.c.bf16 %v2067, %v2066
  %v2119 = vpack.c.bf16 %v2069, %v2068
  %v2120 = vpack.c.bf16 %v2071, %v2070
  %v2121 = vpack.c.bf16 %v2073, %v2072
  %v2122 = vpack.c.bf16 %v2075, %v2074
  %v2123 = vpack.c.bf16 %v2077, %v2076
  %v2124 = vpack.c.bf16 %v2079, %v2078
  %v2125 = vpack.c.bf16 %v2081, %v2080
  %v2126 = vpack.c.bf16 %v2083, %v2082
  %v2127 = vpack.c.bf16 %v2085, %v2084
  %v2128 = vpack.c.bf16 %v2087, %v2086
  %v2129 = vpack.c.bf16 %v2089, %v2088
  %v2130 = vpack.c.bf16 %v2091, %v2090
  %v2131 = vpack.c.bf16 %v2093, %v2092
  %v2132 = vpack.c.bf16 %v2095, %v2094
  %v2133 = vpack.c.bf16 %v2097, %v2096
  %v2134 = vpack.c.bf16 %v2099, %v2098
  %v2135 = vpack.c.bf16 %v2101, %v2100
  %v2136 = vpack.c.bf16 %v2103, %v2102
  %v2137 = vpack.c.bf16 %v2105, %v2104
  %s2138 = scalar_lea.vmem %s1, 4
  %v2139 = vld [vmem:[%s2138] sm:$0x3]
  %v2141 = vsel %vm96, %v2106, 0
  %v2144 = vsel %vm96, %v2107, 0
  %v2147 = vsel %vm96, %v2108, 0
  %v2150 = vsel %vm96, %v2109, 0
  %v2153 = vsel %vm96, %v2110, 0
  %v2156 = vsel %vm96, %v2111, 0
  %v2159 = vsel %vm96, %v2112, 0
  %v2162 = vsel %vm96, %v2113, 0
  %v2165 = vsel %vm96, %v2114, 0
  %v2168 = vsel %vm96, %v2115, 0
  %v2171 = vsel %vm96, %v2116, 0
  %v2174 = vsel %vm96, %v2117, 0
  %v2177 = vsel %vm96, %v2118, 0
  %v2180 = vsel %vm96, %v2119, 0
  %v2183 = vsel %vm96, %v2120, 0
  %v2186 = vsel %vm96, %v2121, 0
  %v2189 = vsel %vm96, %v2122, 0
  %v2192 = vsel %vm96, %v2123, 0
  %v2195 = vsel %vm96, %v2124, 0
  %v2198 = vsel %vm96, %v2125, 0
  %v2201 = vsel %vm96, %v2126, 0
  %v2204 = vsel %vm96, %v2127, 0
  %v2207 = vsel %vm96, %v2128, 0
  %v2210 = vsel %vm96, %v2129, 0
  %v2213 = vsel %vm96, %v2130, 0
  %v2216 = vsel %vm96, %v2131, 0
  %v2219 = vsel %vm96, %v2132, 0
  %v2222 = vsel %vm96, %v2133, 0
  %v2225 = vsel %vm96, %v2134, 0
  %v2228 = vsel %vm96, %v2135, 0
  %v2231 = vsel %vm96, %v2136, 0
  %v2234 = vsel %vm96, %v2137, 0
  %v2237 = vsel %vm1361, %v2139, 0
  %2239 = vmatprep.subr.bf16.mxu0 0
  %2240 = vmatpush1.bf16.msra.mxu0 %v2237
  %2241 = vmatprep.subr.bf16.mxu0 0
  %2242 = vmatpush1.bf16.msra.mxu0 0
  %2243 = vmatprep.subr.bf16.mxu0 0
  %2244 = vmatpush1.bf16.msra.mxu0 0
  %2245 = vmatprep.subr.bf16.mxu0 0
  %2246 = vmatpush1.bf16.msra.mxu0 0
  %2247 = vmatprep.subr.bf16.mxu0 0
  %2248 = vmatpush1.bf16.msra.mxu0 0
  %2249 = vmatprep.subr.bf16.mxu0 0
  %2250 = vmatpush1.bf16.msra.mxu0 0
  %2251 = vmatprep.subr.bf16.mxu0 0
  %2252 = vmatpush1.bf16.msra.mxu0 0
  %2253 = vmatprep.subr.bf16.mxu0 0
  %2254 = vmatpush1.bf16.msra.mxu0 0
  %2255 = vmatprep.subr.bf16.mxu0 0
  %2256 = vmatpush1.bf16.msra.mxu0 0
  %2257 = vmatprep.subr.bf16.mxu0 0
  %2258 = vmatpush1.bf16.msra.mxu0 0
  %2259 = vmatprep.subr.bf16.mxu0 0
  %2260 = vmatpush1.bf16.msra.mxu0 0
  %2261 = vmatprep.subr.bf16.mxu0 0
  %2262 = vmatpush1.bf16.msra.mxu0 0
  %2263 = vmatprep.subr.bf16.mxu0 0
  %2264 = vmatpush1.bf16.msra.mxu0 0
  %2265 = vmatprep.subr.bf16.mxu0 0
  %2266 = vmatpush1.bf16.msra.mxu0 0
  %2267 = vmatprep.subr.bf16.mxu0 0
  %2268 = vmatpush1.bf16.msra.mxu0 0
  %2269 = vmatprep.subr.bf16.mxu0 0
  %2270 = vmatpush1.bf16.msra.mxu0 0
  %2271 = vmatprep.mubr.bf16.mxu0 0
  %2272 = vmatmul.mubr.bf16.gmra.mrb[0].mxu0 %v2141
  %v2273 = vpop.f32.mrb[0].mxu0
  %v2274 = vadd.f32 0.0, %v2273
  %v2275 = vpop.f32.mrb[0].mxu0
  %v2276 = vpop.f32.mrb[0].mxu0
  %v2277 = vadd.f32 0.0, %v2276
  %v2278 = vpop.f32.mrb[0].mxu0
  %2279 = vmatprep.mubr.bf16.mxu0 0
  %2280 = vmatmul.mubr.bf16.gmra.mrb[0].mxu0 %v2144
  %v2281 = vpop.f32.mrb[0].mxu0
  %v2282 = vadd.f32 0.0, %v2281
  %v2283 = vpop.f32.mrb[0].mxu0
  %v2284 = vpop.f32.mrb[0].mxu0
  %v2285 = vadd.f32 0.0, %v2284
  %v2286 = vpop.f32.mrb[0].mxu0
  %2287 = vmatprep.mubr.bf16.mxu0 0
  %2288 = vmatmul.mubr.bf16.gmra.mrb[0].mxu0 %v2147
  %v2289 = vpop.f32.mrb[0].mxu0
  %v2290 = vadd.f32 0.0, %v2289
  %v2291 = vpop.f32.mrb[0].mxu0
  %v2292 = vpop.f32.mrb[0].mxu0
  %v2293 = vadd.f32 0.0, %v2292
  %v2294 = vpop.f32.mrb[0].mxu0
  %2295 = vmatprep.mubr.bf16.mxu0 0
  %2296 = vmatmul.mubr.bf16.gmra.mrb[0].mxu0 %v2150
  %v2297 = vpop.f32.mrb[0].mxu0
  %v2298 = vadd.f32 0.0, %v2297
  %v2299 = vpop.f32.mrb[0].mxu0
  %v2300 = vpop.f32.mrb[0].mxu0
  %v2301 = vadd.f32 0.0, %v2300
  %v2302 = vpop.f32.mrb[0].mxu0
  %2303 = vmatprep.mubr.bf16.mxu0 0
  %2304 = vmatmul.mubr.bf16.gmra.mrb[0].mxu0 %v2153
  %v2305 = vpop.f32.mrb[0].mxu0
  %v2306 = vadd.f32 0.0, %v2305
  %v2307 = vpop.f32.mrb[0].mxu0
  %v2308 = vpop.f32.mrb[0].mxu0
  %v2309 = vadd.f32 0.0, %v2308
  %v2310 = vpop.f32.mrb[0].mxu0
  %2311 = vmatprep.mubr.bf16.mxu0 0
  %2312 = vmatmul.mubr.bf16.gmra.mrb[0].mxu0 %v2156
  %v2313 = vpop.f32.mrb[0].mxu0
  %v2314 = vadd.f32 0.0, %v2313
  %v2315 = vpop.f32.mrb[0].mxu0
  %v2316 = vpop.f32.mrb[0].mxu0
  %v2317 = vadd.f32 0.0, %v2316
  %v2318 = vpop.f32.mrb[0].mxu0
  %2319 = vmatprep.mubr.bf16.mxu0 0
  %2320 = vmatmul.mubr.bf16.gmra.mrb[0].mxu0 %v2159
  %v2321 = vpop.f32.mrb[0].mxu0
  %v2322 = vadd.f32 0.0, %v2321
  %v2323 = vpop.f32.mrb[0].mxu0
  %v2324 = vpop.f32.mrb[0].mxu0
  %v2325 = vadd.f32 0.0, %v2324
  %v2326 = vpop.f32.mrb[0].mxu0
  %2327 = vmatprep.mubr.bf16.mxu0 0
  %2328 = vmatmul.mubr.bf16.gmra.mrb[0].mxu0 %v2162
  %v2329 = vpop.f32.mrb[0].mxu0
  %v2330 = vadd.f32 0.0, %v2329
  %v2331 = vpop.f32.mrb[0].mxu0
  %v2332 = vpop.f32.mrb[0].mxu0
  %v2333 = vadd.f32 0.0, %v2332
  %v2334 = vpop.f32.mrb[0].mxu0
  %2335 = vmatprep.mubr.bf16.mxu0 0
  %2336 = vmatmul.mubr.bf16.gmra.mrb[0].mxu0 %v2165
  %v2337 = vpop.f32.mrb[0].mxu0
  %v2338 = vadd.f32 0.0, %v2337
  %v2339 = vpop.f32.mrb[0].mxu0
  %v2340 = vpop.f32.mrb[0].mxu0
  %v2341 = vadd.f32 0.0, %v2340
  %v2342 = vpop.f32.mrb[0].mxu0
  %2343 = vmatprep.mubr.bf16.mxu0 0
  %2344 = vmatmul.mubr.bf16.gmra.mrb[0].mxu0 %v2168
  %v2345 = vpop.f32.mrb[0].mxu0
  %v2346 = vadd.f32 0.0, %v2345
  %v2347 = vpop.f32.mrb[0].mxu0
  %v2348 = vpop.f32.mrb[0].mxu0
  %v2349 = vadd.f32 0.0, %v2348
  %v2350 = vpop.f32.mrb[0].mxu0
  %2351 = vmatprep.mubr.bf16.mxu0 0
  %2352 = vmatmul.mubr.bf16.gmra.mrb[0].mxu0 %v2171
  %v2353 = vpop.f32.mrb[0].mxu0
  %v2354 = vadd.f32 0.0, %v2353
  %v2355 = vpop.f32.mrb[0].mxu0
  %v2356 = vpop.f32.mrb[0].mxu0
  %v2357 = vadd.f32 0.0, %v2356
  %v2358 = vpop.f32.mrb[0].mxu0
  %2359 = vmatprep.mubr.bf16.mxu0 0
  %2360 = vmatmul.mubr.bf16.gmra.mrb[0].mxu0 %v2174
  %v2361 = vpop.f32.mrb[0].mxu0
  %v2362 = vadd.f32 0.0, %v2361
  %v2363 = vpop.f32.mrb[0].mxu0
  %v2364 = vpop.f32.mrb[0].mxu0
  %v2365 = vadd.f32 0.0, %v2364
  %v2366 = vpop.f32.mrb[0].mxu0
  %2367 = vmatprep.mubr.bf16.mxu0 0
  %2368 = vmatmul.mubr.bf16.gmra.mrb[0].mxu0 %v2177
  %v2369 = vpop.f32.mrb[0].mxu0
  %v2370 = vadd.f32 0.0, %v2369
  %v2371 = vpop.f32.mrb[0].mxu0
  %v2372 = vpop.f32.mrb[0].mxu0
  %v2373 = vadd.f32 0.0, %v2372
  %v2374 = vpop.f32.mrb[0].mxu0
  %2375 = vmatprep.mubr.bf16.mxu0 0
  %2376 = vmatmul.mubr.bf16.gmra.mrb[0].mxu0 %v2180
  %v2377 = vpop.f32.mrb[0].mxu0
  %v2378 = vadd.f32 0.0, %v2377
  %v2379 = vpop.f32.mrb[0].mxu0
  %v2380 = vpop.f32.mrb[0].mxu0
  %v2381 = vadd.f32 0.0, %v2380
  %v2382 = vpop.f32.mrb[0].mxu0
  %2383 = vmatprep.mubr.bf16.mxu0 0
  %2384 = vmatmul.mubr.bf16.gmra.mrb[0].mxu0 %v2183
  %v2385 = vpop.f32.mrb[0].mxu0
  %v2386 = vadd.f32 0.0, %v2385
  %v2387 = vpop.f32.mrb[0].mxu0
  %v2388 = vpop.f32.mrb[0].mxu0
  %v2389 = vadd.f32 0.0, %v2388
  %v2390 = vpop.f32.mrb[0].mxu0
  %2391 = vmatprep.mubr.bf16.mxu0 0
  %2392 = vmatmul.mubr.bf16.gmra.mrb[0].mxu0 %v2186
  %v2393 = vpop.f32.mrb[0].mxu0
  %v2394 = vadd.f32 0.0, %v2393
  %v2395 = vpop.f32.mrb[0].mxu0
  %v2396 = vpop.f32.mrb[0].mxu0
  %v2397 = vadd.f32 0.0, %v2396
  %v2398 = vpop.f32.mrb[0].mxu0
  %2399 = vmatprep.mubr.bf16.mxu0 0
  %2400 = vmatmul.mubr.bf16.gmra.mrb[0].mxu0 %v2189
  %v2401 = vpop.f32.mrb[0].mxu0
  %v2402 = vadd.f32 0.0, %v2401
  %v2403 = vpop.f32.mrb[0].mxu0
  %v2404 = vpop.f32.mrb[0].mxu0
  %v2405 = vadd.f32 0.0, %v2404
  %v2406 = vpop.f32.mrb[0].mxu0
  %2407 = vmatprep.mubr.bf16.mxu0 0
  %2408 = vmatmul.mubr.bf16.gmra.mrb[0].mxu0 %v2192
  %v2409 = vpop.f32.mrb[0].mxu0
  %v2410 = vadd.f32 0.0, %v2409
  %v2411 = vpop.f32.mrb[0].mxu0
  %v2412 = vpop.f32.mrb[0].mxu0
  %v2413 = vadd.f32 0.0, %v2412
  %v2414 = vpop.f32.mrb[0].mxu0
  %2415 = vmatprep.mubr.bf16.mxu0 0
  %2416 = vmatmul.mubr.bf16.gmra.mrb[0].mxu0 %v2195
  %v2417 = vpop.f32.mrb[0].mxu0
  %v2418 = vadd.f32 0.0, %v2417
  %v2419 = vpop.f32.mrb[0].mxu0
  %v2420 = vpop.f32.mrb[0].mxu0
  %v2421 = vadd.f32 0.0, %v2420
  %v2422 = vpop.f32.mrb[0].mxu0
  %2423 = vmatprep.mubr.bf16.mxu0 0
  %2424 = vmatmul.mubr.bf16.gmra.mrb[0].mxu0 %v2198
  %v2425 = vpop.f32.mrb[0].mxu0
  %v2426 = vadd.f32 0.0, %v2425
  %v2427 = vpop.f32.mrb[0].mxu0
  %v2428 = vpop.f32.mrb[0].mxu0
  %v2429 = vadd.f32 0.0, %v2428
  %v2430 = vpop.f32.mrb[0].mxu0
  %2431 = vmatprep.mubr.bf16.mxu0 0
  %2432 = vmatmul.mubr.bf16.gmra.mrb[0].mxu0 %v2201
  %v2433 = vpop.f32.mrb[0].mxu0
  %v2434 = vadd.f32 0.0, %v2433
  %v2435 = vpop.f32.mrb[0].mxu0
  %v2436 = vpop.f32.mrb[0].mxu0
  %v2437 = vadd.f32 0.0, %v2436
  %v2438 = vpop.f32.mrb[0].mxu0
  %2439 = vmatprep.mubr.bf16.mxu0 0
  %2440 = vmatmul.mubr.bf16.gmra.mrb[0].mxu0 %v2204
  %v2441 = vpop.f32.mrb[0].mxu0
  %v2442 = vadd.f32 0.0, %v2441
  %v2443 = vpop.f32.mrb[0].mxu0
  %v2444 = vpop.f32.mrb[0].mxu0
  %v2445 = vadd.f32 0.0, %v2444
  %v2446 = vpop.f32.mrb[0].mxu0
  %2447 = vmatprep.mubr.bf16.mxu0 0
  %2448 = vmatmul.mubr.bf16.gmra.mrb[0].mxu0 %v2207
  %v2449 = vpop.f32.mrb[0].mxu0
  %v2450 = vadd.f32 0.0, %v2449
  %v2451 = vpop.f32.mrb[0].mxu0
  %v2452 = vpop.f32.mrb[0].mxu0
  %v2453 = vadd.f32 0.0, %v2452
  %v2454 = vpop.f32.mrb[0].mxu0
  %2455 = vmatprep.mubr.bf16.mxu0 0
  %2456 = vmatmul.mubr.bf16.gmra.mrb[0].mxu0 %v2210
  %v2457 = vpop.f32.mrb[0].mxu0
  %v2458 = vadd.f32 0.0, %v2457
  %v2459 = vpop.f32.mrb[0].mxu0
  %v2460 = vpop.f32.mrb[0].mxu0
  %v2461 = vadd.f32 0.0, %v2460
  %v2462 = vpop.f32.mrb[0].mxu0
  %2463 = vmatprep.mubr.bf16.mxu0 0
  %2464 = vmatmul.mubr.bf16.gmra.mrb[0].mxu0 %v2213
  %v2465 = vpop.f32.mrb[0].mxu0
  %v2466 = vadd.f32 0.0, %v2465
  %v2467 = vpop.f32.mrb[0].mxu0
  %v2468 = vpop.f32.mrb[0].mxu0
  %v2469 = vadd.f32 0.0, %v2468
  %v2470 = vpop.f32.mrb[0].mxu0
  %2471 = vmatprep.mubr.bf16.mxu0 0
  %2472 = vmatmul.mubr.bf16.gmra.mrb[0].mxu0 %v2216
  %v2473 = vpop.f32.mrb[0].mxu0
  %v2474 = vadd.f32 0.0, %v2473
  %v2475 = vpop.f32.mrb[0].mxu0
  %v2476 = vpop.f32.mrb[0].mxu0
  %v2477 = vadd.f32 0.0, %v2476
  %v2478 = vpop.f32.mrb[0].mxu0
  %2479 = vmatprep.mubr.bf16.mxu0 0
  %2480 = vmatmul.mubr.bf16.gmra.mrb[0].mxu0 %v2219
  %v2481 = vpop.f32.mrb[0].mxu0
  %v2482 = vadd.f32 0.0, %v2481
  %v2483 = vpop.f32.mrb[0].mxu0
  %v2484 = vpop.f32.mrb[0].mxu0
  %v2485 = vadd.f32 0.0, %v2484
  %v2486 = vpop.f32.mrb[0].mxu0
  %2487 = vmatprep.mubr.bf16.mxu0 0
  %2488 = vmatmul.mubr.bf16.gmra.mrb[0].mxu0 %v2222
  %v2489 = vpop.f32.mrb[0].mxu0
  %v2490 = vadd.f32 0.0, %v2489
  %v2491 = vpop.f32.mrb[0].mxu0
  %v2492 = vpop.f32.mrb[0].mxu0
  %v2493 = vadd.f32 0.0, %v2492
  %v2494 = vpop.f32.mrb[0].mxu0
  %2495 = vmatprep.mubr.bf16.mxu0 0
  %2496 = vmatmul.mubr.bf16.gmra.mrb[0].mxu0 %v2225
  %v2497 = vpop.f32.mrb[0].mxu0
  %v2498 = vadd.f32 0.0, %v2497
  %v2499 = vpop.f32.mrb[0].mxu0
  %v2500 = vpop.f32.mrb[0].mxu0
  %v2501 = vadd.f32 0.0, %v2500
  %v2502 = vpop.f32.mrb[0].mxu0
  %2503 = vmatprep.mubr.bf16.mxu0 0
  %2504 = vmatmul.mubr.bf16.gmra.mrb[0].mxu0 %v2228
  %v2505 = vpop.f32.mrb[0].mxu0
  %v2506 = vadd.f32 0.0, %v2505
  %v2507 = vpop.f32.mrb[0].mxu0
  %v2508 = vpop.f32.mrb[0].mxu0
  %v2509 = vadd.f32 0.0, %v2508
  %v2510 = vpop.f32.mrb[0].mxu0
  %2511 = vmatprep.mubr.bf16.mxu0 0
  %2512 = vmatmul.mubr.bf16.gmra.mrb[0].mxu0 %v2231
  %v2513 = vpop.f32.mrb[0].mxu0
  %v2514 = vadd.f32 0.0, %v2513
  %v2515 = vpop.f32.mrb[0].mxu0
  %v2516 = vpop.f32.mrb[0].mxu0
  %v2517 = vadd.f32 0.0, %v2516
  %v2518 = vpop.f32.mrb[0].mxu0
  %2519 = vmatprep.mubr.bf16.mxu0 0
  %2520 = vmatmul.mubr.bf16.gmra.mrb[0].mxu0 %v2234
  %v2521 = vpop.f32.mrb[0].mxu0
  %v2522 = vadd.f32 0.0, %v2521
  %v2523 = vpop.f32.mrb[0].mxu0
  %v2524 = vpop.f32.mrb[0].mxu0
  %v2525 = vadd.f32 0.0, %v2524
  %v2526 = vpop.f32.mrb[0].mxu0
  %2527 = vdwg.mxu0
  %v2528 = vadd.f32 %v1788, %v2274
  %v2529 = vadd.f32 %v1791, %v2277
  %v2530 = vadd.f32 %v1796, %v2282
  %v2531 = vadd.f32 %v1799, %v2285
  %v2532 = vadd.f32 %v1804, %v2290
  %v2533 = vadd.f32 %v1807, %v2293
  %v2534 = vadd.f32 %v1812, %v2298
  %v2535 = vadd.f32 %v1815, %v2301
  %v2536 = vadd.f32 %v1820, %v2306
  %v2537 = vadd.f32 %v1823, %v2309
  %v2538 = vadd.f32 %v1828, %v2314
  %v2539 = vadd.f32 %v1831, %v2317
  %v2540 = vadd.f32 %v1836, %v2322
  %v2541 = vadd.f32 %v1839, %v2325
  %v2542 = vadd.f32 %v1844, %v2330
  %v2543 = vadd.f32 %v1847, %v2333
  %v2544 = vadd.f32 %v1852, %v2338
  %v2545 = vadd.f32 %v1855, %v2341
  %v2546 = vadd.f32 %v1860, %v2346
  %v2547 = vadd.f32 %v1863, %v2349
  %v2548 = vadd.f32 %v1868, %v2354
  %v2549 = vadd.f32 %v1871, %v2357
  %v2550 = vadd.f32 %v1876, %v2362
  %v2551 = vadd.f32 %v1879, %v2365
  %v2552 = vadd.f32 %v1884, %v2370
  %v2553 = vadd.f32 %v1887, %v2373
  %v2554 = vadd.f32 %v1892, %v2378
  %v2555 = vadd.f32 %v1895, %v2381
  %v2556 = vadd.f32 %v1900, %v2386
  %v2557 = vadd.f32 %v1903, %v2389
  %v2558 = vadd.f32 %v1908, %v2394
  %v2559 = vadd.f32 %v1911, %v2397
  %v2560 = vadd.f32 %v1916, %v2402
  %v2561 = vadd.f32 %v1919, %v2405
  %v2562 = vadd.f32 %v1924, %v2410
  %v2563 = vadd.f32 %v1927, %v2413
  %v2564 = vadd.f32 %v1932, %v2418
  %v2565 = vadd.f32 %v1935, %v2421
  %v2566 = vadd.f32 %v1940, %v2426
  %v2567 = vadd.f32 %v1943, %v2429
  %v2568 = vadd.f32 %v1948, %v2434
  %v2569 = vadd.f32 %v1951, %v2437
  %v2570 = vadd.f32 %v1956, %v2442
  %v2571 = vadd.f32 %v1959, %v2445
  %v2572 = vadd.f32 %v1964, %v2450
  %v2573 = vadd.f32 %v1967, %v2453
  %v2574 = vadd.f32 %v1972, %v2458
  %v2575 = vadd.f32 %v1975, %v2461
  %v2576 = vadd.f32 %v1980, %v2466
  %v2577 = vadd.f32 %v1983, %v2469
  %v2578 = vadd.f32 %v1988, %v2474
  %v2579 = vadd.f32 %v1991, %v2477
  %v2580 = vadd.f32 %v1996, %v2482
  %v2581 = vadd.f32 %v1999, %v2485
  %v2582 = vadd.f32 %v2004, %v2490
  %v2583 = vadd.f32 %v2007, %v2493
  %v2584 = vadd.f32 %v2012, %v2498
  %v2585 = vadd.f32 %v2015, %v2501
  %v2586 = vadd.f32 %v2020, %v2506
  %v2587 = vadd.f32 %v2023, %v2509
  %v2588 = vadd.f32 %v2028, %v2514
  %v2589 = vadd.f32 %v2031, %v2517
  %v2590 = vadd.f32 %v2036, %v2522
  %v2591 = vadd.f32 %v2039, %v2525
  %v2592 = vld [vmem:[%s941 + $0x7] sm:$0xff]
  %v2593 = vld [vmem:[%s941 + $0xf] sm:$0xff]
  %v2594 = vld [vmem:[%s941 + $0x27] sm:$0xff]
  %v2595 = vld [vmem:[%s941 + $0x2f] sm:$0xff]
  %v2596 = vld [vmem:[%s941 + $0x47] sm:$0xff]
  %v2597 = vld [vmem:[%s941 + $0x4f] sm:$0xff]
  %v2598 = vld [vmem:[%s941 + $0x67] sm:$0xff]
  %v2599 = vld [vmem:[%s941 + $0x6f] sm:$0xff]
  %v2600 = vld [vmem:[%s941 + $0x87] sm:$0xff]
  %v2601 = vld [vmem:[%s941 + $0x8f] sm:$0xff]
  %v2602 = vld [vmem:[%s941 + $0xa7] sm:$0xff]
  %v2603 = vld [vmem:[%s941 + $0xaf] sm:$0xff]
  %v2604 = vld [vmem:[%s941 + $0xc7] sm:$0xff]
  %v2605 = vld [vmem:[%s941 + $0xcf] sm:$0xff]
  %v2606 = vld [vmem:[%s941 + $0xe7] sm:$0xff]
  %v2607 = vld [vmem:[%s941 + $0xef] sm:$0xff]
  %v2608 = vld [vmem:[%s941 + $0x107] sm:$0xff]
  %v2609 = vld [vmem:[%s941 + $0x10f] sm:$0xff]
  %v2610 = vld [vmem:[%s941 + $0x127] sm:$0xff]
  %v2611 = vld [vmem:[%s941 + $0x12f] sm:$0xff]
  %v2612 = vld [vmem:[%s941 + $0x147] sm:$0xff]
  %v2613 = vld [vmem:[%s941 + $0x14f] sm:$0xff]
  %v2614 = vld [vmem:[%s941 + $0x167] sm:$0xff]
  %v2615 = vld [vmem:[%s941 + $0x16f] sm:$0xff]
  %v2616 = vld [vmem:[%s941 + $0x187] sm:$0xff]
  %v2617 = vld [vmem:[%s941 + $0x18f] sm:$0xff]
  %v2618 = vld [vmem:[%s941 + $0x1a7] sm:$0xff]
  %v2619 = vld [vmem:[%s941 + $0x1af] sm:$0xff]
  %v2620 = vld [vmem:[%s941 + $0x1c7] sm:$0xff]
  %v2621 = vld [vmem:[%s941 + $0x1cf] sm:$0xff]
  %v2622 = vld [vmem:[%s941 + $0x1e7] sm:$0xff]
  %v2623 = vld [vmem:[%s941 + $0x1ef] sm:$0xff]
  %v2624 = vld [vmem:[%s941 + $0x247] sm:$0xff]
  %v2625 = vld [vmem:[%s941 + $0x24f] sm:$0xff]
  %v2626 = vld [vmem:[%s941 + $0x267] sm:$0xff]
  %v2627 = vld [vmem:[%s941 + $0x26f] sm:$0xff]
  %v2628 = vld [vmem:[%s941 + $0x287] sm:$0xff]
  %v2629 = vld [vmem:[%s941 + $0x28f] sm:$0xff]
  %v2630 = vld [vmem:[%s941 + $0x2a7] sm:$0xff]
  %v2631 = vld [vmem:[%s941 + $0x2af] sm:$0xff]
  %v2632 = vld [vmem:[%s941 + $0x2c7] sm:$0xff]
  %v2633 = vld [vmem:[%s941 + $0x2cf] sm:$0xff]
  %v2634 = vld [vmem:[%s941 + $0x2e7] sm:$0xff]
  %v2635 = vld [vmem:[%s941 + $0x2ef] sm:$0xff]
  %v2636 = vld [vmem:[%s941 + $0x307] sm:$0xff]
  %v2637 = vld [vmem:[%s941 + $0x30f] sm:$0xff]
  %v2638 = vld [vmem:[%s941 + $0x327] sm:$0xff]
  %v2639 = vld [vmem:[%s941 + $0x32f] sm:$0xff]
  %v2640 = vld [vmem:[%s941 + $0x347] sm:$0xff]
  %v2641 = vld [vmem:[%s941 + $0x34f] sm:$0xff]
  %v2642 = vld [vmem:[%s941 + $0x367] sm:$0xff]
  %v2643 = vld [vmem:[%s941 + $0x36f] sm:$0xff]
  %v2644 = vld [vmem:[%s941 + $0x387] sm:$0xff]
  %v2645 = vld [vmem:[%s941 + $0x38f] sm:$0xff]
  %v2646 = vld [vmem:[%s941 + $0x3a7] sm:$0xff]
  %v2647 = vld [vmem:[%s941 + $0x3af] sm:$0xff]
  %v2648 = vld [vmem:[%s941 + $0x3c7] sm:$0xff]
  %v2649 = vld [vmem:[%s941 + $0x3cf] sm:$0xff]
  %v2650 = vld [vmem:[%s941 + $0x3e7] sm:$0xff]
  %v2651 = vld [vmem:[%s941 + $0x3ef] sm:$0xff]
  %v2652 = vld [vmem:[%s941 + $0x407] sm:$0xff]
  %v2653 = vld [vmem:[%s941 + $0x40f] sm:$0xff]
  %v2654 = vld [vmem:[%s941 + $0x427] sm:$0xff]
  %v2655 = vld [vmem:[%s941 + $0x42f] sm:$0xff]
  %v2656 = vpack.c.bf16 %v2593, %v2592
  %v2657 = vpack.c.bf16 %v2595, %v2594
  %v2658 = vpack.c.bf16 %v2597, %v2596
  %v2659 = vpack.c.bf16 %v2599, %v2598
  %v2660 = vpack.c.bf16 %v2601, %v2600
  %v2661 = vpack.c.bf16 %v2603, %v2602
  %v2662 = vpack.c.bf16 %v2605, %v2604
  %v2663 = vpack.c.bf16 %v2607, %v2606
  %v2664 = vpack.c.bf16 %v2609, %v2608
  %v2665 = vpack.c.bf16 %v2611, %v2610
  %v2666 = vpack.c.bf16 %v2613, %v2612
  %v2667 = vpack.c.bf16 %v2615, %v2614
  %v2668 = vpack.c.bf16 %v2617, %v2616
  %v2669 = vpack.c.bf16 %v2619, %v2618
  %v2670 = vpack.c.bf16 %v2621, %v2620
  %v2671 = vpack.c.bf16 %v2623, %v2622
  %v2672 = vpack.c.bf16 %v2625, %v2624
  %v2673 = vpack.c.bf16 %v2627, %v2626
  %v2674 = vpack.c.bf16 %v2629, %v2628
  %v2675 = vpack.c.bf16 %v2631, %v2630
  %v2676 = vpack.c.bf16 %v2633, %v2632
  %v2677 = vpack.c.bf16 %v2635, %v2634
  %v2678 = vpack.c.bf16 %v2637, %v2636
  %v2679 = vpack.c.bf16 %v2639, %v2638
  %v2680 = vpack.c.bf16 %v2641, %v2640
  %v2681 = vpack.c.bf16 %v2643, %v2642
  %v2682 = vpack.c.bf16 %v2645, %v2644
  %v2683 = vpack.c.bf16 %v2647, %v2646
  %v2684 = vpack.c.bf16 %v2649, %v2648
  %v2685 = vpack.c.bf16 %v2651, %v2650
  %v2686 = vpack.c.bf16 %v2653, %v2652
  %v2687 = vpack.c.bf16 %v2655, %v2654
  %s2688 = scalar_lea.vmem %s1, 6
  %v2689 = vld [vmem:[%s2688] sm:$0x3]
  %v2691 = vsel %vm96, %v2656, 0
  %v2694 = vsel %vm96, %v2657, 0
  %v2697 = vsel %vm96, %v2658, 0
  %v2700 = vsel %vm96, %v2659, 0
  %v2703 = vsel %vm96, %v2660, 0
  %v2706 = vsel %vm96, %v2661, 0
  %v2709 = vsel %vm96, %v2662, 0
  %v2712 = vsel %vm96, %v2663, 0
  %v2715 = vsel %vm96, %v2664, 0
  %v2718 = vsel %vm96, %v2665, 0
  %v2721 = vsel %vm96, %v2666, 0
  %v2724 = vsel %vm96, %v2667, 0
  %v2727 = vsel %vm96, %v2668, 0
  %v2730 = vsel %vm96, %v2669, 0
  %v2733 = vsel %vm96, %v2670, 0
  %v2736 = vsel %vm96, %v2671, 0
  %v2739 = vsel %vm96, %v2672, 0
  %v2742 = vsel %vm96, %v2673, 0
  %v2745 = vsel %vm96, %v2674, 0
  %v2748 = vsel %vm96, %v2675, 0
  %v2751 = vsel %vm96, %v2676, 0
  %v2754 = vsel %vm96, %v2677, 0
  %v2757 = vsel %vm96, %v2678, 0
  %v2760 = vsel %vm96, %v2679, 0
  %v2763 = vsel %vm96, %v2680, 0
  %v2766 = vsel %vm96, %v2681, 0
  %v2769 = vsel %vm96, %v2682, 0
  %v2772 = vsel %vm96, %v2683, 0
  %v2775 = vsel %vm96, %v2684, 0
  %v2778 = vsel %vm96, %v2685, 0
  %v2781 = vsel %vm96, %v2686, 0
  %v2784 = vsel %vm96, %v2687, 0
  %v2787 = vsel %vm1361, %v2689, 0
  %2789 = vmatprep.subr.bf16.mxu0 0
  %2790 = vmatpush1.bf16.msra.mxu0 %v2787
  %2791 = vmatprep.subr.bf16.mxu0 0
  %2792 = vmatpush1.bf16.msra.mxu0 0
  %2793 = vmatprep.subr.bf16.mxu0 0
  %2794 = vmatpush1.bf16.msra.mxu0 0
  %2795 = vmatprep.subr.bf16.mxu0 0
  %2796 = vmatpush1.bf16.msra.mxu0 0
  %2797 = vmatprep.subr.bf16.mxu0 0
  %2798 = vmatpush1.bf16.msra.mxu0 0
  %2799 = vmatprep.subr.bf16.mxu0 0
  %2800 = vmatpush1.bf16.msra.mxu0 0
  %2801 = vmatprep.subr.bf16.mxu0 0
  %2802 = vmatpush1.bf16.msra.mxu0 0
  %2803 = vmatprep.subr.bf16.mxu0 0
  %2804 = vmatpush1.bf16.msra.mxu0 0
  %2805 = vmatprep.subr.bf16.mxu0 0
  %2806 = vmatpush1.bf16.msra.mxu0 0
  %2807 = vmatprep.subr.bf16.mxu0 0
  %2808 = vmatpush1.bf16.msra.mxu0 0
  %2809 = vmatprep.subr.bf16.mxu0 0
  %2810 = vmatpush1.bf16.msra.mxu0 0
  %2811 = vmatprep.subr.bf16.mxu0 0
  %2812 = vmatpush1.bf16.msra.mxu0 0
  %2813 = vmatprep.subr.bf16.mxu0 0
  %2814 = vmatpush1.bf16.msra.mxu0 0
  %2815 = vmatprep.subr.bf16.mxu0 0
  %2816 = vmatpush1.bf16.msra.mxu0 0
  %2817 = vmatprep.subr.bf16.mxu0 0
  %2818 = vmatpush1.bf16.msra.mxu0 0
  %2819 = vmatprep.subr.bf16.mxu0 0
  %2820 = vmatpush1.bf16.msra.mxu0 0
  %2821 = vmatprep.mubr.bf16.mxu0 0
  %2822 = vmatmul.mubr.bf16.gmra.mrb[0].mxu0 %v2691
  %v2823 = vpop.f32.mrb[0].mxu0
  %v2824 = vadd.f32 0.0, %v2823
  %v2825 = vpop.f32.mrb[0].mxu0
  %v2826 = vpop.f32.mrb[0].mxu0
  %v2827 = vadd.f32 0.0, %v2826
  %v2828 = vpop.f32.mrb[0].mxu0
  %2829 = vmatprep.mubr.bf16.mxu0 0
  %2830 = vmatmul.mubr.bf16.gmra.mrb[0].mxu0 %v2694
  %v2831 = vpop.f32.mrb[0].mxu0
  %v2832 = vadd.f32 0.0, %v2831
  %v2833 = vpop.f32.mrb[0].mxu0
  %v2834 = vpop.f32.mrb[0].mxu0
  %v2835 = vadd.f32 0.0, %v2834
  %v2836 = vpop.f32.mrb[0].mxu0
  %2837 = vmatprep.mubr.bf16.mxu0 0
  %2838 = vmatmul.mubr.bf16.gmra.mrb[0].mxu0 %v2697
  %v2839 = vpop.f32.mrb[0].mxu0
  %v2840 = vadd.f32 0.0, %v2839
  %v2841 = vpop.f32.mrb[0].mxu0
  %v2842 = vpop.f32.mrb[0].mxu0
  %v2843 = vadd.f32 0.0, %v2842
  %v2844 = vpop.f32.mrb[0].mxu0
  %2845 = vmatprep.mubr.bf16.mxu0 0
  %2846 = vmatmul.mubr.bf16.gmra.mrb[0].mxu0 %v2700
  %v2847 = vpop.f32.mrb[0].mxu0
  %v2848 = vadd.f32 0.0, %v2847
  %v2849 = vpop.f32.mrb[0].mxu0
  %v2850 = vpop.f32.mrb[0].mxu0
  %v2851 = vadd.f32 0.0, %v2850
  %v2852 = vpop.f32.mrb[0].mxu0
  %2853 = vmatprep.mubr.bf16.mxu0 0
  %2854 = vmatmul.mubr.bf16.gmra.mrb[0].mxu0 %v2703
  %v2855 = vpop.f32.mrb[0].mxu0
  %v2856 = vadd.f32 0.0, %v2855
  %v2857 = vpop.f32.mrb[0].mxu0
  %v2858 = vpop.f32.mrb[0].mxu0
  %v2859 = vadd.f32 0.0, %v2858
  %v2860 = vpop.f32.mrb[0].mxu0
  %2861 = vmatprep.mubr.bf16.mxu0 0
  %2862 = vmatmul.mubr.bf16.gmra.mrb[0].mxu0 %v2706
  %v2863 = vpop.f32.mrb[0].mxu0
  %v2864 = vadd.f32 0.0, %v2863
  %v2865 = vpop.f32.mrb[0].mxu0
  %v2866 = vpop.f32.mrb[0].mxu0
  %v2867 = vadd.f32 0.0, %v2866
  %v2868 = vpop.f32.mrb[0].mxu0
  %2869 = vmatprep.mubr.bf16.mxu0 0
  %2870 = vmatmul.mubr.bf16.gmra.mrb[0].mxu0 %v2709
  %v2871 = vpop.f32.mrb[0].mxu0
  %v2872 = vadd.f32 0.0, %v2871
  %v2873 = vpop.f32.mrb[0].mxu0
  %v2874 = vpop.f32.mrb[0].mxu0
  %v2875 = vadd.f32 0.0, %v2874
  %v2876 = vpop.f32.mrb[0].mxu0
  %2877 = vmatprep.mubr.bf16.mxu0 0
  %2878 = vmatmul.mubr.bf16.gmra.mrb[0].mxu0 %v2712
  %v2879 = vpop.f32.mrb[0].mxu0
  %v2880 = vadd.f32 0.0, %v2879
  %v2881 = vpop.f32.mrb[0].mxu0
  %v2882 = vpop.f32.mrb[0].mxu0
  %v2883 = vadd.f32 0.0, %v2882
  %v2884 = vpop.f32.mrb[0].mxu0
  %2885 = vmatprep.mubr.bf16.mxu0 0
  %2886 = vmatmul.mubr.bf16.gmra.mrb[0].mxu0 %v2715
  %v2887 = vpop.f32.mrb[0].mxu0
  %v2888 = vadd.f32 0.0, %v2887
  %v2889 = vpop.f32.mrb[0].mxu0
  %v2890 = vpop.f32.mrb[0].mxu0
  %v2891 = vadd.f32 0.0, %v2890
  %v2892 = vpop.f32.mrb[0].mxu0
  %2893 = vmatprep.mubr.bf16.mxu0 0
  %2894 = vmatmul.mubr.bf16.gmra.mrb[0].mxu0 %v2718
  %v2895 = vpop.f32.mrb[0].mxu0
  %v2896 = vadd.f32 0.0, %v2895
  %v2897 = vpop.f32.mrb[0].mxu0
  %v2898 = vpop.f32.mrb[0].mxu0
  %v2899 = vadd.f32 0.0, %v2898
  %v2900 = vpop.f32.mrb[0].mxu0
  %2901 = vmatprep.mubr.bf16.mxu0 0
  %2902 = vmatmul.mubr.bf16.gmra.mrb[0].mxu0 %v2721
  %v2903 = vpop.f32.mrb[0].mxu0
  %v2904 = vadd.f32 0.0, %v2903
  %v2905 = vpop.f32.mrb[0].mxu0
  %v2906 = vpop.f32.mrb[0].mxu0
  %v2907 = vadd.f32 0.0, %v2906
  %v2908 = vpop.f32.mrb[0].mxu0
  %2909 = vmatprep.mubr.bf16.mxu0 0
  %2910 = vmatmul.mubr.bf16.gmra.mrb[0].mxu0 %v2724
  %v2911 = vpop.f32.mrb[0].mxu0
  %v2912 = vadd.f32 0.0, %v2911
  %v2913 = vpop.f32.mrb[0].mxu0
  %v2914 = vpop.f32.mrb[0].mxu0
  %v2915 = vadd.f32 0.0, %v2914
  %v2916 = vpop.f32.mrb[0].mxu0
  %2917 = vmatprep.mubr.bf16.mxu0 0
  %2918 = vmatmul.mubr.bf16.gmra.mrb[0].mxu0 %v2727
  %v2919 = vpop.f32.mrb[0].mxu0
  %v2920 = vadd.f32 0.0, %v2919
  %v2921 = vpop.f32.mrb[0].mxu0
  %v2922 = vpop.f32.mrb[0].mxu0
  %v2923 = vadd.f32 0.0, %v2922
  %v2924 = vpop.f32.mrb[0].mxu0
  %2925 = vmatprep.mubr.bf16.mxu0 0
  %2926 = vmatmul.mubr.bf16.gmra.mrb[0].mxu0 %v2730
  %v2927 = vpop.f32.mrb[0].mxu0
  %v2928 = vadd.f32 0.0, %v2927
  %v2929 = vpop.f32.mrb[0].mxu0
  %v2930 = vpop.f32.mrb[0].mxu0
  %v2931 = vadd.f32 0.0, %v2930
  %v2932 = vpop.f32.mrb[0].mxu0
  %2933 = vmatprep.mubr.bf16.mxu0 0
  %2934 = vmatmul.mubr.bf16.gmra.mrb[0].mxu0 %v2733
  %v2935 = vpop.f32.mrb[0].mxu0
  %v2936 = vadd.f32 0.0, %v2935
  %v2937 = vpop.f32.mrb[0].mxu0
  %v2938 = vpop.f32.mrb[0].mxu0
  %v2939 = vadd.f32 0.0, %v2938
  %v2940 = vpop.f32.mrb[0].mxu0
  %2941 = vmatprep.mubr.bf16.mxu0 0
  %2942 = vmatmul.mubr.bf16.gmra.mrb[0].mxu0 %v2736
  %v2943 = vpop.f32.mrb[0].mxu0
  %v2944 = vadd.f32 0.0, %v2943
  %v2945 = vpop.f32.mrb[0].mxu0
  %v2946 = vpop.f32.mrb[0].mxu0
  %v2947 = vadd.f32 0.0, %v2946
  %v2948 = vpop.f32.mrb[0].mxu0
  %2949 = vmatprep.mubr.bf16.mxu0 0
  %2950 = vmatmul.mubr.bf16.gmra.mrb[0].mxu0 %v2739
  %v2951 = vpop.f32.mrb[0].mxu0
  %v2952 = vadd.f32 0.0, %v2951
  %v2953 = vpop.f32.mrb[0].mxu0
  %v2954 = vpop.f32.mrb[0].mxu0
  %v2955 = vadd.f32 0.0, %v2954
  %v2956 = vpop.f32.mrb[0].mxu0
  %2957 = vmatprep.mubr.bf16.mxu0 0
  %2958 = vmatmul.mubr.bf16.gmra.mrb[0].mxu0 %v2742
  %v2959 = vpop.f32.mrb[0].mxu0
  %v2960 = vadd.f32 0.0, %v2959
  %v2961 = vpop.f32.mrb[0].mxu0
  %v2962 = vpop.f32.mrb[0].mxu0
  %v2963 = vadd.f32 0.0, %v2962
  %v2964 = vpop.f32.mrb[0].mxu0
  %2965 = vmatprep.mubr.bf16.mxu0 0
  %2966 = vmatmul.mubr.bf16.gmra.mrb[0].mxu0 %v2745
  %v2967 = vpop.f32.mrb[0].mxu0
  %v2968 = vadd.f32 0.0, %v2967
  %v2969 = vpop.f32.mrb[0].mxu0
  %v2970 = vpop.f32.mrb[0].mxu0
  %v2971 = vadd.f32 0.0, %v2970
  %v2972 = vpop.f32.mrb[0].mxu0
  %2973 = vmatprep.mubr.bf16.mxu0 0
  %2974 = vmatmul.mubr.bf16.gmra.mrb[0].mxu0 %v2748
  %v2975 = vpop.f32.mrb[0].mxu0
  %v2976 = vadd.f32 0.0, %v2975
  %v2977 = vpop.f32.mrb[0].mxu0
  %v2978 = vpop.f32.mrb[0].mxu0
  %v2979 = vadd.f32 0.0, %v2978
  %v2980 = vpop.f32.mrb[0].mxu0
  %2981 = vmatprep.mubr.bf16.mxu0 0
  %2982 = vmatmul.mubr.bf16.gmra.mrb[0].mxu0 %v2751
  %v2983 = vpop.f32.mrb[0].mxu0
  %v2984 = vadd.f32 0.0, %v2983
  %v2985 = vpop.f32.mrb[0].mxu0
  %v2986 = vpop.f32.mrb[0].mxu0
  %v2987 = vadd.f32 0.0, %v2986
  %v2988 = vpop.f32.mrb[0].mxu0
  %2989 = vmatprep.mubr.bf16.mxu0 0
  %2990 = vmatmul.mubr.bf16.gmra.mrb[0].mxu0 %v2754
  %v2991 = vpop.f32.mrb[0].mxu0
  %v2992 = vadd.f32 0.0, %v2991
  %v2993 = vpop.f32.mrb[0].mxu0
  %v2994 = vpop.f32.mrb[0].mxu0
  %v2995 = vadd.f32 0.0, %v2994
  %v2996 = vpop.f32.mrb[0].mxu0
  %2997 = vmatprep.mubr.bf16.mxu0 0
  %2998 = vmatmul.mubr.bf16.gmra.mrb[0].mxu0 %v2757
  %v2999 = vpop.f32.mrb[0].mxu0
  %v3000 = vadd.f32 0.0, %v2999
  %v3001 = vpop.f32.mrb[0].mxu0
  %v3002 = vpop.f32.mrb[0].mxu0
  %v3003 = vadd.f32 0.0, %v3002
  %v3004 = vpop.f32.mrb[0].mxu0
  %3005 = vmatprep.mubr.bf16.mxu0 0
  %3006 = vmatmul.mubr.bf16.gmra.mrb[0].mxu0 %v2760
  %v3007 = vpop.f32.mrb[0].mxu0
  %v3008 = vadd.f32 0.0, %v3007
  %v3009 = vpop.f32.mrb[0].mxu0
  %v3010 = vpop.f32.mrb[0].mxu0
  %v3011 = vadd.f32 0.0, %v3010
  %v3012 = vpop.f32.mrb[0].mxu0
  %3013 = vmatprep.mubr.bf16.mxu0 0
  %3014 = vmatmul.mubr.bf16.gmra.mrb[0].mxu0 %v2763
  %v3015 = vpop.f32.mrb[0].mxu0
  %v3016 = vadd.f32 0.0, %v3015
  %v3017 = vpop.f32.mrb[0].mxu0
  %v3018 = vpop.f32.mrb[0].mxu0
  %v3019 = vadd.f32 0.0, %v3018
  %v3020 = vpop.f32.mrb[0].mxu0
  %3021 = vmatprep.mubr.bf16.mxu0 0
  %3022 = vmatmul.mubr.bf16.gmra.mrb[0].mxu0 %v2766
  %v3023 = vpop.f32.mrb[0].mxu0
  %v3024 = vadd.f32 0.0, %v3023
  %v3025 = vpop.f32.mrb[0].mxu0
  %v3026 = vpop.f32.mrb[0].mxu0
  %v3027 = vadd.f32 0.0, %v3026
  %v3028 = vpop.f32.mrb[0].mxu0
  %3029 = vmatprep.mubr.bf16.mxu0 0
  %3030 = vmatmul.mubr.bf16.gmra.mrb[0].mxu0 %v2769
  %v3031 = vpop.f32.mrb[0].mxu0
  %v3032 = vadd.f32 0.0, %v3031
  %v3033 = vpop.f32.mrb[0].mxu0
  %v3034 = vpop.f32.mrb[0].mxu0
  %v3035 = vadd.f32 0.0, %v3034
  %v3036 = vpop.f32.mrb[0].mxu0
  %3037 = vmatprep.mubr.bf16.mxu0 0
  %3038 = vmatmul.mubr.bf16.gmra.mrb[0].mxu0 %v2772
  %v3039 = vpop.f32.mrb[0].mxu0
  %v3040 = vadd.f32 0.0, %v3039
  %v3041 = vpop.f32.mrb[0].mxu0
  %v3042 = vpop.f32.mrb[0].mxu0
  %v3043 = vadd.f32 0.0, %v3042
  %v3044 = vpop.f32.mrb[0].mxu0
  %3045 = vmatprep.mubr.bf16.mxu0 0
  %3046 = vmatmul.mubr.bf16.gmra.mrb[0].mxu0 %v2775
  %v3047 = vpop.f32.mrb[0].mxu0
  %v3048 = vadd.f32 0.0, %v3047
  %v3049 = vpop.f32.mrb[0].mxu0
  %v3050 = vpop.f32.mrb[0].mxu0
  %v3051 = vadd.f32 0.0, %v3050
  %v3052 = vpop.f32.mrb[0].mxu0
  %3053 = vmatprep.mubr.bf16.mxu0 0
  %3054 = vmatmul.mubr.bf16.gmra.mrb[0].mxu0 %v2778
  %v3055 = vpop.f32.mrb[0].mxu0
  %v3056 = vadd.f32 0.0, %v3055
  %v3057 = vpop.f32.mrb[0].mxu0
  %v3058 = vpop.f32.mrb[0].mxu0
  %v3059 = vadd.f32 0.0, %v3058
  %v3060 = vpop.f32.mrb[0].mxu0
  %3061 = vmatprep.mubr.bf16.mxu0 0
  %3062 = vmatmul.mubr.bf16.gmra.mrb[0].mxu0 %v2781
  %v3063 = vpop.f32.mrb[0].mxu0
  %v3064 = vadd.f32 0.0, %v3063
  %v3065 = vpop.f32.mrb[0].mxu0
  %v3066 = vpop.f32.mrb[0].mxu0
  %v3067 = vadd.f32 0.0, %v3066
  %v3068 = vpop.f32.mrb[0].mxu0
  %3069 = vmatprep.mubr.bf16.mxu0 0
  %3070 = vmatmul.mubr.bf16.gmra.mrb[0].mxu0 %v2784
  %v3071 = vpop.f32.mrb[0].mxu0
  %v3072 = vadd.f32 0.0, %v3071
  %v3073 = vpop.f32.mrb[0].mxu0
  %v3074 = vpop.f32.mrb[0].mxu0
  %v3075 = vadd.f32 0.0, %v3074
  %v3076 = vpop.f32.mrb[0].mxu0
  %3077 = vdwg.mxu0
  %v3078 = vadd.f32 %v2528, %v2824
  %v3079 = vadd.f32 %v2529, %v2827
  %v3080 = vadd.f32 %v2530, %v2832
  %v3081 = vadd.f32 %v2531, %v2835
  %v3082 = vadd.f32 %v2532, %v2840
  %v3083 = vadd.f32 %v2533, %v2843
  %v3084 = vadd.f32 %v2534, %v2848
  %v3085 = vadd.f32 %v2535, %v2851
  %v3086 = vadd.f32 %v2536, %v2856
  %v3087 = vadd.f32 %v2537, %v2859
  %v3088 = vadd.f32 %v2538, %v2864
  %v3089 = vadd.f32 %v2539, %v2867
  %v3090 = vadd.f32 %v2540, %v2872
  %v3091 = vadd.f32 %v2541, %v2875
  %v3092 = vadd.f32 %v2542, %v2880
  %v3093 = vadd.f32 %v2543, %v2883
  %v3094 = vadd.f32 %v2544, %v2888
  %v3095 = vadd.f32 %v2545, %v2891
  %v3096 = vadd.f32 %v2546, %v2896
  %v3097 = vadd.f32 %v2547, %v2899
  %v3098 = vadd.f32 %v2548, %v2904
  %v3099 = vadd.f32 %v2549, %v2907
  %v3100 = vadd.f32 %v2550, %v2912
  %v3101 = vadd.f32 %v2551, %v2915
  %v3102 = vadd.f32 %v2552, %v2920
  %v3103 = vadd.f32 %v2553, %v2923
  %v3104 = vadd.f32 %v2554, %v2928
  %v3105 = vadd.f32 %v2555, %v2931
  %v3106 = vadd.f32 %v2556, %v2936
  %v3107 = vadd.f32 %v2557, %v2939
  %v3108 = vadd.f32 %v2558, %v2944
  %v3109 = vadd.f32 %v2559, %v2947
  %v3110 = vadd.f32 %v2560, %v2952
  %v3111 = vadd.f32 %v2561, %v2955
  %v3112 = vadd.f32 %v2562, %v2960
  %v3113 = vadd.f32 %v2563, %v2963
  %v3114 = vadd.f32 %v2564, %v2968
  %v3115 = vadd.f32 %v2565, %v2971
  %v3116 = vadd.f32 %v2566, %v2976
  %v3117 = vadd.f32 %v2567, %v2979
  %v3118 = vadd.f32 %v2568, %v2984
  %v3119 = vadd.f32 %v2569, %v2987
  %v3120 = vadd.f32 %v2570, %v2992
  %v3121 = vadd.f32 %v2571, %v2995
  %v3122 = vadd.f32 %v2572, %v3000
  %v3123 = vadd.f32 %v2573, %v3003
  %v3124 = vadd.f32 %v2574, %v3008
  %v3125 = vadd.f32 %v2575, %v3011
  %v3126 = vadd.f32 %v2576, %v3016
  %v3127 = vadd.f32 %v2577, %v3019
  %v3128 = vadd.f32 %v2578, %v3024
  %v3129 = vadd.f32 %v2579, %v3027
  %v3130 = vadd.f32 %v2580, %v3032
  %v3131 = vadd.f32 %v2581, %v3035
  %v3132 = vadd.f32 %v2582, %v3040
  %v3133 = vadd.f32 %v2583, %v3043
  %v3134 = vadd.f32 %v2584, %v3048
  %v3135 = vadd.f32 %v2585, %v3051
  %v3136 = vadd.f32 %v2586, %v3056
  %v3137 = vadd.f32 %v2587, %v3059
  %v3138 = vadd.f32 %v2588, %v3064
  %v3139 = vadd.f32 %v2589, %v3067
  %v3140 = vadd.f32 %v2590, %v3072
  %v3141 = vadd.f32 %v2591, %v3075
  %v3142 = vld [vmem:[%s941 + $0x8] sm:$0xff]
  %v3143 = vld [vmem:[%s941 + $0x10] sm:$0xff]
  %v3144 = vld [vmem:[%s941 + $0x28] sm:$0xff]
  %v3145 = vld [vmem:[%s941 + $0x30] sm:$0xff]
  %v3146 = vld [vmem:[%s941 + $0x48] sm:$0xff]
  %v3147 = vld [vmem:[%s941 + $0x50] sm:$0xff]
  %v3148 = vld [vmem:[%s941 + $0x68] sm:$0xff]
  %v3149 = vld [vmem:[%s941 + $0x70] sm:$0xff]
  %v3150 = vld [vmem:[%s941 + $0x88] sm:$0xff]
  %v3151 = vld [vmem:[%s941 + $0x90] sm:$0xff]
  %v3152 = vld [vmem:[%s941 + $0xa8] sm:$0xff]
  %v3153 = vld [vmem:[%s941 + $0xb0] sm:$0xff]
  %v3154 = vld [vmem:[%s941 + $0xc8] sm:$0xff]
  %v3155 = vld [vmem:[%s941 + $0xd0] sm:$0xff]
  %v3156 = vld [vmem:[%s941 + $0xe8] sm:$0xff]
  %v3157 = vld [vmem:[%s941 + $0xf0] sm:$0xff]
  %v3158 = vld [vmem:[%s941 + $0x108] sm:$0xff]
  %v3159 = vld [vmem:[%s941 + $0x110] sm:$0xff]
  %v3160 = vld [vmem:[%s941 + $0x128] sm:$0xff]
  %v3161 = vld [vmem:[%s941 + $0x130] sm:$0xff]
  %v3162 = vld [vmem:[%s941 + $0x148] sm:$0xff]
  %v3163 = vld [vmem:[%s941 + $0x150] sm:$0xff]
  %v3164 = vld [vmem:[%s941 + $0x168] sm:$0xff]
  %v3165 = vld [vmem:[%s941 + $0x170] sm:$0xff]
  %v3166 = vld [vmem:[%s941 + $0x188] sm:$0xff]
  %v3167 = vld [vmem:[%s941 + $0x190] sm:$0xff]
  %v3168 = vld [vmem:[%s941 + $0x1a8] sm:$0xff]
  %v3169 = vld [vmem:[%s941 + $0x1b0] sm:$0xff]
  %v3170 = vld [vmem:[%s941 + $0x1c8] sm:$0xff]
  %v3171 = vld [vmem:[%s941 + $0x1d0] sm:$0xff]
  %v3172 = vld [vmem:[%s941 + $0x1e8] sm:$0xff]
  %v3173 = vld [vmem:[%s941 + $0x1f0] sm:$0xff]
  %v3174 = vld [vmem:[%s941 + $0x248] sm:$0xff]
  %v3175 = vld [vmem:[%s941 + $0x250] sm:$0xff]
  %v3176 = vld [vmem:[%s941 + $0x268] sm:$0xff]
  %v3177 = vld [vmem:[%s941 + $0x270] sm:$0xff]
  %v3178 = vld [vmem:[%s941 + $0x288] sm:$0xff]
  %v3179 = vld [vmem:[%s941 + $0x290] sm:$0xff]
  %v3180 = vld [vmem:[%s941 + $0x2a8] sm:$0xff]
  %v3181 = vld [vmem:[%s941 + $0x2b0] sm:$0xff]
  %v3182 = vld [vmem:[%s941 + $0x2c8] sm:$0xff]
  %v3183 = vld [vmem:[%s941 + $0x2d0] sm:$0xff]
  %v3184 = vld [vmem:[%s941 + $0x2e8] sm:$0xff]
  %v3185 = vld [vmem:[%s941 + $0x2f0] sm:$0xff]
  %v3186 = vld [vmem:[%s941 + $0x308] sm:$0xff]
  %v3187 = vld [vmem:[%s941 + $0x310] sm:$0xff]
  %v3188 = vld [vmem:[%s941 + $0x328] sm:$0xff]
  %v3189 = vld [vmem:[%s941 + $0x330] sm:$0xff]
  %v3190 = vld [vmem:[%s941 + $0x348] sm:$0xff]
  %v3191 = vld [vmem:[%s941 + $0x350] sm:$0xff]
  %v3192 = vld [vmem:[%s941 + $0x368] sm:$0xff]
  %v3193 = vld [vmem:[%s941 + $0x370] sm:$0xff]
  %v3194 = vld [vmem:[%s941 + $0x388] sm:$0xff]
  %v3195 = vld [vmem:[%s941 + $0x390] sm:$0xff]
  %v3196 = vld [vmem:[%s941 + $0x3a8] sm:$0xff]
  %v3197 = vld [vmem:[%s941 + $0x3b0] sm:$0xff]
  %v3198 = vld [vmem:[%s941 + $0x3c8] sm:$0xff]
  %v3199 = vld [vmem:[%s941 + $0x3d0] sm:$0xff]
  %v3200 = vld [vmem:[%s941 + $0x3e8] sm:$0xff]
  %v3201 = vld [vmem:[%s941 + $0x3f0] sm:$0xff]
  %v3202 = vld [vmem:[%s941 + $0x408] sm:$0xff]
  %v3203 = vld [vmem:[%s941 + $0x410] sm:$0xff]
  %v3204 = vld [vmem:[%s941 + $0x428] sm:$0xff]
  %v3205 = vld [vmem:[%s941 + $0x430] sm:$0xff]
  %v3206 = vpack.c.bf16 %v3143, %v3142
  %v3207 = vpack.c.bf16 %v3145, %v3144
  %v3208 = vpack.c.bf16 %v3147, %v3146
  %v3209 = vpack.c.bf16 %v3149, %v3148
  %v3210 = vpack.c.bf16 %v3151, %v3150
  %v3211 = vpack.c.bf16 %v3153, %v3152
  %v3212 = vpack.c.bf16 %v3155, %v3154
  %v3213 = vpack.c.bf16 %v3157, %v3156
  %v3214 = vpack.c.bf16 %v3159, %v3158
  %v3215 = vpack.c.bf16 %v3161, %v3160
  %v3216 = vpack.c.bf16 %v3163, %v3162
  %v3217 = vpack.c.bf16 %v3165, %v3164
  %v3218 = vpack.c.bf16 %v3167, %v3166
  %v3219 = vpack.c.bf16 %v3169, %v3168
  %v3220 = vpack.c.bf16 %v3171, %v3170
  %v3221 = vpack.c.bf16 %v3173, %v3172
  %v3222 = vpack.c.bf16 %v3175, %v3174
  %v3223 = vpack.c.bf16 %v3177, %v3176
  %v3224 = vpack.c.bf16 %v3179, %v3178
  %v3225 = vpack.c.bf16 %v3181, %v3180
  %v3226 = vpack.c.bf16 %v3183, %v3182
  %v3227 = vpack.c.bf16 %v3185, %v3184
  %v3228 = vpack.c.bf16 %v3187, %v3186
  %v3229 = vpack.c.bf16 %v3189, %v3188
  %v3230 = vpack.c.bf16 %v3191, %v3190
  %v3231 = vpack.c.bf16 %v3193, %v3192
  %v3232 = vpack.c.bf16 %v3195, %v3194
  %v3233 = vpack.c.bf16 %v3197, %v3196
  %v3234 = vpack.c.bf16 %v3199, %v3198
  %v3235 = vpack.c.bf16 %v3201, %v3200
  %v3236 = vpack.c.bf16 %v3203, %v3202
  %v3237 = vpack.c.bf16 %v3205, %v3204
  %s3238 = scalar_lea.vmem %s1, 8
  %v3239 = vld [vmem:[%s3238] sm:$0x3]
  %v3241 = vsel %vm96, %v3206, 0
  %v3244 = vsel %vm96, %v3207, 0
  %v3247 = vsel %vm96, %v3208, 0
  %v3250 = vsel %vm96, %v3209, 0
  %v3253 = vsel %vm96, %v3210, 0
  %v3256 = vsel %vm96, %v3211, 0
  %v3259 = vsel %vm96, %v3212, 0
  %v3262 = vsel %vm96, %v3213, 0
  %v3265 = vsel %vm96, %v3214, 0
  %v3268 = vsel %vm96, %v3215, 0
  %v3271 = vsel %vm96, %v3216, 0
  %v3274 = vsel %vm96, %v3217, 0
  %v3277 = vsel %vm96, %v3218, 0
  %v3280 = vsel %vm96, %v3219, 0
  %v3283 = vsel %vm96, %v3220, 0
  %v3286 = vsel %vm96, %v3221, 0
  %v3289 = vsel %vm96, %v3222, 0
  %v3292 = vsel %vm96, %v3223, 0
  %v3295 = vsel %vm96, %v3224, 0
  %v3298 = vsel %vm96, %v3225, 0
  %v3301 = vsel %vm96, %v3226, 0
  %v3304 = vsel %vm96, %v3227, 0
  %v3307 = vsel %vm96, %v3228, 0
  %v3310 = vsel %vm96, %v3229, 0
  %v3313 = vsel %vm96, %v3230, 0
  %v3316 = vsel %vm96, %v3231, 0
  %v3319 = vsel %vm96, %v3232, 0
  %v3322 = vsel %vm96, %v3233, 0
  %v3325 = vsel %vm96, %v3234, 0
  %v3328 = vsel %vm96, %v3235, 0
  %v3331 = vsel %vm96, %v3236, 0
  %v3334 = vsel %vm96, %v3237, 0
  %v3337 = vsel %vm1361, %v3239, 0
  %3339 = vmatprep.subr.bf16.mxu0 0
  %3340 = vmatpush1.bf16.msra.mxu0 %v3337
  %3341 = vmatprep.subr.bf16.mxu0 0
  %3342 = vmatpush1.bf16.msra.mxu0 0
  %3343 = vmatprep.subr.bf16.mxu0 0
  %3344 = vmatpush1.bf16.msra.mxu0 0
  %3345 = vmatprep.subr.bf16.mxu0 0
  %3346 = vmatpush1.bf16.msra.mxu0 0
  %3347 = vmatprep.subr.bf16.mxu0 0
  %3348 = vmatpush1.bf16.msra.mxu0 0
  %3349 = vmatprep.subr.bf16.mxu0 0
  %3350 = vmatpush1.bf16.msra.mxu0 0
  %3351 = vmatprep.subr.bf16.mxu0 0
  %3352 = vmatpush1.bf16.msra.mxu0 0
  %3353 = vmatprep.subr.bf16.mxu0 0
  %3354 = vmatpush1.bf16.msra.mxu0 0
  %3355 = vmatprep.subr.bf16.mxu0 0
  %3356 = vmatpush1.bf16.msra.mxu0 0
  %3357 = vmatprep.subr.bf16.mxu0 0
  %3358 = vmatpush1.bf16.msra.mxu0 0
  %3359 = vmatprep.subr.bf16.mxu0 0
  %3360 = vmatpush1.bf16.msra.mxu0 0
  %3361 = vmatprep.subr.bf16.mxu0 0
  %3362 = vmatpush1.bf16.msra.mxu0 0
  %3363 = vmatprep.subr.bf16.mxu0 0
  %3364 = vmatpush1.bf16.msra.mxu0 0
  %3365 = vmatprep.subr.bf16.mxu0 0
  %3366 = vmatpush1.bf16.msra.mxu0 0
  %3367 = vmatprep.subr.bf16.mxu0 0
  %3368 = vmatpush1.bf16.msra.mxu0 0
  %3369 = vmatprep.subr.bf16.mxu0 0
  %3370 = vmatpush1.bf16.msra.mxu0 0
  %3371 = vmatprep.mubr.bf16.mxu0 0
  %3372 = vmatmul.mubr.bf16.gmra.mrb[0].mxu0 %v3241
  %v3373 = vpop.f32.mrb[0].mxu0
  %v3374 = vadd.f32 0.0, %v3373
  %v3375 = vpop.f32.mrb[0].mxu0
  %v3376 = vpop.f32.mrb[0].mxu0
  %v3377 = vadd.f32 0.0, %v3376
  %v3378 = vpop.f32.mrb[0].mxu0
  %3379 = vmatprep.mubr.bf16.mxu0 0
  %3380 = vmatmul.mubr.bf16.gmra.mrb[0].mxu0 %v3244
  %v3381 = vpop.f32.mrb[0].mxu0
  %v3382 = vadd.f32 0.0, %v3381
  %v3383 = vpop.f32.mrb[0].mxu0
  %v3384 = vpop.f32.mrb[0].mxu0
  %v3385 = vadd.f32 0.0, %v3384
  %v3386 = vpop.f32.mrb[0].mxu0
  %3387 = vmatprep.mubr.bf16.mxu0 0
  %3388 = vmatmul.mubr.bf16.gmra.mrb[0].mxu0 %v3247
  %v3389 = vpop.f32.mrb[0].mxu0
  %v3390 = vadd.f32 0.0, %v3389
  %v3391 = vpop.f32.mrb[0].mxu0
  %v3392 = vpop.f32.mrb[0].mxu0
  %v3393 = vadd.f32 0.0, %v3392
  %v3394 = vpop.f32.mrb[0].mxu0
  %3395 = vmatprep.mubr.bf16.mxu0 0
  %3396 = vmatmul.mubr.bf16.gmra.mrb[0].mxu0 %v3250
  %v3397 = vpop.f32.mrb[0].mxu0
  %v3398 = vadd.f32 0.0, %v3397
  %v3399 = vpop.f32.mrb[0].mxu0
  %v3400 = vpop.f32.mrb[0].mxu0
  %v3401 = vadd.f32 0.0, %v3400
  %v3402 = vpop.f32.mrb[0].mxu0
  %3403 = vmatprep.mubr.bf16.mxu0 0
  %3404 = vmatmul.mubr.bf16.gmra.mrb[0].mxu0 %v3253
  %v3405 = vpop.f32.mrb[0].mxu0
  %v3406 = vadd.f32 0.0, %v3405
  %v3407 = vpop.f32.mrb[0].mxu0
  %v3408 = vpop.f32.mrb[0].mxu0
  %v3409 = vadd.f32 0.0, %v3408
  %v3410 = vpop.f32.mrb[0].mxu0
  %3411 = vmatprep.mubr.bf16.mxu0 0
  %3412 = vmatmul.mubr.bf16.gmra.mrb[0].mxu0 %v3256
  %v3413 = vpop.f32.mrb[0].mxu0
  %v3414 = vadd.f32 0.0, %v3413
  %v3415 = vpop.f32.mrb[0].mxu0
  %v3416 = vpop.f32.mrb[0].mxu0
  %v3417 = vadd.f32 0.0, %v3416
  %v3418 = vpop.f32.mrb[0].mxu0
  %3419 = vmatprep.mubr.bf16.mxu0 0
  %3420 = vmatmul.mubr.bf16.gmra.mrb[0].mxu0 %v3259
  %v3421 = vpop.f32.mrb[0].mxu0
  %v3422 = vadd.f32 0.0, %v3421
  %v3423 = vpop.f32.mrb[0].mxu0
  %v3424 = vpop.f32.mrb[0].mxu0
  %v3425 = vadd.f32 0.0, %v3424
  %v3426 = vpop.f32.mrb[0].mxu0
  %3427 = vmatprep.mubr.bf16.mxu0 0
  %3428 = vmatmul.mubr.bf16.gmra.mrb[0].mxu0 %v3262
  %v3429 = vpop.f32.mrb[0].mxu0
  %v3430 = vadd.f32 0.0, %v3429
  %v3431 = vpop.f32.mrb[0].mxu0
  %v3432 = vpop.f32.mrb[0].mxu0
  %v3433 = vadd.f32 0.0, %v3432
  %v3434 = vpop.f32.mrb[0].mxu0
  %3435 = vmatprep.mubr.bf16.mxu0 0
  %3436 = vmatmul.mubr.bf16.gmra.mrb[0].mxu0 %v3265
  %v3437 = vpop.f32.mrb[0].mxu0
  %v3438 = vadd.f32 0.0, %v3437
  %v3439 = vpop.f32.mrb[0].mxu0
  %v3440 = vpop.f32.mrb[0].mxu0
  %v3441 = vadd.f32 0.0, %v3440
  %v3442 = vpop.f32.mrb[0].mxu0
  %3443 = vmatprep.mubr.bf16.mxu0 0
  %3444 = vmatmul.mubr.bf16.gmra.mrb[0].mxu0 %v3268
  %v3445 = vpop.f32.mrb[0].mxu0
  %v3446 = vadd.f32 0.0, %v3445
  %v3447 = vpop.f32.mrb[0].mxu0
  %v3448 = vpop.f32.mrb[0].mxu0
  %v3449 = vadd.f32 0.0, %v3448
  %v3450 = vpop.f32.mrb[0].mxu0
  %3451 = vmatprep.mubr.bf16.mxu0 0
  %3452 = vmatmul.mubr.bf16.gmra.mrb[0].mxu0 %v3271
  %v3453 = vpop.f32.mrb[0].mxu0
  %v3454 = vadd.f32 0.0, %v3453
  %v3455 = vpop.f32.mrb[0].mxu0
  %v3456 = vpop.f32.mrb[0].mxu0
  %v3457 = vadd.f32 0.0, %v3456
  %v3458 = vpop.f32.mrb[0].mxu0
  %3459 = vmatprep.mubr.bf16.mxu0 0
  %3460 = vmatmul.mubr.bf16.gmra.mrb[0].mxu0 %v3274
  %v3461 = vpop.f32.mrb[0].mxu0
  %v3462 = vadd.f32 0.0, %v3461
  %v3463 = vpop.f32.mrb[0].mxu0
  %v3464 = vpop.f32.mrb[0].mxu0
  %v3465 = vadd.f32 0.0, %v3464
  %v3466 = vpop.f32.mrb[0].mxu0
  %3467 = vmatprep.mubr.bf16.mxu0 0
  %3468 = vmatmul.mubr.bf16.gmra.mrb[0].mxu0 %v3277
  %v3469 = vpop.f32.mrb[0].mxu0
  %v3470 = vadd.f32 0.0, %v3469
  %v3471 = vpop.f32.mrb[0].mxu0
  %v3472 = vpop.f32.mrb[0].mxu0
  %v3473 = vadd.f32 0.0, %v3472
  %v3474 = vpop.f32.mrb[0].mxu0
  %3475 = vmatprep.mubr.bf16.mxu0 0
  %3476 = vmatmul.mubr.bf16.gmra.mrb[0].mxu0 %v3280
  %v3477 = vpop.f32.mrb[0].mxu0
  %v3478 = vadd.f32 0.0, %v3477
  %v3479 = vpop.f32.mrb[0].mxu0
  %v3480 = vpop.f32.mrb[0].mxu0
  %v3481 = vadd.f32 0.0, %v3480
  %v3482 = vpop.f32.mrb[0].mxu0
  %3483 = vmatprep.mubr.bf16.mxu0 0
  %3484 = vmatmul.mubr.bf16.gmra.mrb[0].mxu0 %v3283
  %v3485 = vpop.f32.mrb[0].mxu0
  %v3486 = vadd.f32 0.0, %v3485
  %v3487 = vpop.f32.mrb[0].mxu0
  %v3488 = vpop.f32.mrb[0].mxu0
  %v3489 = vadd.f32 0.0, %v3488
  %v3490 = vpop.f32.mrb[0].mxu0
  %3491 = vmatprep.mubr.bf16.mxu0 0
  %3492 = vmatmul.mubr.bf16.gmra.mrb[0].mxu0 %v3286
  %v3493 = vpop.f32.mrb[0].mxu0
  %v3494 = vadd.f32 0.0, %v3493
  %v3495 = vpop.f32.mrb[0].mxu0
  %v3496 = vpop.f32.mrb[0].mxu0
  %v3497 = vadd.f32 0.0, %v3496
  %v3498 = vpop.f32.mrb[0].mxu0
  %3499 = vmatprep.mubr.bf16.mxu0 0
  %3500 = vmatmul.mubr.bf16.gmra.mrb[0].mxu0 %v3289
  %v3501 = vpop.f32.mrb[0].mxu0
  %v3502 = vadd.f32 0.0, %v3501
  %v3503 = vpop.f32.mrb[0].mxu0
  %v3504 = vpop.f32.mrb[0].mxu0
  %v3505 = vadd.f32 0.0, %v3504
  %v3506 = vpop.f32.mrb[0].mxu0
  %3507 = vmatprep.mubr.bf16.mxu0 0
  %3508 = vmatmul.mubr.bf16.gmra.mrb[0].mxu0 %v3292
  %v3509 = vpop.f32.mrb[0].mxu0
  %v3510 = vadd.f32 0.0, %v3509
  %v3511 = vpop.f32.mrb[0].mxu0
  %v3512 = vpop.f32.mrb[0].mxu0
  %v3513 = vadd.f32 0.0, %v3512
  %v3514 = vpop.f32.mrb[0].mxu0
  %3515 = vmatprep.mubr.bf16.mxu0 0
  %3516 = vmatmul.mubr.bf16.gmra.mrb[0].mxu0 %v3295
  %v3517 = vpop.f32.mrb[0].mxu0
  %v3518 = vadd.f32 0.0, %v3517
  %v3519 = vpop.f32.mrb[0].mxu0
  %v3520 = vpop.f32.mrb[0].mxu0
  %v3521 = vadd.f32 0.0, %v3520
  %v3522 = vpop.f32.mrb[0].mxu0
  %3523 = vmatprep.mubr.bf16.mxu0 0
  %3524 = vmatmul.mubr.bf16.gmra.mrb[0].mxu0 %v3298
  %v3525 = vpop.f32.mrb[0].mxu0
  %v3526 = vadd.f32 0.0, %v3525
  %v3527 = vpop.f32.mrb[0].mxu0
  %v3528 = vpop.f32.mrb[0].mxu0
  %v3529 = vadd.f32 0.0, %v3528
  %v3530 = vpop.f32.mrb[0].mxu0
  %3531 = vmatprep.mubr.bf16.mxu0 0
  %3532 = vmatmul.mubr.bf16.gmra.mrb[0].mxu0 %v3301
  %v3533 = vpop.f32.mrb[0].mxu0
  %v3534 = vadd.f32 0.0, %v3533
  %v3535 = vpop.f32.mrb[0].mxu0
  %v3536 = vpop.f32.mrb[0].mxu0
  %v3537 = vadd.f32 0.0, %v3536
  %v3538 = vpop.f32.mrb[0].mxu0
  %3539 = vmatprep.mubr.bf16.mxu0 0
  %3540 = vmatmul.mubr.bf16.gmra.mrb[0].mxu0 %v3304
  %v3541 = vpop.f32.mrb[0].mxu0
  %v3542 = vadd.f32 0.0, %v3541
  %v3543 = vpop.f32.mrb[0].mxu0
  %v3544 = vpop.f32.mrb[0].mxu0
  %v3545 = vadd.f32 0.0, %v3544
  %v3546 = vpop.f32.mrb[0].mxu0
  %3547 = vmatprep.mubr.bf16.mxu0 0
  %3548 = vmatmul.mubr.bf16.gmra.mrb[0].mxu0 %v3307
  %v3549 = vpop.f32.mrb[0].mxu0
  %v3550 = vadd.f32 0.0, %v3549
  %v3551 = vpop.f32.mrb[0].mxu0
  %v3552 = vpop.f32.mrb[0].mxu0
  %v3553 = vadd.f32 0.0, %v3552
  %v3554 = vpop.f32.mrb[0].mxu0
  %3555 = vmatprep.mubr.bf16.mxu0 0
  %3556 = vmatmul.mubr.bf16.gmra.mrb[0].mxu0 %v3310
  %v3557 = vpop.f32.mrb[0].mxu0
  %v3558 = vadd.f32 0.0, %v3557
  %v3559 = vpop.f32.mrb[0].mxu0
  %v3560 = vpop.f32.mrb[0].mxu0
  %v3561 = vadd.f32 0.0, %v3560
  %v3562 = vpop.f32.mrb[0].mxu0
  %3563 = vmatprep.mubr.bf16.mxu0 0
  %3564 = vmatmul.mubr.bf16.gmra.mrb[0].mxu0 %v3313
  %v3565 = vpop.f32.mrb[0].mxu0
  %v3566 = vadd.f32 0.0, %v3565
  %v3567 = vpop.f32.mrb[0].mxu0
  %v3568 = vpop.f32.mrb[0].mxu0
  %v3569 = vadd.f32 0.0, %v3568
  %v3570 = vpop.f32.mrb[0].mxu0
  %3571 = vmatprep.mubr.bf16.mxu0 0
  %3572 = vmatmul.mubr.bf16.gmra.mrb[0].mxu0 %v3316
  %v3573 = vpop.f32.mrb[0].mxu0
  %v3574 = vadd.f32 0.0, %v3573
  %v3575 = vpop.f32.mrb[0].mxu0
  %v3576 = vpop.f32.mrb[0].mxu0
  %v3577 = vadd.f32 0.0, %v3576
  %v3578 = vpop.f32.mrb[0].mxu0
  %3579 = vmatprep.mubr.bf16.mxu0 0
  %3580 = vmatmul.mubr.bf16.gmra.mrb[0].mxu0 %v3319
  %v3581 = vpop.f32.mrb[0].mxu0
  %v3582 = vadd.f32 0.0, %v3581
  %v3583 = vpop.f32.mrb[0].mxu0
  %v3584 = vpop.f32.mrb[0].mxu0
  %v3585 = vadd.f32 0.0, %v3584
  %v3586 = vpop.f32.mrb[0].mxu0
  %3587 = vmatprep.mubr.bf16.mxu0 0
  %3588 = vmatmul.mubr.bf16.gmra.mrb[0].mxu0 %v3322
  %v3589 = vpop.f32.mrb[0].mxu0
  %v3590 = vadd.f32 0.0, %v3589
  %v3591 = vpop.f32.mrb[0].mxu0
  %v3592 = vpop.f32.mrb[0].mxu0
  %v3593 = vadd.f32 0.0, %v3592
  %v3594 = vpop.f32.mrb[0].mxu0
  %3595 = vmatprep.mubr.bf16.mxu0 0
  %3596 = vmatmul.mubr.bf16.gmra.mrb[0].mxu0 %v3325
  %v3597 = vpop.f32.mrb[0].mxu0
  %v3598 = vadd.f32 0.0, %v3597
  %v3599 = vpop.f32.mrb[0].mxu0
  %v3600 = vpop.f32.mrb[0].mxu0
  %v3601 = vadd.f32 0.0, %v3600
  %v3602 = vpop.f32.mrb[0].mxu0
  %3603 = vmatprep.mubr.bf16.mxu0 0
  %3604 = vmatmul.mubr.bf16.gmra.mrb[0].mxu0 %v3328
  %v3605 = vpop.f32.mrb[0].mxu0
  %v3606 = vadd.f32 0.0, %v3605
  %v3607 = vpop.f32.mrb[0].mxu0
  %v3608 = vpop.f32.mrb[0].mxu0
  %v3609 = vadd.f32 0.0, %v3608
  %v3610 = vpop.f32.mrb[0].mxu0
  %3611 = vmatprep.mubr.bf16.mxu0 0
  %3612 = vmatmul.mubr.bf16.gmra.mrb[0].mxu0 %v3331
  %v3613 = vpop.f32.mrb[0].mxu0
  %v3614 = vadd.f32 0.0, %v3613
  %v3615 = vpop.f32.mrb[0].mxu0
  %v3616 = vpop.f32.mrb[0].mxu0
  %v3617 = vadd.f32 0.0, %v3616
  %v3618 = vpop.f32.mrb[0].mxu0
  %3619 = vmatprep.mubr.bf16.mxu0 0
  %3620 = vmatmul.mubr.bf16.gmra.mrb[0].mxu0 %v3334
  %v3621 = vpop.f32.mrb[0].mxu0
  %v3622 = vadd.f32 0.0, %v3621
  %v3623 = vpop.f32.mrb[0].mxu0
  %v3624 = vpop.f32.mrb[0].mxu0
  %v3625 = vadd.f32 0.0, %v3624
  %v3626 = vpop.f32.mrb[0].mxu0
  %3627 = vdwg.mxu0
  %v3628 = vadd.f32 %v3078, %v3374
  %v3629 = vadd.f32 %v3079, %v3377
  %v3630 = vadd.f32 %v3080, %v3382
  %v3631 = vadd.f32 %v3081, %v3385
  %v3632 = vadd.f32 %v3082, %v3390
  %v3633 = vadd.f32 %v3083, %v3393
  %v3634 = vadd.f32 %v3084, %v3398
  %v3635 = vadd.f32 %v3085, %v3401
  %v3636 = vadd.f32 %v3086, %v3406
  %v3637 = vadd.f32 %v3087, %v3409
  %v3638 = vadd.f32 %v3088, %v3414
  %v3639 = vadd.f32 %v3089, %v3417
  %v3640 = vadd.f32 %v3090, %v3422
  %v3641 = vadd.f32 %v3091, %v3425
  %v3642 = vadd.f32 %v3092, %v3430
  %v3643 = vadd.f32 %v3093, %v3433
  %v3644 = vadd.f32 %v3094, %v3438
  %v3645 = vadd.f32 %v3095, %v3441
  %v3646 = vadd.f32 %v3096, %v3446
  %v3647 = vadd.f32 %v3097, %v3449
  %v3648 = vadd.f32 %v3098, %v3454
  %v3649 = vadd.f32 %v3099, %v3457
  %v3650 = vadd.f32 %v3100, %v3462
  %v3651 = vadd.f32 %v3101, %v3465
  %v3652 = vadd.f32 %v3102, %v3470
  %v3653 = vadd.f32 %v3103, %v3473
  %v3654 = vadd.f32 %v3104, %v3478
  %v3655 = vadd.f32 %v3105, %v3481
  %v3656 = vadd.f32 %v3106, %v3486
  %v3657 = vadd.f32 %v3107, %v3489
  %v3658 = vadd.f32 %v3108, %v3494
  %v3659 = vadd.f32 %v3109, %v3497
  %v3660 = vadd.f32 %v3110, %v3502
  %v3661 = vadd.f32 %v3111, %v3505
  %v3662 = vadd.f32 %v3112, %v3510
  %v3663 = vadd.f32 %v3113, %v3513
  %v3664 = vadd.f32 %v3114, %v3518
  %v3665 = vadd.f32 %v3115, %v3521
  %v3666 = vadd.f32 %v3116, %v3526
  %v3667 = vadd.f32 %v3117, %v3529
  %v3668 = vadd.f32 %v3118, %v3534
  %v3669 = vadd.f32 %v3119, %v3537
  %v3670 = vadd.f32 %v3120, %v3542
  %v3671 = vadd.f32 %v3121, %v3545
  %v3672 = vadd.f32 %v3122, %v3550
  %v3673 = vadd.f32 %v3123, %v3553
  %v3674 = vadd.f32 %v3124, %v3558
  %v3675 = vadd.f32 %v3125, %v3561
  %v3676 = vadd.f32 %v3126, %v3566
  %v3677 = vadd.f32 %v3127, %v3569
  %v3678 = vadd.f32 %v3128, %v3574
  %v3679 = vadd.f32 %v3129, %v3577
  %v3680 = vadd.f32 %v3130, %v3582
  %v3681 = vadd.f32 %v3131, %v3585
  %v3682 = vadd.f32 %v3132, %v3590
  %v3683 = vadd.f32 %v3133, %v3593
  %v3684 = vadd.f32 %v3134, %v3598
  %v3685 = vadd.f32 %v3135, %v3601
  %v3686 = vadd.f32 %v3136, %v3606
  %v3687 = vadd.f32 %v3137, %v3609
  %v3688 = vadd.f32 %v3138, %v3614
  %v3689 = vadd.f32 %v3139, %v3617
  %v3690 = vadd.f32 %v3140, %v3622
  %v3691 = vadd.f32 %v3141, %v3625
  %v3692 = vld [vmem:[%s941 + $0x9] sm:$0xff]
  %v3693 = vld [vmem:[%s941 + $0x11] sm:$0xff]
  %v3694 = vld [vmem:[%s941 + $0x29] sm:$0xff]
  %v3695 = vld [vmem:[%s941 + $0x31] sm:$0xff]
  %v3696 = vld [vmem:[%s941 + $0x49] sm:$0xff]
  %v3697 = vld [vmem:[%s941 + $0x51] sm:$0xff]
  %v3698 = vld [vmem:[%s941 + $0x69] sm:$0xff]
  %v3699 = vld [vmem:[%s941 + $0x71] sm:$0xff]
  %v3700 = vld [vmem:[%s941 + $0x89] sm:$0xff]
  %v3701 = vld [vmem:[%s941 + $0x91] sm:$0xff]
  %v3702 = vld [vmem:[%s941 + $0xa9] sm:$0xff]
  %v3703 = vld [vmem:[%s941 + $0xb1] sm:$0xff]
  %v3704 = vld [vmem:[%s941 + $0xc9] sm:$0xff]
  %v3705 = vld [vmem:[%s941 + $0xd1] sm:$0xff]
  %v3706 = vld [vmem:[%s941 + $0xe9] sm:$0xff]
  %v3707 = vld [vmem:[%s941 + $0xf1] sm:$0xff]
  %v3708 = vld [vmem:[%s941 + $0x109] sm:$0xff]
  %v3709 = vld [vmem:[%s941 + $0x111] sm:$0xff]
  %v3710 = vld [vmem:[%s941 + $0x129] sm:$0xff]
  %v3711 = vld [vmem:[%s941 + $0x131] sm:$0xff]
  %v3712 = vld [vmem:[%s941 + $0x149] sm:$0xff]
  %v3713 = vld [vmem:[%s941 + $0x151] sm:$0xff]
  %v3714 = vld [vmem:[%s941 + $0x169] sm:$0xff]
  %v3715 = vld [vmem:[%s941 + $0x171] sm:$0xff]
  %v3716 = vld [vmem:[%s941 + $0x189] sm:$0xff]
  %v3717 = vld [vmem:[%s941 + $0x191] sm:$0xff]
  %v3718 = vld [vmem:[%s941 + $0x1a9] sm:$0xff]
  %v3719 = vld [vmem:[%s941 + $0x1b1] sm:$0xff]
  %v3720 = vld [vmem:[%s941 + $0x1c9] sm:$0xff]
  %v3721 = vld [vmem:[%s941 + $0x1d1] sm:$0xff]
  %v3722 = vld [vmem:[%s941 + $0x1e9] sm:$0xff]
  %v3723 = vld [vmem:[%s941 + $0x1f1] sm:$0xff]
  %v3724 = vld [vmem:[%s941 + $0x249] sm:$0xff]
  %v3725 = vld [vmem:[%s941 + $0x251] sm:$0xff]
  %v3726 = vld [vmem:[%s941 + $0x269] sm:$0xff]
  %v3727 = vld [vmem:[%s941 + $0x271] sm:$0xff]
  %v3728 = vld [vmem:[%s941 + $0x289] sm:$0xff]
  %v3729 = vld [vmem:[%s941 + $0x291] sm:$0xff]
  %v3730 = vld [vmem:[%s941 + $0x2a9] sm:$0xff]
  %v3731 = vld [vmem:[%s941 + $0x2b1] sm:$0xff]
  %v3732 = vld [vmem:[%s941 + $0x2c9] sm:$0xff]
  %v3733 = vld [vmem:[%s941 + $0x2d1] sm:$0xff]
  %v3734 = vld [vmem:[%s941 + $0x2e9] sm:$0xff]
  %v3735 = vld [vmem:[%s941 + $0x2f1] sm:$0xff]
  %v3736 = vld [vmem:[%s941 + $0x309] sm:$0xff]
  %v3737 = vld [vmem:[%s941 + $0x311] sm:$0xff]
  %v3738 = vld [vmem:[%s941 + $0x329] sm:$0xff]
  %v3739 = vld [vmem:[%s941 + $0x331] sm:$0xff]
  %v3740 = vld [vmem:[%s941 + $0x349] sm:$0xff]
  %v3741 = vld [vmem:[%s941 + $0x351] sm:$0xff]
  %v3742 = vld [vmem:[%s941 + $0x369] sm:$0xff]
  %v3743 = vld [vmem:[%s941 + $0x371] sm:$0xff]
  %v3744 = vld [vmem:[%s941 + $0x389] sm:$0xff]
  %v3745 = vld [vmem:[%s941 + $0x391] sm:$0xff]
  %v3746 = vld [vmem:[%s941 + $0x3a9] sm:$0xff]
  %v3747 = vld [vmem:[%s941 + $0x3b1] sm:$0xff]
  %v3748 = vld [vmem:[%s941 + $0x3c9] sm:$0xff]
  %v3749 = vld [vmem:[%s941 + $0x3d1] sm:$0xff]
  %v3750 = vld [vmem:[%s941 + $0x3e9] sm:$0xff]
  %v3751 = vld [vmem:[%s941 + $0x3f1] sm:$0xff]
  %v3752 = vld [vmem:[%s941 + $0x409] sm:$0xff]
  %v3753 = vld [vmem:[%s941 + $0x411] sm:$0xff]
  %v3754 = vld [vmem:[%s941 + $0x429] sm:$0xff]
  %v3755 = vld [vmem:[%s941 + $0x431] sm:$0xff]
  %v3756 = vpack.c.bf16 %v3693, %v3692
  %v3757 = vpack.c.bf16 %v3695, %v3694
  %v3758 = vpack.c.bf16 %v3697, %v3696
  %v3759 = vpack.c.bf16 %v3699, %v3698
  %v3760 = vpack.c.bf16 %v3701, %v3700
  %v3761 = vpack.c.bf16 %v3703, %v3702
  %v3762 = vpack.c.bf16 %v3705, %v3704
  %v3763 = vpack.c.bf16 %v3707, %v3706
  %v3764 = vpack.c.bf16 %v3709, %v3708
  %v3765 = vpack.c.bf16 %v3711, %v3710
  %v3766 = vpack.c.bf16 %v3713, %v3712
  %v3767 = vpack.c.bf16 %v3715, %v3714
  %v3768 = vpack.c.bf16 %v3717, %v3716
  %v3769 = vpack.c.bf16 %v3719, %v3718
  %v3770 = vpack.c.bf16 %v3721, %v3720
  %v3771 = vpack.c.bf16 %v3723, %v3722
  %v3772 = vpack.c.bf16 %v3725, %v3724
  %v3773 = vpack.c.bf16 %v3727, %v3726
  %v3774 = vpack.c.bf16 %v3729, %v3728
  %v3775 = vpack.c.bf16 %v3731, %v3730
  %v3776 = vpack.c.bf16 %v3733, %v3732
  %v3777 = vpack.c.bf16 %v3735, %v3734
  %v3778 = vpack.c.bf16 %v3737, %v3736
  %v3779 = vpack.c.bf16 %v3739, %v3738
  %v3780 = vpack.c.bf16 %v3741, %v3740
  %v3781 = vpack.c.bf16 %v3743, %v3742
  %v3782 = vpack.c.bf16 %v3745, %v3744
  %v3783 = vpack.c.bf16 %v3747, %v3746
  %v3784 = vpack.c.bf16 %v3749, %v3748
  %v3785 = vpack.c.bf16 %v3751, %v3750
  %v3786 = vpack.c.bf16 %v3753, %v3752
  %v3787 = vpack.c.bf16 %v3755, %v3754
  %s3788 = scalar_lea.vmem %s1, 10
  %v3789 = vld [vmem:[%s3788] sm:$0x3]
  %v3791 = vsel %vm96, %v3756, 0
  %v3794 = vsel %vm96, %v3757, 0
  %v3797 = vsel %vm96, %v3758, 0
  %v3800 = vsel %vm96, %v3759, 0
  %v3803 = vsel %vm96, %v3760, 0
  %v3806 = vsel %vm96, %v3761, 0
  %v3809 = vsel %vm96, %v3762, 0
  %v3812 = vsel %vm96, %v3763, 0
  %v3815 = vsel %vm96, %v3764, 0
  %v3818 = vsel %vm96, %v3765, 0
  %v3821 = vsel %vm96, %v3766, 0
  %v3824 = vsel %vm96, %v3767, 0
  %v3827 = vsel %vm96, %v3768, 0
  %v3830 = vsel %vm96, %v3769, 0
  %v3833 = vsel %vm96, %v3770, 0
  %v3836 = vsel %vm96, %v3771, 0
  %v3839 = vsel %vm96, %v3772, 0
  %v3842 = vsel %vm96, %v3773, 0
  %v3845 = vsel %vm96, %v3774, 0
  %v3848 = vsel %vm96, %v3775, 0
  %v3851 = vsel %vm96, %v3776, 0
  %v3854 = vsel %vm96, %v3777, 0
  %v3857 = vsel %vm96, %v3778, 0
  %v3860 = vsel %vm96, %v3779, 0
  %v3863 = vsel %vm96, %v3780, 0
  %v3866 = vsel %vm96, %v3781, 0
  %v3869 = vsel %vm96, %v3782, 0
  %v3872 = vsel %vm96, %v3783, 0
  %v3875 = vsel %vm96, %v3784, 0
  %v3878 = vsel %vm96, %v3785, 0
  %v3881 = vsel %vm96, %v3786, 0
  %v3884 = vsel %vm96, %v3787, 0
  %v3887 = vsel %vm1361, %v3789, 0
  %3889 = vmatprep.subr.bf16.mxu0 0
  %3890 = vmatpush1.bf16.msra.mxu0 %v3887
  %3891 = vmatprep.subr.bf16.mxu0 0
  %3892 = vmatpush1.bf16.msra.mxu0 0
  %3893 = vmatprep.subr.bf16.mxu0 0
  %3894 = vmatpush1.bf16.msra.mxu0 0
  %3895 = vmatprep.subr.bf16.mxu0 0
  %3896 = vmatpush1.bf16.msra.mxu0 0
  %3897 = vmatprep.subr.bf16.mxu0 0
  %3898 = vmatpush1.bf16.msra.mxu0 0
  %3899 = vmatprep.subr.bf16.mxu0 0
  %3900 = vmatpush1.bf16.msra.mxu0 0
  %3901 = vmatprep.subr.bf16.mxu0 0
  %3902 = vmatpush1.bf16.msra.mxu0 0
  %3903 = vmatprep.subr.bf16.mxu0 0
  %3904 = vmatpush1.bf16.msra.mxu0 0
  %3905 = vmatprep.subr.bf16.mxu0 0
  %3906 = vmatpush1.bf16.msra.mxu0 0
  %3907 = vmatprep.subr.bf16.mxu0 0
  %3908 = vmatpush1.bf16.msra.mxu0 0
  %3909 = vmatprep.subr.bf16.mxu0 0
  %3910 = vmatpush1.bf16.msra.mxu0 0
  %3911 = vmatprep.subr.bf16.mxu0 0
  %3912 = vmatpush1.bf16.msra.mxu0 0
  %3913 = vmatprep.subr.bf16.mxu0 0
  %3914 = vmatpush1.bf16.msra.mxu0 0
  %3915 = vmatprep.subr.bf16.mxu0 0
  %3916 = vmatpush1.bf16.msra.mxu0 0
  %3917 = vmatprep.subr.bf16.mxu0 0
  %3918 = vmatpush1.bf16.msra.mxu0 0
  %3919 = vmatprep.subr.bf16.mxu0 0
  %3920 = vmatpush1.bf16.msra.mxu0 0
  %3921 = vmatprep.mubr.bf16.mxu0 0
  %3922 = vmatmul.mubr.bf16.gmra.mrb[0].mxu0 %v3791
  %v3923 = vpop.f32.mrb[0].mxu0
  %v3924 = vadd.f32 0.0, %v3923
  %v3925 = vpop.f32.mrb[0].mxu0
  %v3926 = vpop.f32.mrb[0].mxu0
  %v3927 = vadd.f32 0.0, %v3926
  %v3928 = vpop.f32.mrb[0].mxu0
  %3929 = vmatprep.mubr.bf16.mxu0 0
  %3930 = vmatmul.mubr.bf16.gmra.mrb[0].mxu0 %v3794
  %v3931 = vpop.f32.mrb[0].mxu0
  %v3932 = vadd.f32 0.0, %v3931
  %v3933 = vpop.f32.mrb[0].mxu0
  %v3934 = vpop.f32.mrb[0].mxu0
  %v3935 = vadd.f32 0.0, %v3934
  %v3936 = vpop.f32.mrb[0].mxu0
  %3937 = vmatprep.mubr.bf16.mxu0 0
  %3938 = vmatmul.mubr.bf16.gmra.mrb[0].mxu0 %v3797
  %v3939 = vpop.f32.mrb[0].mxu0
  %v3940 = vadd.f32 0.0, %v3939
  %v3941 = vpop.f32.mrb[0].mxu0
  %v3942 = vpop.f32.mrb[0].mxu0
  %v3943 = vadd.f32 0.0, %v3942
  %v3944 = vpop.f32.mrb[0].mxu0
  %3945 = vmatprep.mubr.bf16.mxu0 0
  %3946 = vmatmul.mubr.bf16.gmra.mrb[0].mxu0 %v3800
  %v3947 = vpop.f32.mrb[0].mxu0
  %v3948 = vadd.f32 0.0, %v3947
  %v3949 = vpop.f32.mrb[0].mxu0
  %v3950 = vpop.f32.mrb[0].mxu0
  %v3951 = vadd.f32 0.0, %v3950
  %v3952 = vpop.f32.mrb[0].mxu0
  %3953 = vmatprep.mubr.bf16.mxu0 0
  %3954 = vmatmul.mubr.bf16.gmra.mrb[0].mxu0 %v3803
  %v3955 = vpop.f32.mrb[0].mxu0
  %v3956 = vadd.f32 0.0, %v3955
  %v3957 = vpop.f32.mrb[0].mxu0
  %v3958 = vpop.f32.mrb[0].mxu0
  %v3959 = vadd.f32 0.0, %v3958
  %v3960 = vpop.f32.mrb[0].mxu0
  %3961 = vmatprep.mubr.bf16.mxu0 0
  %3962 = vmatmul.mubr.bf16.gmra.mrb[0].mxu0 %v3806
  %v3963 = vpop.f32.mrb[0].mxu0
  %v3964 = vadd.f32 0.0, %v3963
  %v3965 = vpop.f32.mrb[0].mxu0
  %v3966 = vpop.f32.mrb[0].mxu0
  %v3967 = vadd.f32 0.0, %v3966
  %v3968 = vpop.f32.mrb[0].mxu0
  %3969 = vmatprep.mubr.bf16.mxu0 0
  %3970 = vmatmul.mubr.bf16.gmra.mrb[0].mxu0 %v3809
  %v3971 = vpop.f32.mrb[0].mxu0
  %v3972 = vadd.f32 0.0, %v3971
  %v3973 = vpop.f32.mrb[0].mxu0
  %v3974 = vpop.f32.mrb[0].mxu0
  %v3975 = vadd.f32 0.0, %v3974
  %v3976 = vpop.f32.mrb[0].mxu0
  %3977 = vmatprep.mubr.bf16.mxu0 0
  %3978 = vmatmul.mubr.bf16.gmra.mrb[0].mxu0 %v3812
  %v3979 = vpop.f32.mrb[0].mxu0
  %v3980 = vadd.f32 0.0, %v3979
  %v3981 = vpop.f32.mrb[0].mxu0
  %v3982 = vpop.f32.mrb[0].mxu0
  %v3983 = vadd.f32 0.0, %v3982
  %v3984 = vpop.f32.mrb[0].mxu0
  %3985 = vmatprep.mubr.bf16.mxu0 0
  %3986 = vmatmul.mubr.bf16.gmra.mrb[0].mxu0 %v3815
  %v3987 = vpop.f32.mrb[0].mxu0
  %v3988 = vadd.f32 0.0, %v3987
  %v3989 = vpop.f32.mrb[0].mxu0
  %v3990 = vpop.f32.mrb[0].mxu0
  %v3991 = vadd.f32 0.0, %v3990
  %v3992 = vpop.f32.mrb[0].mxu0
  %3993 = vmatprep.mubr.bf16.mxu0 0
  %3994 = vmatmul.mubr.bf16.gmra.mrb[0].mxu0 %v3818
  %v3995 = vpop.f32.mrb[0].mxu0
  %v3996 = vadd.f32 0.0, %v3995
  %v3997 = vpop.f32.mrb[0].mxu0
  %v3998 = vpop.f32.mrb[0].mxu0
  %v3999 = vadd.f32 0.0, %v3998
  %v4000 = vpop.f32.mrb[0].mxu0
  %4001 = vmatprep.mubr.bf16.mxu0 0
  %4002 = vmatmul.mubr.bf16.gmra.mrb[0].mxu0 %v3821
  %v4003 = vpop.f32.mrb[0].mxu0
  %v4004 = vadd.f32 0.0, %v4003
  %v4005 = vpop.f32.mrb[0].mxu0
  %v4006 = vpop.f32.mrb[0].mxu0
  %v4007 = vadd.f32 0.0, %v4006
  %v4008 = vpop.f32.mrb[0].mxu0
  %4009 = vmatprep.mubr.bf16.mxu0 0
  %4010 = vmatmul.mubr.bf16.gmra.mrb[0].mxu0 %v3824
  %v4011 = vpop.f32.mrb[0].mxu0
  %v4012 = vadd.f32 0.0, %v4011
  %v4013 = vpop.f32.mrb[0].mxu0
  %v4014 = vpop.f32.mrb[0].mxu0
  %v4015 = vadd.f32 0.0, %v4014
  %v4016 = vpop.f32.mrb[0].mxu0
  %4017 = vmatprep.mubr.bf16.mxu0 0
  %4018 = vmatmul.mubr.bf16.gmra.mrb[0].mxu0 %v3827
  %v4019 = vpop.f32.mrb[0].mxu0
  %v4020 = vadd.f32 0.0, %v4019
  %v4021 = vpop.f32.mrb[0].mxu0
  %v4022 = vpop.f32.mrb[0].mxu0
  %v4023 = vadd.f32 0.0, %v4022
  %v4024 = vpop.f32.mrb[0].mxu0
  %4025 = vmatprep.mubr.bf16.mxu0 0
  %4026 = vmatmul.mubr.bf16.gmra.mrb[0].mxu0 %v3830
  %v4027 = vpop.f32.mrb[0].mxu0
  %v4028 = vadd.f32 0.0, %v4027
  %v4029 = vpop.f32.mrb[0].mxu0
  %v4030 = vpop.f32.mrb[0].mxu0
  %v4031 = vadd.f32 0.0, %v4030
  %v4032 = vpop.f32.mrb[0].mxu0
  %4033 = vmatprep.mubr.bf16.mxu0 0
  %4034 = vmatmul.mubr.bf16.gmra.mrb[0].mxu0 %v3833
  %v4035 = vpop.f32.mrb[0].mxu0
  %v4036 = vadd.f32 0.0, %v4035
  %v4037 = vpop.f32.mrb[0].mxu0
  %v4038 = vpop.f32.mrb[0].mxu0
  %v4039 = vadd.f32 0.0, %v4038
  %v4040 = vpop.f32.mrb[0].mxu0
  %4041 = vmatprep.mubr.bf16.mxu0 0
  %4042 = vmatmul.mubr.bf16.gmra.mrb[0].mxu0 %v3836
  %v4043 = vpop.f32.mrb[0].mxu0
  %v4044 = vadd.f32 0.0, %v4043
  %v4045 = vpop.f32.mrb[0].mxu0
  %v4046 = vpop.f32.mrb[0].mxu0
  %v4047 = vadd.f32 0.0, %v4046
  %v4048 = vpop.f32.mrb[0].mxu0
  %4049 = vmatprep.mubr.bf16.mxu0 0
  %4050 = vmatmul.mubr.bf16.gmra.mrb[0].mxu0 %v3839
  %v4051 = vpop.f32.mrb[0].mxu0
  %v4052 = vadd.f32 0.0, %v4051
  %v4053 = vpop.f32.mrb[0].mxu0
  %v4054 = vpop.f32.mrb[0].mxu0
  %v4055 = vadd.f32 0.0, %v4054
  %v4056 = vpop.f32.mrb[0].mxu0
  %4057 = vmatprep.mubr.bf16.mxu0 0
  %4058 = vmatmul.mubr.bf16.gmra.mrb[0].mxu0 %v3842
  %v4059 = vpop.f32.mrb[0].mxu0
  %v4060 = vadd.f32 0.0, %v4059
  %v4061 = vpop.f32.mrb[0].mxu0
  %v4062 = vpop.f32.mrb[0].mxu0
  %v4063 = vadd.f32 0.0, %v4062
  %v4064 = vpop.f32.mrb[0].mxu0
  %4065 = vmatprep.mubr.bf16.mxu0 0
  %4066 = vmatmul.mubr.bf16.gmra.mrb[0].mxu0 %v3845
  %v4067 = vpop.f32.mrb[0].mxu0
  %v4068 = vadd.f32 0.0, %v4067
  %v4069 = vpop.f32.mrb[0].mxu0
  %v4070 = vpop.f32.mrb[0].mxu0
  %v4071 = vadd.f32 0.0, %v4070
  %v4072 = vpop.f32.mrb[0].mxu0
  %4073 = vmatprep.mubr.bf16.mxu0 0
  %4074 = vmatmul.mubr.bf16.gmra.mrb[0].mxu0 %v3848
  %v4075 = vpop.f32.mrb[0].mxu0
  %v4076 = vadd.f32 0.0, %v4075
  %v4077 = vpop.f32.mrb[0].mxu0
  %v4078 = vpop.f32.mrb[0].mxu0
  %v4079 = vadd.f32 0.0, %v4078
  %v4080 = vpop.f32.mrb[0].mxu0
  %4081 = vmatprep.mubr.bf16.mxu0 0
  %4082 = vmatmul.mubr.bf16.gmra.mrb[0].mxu0 %v3851
  %v4083 = vpop.f32.mrb[0].mxu0
  %v4084 = vadd.f32 0.0, %v4083
  %v4085 = vpop.f32.mrb[0].mxu0
  %v4086 = vpop.f32.mrb[0].mxu0
  %v4087 = vadd.f32 0.0, %v4086
  %v4088 = vpop.f32.mrb[0].mxu0
  %4089 = vmatprep.mubr.bf16.mxu0 0
  %4090 = vmatmul.mubr.bf16.gmra.mrb[0].mxu0 %v3854
  %v4091 = vpop.f32.mrb[0].mxu0
  %v4092 = vadd.f32 0.0, %v4091
  %v4093 = vpop.f32.mrb[0].mxu0
  %v4094 = vpop.f32.mrb[0].mxu0
  %v4095 = vadd.f32 0.0, %v4094
  %v4096 = vpop.f32.mrb[0].mxu0
  %4097 = vmatprep.mubr.bf16.mxu0 0
  %4098 = vmatmul.mubr.bf16.gmra.mrb[0].mxu0 %v3857
  %v4099 = vpop.f32.mrb[0].mxu0
  %v4100 = vadd.f32 0.0, %v4099
  %v4101 = vpop.f32.mrb[0].mxu0
  %v4102 = vpop.f32.mrb[0].mxu0
  %v4103 = vadd.f32 0.0, %v4102
  %v4104 = vpop.f32.mrb[0].mxu0
  %4105 = vmatprep.mubr.bf16.mxu0 0
  %4106 = vmatmul.mubr.bf16.gmra.mrb[0].mxu0 %v3860
  %v4107 = vpop.f32.mrb[0].mxu0
  %v4108 = vadd.f32 0.0, %v4107
  %v4109 = vpop.f32.mrb[0].mxu0
  %v4110 = vpop.f32.mrb[0].mxu0
  %v4111 = vadd.f32 0.0, %v4110
  %v4112 = vpop.f32.mrb[0].mxu0
  %4113 = vmatprep.mubr.bf16.mxu0 0
  %4114 = vmatmul.mubr.bf16.gmra.mrb[0].mxu0 %v3863
  %v4115 = vpop.f32.mrb[0].mxu0
  %v4116 = vadd.f32 0.0, %v4115
  %v4117 = vpop.f32.mrb[0].mxu0
  %v4118 = vpop.f32.mrb[0].mxu0
  %v4119 = vadd.f32 0.0, %v4118
  %v4120 = vpop.f32.mrb[0].mxu0
  %4121 = vmatprep.mubr.bf16.mxu0 0
  %4122 = vmatmul.mubr.bf16.gmra.mrb[0].mxu0 %v3866
  %v4123 = vpop.f32.mrb[0].mxu0
  %v4124 = vadd.f32 0.0, %v4123
  %v4125 = vpop.f32.mrb[0].mxu0
  %v4126 = vpop.f32.mrb[0].mxu0
  %v4127 = vadd.f32 0.0, %v4126
  %v4128 = vpop.f32.mrb[0].mxu0
  %4129 = vmatprep.mubr.bf16.mxu0 0
  %4130 = vmatmul.mubr.bf16.gmra.mrb[0].mxu0 %v3869
  %v4131 = vpop.f32.mrb[0].mxu0
  %v4132 = vadd.f32 0.0, %v4131
  %v4133 = vpop.f32.mrb[0].mxu0
  %v4134 = vpop.f32.mrb[0].mxu0
  %v4135 = vadd.f32 0.0, %v4134
  %v4136 = vpop.f32.mrb[0].mxu0
  %4137 = vmatprep.mubr.bf16.mxu0 0
  %4138 = vmatmul.mubr.bf16.gmra.mrb[0].mxu0 %v3872
  %v4139 = vpop.f32.mrb[0].mxu0
  %v4140 = vadd.f32 0.0, %v4139
  %v4141 = vpop.f32.mrb[0].mxu0
  %v4142 = vpop.f32.mrb[0].mxu0
  %v4143 = vadd.f32 0.0, %v4142
  %v4144 = vpop.f32.mrb[0].mxu0
  %4145 = vmatprep.mubr.bf16.mxu0 0
  %4146 = vmatmul.mubr.bf16.gmra.mrb[0].mxu0 %v3875
  %v4147 = vpop.f32.mrb[0].mxu0
  %v4148 = vadd.f32 0.0, %v4147
  %v4149 = vpop.f32.mrb[0].mxu0
  %v4150 = vpop.f32.mrb[0].mxu0
  %v4151 = vadd.f32 0.0, %v4150
  %v4152 = vpop.f32.mrb[0].mxu0
  %4153 = vmatprep.mubr.bf16.mxu0 0
  %4154 = vmatmul.mubr.bf16.gmra.mrb[0].mxu0 %v3878
  %v4155 = vpop.f32.mrb[0].mxu0
  %v4156 = vadd.f32 0.0, %v4155
  %v4157 = vpop.f32.mrb[0].mxu0
  %v4158 = vpop.f32.mrb[0].mxu0
  %v4159 = vadd.f32 0.0, %v4158
  %v4160 = vpop.f32.mrb[0].mxu0
  %4161 = vmatprep.mubr.bf16.mxu0 0
  %4162 = vmatmul.mubr.bf16.gmra.mrb[0].mxu0 %v3881
  %v4163 = vpop.f32.mrb[0].mxu0
  %v4164 = vadd.f32 0.0, %v4163
  %v4165 = vpop.f32.mrb[0].mxu0
  %v4166 = vpop.f32.mrb[0].mxu0
  %v4167 = vadd.f32 0.0, %v4166
  %v4168 = vpop.f32.mrb[0].mxu0
  %4169 = vmatprep.mubr.bf16.mxu0 0
  %4170 = vmatmul.mubr.bf16.gmra.mrb[0].mxu0 %v3884
  %v4171 = vpop.f32.mrb[0].mxu0
  %v4172 = vadd.f32 0.0, %v4171
  %v4173 = vpop.f32.mrb[0].mxu0
  %v4174 = vpop.f32.mrb[0].mxu0
  %v4175 = vadd.f32 0.0, %v4174
  %v4176 = vpop.f32.mrb[0].mxu0
  %4177 = vdwg.mxu0
  %v4178 = vadd.f32 %v3628, %v3924
  %v4179 = vadd.f32 %v3629, %v3927
  %v4180 = vadd.f32 %v3630, %v3932
  %v4181 = vadd.f32 %v3631, %v3935
  %v4182 = vadd.f32 %v3632, %v3940
  %v4183 = vadd.f32 %v3633, %v3943
  %v4184 = vadd.f32 %v3634, %v3948
  %v4185 = vadd.f32 %v3635, %v3951
  %v4186 = vadd.f32 %v3636, %v3956
  %v4187 = vadd.f32 %v3637, %v3959
  %v4188 = vadd.f32 %v3638, %v3964
  %v4189 = vadd.f32 %v3639, %v3967
  %v4190 = vadd.f32 %v3640, %v3972
  %v4191 = vadd.f32 %v3641, %v3975
  %v4192 = vadd.f32 %v3642, %v3980
  %v4193 = vadd.f32 %v3643, %v3983
  %v4194 = vadd.f32 %v3644, %v3988
  %v4195 = vadd.f32 %v3645, %v3991
  %v4196 = vadd.f32 %v3646, %v3996
  %v4197 = vadd.f32 %v3647, %v3999
  %v4198 = vadd.f32 %v3648, %v4004
  %v4199 = vadd.f32 %v3649, %v4007
  %v4200 = vadd.f32 %v3650, %v4012
  %v4201 = vadd.f32 %v3651, %v4015
  %v4202 = vadd.f32 %v3652, %v4020
  %v4203 = vadd.f32 %v3653, %v4023
  %v4204 = vadd.f32 %v3654, %v4028
  %v4205 = vadd.f32 %v3655, %v4031
  %v4206 = vadd.f32 %v3656, %v4036
  %v4207 = vadd.f32 %v3657, %v4039
  %v4208 = vadd.f32 %v3658, %v4044
  %v4209 = vadd.f32 %v3659, %v4047
  %v4210 = vadd.f32 %v3660, %v4052
  %v4211 = vadd.f32 %v3661, %v4055
  %v4212 = vadd.f32 %v3662, %v4060
  %v4213 = vadd.f32 %v3663, %v4063
  %v4214 = vadd.f32 %v3664, %v4068
  %v4215 = vadd.f32 %v3665, %v4071
  %v4216 = vadd.f32 %v3666, %v4076
  %v4217 = vadd.f32 %v3667, %v4079
  %v4218 = vadd.f32 %v3668, %v4084
  %v4219 = vadd.f32 %v3669, %v4087
  %v4220 = vadd.f32 %v3670, %v4092
  %v4221 = vadd.f32 %v3671, %v4095
  %v4222 = vadd.f32 %v3672, %v4100
  %v4223 = vadd.f32 %v3673, %v4103
  %v4224 = vadd.f32 %v3674, %v4108
  %v4225 = vadd.f32 %v3675, %v4111
  %v4226 = vadd.f32 %v3676, %v4116
  %v4227 = vadd.f32 %v3677, %v4119
  %v4228 = vadd.f32 %v3678, %v4124
  %v4229 = vadd.f32 %v3679, %v4127
  %v4230 = vadd.f32 %v3680, %v4132
  %v4231 = vadd.f32 %v3681, %v4135
  %v4232 = vadd.f32 %v3682, %v4140
  %v4233 = vadd.f32 %v3683, %v4143
  %v4234 = vadd.f32 %v3684, %v4148
  %v4235 = vadd.f32 %v3685, %v4151
  %v4236 = vadd.f32 %v3686, %v4156
  %v4237 = vadd.f32 %v3687, %v4159
  %v4238 = vadd.f32 %v3688, %v4164
  %v4239 = vadd.f32 %v3689, %v4167
  %v4240 = vadd.f32 %v3690, %v4172
  %v4241 = vadd.f32 %v3691, %v4175
  %s4242 = scalar_lea.vmem [#allocation2], 64
  %v4243 = vld [vmem:[%s4242 + $0x7] sm:$0xff]
  %v4244 = vld [vmem:[%s4242 + $0xf] sm:$0xff]
  %v4245 = vld [vmem:[%s4242 + $0x27] sm:$0xff]
  %v4246 = vld [vmem:[%s4242 + $0x2f] sm:$0xff]
  %v4247 = vld [vmem:[%s4242 + $0x47] sm:$0xff]
  %v4248 = vld [vmem:[%s4242 + $0x4f] sm:$0xff]
  %v4249 = vld [vmem:[%s4242 + $0x67] sm:$0xff]
  %v4250 = vld [vmem:[%s4242 + $0x6f] sm:$0xff]
  %v4251 = vld [vmem:[%s4242 + $0x87] sm:$0xff]
  %v4252 = vld [vmem:[%s4242 + $0x8f] sm:$0xff]
  %v4253 = vld [vmem:[%s4242 + $0xa7] sm:$0xff]
  %v4254 = vld [vmem:[%s4242 + $0xaf] sm:$0xff]
  %v4255 = vld [vmem:[%s4242 + $0xc7] sm:$0xff]
  %v4256 = vld [vmem:[%s4242 + $0xcf] sm:$0xff]
  %v4257 = vld [vmem:[%s4242 + $0xe7] sm:$0xff]
  %v4258 = vld [vmem:[%s4242 + $0xef] sm:$0xff]
  %v4259 = vld [vmem:[%s4242 + $0x107] sm:$0xff]
  %v4260 = vld [vmem:[%s4242 + $0x10f] sm:$0xff]
  %v4261 = vld [vmem:[%s4242 + $0x127] sm:$0xff]
  %v4262 = vld [vmem:[%s4242 + $0x12f] sm:$0xff]
  %v4263 = vld [vmem:[%s4242 + $0x147] sm:$0xff]
  %v4264 = vld [vmem:[%s4242 + $0x14f] sm:$0xff]
  %v4265 = vld [vmem:[%s4242 + $0x167] sm:$0xff]
  %v4266 = vld [vmem:[%s4242 + $0x16f] sm:$0xff]
  %v4267 = vld [vmem:[%s4242 + $0x187] sm:$0xff]
  %v4268 = vld [vmem:[%s4242 + $0x18f] sm:$0xff]
  %v4269 = vld [vmem:[%s4242 + $0x1a7] sm:$0xff]
  %v4270 = vld [vmem:[%s4242 + $0x1af] sm:$0xff]
  %v4271 = vld [vmem:[%s4242 + $0x1c7] sm:$0xff]
  %v4272 = vld [vmem:[%s4242 + $0x1cf] sm:$0xff]
  %v4273 = vld [vmem:[%s4242 + $0x1e7] sm:$0xff]
  %v4274 = vld [vmem:[%s4242 + $0x1ef] sm:$0xff]
  %v4275 = vld [vmem:[%s4242 + $0x247] sm:$0xff]
  %v4276 = vld [vmem:[%s4242 + $0x24f] sm:$0xff]
  %v4277 = vld [vmem:[%s4242 + $0x267] sm:$0xff]
  %v4278 = vld [vmem:[%s4242 + $0x26f] sm:$0xff]
  %v4279 = vld [vmem:[%s4242 + $0x287] sm:$0xff]
  %v4280 = vld [vmem:[%s4242 + $0x28f] sm:$0xff]
  %v4281 = vld [vmem:[%s4242 + $0x2a7] sm:$0xff]
  %v4282 = vld [vmem:[%s4242 + $0x2af] sm:$0xff]
  %v4283 = vld [vmem:[%s4242 + $0x2c7] sm:$0xff]
  %v4284 = vld [vmem:[%s4242 + $0x2cf] sm:$0xff]
  %v4285 = vld [vmem:[%s4242 + $0x2e7] sm:$0xff]
  %v4286 = vld [vmem:[%s4242 + $0x2ef] sm:$0xff]
  %v4287 = vld [vmem:[%s4242 + $0x307] sm:$0xff]
  %v4288 = vld [vmem:[%s4242 + $0x30f] sm:$0xff]
  %v4289 = vld [vmem:[%s4242 + $0x327] sm:$0xff]
  %v4290 = vld [vmem:[%s4242 + $0x32f] sm:$0xff]
  %v4291 = vld [vmem:[%s4242 + $0x347] sm:$0xff]
  %v4292 = vld [vmem:[%s4242 + $0x34f] sm:$0xff]
  %v4293 = vld [vmem:[%s4242 + $0x367] sm:$0xff]
  %v4294 = vld [vmem:[%s4242 + $0x36f] sm:$0xff]
  %v4295 = vld [vmem:[%s4242 + $0x387] sm:$0xff]
  %v4296 = vld [vmem:[%s4242 + $0x38f] sm:$0xff]
  %v4297 = vld [vmem:[%s4242 + $0x3a7] sm:$0xff]
  %v4298 = vld [vmem:[%s4242 + $0x3af] sm:$0xff]
  %v4299 = vld [vmem:[%s4242 + $0x3c7] sm:$0xff]
  %v4300 = vld [vmem:[%s4242 + $0x3cf] sm:$0xff]
  %v4301 = vld [vmem:[%s4242 + $0x3e7] sm:$0xff]
  %v4302 = vld [vmem:[%s4242 + $0x3ef] sm:$0xff]
  %v4303 = vld [vmem:[%s4242 + $0x407] sm:$0xff]
  %v4304 = vld [vmem:[%s4242 + $0x40f] sm:$0xff]
  %v4305 = vld [vmem:[%s4242 + $0x427] sm:$0xff]
  %v4306 = vld [vmem:[%s4242 + $0x42f] sm:$0xff]
  %v4307 = vpack.c.bf16 %v4244, %v4243
  %v4308 = vpack.c.bf16 %v4246, %v4245
  %v4309 = vpack.c.bf16 %v4248, %v4247
  %v4310 = vpack.c.bf16 %v4250, %v4249
  %v4311 = vpack.c.bf16 %v4252, %v4251
  %v4312 = vpack.c.bf16 %v4254, %v4253
  %v4313 = vpack.c.bf16 %v4256, %v4255
  %v4314 = vpack.c.bf16 %v4258, %v4257
  %v4315 = vpack.c.bf16 %v4260, %v4259
  %v4316 = vpack.c.bf16 %v4262, %v4261
  %v4317 = vpack.c.bf16 %v4264, %v4263
  %v4318 = vpack.c.bf16 %v4266, %v4265
  %v4319 = vpack.c.bf16 %v4268, %v4267
  %v4320 = vpack.c.bf16 %v4270, %v4269
  %v4321 = vpack.c.bf16 %v4272, %v4271
  %v4322 = vpack.c.bf16 %v4274, %v4273
  %v4323 = vpack.c.bf16 %v4276, %v4275
  %v4324 = vpack.c.bf16 %v4278, %v4277
  %v4325 = vpack.c.bf16 %v4280, %v4279
  %v4326 = vpack.c.bf16 %v4282, %v4281
  %v4327 = vpack.c.bf16 %v4284, %v4283
  %v4328 = vpack.c.bf16 %v4286, %v4285
  %v4329 = vpack.c.bf16 %v4288, %v4287
  %v4330 = vpack.c.bf16 %v4290, %v4289
  %v4331 = vpack.c.bf16 %v4292, %v4291
  %v4332 = vpack.c.bf16 %v4294, %v4293
  %v4333 = vpack.c.bf16 %v4296, %v4295
  %v4334 = vpack.c.bf16 %v4298, %v4297
  %v4335 = vpack.c.bf16 %v4300, %v4299
  %v4336 = vpack.c.bf16 %v4302, %v4301
  %v4337 = vpack.c.bf16 %v4304, %v4303
  %v4338 = vpack.c.bf16 %v4306, %v4305
  %s4339 = scalar_lea.vmem %s1, 12
  %v4340 = vld [vmem:[%s4339] sm:$0x3]
  %v4342 = vsel %vm96, %v4307, 0
  %v4345 = vsel %vm96, %v4308, 0
  %v4348 = vsel %vm96, %v4309, 0
  %v4351 = vsel %vm96, %v4310, 0
  %v4354 = vsel %vm96, %v4311, 0
  %v4357 = vsel %vm96, %v4312, 0
  %v4360 = vsel %vm96, %v4313, 0
  %v4363 = vsel %vm96, %v4314, 0
  %v4366 = vsel %vm96, %v4315, 0
  %v4369 = vsel %vm96, %v4316, 0
  %v4372 = vsel %vm96, %v4317, 0
  %v4375 = vsel %vm96, %v4318, 0
  %v4378 = vsel %vm96, %v4319, 0
  %v4381 = vsel %vm96, %v4320, 0
  %v4384 = vsel %vm96, %v4321, 0
  %v4387 = vsel %vm96, %v4322, 0
  %v4390 = vsel %vm96, %v4323, 0
  %v4393 = vsel %vm96, %v4324, 0
  %v4396 = vsel %vm96, %v4325, 0
  %v4399 = vsel %vm96, %v4326, 0
  %v4402 = vsel %vm96, %v4327, 0
  %v4405 = vsel %vm96, %v4328, 0
  %v4408 = vsel %vm96, %v4329, 0
  %v4411 = vsel %vm96, %v4330, 0
  %v4414 = vsel %vm96, %v4331, 0
  %v4417 = vsel %vm96, %v4332, 0
  %v4420 = vsel %vm96, %v4333, 0
  %v4423 = vsel %vm96, %v4334, 0
  %v4426 = vsel %vm96, %v4335, 0
  %v4429 = vsel %vm96, %v4336, 0
  %v4432 = vsel %vm96, %v4337, 0
  %v4435 = vsel %vm96, %v4338, 0
  %v4438 = vsel %vm1361, %v4340, 0
  %4440 = vmatprep.subr.bf16.mxu0 0
  %4441 = vmatpush1.bf16.msra.mxu0 %v4438
  %4442 = vmatprep.subr.bf16.mxu0 0
  %4443 = vmatpush1.bf16.msra.mxu0 0
  %4444 = vmatprep.subr.bf16.mxu0 0
  %4445 = vmatpush1.bf16.msra.mxu0 0
  %4446 = vmatprep.subr.bf16.mxu0 0
  %4447 = vmatpush1.bf16.msra.mxu0 0
  %4448 = vmatprep.subr.bf16.mxu0 0
  %4449 = vmatpush1.bf16.msra.mxu0 0
  %4450 = vmatprep.subr.bf16.mxu0 0
  %4451 = vmatpush1.bf16.msra.mxu0 0
  %4452 = vmatprep.subr.bf16.mxu0 0
  %4453 = vmatpush1.bf16.msra.mxu0 0
  %4454 = vmatprep.subr.bf16.mxu0 0
  %4455 = vmatpush1.bf16.msra.mxu0 0
  %4456 = vmatprep.subr.bf16.mxu0 0
  %4457 = vmatpush1.bf16.msra.mxu0 0
  %4458 = vmatprep.subr.bf16.mxu0 0
  %4459 = vmatpush1.bf16.msra.mxu0 0
  %4460 = vmatprep.subr.bf16.mxu0 0
  %4461 = vmatpush1.bf16.msra.mxu0 0
  %4462 = vmatprep.subr.bf16.mxu0 0
  %4463 = vmatpush1.bf16.msra.mxu0 0
  %4464 = vmatprep.subr.bf16.mxu0 0
  %4465 = vmatpush1.bf16.msra.mxu0 0
  %4466 = vmatprep.subr.bf16.mxu0 0
  %4467 = vmatpush1.bf16.msra.mxu0 0
  %4468 = vmatprep.subr.bf16.mxu0 0
  %4469 = vmatpush1.bf16.msra.mxu0 0
  %4470 = vmatprep.subr.bf16.mxu0 0
  %4471 = vmatpush1.bf16.msra.mxu0 0
  %4472 = vmatprep.mubr.bf16.mxu0 0
  %4473 = vmatmul.mubr.bf16.gmra.mrb[0].mxu0 %v4342
  %v4474 = vpop.f32.mrb[0].mxu0
  %v4475 = vadd.f32 0.0, %v4474
  %v4476 = vpop.f32.mrb[0].mxu0
  %v4477 = vpop.f32.mrb[0].mxu0
  %v4478 = vadd.f32 0.0, %v4477
  %v4479 = vpop.f32.mrb[0].mxu0
  %4480 = vmatprep.mubr.bf16.mxu0 0
  %4481 = vmatmul.mubr.bf16.gmra.mrb[0].mxu0 %v4345
  %v4482 = vpop.f32.mrb[0].mxu0
  %v4483 = vadd.f32 0.0, %v4482
  %v4484 = vpop.f32.mrb[0].mxu0
  %v4485 = vpop.f32.mrb[0].mxu0
  %v4486 = vadd.f32 0.0, %v4485
  %v4487 = vpop.f32.mrb[0].mxu0
  %4488 = vmatprep.mubr.bf16.mxu0 0
  %4489 = vmatmul.mubr.bf16.gmra.mrb[0].mxu0 %v4348
  %v4490 = vpop.f32.mrb[0].mxu0
  %v4491 = vadd.f32 0.0, %v4490
  %v4492 = vpop.f32.mrb[0].mxu0
  %v4493 = vpop.f32.mrb[0].mxu0
  %v4494 = vadd.f32 0.0, %v4493
  %v4495 = vpop.f32.mrb[0].mxu0
  %4496 = vmatprep.mubr.bf16.mxu0 0
  %4497 = vmatmul.mubr.bf16.gmra.mrb[0].mxu0 %v4351
  %v4498 = vpop.f32.mrb[0].mxu0
  %v4499 = vadd.f32 0.0, %v4498
  %v4500 = vpop.f32.mrb[0].mxu0
  %v4501 = vpop.f32.mrb[0].mxu0
  %v4502 = vadd.f32 0.0, %v4501
  %v4503 = vpop.f32.mrb[0].mxu0
  %4504 = vmatprep.mubr.bf16.mxu0 0
  %4505 = vmatmul.mubr.bf16.gmra.mrb[0].mxu0 %v4354
  %v4506 = vpop.f32.mrb[0].mxu0
  %v4507 = vadd.f32 0.0, %v4506
  %v4508 = vpop.f32.mrb[0].mxu0
  %v4509 = vpop.f32.mrb[0].mxu0
  %v4510 = vadd.f32 0.0, %v4509
  %v4511 = vpop.f32.mrb[0].mxu0
  %4512 = vmatprep.mubr.bf16.mxu0 0
  %4513 = vmatmul.mubr.bf16.gmra.mrb[0].mxu0 %v4357
  %v4514 = vpop.f32.mrb[0].mxu0
  %v4515 = vadd.f32 0.0, %v4514
  %v4516 = vpop.f32.mrb[0].mxu0
  %v4517 = vpop.f32.mrb[0].mxu0
  %v4518 = vadd.f32 0.0, %v4517
  %v4519 = vpop.f32.mrb[0].mxu0
  %4520 = vmatprep.mubr.bf16.mxu0 0
  %4521 = vmatmul.mubr.bf16.gmra.mrb[0].mxu0 %v4360
  %v4522 = vpop.f32.mrb[0].mxu0
  %v4523 = vadd.f32 0.0, %v4522
  %v4524 = vpop.f32.mrb[0].mxu0
  %v4525 = vpop.f32.mrb[0].mxu0
  %v4526 = vadd.f32 0.0, %v4525
  %v4527 = vpop.f32.mrb[0].mxu0
  %4528 = vmatprep.mubr.bf16.mxu0 0
  %4529 = vmatmul.mubr.bf16.gmra.mrb[0].mxu0 %v4363
  %v4530 = vpop.f32.mrb[0].mxu0
  %v4531 = vadd.f32 0.0, %v4530
  %v4532 = vpop.f32.mrb[0].mxu0
  %v4533 = vpop.f32.mrb[0].mxu0
  %v4534 = vadd.f32 0.0, %v4533
  %v4535 = vpop.f32.mrb[0].mxu0
  %4536 = vmatprep.mubr.bf16.mxu0 0
  %4537 = vmatmul.mubr.bf16.gmra.mrb[0].mxu0 %v4366
  %v4538 = vpop.f32.mrb[0].mxu0
  %v4539 = vadd.f32 0.0, %v4538
  %v4540 = vpop.f32.mrb[0].mxu0
  %v4541 = vpop.f32.mrb[0].mxu0
  %v4542 = vadd.f32 0.0, %v4541
  %v4543 = vpop.f32.mrb[0].mxu0
  %4544 = vmatprep.mubr.bf16.mxu0 0
  %4545 = vmatmul.mubr.bf16.gmra.mrb[0].mxu0 %v4369
  %v4546 = vpop.f32.mrb[0].mxu0
  %v4547 = vadd.f32 0.0, %v4546
  %v4548 = vpop.f32.mrb[0].mxu0
  %v4549 = vpop.f32.mrb[0].mxu0
  %v4550 = vadd.f32 0.0, %v4549
  %v4551 = vpop.f32.mrb[0].mxu0
  %4552 = vmatprep.mubr.bf16.mxu0 0
  %4553 = vmatmul.mubr.bf16.gmra.mrb[0].mxu0 %v4372
  %v4554 = vpop.f32.mrb[0].mxu0
  %v4555 = vadd.f32 0.0, %v4554
  %v4556 = vpop.f32.mrb[0].mxu0
  %v4557 = vpop.f32.mrb[0].mxu0
  %v4558 = vadd.f32 0.0, %v4557
  %v4559 = vpop.f32.mrb[0].mxu0
  %4560 = vmatprep.mubr.bf16.mxu0 0
  %4561 = vmatmul.mubr.bf16.gmra.mrb[0].mxu0 %v4375
  %v4562 = vpop.f32.mrb[0].mxu0
  %v4563 = vadd.f32 0.0, %v4562
  %v4564 = vpop.f32.mrb[0].mxu0
  %v4565 = vpop.f32.mrb[0].mxu0
  %v4566 = vadd.f32 0.0, %v4565
  %v4567 = vpop.f32.mrb[0].mxu0
  %4568 = vmatprep.mubr.bf16.mxu0 0
  %4569 = vmatmul.mubr.bf16.gmra.mrb[0].mxu0 %v4378
  %v4570 = vpop.f32.mrb[0].mxu0
  %v4571 = vadd.f32 0.0, %v4570
  %v4572 = vpop.f32.mrb[0].mxu0
  %v4573 = vpop.f32.mrb[0].mxu0
  %v4574 = vadd.f32 0.0, %v4573
  %v4575 = vpop.f32.mrb[0].mxu0
  %4576 = vmatprep.mubr.bf16.mxu0 0
  %4577 = vmatmul.mubr.bf16.gmra.mrb[0].mxu0 %v4381
  %v4578 = vpop.f32.mrb[0].mxu0
  %v4579 = vadd.f32 0.0, %v4578
  %v4580 = vpop.f32.mrb[0].mxu0
  %v4581 = vpop.f32.mrb[0].mxu0
  %v4582 = vadd.f32 0.0, %v4581
  %v4583 = vpop.f32.mrb[0].mxu0
  %4584 = vmatprep.mubr.bf16.mxu0 0
  %4585 = vmatmul.mubr.bf16.gmra.mrb[0].mxu0 %v4384
  %v4586 = vpop.f32.mrb[0].mxu0
  %v4587 = vadd.f32 0.0, %v4586
  %v4588 = vpop.f32.mrb[0].mxu0
  %v4589 = vpop.f32.mrb[0].mxu0
  %v4590 = vadd.f32 0.0, %v4589
  %v4591 = vpop.f32.mrb[0].mxu0
  %4592 = vmatprep.mubr.bf16.mxu0 0
  %4593 = vmatmul.mubr.bf16.gmra.mrb[0].mxu0 %v4387
  %v4594 = vpop.f32.mrb[0].mxu0
  %v4595 = vadd.f32 0.0, %v4594
  %v4596 = vpop.f32.mrb[0].mxu0
  %v4597 = vpop.f32.mrb[0].mxu0
  %v4598 = vadd.f32 0.0, %v4597
  %v4599 = vpop.f32.mrb[0].mxu0
  %4600 = vmatprep.mubr.bf16.mxu0 0
  %4601 = vmatmul.mubr.bf16.gmra.mrb[0].mxu0 %v4390
  %v4602 = vpop.f32.mrb[0].mxu0
  %v4603 = vadd.f32 0.0, %v4602
  %v4604 = vpop.f32.mrb[0].mxu0
  %v4605 = vpop.f32.mrb[0].mxu0
  %v4606 = vadd.f32 0.0, %v4605
  %v4607 = vpop.f32.mrb[0].mxu0
  %4608 = vmatprep.mubr.bf16.mxu0 0
  %4609 = vmatmul.mubr.bf16.gmra.mrb[0].mxu0 %v4393
  %v4610 = vpop.f32.mrb[0].mxu0
  %v4611 = vadd.f32 0.0, %v4610
  %v4612 = vpop.f32.mrb[0].mxu0
  %v4613 = vpop.f32.mrb[0].mxu0
  %v4614 = vadd.f32 0.0, %v4613
  %v4615 = vpop.f32.mrb[0].mxu0
  %4616 = vmatprep.mubr.bf16.mxu0 0
  %4617 = vmatmul.mubr.bf16.gmra.mrb[0].mxu0 %v4396
  %v4618 = vpop.f32.mrb[0].mxu0
  %v4619 = vadd.f32 0.0, %v4618
  %v4620 = vpop.f32.mrb[0].mxu0
  %v4621 = vpop.f32.mrb[0].mxu0
  %v4622 = vadd.f32 0.0, %v4621
  %v4623 = vpop.f32.mrb[0].mxu0
  %4624 = vmatprep.mubr.bf16.mxu0 0
  %4625 = vmatmul.mubr.bf16.gmra.mrb[0].mxu0 %v4399
  %v4626 = vpop.f32.mrb[0].mxu0
  %v4627 = vadd.f32 0.0, %v4626
  %v4628 = vpop.f32.mrb[0].mxu0
  %v4629 = vpop.f32.mrb[0].mxu0
  %v4630 = vadd.f32 0.0, %v4629
  %v4631 = vpop.f32.mrb[0].mxu0
  %4632 = vmatprep.mubr.bf16.mxu0 0
  %4633 = vmatmul.mubr.bf16.gmra.mrb[0].mxu0 %v4402
  %v4634 = vpop.f32.mrb[0].mxu0
  %v4635 = vadd.f32 0.0, %v4634
  %v4636 = vpop.f32.mrb[0].mxu0
  %v4637 = vpop.f32.mrb[0].mxu0
  %v4638 = vadd.f32 0.0, %v4637
  %v4639 = vpop.f32.mrb[0].mxu0
  %4640 = vmatprep.mubr.bf16.mxu0 0
  %4641 = vmatmul.mubr.bf16.gmra.mrb[0].mxu0 %v4405
  %v4642 = vpop.f32.mrb[0].mxu0
  %v4643 = vadd.f32 0.0, %v4642
  %v4644 = vpop.f32.mrb[0].mxu0
  %v4645 = vpop.f32.mrb[0].mxu0
  %v4646 = vadd.f32 0.0, %v4645
  %v4647 = vpop.f32.mrb[0].mxu0
  %4648 = vmatprep.mubr.bf16.mxu0 0
  %4649 = vmatmul.mubr.bf16.gmra.mrb[0].mxu0 %v4408
  %v4650 = vpop.f32.mrb[0].mxu0
  %v4651 = vadd.f32 0.0, %v4650
  %v4652 = vpop.f32.mrb[0].mxu0
  %v4653 = vpop.f32.mrb[0].mxu0
  %v4654 = vadd.f32 0.0, %v4653
  %v4655 = vpop.f32.mrb[0].mxu0
  %4656 = vmatprep.mubr.bf16.mxu0 0
  %4657 = vmatmul.mubr.bf16.gmra.mrb[0].mxu0 %v4411
  %v4658 = vpop.f32.mrb[0].mxu0
  %v4659 = vadd.f32 0.0, %v4658
  %v4660 = vpop.f32.mrb[0].mxu0
  %v4661 = vpop.f32.mrb[0].mxu0
  %v4662 = vadd.f32 0.0, %v4661
  %v4663 = vpop.f32.mrb[0].mxu0
  %4664 = vmatprep.mubr.bf16.mxu0 0
  %4665 = vmatmul.mubr.bf16.gmra.mrb[0].mxu0 %v4414
  %v4666 = vpop.f32.mrb[0].mxu0
  %v4667 = vadd.f32 0.0, %v4666
  %v4668 = vpop.f32.mrb[0].mxu0
  %v4669 = vpop.f32.mrb[0].mxu0
  %v4670 = vadd.f32 0.0, %v4669
  %v4671 = vpop.f32.mrb[0].mxu0
  %4672 = vmatprep.mubr.bf16.mxu0 0
  %4673 = vmatmul.mubr.bf16.gmra.mrb[0].mxu0 %v4417
  %v4674 = vpop.f32.mrb[0].mxu0
  %v4675 = vadd.f32 0.0, %v4674
  %v4676 = vpop.f32.mrb[0].mxu0
  %v4677 = vpop.f32.mrb[0].mxu0
  %v4678 = vadd.f32 0.0, %v4677
  %v4679 = vpop.f32.mrb[0].mxu0
  %4680 = vmatprep.mubr.bf16.mxu0 0
  %4681 = vmatmul.mubr.bf16.gmra.mrb[0].mxu0 %v4420
  %v4682 = vpop.f32.mrb[0].mxu0
  %v4683 = vadd.f32 0.0, %v4682
  %v4684 = vpop.f32.mrb[0].mxu0
  %v4685 = vpop.f32.mrb[0].mxu0
  %v4686 = vadd.f32 0.0, %v4685
  %v4687 = vpop.f32.mrb[0].mxu0
  %4688 = vmatprep.mubr.bf16.mxu0 0
  %4689 = vmatmul.mubr.bf16.gmra.mrb[0].mxu0 %v4423
  %v4690 = vpop.f32.mrb[0].mxu0
  %v4691 = vadd.f32 0.0, %v4690
  %v4692 = vpop.f32.mrb[0].mxu0
  %v4693 = vpop.f32.mrb[0].mxu0
  %v4694 = vadd.f32 0.0, %v4693
  %v4695 = vpop.f32.mrb[0].mxu0
  %4696 = vmatprep.mubr.bf16.mxu0 0
  %4697 = vmatmul.mubr.bf16.gmra.mrb[0].mxu0 %v4426
  %v4698 = vpop.f32.mrb[0].mxu0
  %v4699 = vadd.f32 0.0, %v4698
  %v4700 = vpop.f32.mrb[0].mxu0
  %v4701 = vpop.f32.mrb[0].mxu0
  %v4702 = vadd.f32 0.0, %v4701
  %v4703 = vpop.f32.mrb[0].mxu0
  %4704 = vmatprep.mubr.bf16.mxu0 0
  %4705 = vmatmul.mubr.bf16.gmra.mrb[0].mxu0 %v4429
  %v4706 = vpop.f32.mrb[0].mxu0
  %v4707 = vadd.f32 0.0, %v4706
  %v4708 = vpop.f32.mrb[0].mxu0
  %v4709 = vpop.f32.mrb[0].mxu0
  %v4710 = vadd.f32 0.0, %v4709
  %v4711 = vpop.f32.mrb[0].mxu0
  %4712 = vmatprep.mubr.bf16.mxu0 0
  %4713 = vmatmul.mubr.bf16.gmra.mrb[0].mxu0 %v4432
  %v4714 = vpop.f32.mrb[0].mxu0
  %v4715 = vadd.f32 0.0, %v4714
  %v4716 = vpop.f32.mrb[0].mxu0
  %v4717 = vpop.f32.mrb[0].mxu0
  %v4718 = vadd.f32 0.0, %v4717
  %v4719 = vpop.f32.mrb[0].mxu0
  %4720 = vmatprep.mubr.bf16.mxu0 0
  %4721 = vmatmul.mubr.bf16.gmra.mrb[0].mxu0 %v4435
  %v4722 = vpop.f32.mrb[0].mxu0
  %v4723 = vadd.f32 0.0, %v4722
  %v4724 = vpop.f32.mrb[0].mxu0
  %v4725 = vpop.f32.mrb[0].mxu0
  %v4726 = vadd.f32 0.0, %v4725
  %v4727 = vpop.f32.mrb[0].mxu0
  %4728 = vdwg.mxu0
  %v4729 = vadd.f32 %v4178, %v4475
  %v4730 = vadd.f32 %v4179, %v4478
  %v4731 = vadd.f32 %v4180, %v4483
  %v4732 = vadd.f32 %v4181, %v4486
  %v4733 = vadd.f32 %v4182, %v4491
  %v4734 = vadd.f32 %v4183, %v4494
  %v4735 = vadd.f32 %v4184, %v4499
  %v4736 = vadd.f32 %v4185, %v4502
  %v4737 = vadd.f32 %v4186, %v4507
  %v4738 = vadd.f32 %v4187, %v4510
  %v4739 = vadd.f32 %v4188, %v4515
  %v4740 = vadd.f32 %v4189, %v4518
  %v4741 = vadd.f32 %v4190, %v4523
  %v4742 = vadd.f32 %v4191, %v4526
  %v4743 = vadd.f32 %v4192, %v4531
  %v4744 = vadd.f32 %v4193, %v4534
  %v4745 = vadd.f32 %v4194, %v4539
  %v4746 = vadd.f32 %v4195, %v4542
  %v4747 = vadd.f32 %v4196, %v4547
  %v4748 = vadd.f32 %v4197, %v4550
  %v4749 = vadd.f32 %v4198, %v4555
  %v4750 = vadd.f32 %v4199, %v4558
  %v4751 = vadd.f32 %v4200, %v4563
  %v4752 = vadd.f32 %v4201, %v4566
  %v4753 = vadd.f32 %v4202, %v4571
  %v4754 = vadd.f32 %v4203, %v4574
  %v4755 = vadd.f32 %v4204, %v4579
  %v4756 = vadd.f32 %v4205, %v4582
  %v4757 = vadd.f32 %v4206, %v4587
  %v4758 = vadd.f32 %v4207, %v4590
  %v4759 = vadd.f32 %v4208, %v4595
  %v4760 = vadd.f32 %v4209, %v4598
  %v4761 = vadd.f32 %v4210, %v4603
  %v4762 = vadd.f32 %v4211, %v4606
  %v4763 = vadd.f32 %v4212, %v4611
  %v4764 = vadd.f32 %v4213, %v4614
  %v4765 = vadd.f32 %v4214, %v4619
  %v4766 = vadd.f32 %v4215, %v4622
  %v4767 = vadd.f32 %v4216, %v4627
  %v4768 = vadd.f32 %v4217, %v4630
  %v4769 = vadd.f32 %v4218, %v4635
  %v4770 = vadd.f32 %v4219, %v4638
  %v4771 = vadd.f32 %v4220, %v4643
  %v4772 = vadd.f32 %v4221, %v4646
  %v4773 = vadd.f32 %v4222, %v4651
  %v4774 = vadd.f32 %v4223, %v4654
  %v4775 = vadd.f32 %v4224, %v4659
  %v4776 = vadd.f32 %v4225, %v4662
  %v4777 = vadd.f32 %v4226, %v4667
  %v4778 = vadd.f32 %v4227, %v4670
  %v4779 = vadd.f32 %v4228, %v4675
  %v4780 = vadd.f32 %v4229, %v4678
  %v4781 = vadd.f32 %v4230, %v4683
  %v4782 = vadd.f32 %v4231, %v4686
  %v4783 = vadd.f32 %v4232, %v4691
  %v4784 = vadd.f32 %v4233, %v4694
  %v4785 = vadd.f32 %v4234, %v4699
  %v4786 = vadd.f32 %v4235, %v4702
  %v4787 = vadd.f32 %v4236, %v4707
  %v4788 = vadd.f32 %v4237, %v4710
  %v4789 = vadd.f32 %v4238, %v4715
  %v4790 = vadd.f32 %v4239, %v4718
  %v4791 = vadd.f32 %v4240, %v4723
  %v4792 = vadd.f32 %v4241, %v4726
  %v4793 = vld [vmem:[%s4242 + $0x8] sm:$0xff]
  %v4794 = vld [vmem:[%s4242 + $0x10] sm:$0xff]
  %v4795 = vld [vmem:[%s4242 + $0x28] sm:$0xff]
  %v4796 = vld [vmem:[%s4242 + $0x30] sm:$0xff]
  %v4797 = vld [vmem:[%s4242 + $0x48] sm:$0xff]
  %v4798 = vld [vmem:[%s4242 + $0x50] sm:$0xff]
  %v4799 = vld [vmem:[%s4242 + $0x68] sm:$0xff]
  %v4800 = vld [vmem:[%s4242 + $0x70] sm:$0xff]
  %v4801 = vld [vmem:[%s4242 + $0x88] sm:$0xff]
  %v4802 = vld [vmem:[%s4242 + $0x90] sm:$0xff]
  %v4803 = vld [vmem:[%s4242 + $0xa8] sm:$0xff]
  %v4804 = vld [vmem:[%s4242 + $0xb0] sm:$0xff]
  %v4805 = vld [vmem:[%s4242 + $0xc8] sm:$0xff]
  %v4806 = vld [vmem:[%s4242 + $0xd0] sm:$0xff]
  %v4807 = vld [vmem:[%s4242 + $0xe8] sm:$0xff]
  %v4808 = vld [vmem:[%s4242 + $0xf0] sm:$0xff]
  %v4809 = vld [vmem:[%s4242 + $0x108] sm:$0xff]
  %v4810 = vld [vmem:[%s4242 + $0x110] sm:$0xff]
  %v4811 = vld [vmem:[%s4242 + $0x128] sm:$0xff]
  %v4812 = vld [vmem:[%s4242 + $0x130] sm:$0xff]
  %v4813 = vld [vmem:[%s4242 + $0x148] sm:$0xff]
  %v4814 = vld [vmem:[%s4242 + $0x150] sm:$0xff]
  %v4815 = vld [vmem:[%s4242 + $0x168] sm:$0xff]
  %v4816 = vld [vmem:[%s4242 + $0x170] sm:$0xff]
  %v4817 = vld [vmem:[%s4242 + $0x188] sm:$0xff]
  %v4818 = vld [vmem:[%s4242 + $0x190] sm:$0xff]
  %v4819 = vld [vmem:[%s4242 + $0x1a8] sm:$0xff]
  %v4820 = vld [vmem:[%s4242 + $0x1b0] sm:$0xff]
  %v4821 = vld [vmem:[%s4242 + $0x1c8] sm:$0xff]
  %v4822 = vld [vmem:[%s4242 + $0x1d0] sm:$0xff]
  %v4823 = vld [vmem:[%s4242 + $0x1e8] sm:$0xff]
  %v4824 = vld [vmem:[%s4242 + $0x1f0] sm:$0xff]
  %v4825 = vld [vmem:[%s4242 + $0x248] sm:$0xff]
  %v4826 = vld [vmem:[%s4242 + $0x250] sm:$0xff]
  %v4827 = vld [vmem:[%s4242 + $0x268] sm:$0xff]
  %v4828 = vld [vmem:[%s4242 + $0x270] sm:$0xff]
  %v4829 = vld [vmem:[%s4242 + $0x288] sm:$0xff]
  %v4830 = vld [vmem:[%s4242 + $0x290] sm:$0xff]
  %v4831 = vld [vmem:[%s4242 + $0x2a8] sm:$0xff]
  %v4832 = vld [vmem:[%s4242 + $0x2b0] sm:$0xff]
  %v4833 = vld [vmem:[%s4242 + $0x2c8] sm:$0xff]
  %v4834 = vld [vmem:[%s4242 + $0x2d0] sm:$0xff]
  %v4835 = vld [vmem:[%s4242 + $0x2e8] sm:$0xff]
  %v4836 = vld [vmem:[%s4242 + $0x2f0] sm:$0xff]
  %v4837 = vld [vmem:[%s4242 + $0x308] sm:$0xff]
  %v4838 = vld [vmem:[%s4242 + $0x310] sm:$0xff]
  %v4839 = vld [vmem:[%s4242 + $0x328] sm:$0xff]
  %v4840 = vld [vmem:[%s4242 + $0x330] sm:$0xff]
  %v4841 = vld [vmem:[%s4242 + $0x348] sm:$0xff]
  %v4842 = vld [vmem:[%s4242 + $0x350] sm:$0xff]
  %v4843 = vld [vmem:[%s4242 + $0x368] sm:$0xff]
  %v4844 = vld [vmem:[%s4242 + $0x370] sm:$0xff]
  %v4845 = vld [vmem:[%s4242 + $0x388] sm:$0xff]
  %v4846 = vld [vmem:[%s4242 + $0x390] sm:$0xff]
  %v4847 = vld [vmem:[%s4242 + $0x3a8] sm:$0xff]
  %v4848 = vld [vmem:[%s4242 + $0x3b0] sm:$0xff]
  %v4849 = vld [vmem:[%s4242 + $0x3c8] sm:$0xff]
  %v4850 = vld [vmem:[%s4242 + $0x3d0] sm:$0xff]
  %v4851 = vld [vmem:[%s4242 + $0x3e8] sm:$0xff]
  %v4852 = vld [vmem:[%s4242 + $0x3f0] sm:$0xff]
  %v4853 = vld [vmem:[%s4242 + $0x408] sm:$0xff]
  %v4854 = vld [vmem:[%s4242 + $0x410] sm:$0xff]
  %v4855 = vld [vmem:[%s4242 + $0x428] sm:$0xff]
  %v4856 = vld [vmem:[%s4242 + $0x430] sm:$0xff]
  %v4857 = vpack.c.bf16 %v4794, %v4793
  %v4858 = vpack.c.bf16 %v4796, %v4795
  %v4859 = vpack.c.bf16 %v4798, %v4797
  %v4860 = vpack.c.bf16 %v4800, %v4799
  %v4861 = vpack.c.bf16 %v4802, %v4801
  %v4862 = vpack.c.bf16 %v4804, %v4803
  %v4863 = vpack.c.bf16 %v4806, %v4805
  %v4864 = vpack.c.bf16 %v4808, %v4807
  %v4865 = vpack.c.bf16 %v4810, %v4809
  %v4866 = vpack.c.bf16 %v4812, %v4811
  %v4867 = vpack.c.bf16 %v4814, %v4813
  %v4868 = vpack.c.bf16 %v4816, %v4815
  %v4869 = vpack.c.bf16 %v4818, %v4817
  %v4870 = vpack.c.bf16 %v4820, %v4819
  %v4871 = vpack.c.bf16 %v4822, %v4821
  %v4872 = vpack.c.bf16 %v4824, %v4823
  %v4873 = vpack.c.bf16 %v4826, %v4825
  %v4874 = vpack.c.bf16 %v4828, %v4827
  %v4875 = vpack.c.bf16 %v4830, %v4829
  %v4876 = vpack.c.bf16 %v4832, %v4831
  %v4877 = vpack.c.bf16 %v4834, %v4833
  %v4878 = vpack.c.bf16 %v4836, %v4835
  %v4879 = vpack.c.bf16 %v4838, %v4837
  %v4880 = vpack.c.bf16 %v4840, %v4839
  %v4881 = vpack.c.bf16 %v4842, %v4841
  %v4882 = vpack.c.bf16 %v4844, %v4843
  %v4883 = vpack.c.bf16 %v4846, %v4845
  %v4884 = vpack.c.bf16 %v4848, %v4847
  %v4885 = vpack.c.bf16 %v4850, %v4849
  %v4886 = vpack.c.bf16 %v4852, %v4851
  %v4887 = vpack.c.bf16 %v4854, %v4853
  %v4888 = vpack.c.bf16 %v4856, %v4855
  %s4889 = scalar_lea.vmem %s1, 14
  %v4890 = vld [vmem:[%s4889] sm:$0x3]
  %v4892 = vsel %vm96, %v4857, 0
  %v4895 = vsel %vm96, %v4858, 0
  %v4898 = vsel %vm96, %v4859, 0
  %v4901 = vsel %vm96, %v4860, 0
  %v4904 = vsel %vm96, %v4861, 0
  %v4907 = vsel %vm96, %v4862, 0
  %v4910 = vsel %vm96, %v4863, 0
  %v4913 = vsel %vm96, %v4864, 0
  %v4916 = vsel %vm96, %v4865, 0
  %v4919 = vsel %vm96, %v4866, 0
  %v4922 = vsel %vm96, %v4867, 0
  %v4925 = vsel %vm96, %v4868, 0
  %v4928 = vsel %vm96, %v4869, 0
  %v4931 = vsel %vm96, %v4870, 0
  %v4934 = vsel %vm96, %v4871, 0
  %v4937 = vsel %vm96, %v4872, 0
  %v4940 = vsel %vm96, %v4873, 0
  %v4943 = vsel %vm96, %v4874, 0
  %v4946 = vsel %vm96, %v4875, 0
  %v4949 = vsel %vm96, %v4876, 0
  %v4952 = vsel %vm96, %v4877, 0
  %v4955 = vsel %vm96, %v4878, 0
  %v4958 = vsel %vm96, %v4879, 0
  %v4961 = vsel %vm96, %v4880, 0
  %v4964 = vsel %vm96, %v4881, 0
  %v4967 = vsel %vm96, %v4882, 0
  %v4970 = vsel %vm96, %v4883, 0
  %v4973 = vsel %vm96, %v4884, 0
  %v4976 = vsel %vm96, %v4885, 0
  %v4979 = vsel %vm96, %v4886, 0
  %v4982 = vsel %vm96, %v4887, 0
  %v4985 = vsel %vm96, %v4888, 0
  %v4988 = vsel %vm1361, %v4890, 0
  %4990 = vmatprep.subr.bf16.mxu0 0
  %4991 = vmatpush1.bf16.msra.mxu0 %v4988
  %4992 = vmatprep.subr.bf16.mxu0 0
  %4993 = vmatpush1.bf16.msra.mxu0 0
  %4994 = vmatprep.subr.bf16.mxu0 0
  %4995 = vmatpush1.bf16.msra.mxu0 0
  %4996 = vmatprep.subr.bf16.mxu0 0
  %4997 = vmatpush1.bf16.msra.mxu0 0
  %4998 = vmatprep.subr.bf16.mxu0 0
  %4999 = vmatpush1.bf16.msra.mxu0 0
  %5000 = vmatprep.subr.bf16.mxu0 0
  %5001 = vmatpush1.bf16.msra.mxu0 0
  %5002 = vmatprep.subr.bf16.mxu0 0
  %5003 = vmatpush1.bf16.msra.mxu0 0
  %5004 = vmatprep.subr.bf16.mxu0 0
  %5005 = vmatpush1.bf16.msra.mxu0 0
  %5006 = vmatprep.subr.bf16.mxu0 0
  %5007 = vmatpush1.bf16.msra.mxu0 0
  %5008 = vmatprep.subr.bf16.mxu0 0
  %5009 = vmatpush1.bf16.msra.mxu0 0
  %5010 = vmatprep.subr.bf16.mxu0 0
  %5011 = vmatpush1.bf16.msra.mxu0 0
  %5012 = vmatprep.subr.bf16.mxu0 0
  %5013 = vmatpush1.bf16.msra.mxu0 0
  %5014 = vmatprep.subr.bf16.mxu0 0
  %5015 = vmatpush1.bf16.msra.mxu0 0
  %5016 = vmatprep.subr.bf16.mxu0 0
  %5017 = vmatpush1.bf16.msra.mxu0 0
  %5018 = vmatprep.subr.bf16.mxu0 0
  %5019 = vmatpush1.bf16.msra.mxu0 0
  %5020 = vmatprep.subr.bf16.mxu0 0
  %5021 = vmatpush1.bf16.msra.mxu0 0
  %5022 = vmatprep.mubr.bf16.mxu0 0
  %5023 = vmatmul.mubr.bf16.gmra.mrb[0].mxu0 %v4892
  %v5024 = vpop.f32.mrb[0].mxu0
  %v5025 = vadd.f32 0.0, %v5024
  %v5026 = vpop.f32.mrb[0].mxu0
  %v5027 = vpop.f32.mrb[0].mxu0
  %v5028 = vadd.f32 0.0, %v5027
  %v5029 = vpop.f32.mrb[0].mxu0
  %5030 = vmatprep.mubr.bf16.mxu0 0
  %5031 = vmatmul.mubr.bf16.gmra.mrb[0].mxu0 %v4895
  %v5032 = vpop.f32.mrb[0].mxu0
  %v5033 = vadd.f32 0.0, %v5032
  %v5034 = vpop.f32.mrb[0].mxu0
  %v5035 = vpop.f32.mrb[0].mxu0
  %v5036 = vadd.f32 0.0, %v5035
  %v5037 = vpop.f32.mrb[0].mxu0
  %5038 = vmatprep.mubr.bf16.mxu0 0
  %5039 = vmatmul.mubr.bf16.gmra.mrb[0].mxu0 %v4898
  %v5040 = vpop.f32.mrb[0].mxu0
  %v5041 = vadd.f32 0.0, %v5040
  %v5042 = vpop.f32.mrb[0].mxu0
  %v5043 = vpop.f32.mrb[0].mxu0
  %v5044 = vadd.f32 0.0, %v5043
  %v5045 = vpop.f32.mrb[0].mxu0
  %5046 = vmatprep.mubr.bf16.mxu0 0
  %5047 = vmatmul.mubr.bf16.gmra.mrb[0].mxu0 %v4901
  %v5048 = vpop.f32.mrb[0].mxu0
  %v5049 = vadd.f32 0.0, %v5048
  %v5050 = vpop.f32.mrb[0].mxu0
  %v5051 = vpop.f32.mrb[0].mxu0
  %v5052 = vadd.f32 0.0, %v5051
  %v5053 = vpop.f32.mrb[0].mxu0
  %5054 = vmatprep.mubr.bf16.mxu0 0
  %5055 = vmatmul.mubr.bf16.gmra.mrb[0].mxu0 %v4904
  %v5056 = vpop.f32.mrb[0].mxu0
  %v5057 = vadd.f32 0.0, %v5056
  %v5058 = vpop.f32.mrb[0].mxu0
  %v5059 = vpop.f32.mrb[0].mxu0
  %v5060 = vadd.f32 0.0, %v5059
  %v5061 = vpop.f32.mrb[0].mxu0
  %5062 = vmatprep.mubr.bf16.mxu0 0
  %5063 = vmatmul.mubr.bf16.gmra.mrb[0].mxu0 %v4907
  %v5064 = vpop.f32.mrb[0].mxu0
  %v5065 = vadd.f32 0.0, %v5064
  %v5066 = vpop.f32.mrb[0].mxu0
  %v5067 = vpop.f32.mrb[0].mxu0
  %v5068 = vadd.f32 0.0, %v5067
  %v5069 = vpop.f32.mrb[0].mxu0
  %5070 = vmatprep.mubr.bf16.mxu0 0
  %5071 = vmatmul.mubr.bf16.gmra.mrb[0].mxu0 %v4910
  %v5072 = vpop.f32.mrb[0].mxu0
  %v5073 = vadd.f32 0.0, %v5072
  %v5074 = vpop.f32.mrb[0].mxu0
  %v5075 = vpop.f32.mrb[0].mxu0
  %v5076 = vadd.f32 0.0, %v5075
  %v5077 = vpop.f32.mrb[0].mxu0
  %5078 = vmatprep.mubr.bf16.mxu0 0
  %5079 = vmatmul.mubr.bf16.gmra.mrb[0].mxu0 %v4913
  %v5080 = vpop.f32.mrb[0].mxu0
  %v5081 = vadd.f32 0.0, %v5080
  %v5082 = vpop.f32.mrb[0].mxu0
  %v5083 = vpop.f32.mrb[0].mxu0
  %v5084 = vadd.f32 0.0, %v5083
  %v5085 = vpop.f32.mrb[0].mxu0
  %5086 = vmatprep.mubr.bf16.mxu0 0
  %5087 = vmatmul.mubr.bf16.gmra.mrb[0].mxu0 %v4916
  %v5088 = vpop.f32.mrb[0].mxu0
  %v5089 = vadd.f32 0.0, %v5088
  %v5090 = vpop.f32.mrb[0].mxu0
  %v5091 = vpop.f32.mrb[0].mxu0
  %v5092 = vadd.f32 0.0, %v5091
  %v5093 = vpop.f32.mrb[0].mxu0
  %5094 = vmatprep.mubr.bf16.mxu0 0
  %5095 = vmatmul.mubr.bf16.gmra.mrb[0].mxu0 %v4919
  %v5096 = vpop.f32.mrb[0].mxu0
  %v5097 = vadd.f32 0.0, %v5096
  %v5098 = vpop.f32.mrb[0].mxu0
  %v5099 = vpop.f32.mrb[0].mxu0
  %v5100 = vadd.f32 0.0, %v5099
  %v5101 = vpop.f32.mrb[0].mxu0
  %5102 = vmatprep.mubr.bf16.mxu0 0
  %5103 = vmatmul.mubr.bf16.gmra.mrb[0].mxu0 %v4922
  %v5104 = vpop.f32.mrb[0].mxu0
  %v5105 = vadd.f32 0.0, %v5104
  %v5106 = vpop.f32.mrb[0].mxu0
  %v5107 = vpop.f32.mrb[0].mxu0
  %v5108 = vadd.f32 0.0, %v5107
  %v5109 = vpop.f32.mrb[0].mxu0
  %5110 = vmatprep.mubr.bf16.mxu0 0
  %5111 = vmatmul.mubr.bf16.gmra.mrb[0].mxu0 %v4925
  %v5112 = vpop.f32.mrb[0].mxu0
  %v5113 = vadd.f32 0.0, %v5112
  %v5114 = vpop.f32.mrb[0].mxu0
  %v5115 = vpop.f32.mrb[0].mxu0
  %v5116 = vadd.f32 0.0, %v5115
  %v5117 = vpop.f32.mrb[0].mxu0
  %5118 = vmatprep.mubr.bf16.mxu0 0
  %5119 = vmatmul.mubr.bf16.gmra.mrb[0].mxu0 %v4928
  %v5120 = vpop.f32.mrb[0].mxu0
  %v5121 = vadd.f32 0.0, %v5120
  %v5122 = vpop.f32.mrb[0].mxu0
  %v5123 = vpop.f32.mrb[0].mxu0
  %v5124 = vadd.f32 0.0, %v5123
  %v5125 = vpop.f32.mrb[0].mxu0
  %5126 = vmatprep.mubr.bf16.mxu0 0
  %5127 = vmatmul.mubr.bf16.gmra.mrb[0].mxu0 %v4931
  %v5128 = vpop.f32.mrb[0].mxu0
  %v5129 = vadd.f32 0.0, %v5128
  %v5130 = vpop.f32.mrb[0].mxu0
  %v5131 = vpop.f32.mrb[0].mxu0
  %v5132 = vadd.f32 0.0, %v5131
  %v5133 = vpop.f32.mrb[0].mxu0
  %5134 = vmatprep.mubr.bf16.mxu0 0
  %5135 = vmatmul.mubr.bf16.gmra.mrb[0].mxu0 %v4934
  %v5136 = vpop.f32.mrb[0].mxu0
  %v5137 = vadd.f32 0.0, %v5136
  %v5138 = vpop.f32.mrb[0].mxu0
  %v5139 = vpop.f32.mrb[0].mxu0
  %v5140 = vadd.f32 0.0, %v5139
  %v5141 = vpop.f32.mrb[0].mxu0
  %5142 = vmatprep.mubr.bf16.mxu0 0
  %5143 = vmatmul.mubr.bf16.gmra.mrb[0].mxu0 %v4937
  %v5144 = vpop.f32.mrb[0].mxu0
  %v5145 = vadd.f32 0.0, %v5144
  %v5146 = vpop.f32.mrb[0].mxu0
  %v5147 = vpop.f32.mrb[0].mxu0
  %v5148 = vadd.f32 0.0, %v5147
  %v5149 = vpop.f32.mrb[0].mxu0
  %5150 = vmatprep.mubr.bf16.mxu0 0
  %5151 = vmatmul.mubr.bf16.gmra.mrb[0].mxu0 %v4940
  %v5152 = vpop.f32.mrb[0].mxu0
  %v5153 = vadd.f32 0.0, %v5152
  %v5154 = vpop.f32.mrb[0].mxu0
  %v5155 = vpop.f32.mrb[0].mxu0
  %v5156 = vadd.f32 0.0, %v5155
  %v5157 = vpop.f32.mrb[0].mxu0
  %5158 = vmatprep.mubr.bf16.mxu0 0
  %5159 = vmatmul.mubr.bf16.gmra.mrb[0].mxu0 %v4943
  %v5160 = vpop.f32.mrb[0].mxu0
  %v5161 = vadd.f32 0.0, %v5160
  %v5162 = vpop.f32.mrb[0].mxu0
  %v5163 = vpop.f32.mrb[0].mxu0
  %v5164 = vadd.f32 0.0, %v5163
  %v5165 = vpop.f32.mrb[0].mxu0
  %5166 = vmatprep.mubr.bf16.mxu0 0
  %5167 = vmatmul.mubr.bf16.gmra.mrb[0].mxu0 %v4946
  %v5168 = vpop.f32.mrb[0].mxu0
  %v5169 = vadd.f32 0.0, %v5168
  %v5170 = vpop.f32.mrb[0].mxu0
  %v5171 = vpop.f32.mrb[0].mxu0
  %v5172 = vadd.f32 0.0, %v5171
  %v5173 = vpop.f32.mrb[0].mxu0
  %5174 = vmatprep.mubr.bf16.mxu0 0
  %5175 = vmatmul.mubr.bf16.gmra.mrb[0].mxu0 %v4949
  %v5176 = vpop.f32.mrb[0].mxu0
  %v5177 = vadd.f32 0.0, %v5176
  %v5178 = vpop.f32.mrb[0].mxu0
  %v5179 = vpop.f32.mrb[0].mxu0
  %v5180 = vadd.f32 0.0, %v5179
  %v5181 = vpop.f32.mrb[0].mxu0
  %5182 = vmatprep.mubr.bf16.mxu0 0
  %5183 = vmatmul.mubr.bf16.gmra.mrb[0].mxu0 %v4952
  %v5184 = vpop.f32.mrb[0].mxu0
  %v5185 = vadd.f32 0.0, %v5184
  %v5186 = vpop.f32.mrb[0].mxu0
  %v5187 = vpop.f32.mrb[0].mxu0
  %v5188 = vadd.f32 0.0, %v5187
  %v5189 = vpop.f32.mrb[0].mxu0
  %5190 = vmatprep.mubr.bf16.mxu0 0
  %5191 = vmatmul.mubr.bf16.gmra.mrb[0].mxu0 %v4955
  %v5192 = vpop.f32.mrb[0].mxu0
  %v5193 = vadd.f32 0.0, %v5192
  %v5194 = vpop.f32.mrb[0].mxu0
  %v5195 = vpop.f32.mrb[0].mxu0
  %v5196 = vadd.f32 0.0, %v5195
  %v5197 = vpop.f32.mrb[0].mxu0
  %5198 = vmatprep.mubr.bf16.mxu0 0
  %5199 = vmatmul.mubr.bf16.gmra.mrb[0].mxu0 %v4958
  %v5200 = vpop.f32.mrb[0].mxu0
  %v5201 = vadd.f32 0.0, %v5200
  %v5202 = vpop.f32.mrb[0].mxu0
  %v5203 = vpop.f32.mrb[0].mxu0
  %v5204 = vadd.f32 0.0, %v5203
  %v5205 = vpop.f32.mrb[0].mxu0
  %5206 = vmatprep.mubr.bf16.mxu0 0
  %5207 = vmatmul.mubr.bf16.gmra.mrb[0].mxu0 %v4961
  %v5208 = vpop.f32.mrb[0].mxu0
  %v5209 = vadd.f32 0.0, %v5208
  %v5210 = vpop.f32.mrb[0].mxu0
  %v5211 = vpop.f32.mrb[0].mxu0
  %v5212 = vadd.f32 0.0, %v5211
  %v5213 = vpop.f32.mrb[0].mxu0
  %5214 = vmatprep.mubr.bf16.mxu0 0
  %5215 = vmatmul.mubr.bf16.gmra.mrb[0].mxu0 %v4964
  %v5216 = vpop.f32.mrb[0].mxu0
  %v5217 = vadd.f32 0.0, %v5216
  %v5218 = vpop.f32.mrb[0].mxu0
  %v5219 = vpop.f32.mrb[0].mxu0
  %v5220 = vadd.f32 0.0, %v5219
  %v5221 = vpop.f32.mrb[0].mxu0
  %5222 = vmatprep.mubr.bf16.mxu0 0
  %5223 = vmatmul.mubr.bf16.gmra.mrb[0].mxu0 %v4967
  %v5224 = vpop.f32.mrb[0].mxu0
  %v5225 = vadd.f32 0.0, %v5224
  %v5226 = vpop.f32.mrb[0].mxu0
  %v5227 = vpop.f32.mrb[0].mxu0
  %v5228 = vadd.f32 0.0, %v5227
  %v5229 = vpop.f32.mrb[0].mxu0
  %5230 = vmatprep.mubr.bf16.mxu0 0
  %5231 = vmatmul.mubr.bf16.gmra.mrb[0].mxu0 %v4970
  %v5232 = vpop.f32.mrb[0].mxu0
  %v5233 = vadd.f32 0.0, %v5232
  %v5234 = vpop.f32.mrb[0].mxu0
  %v5235 = vpop.f32.mrb[0].mxu0
  %v5236 = vadd.f32 0.0, %v5235
  %v5237 = vpop.f32.mrb[0].mxu0
  %5238 = vmatprep.mubr.bf16.mxu0 0
  %5239 = vmatmul.mubr.bf16.gmra.mrb[0].mxu0 %v4973
  %v5240 = vpop.f32.mrb[0].mxu0
  %v5241 = vadd.f32 0.0, %v5240
  %v5242 = vpop.f32.mrb[0].mxu0
  %v5243 = vpop.f32.mrb[0].mxu0
  %v5244 = vadd.f32 0.0, %v5243
  %v5245 = vpop.f32.mrb[0].mxu0
  %5246 = vmatprep.mubr.bf16.mxu0 0
  %5247 = vmatmul.mubr.bf16.gmra.mrb[0].mxu0 %v4976
  %v5248 = vpop.f32.mrb[0].mxu0
  %v5249 = vadd.f32 0.0, %v5248
  %v5250 = vpop.f32.mrb[0].mxu0
  %v5251 = vpop.f32.mrb[0].mxu0
  %v5252 = vadd.f32 0.0, %v5251
  %v5253 = vpop.f32.mrb[0].mxu0
  %5254 = vmatprep.mubr.bf16.mxu0 0
  %5255 = vmatmul.mubr.bf16.gmra.mrb[0].mxu0 %v4979
  %v5256 = vpop.f32.mrb[0].mxu0
  %v5257 = vadd.f32 0.0, %v5256
  %v5258 = vpop.f32.mrb[0].mxu0
  %v5259 = vpop.f32.mrb[0].mxu0
  %v5260 = vadd.f32 0.0, %v5259
  %v5261 = vpop.f32.mrb[0].mxu0
  %5262 = vmatprep.mubr.bf16.mxu0 0
  %5263 = vmatmul.mubr.bf16.gmra.mrb[0].mxu0 %v4982
  %v5264 = vpop.f32.mrb[0].mxu0
  %v5265 = vadd.f32 0.0, %v5264
  %v5266 = vpop.f32.mrb[0].mxu0
  %v5267 = vpop.f32.mrb[0].mxu0
  %v5268 = vadd.f32 0.0, %v5267
  %v5269 = vpop.f32.mrb[0].mxu0
  %5270 = vmatprep.mubr.bf16.mxu0 0
  %5271 = vmatmul.mubr.bf16.gmra.mrb[0].mxu0 %v4985
  %v5272 = vpop.f32.mrb[0].mxu0
  %v5273 = vadd.f32 0.0, %v5272
  %v5274 = vpop.f32.mrb[0].mxu0
  %v5275 = vpop.f32.mrb[0].mxu0
  %v5276 = vadd.f32 0.0, %v5275
  %v5277 = vpop.f32.mrb[0].mxu0
  %5278 = vdwg.mxu0
  %v5279 = vadd.f32 %v4729, %v5025
  %v5280 = vadd.f32 %v4730, %v5028
  %v5281 = vadd.f32 %v4731, %v5033
  %v5282 = vadd.f32 %v4732, %v5036
  %v5283 = vadd.f32 %v4733, %v5041
  %v5284 = vadd.f32 %v4734, %v5044
  %v5285 = vadd.f32 %v4735, %v5049
  %v5286 = vadd.f32 %v4736, %v5052
  %v5287 = vadd.f32 %v4737, %v5057
  %v5288 = vadd.f32 %v4738, %v5060
  %v5289 = vadd.f32 %v4739, %v5065
  %v5290 = vadd.f32 %v4740, %v5068
  %v5291 = vadd.f32 %v4741, %v5073
  %v5292 = vadd.f32 %v4742, %v5076
  %v5293 = vadd.f32 %v4743, %v5081
  %v5294 = vadd.f32 %v4744, %v5084
  %v5295 = vadd.f32 %v4745, %v5089
  %v5296 = vadd.f32 %v4746, %v5092
  %v5297 = vadd.f32 %v4747, %v5097
  %v5298 = vadd.f32 %v4748, %v5100
  %v5299 = vadd.f32 %v4749, %v5105
  %v5300 = vadd.f32 %v4750, %v5108
  %v5301 = vadd.f32 %v4751, %v5113
  %v5302 = vadd.f32 %v4752, %v5116
  %v5303 = vadd.f32 %v4753, %v5121
  %v5304 = vadd.f32 %v4754, %v5124
  %v5305 = vadd.f32 %v4755, %v5129
  %v5306 = vadd.f32 %v4756, %v5132
  %v5307 = vadd.f32 %v4757, %v5137
  %v5308 = vadd.f32 %v4758, %v5140
  %v5309 = vadd.f32 %v4759, %v5145
  %v5310 = vadd.f32 %v4760, %v5148
  %v5311 = vadd.f32 %v4761, %v5153
  %v5312 = vadd.f32 %v4762, %v5156
  %v5313 = vadd.f32 %v4763, %v5161
  %v5314 = vadd.f32 %v4764, %v5164
  %v5315 = vadd.f32 %v4765, %v5169
  %v5316 = vadd.f32 %v4766, %v5172
  %v5317 = vadd.f32 %v4767, %v5177
  %v5318 = vadd.f32 %v4768, %v5180
  %v5319 = vadd.f32 %v4769, %v5185
  %v5320 = vadd.f32 %v4770, %v5188
  %v5321 = vadd.f32 %v4771, %v5193
  %v5322 = vadd.f32 %v4772, %v5196
  %v5323 = vadd.f32 %v4773, %v5201
  %v5324 = vadd.f32 %v4774, %v5204
  %v5325 = vadd.f32 %v4775, %v5209
  %v5326 = vadd.f32 %v4776, %v5212
  %v5327 = vadd.f32 %v4777, %v5217
  %v5328 = vadd.f32 %v4778, %v5220
  %v5329 = vadd.f32 %v4779, %v5225
  %v5330 = vadd.f32 %v4780, %v5228
  %v5331 = vadd.f32 %v4781, %v5233
  %v5332 = vadd.f32 %v4782, %v5236
  %v5333 = vadd.f32 %v4783, %v5241
  %v5334 = vadd.f32 %v4784, %v5244
  %v5335 = vadd.f32 %v4785, %v5249
  %v5336 = vadd.f32 %v4786, %v5252
  %v5337 = vadd.f32 %v4787, %v5257
  %v5338 = vadd.f32 %v4788, %v5260
  %v5339 = vadd.f32 %v4789, %v5265
  %v5340 = vadd.f32 %v4790, %v5268
  %v5341 = vadd.f32 %v4791, %v5273
  %v5342 = vadd.f32 %v4792, %v5276
  %v5343 = vld [vmem:[%s4242 + $0x9] sm:$0xff]
  %v5344 = vld [vmem:[%s4242 + $0x11] sm:$0xff]
  %v5345 = vld [vmem:[%s4242 + $0x29] sm:$0xff]
  %v5346 = vld [vmem:[%s4242 + $0x31] sm:$0xff]
  %v5347 = vld [vmem:[%s4242 + $0x49] sm:$0xff]
  %v5348 = vld [vmem:[%s4242 + $0x51] sm:$0xff]
  %v5349 = vld [vmem:[%s4242 + $0x69] sm:$0xff]
  %v5350 = vld [vmem:[%s4242 + $0x71] sm:$0xff]
  %v5351 = vld [vmem:[%s4242 + $0x89] sm:$0xff]
  %v5352 = vld [vmem:[%s4242 + $0x91] sm:$0xff]
  %v5353 = vld [vmem:[%s4242 + $0xa9] sm:$0xff]
  %v5354 = vld [vmem:[%s4242 + $0xb1] sm:$0xff]
  %v5355 = vld [vmem:[%s4242 + $0xc9] sm:$0xff]
  %v5356 = vld [vmem:[%s4242 + $0xd1] sm:$0xff]
  %v5357 = vld [vmem:[%s4242 + $0xe9] sm:$0xff]
  %v5358 = vld [vmem:[%s4242 + $0xf1] sm:$0xff]
  %v5359 = vld [vmem:[%s4242 + $0x109] sm:$0xff]
  %v5360 = vld [vmem:[%s4242 + $0x111] sm:$0xff]
  %v5361 = vld [vmem:[%s4242 + $0x129] sm:$0xff]
  %v5362 = vld [vmem:[%s4242 + $0x131] sm:$0xff]
  %v5363 = vld [vmem:[%s4242 + $0x149] sm:$0xff]
  %v5364 = vld [vmem:[%s4242 + $0x151] sm:$0xff]
  %v5365 = vld [vmem:[%s4242 + $0x169] sm:$0xff]
  %v5366 = vld [vmem:[%s4242 + $0x171] sm:$0xff]
  %v5367 = vld [vmem:[%s4242 + $0x189] sm:$0xff]
  %v5368 = vld [vmem:[%s4242 + $0x191] sm:$0xff]
  %v5369 = vld [vmem:[%s4242 + $0x1a9] sm:$0xff]
  %v5370 = vld [vmem:[%s4242 + $0x1b1] sm:$0xff]
  %v5371 = vld [vmem:[%s4242 + $0x1c9] sm:$0xff]
  %v5372 = vld [vmem:[%s4242 + $0x1d1] sm:$0xff]
  %v5373 = vld [vmem:[%s4242 + $0x1e9] sm:$0xff]
  %v5374 = vld [vmem:[%s4242 + $0x1f1] sm:$0xff]
  %v5375 = vld [vmem:[%s4242 + $0x249] sm:$0xff]
  %v5376 = vld [vmem:[%s4242 + $0x251] sm:$0xff]
  %v5377 = vld [vmem:[%s4242 + $0x269] sm:$0xff]
  %v5378 = vld [vmem:[%s4242 + $0x271] sm:$0xff]
  %v5379 = vld [vmem:[%s4242 + $0x289] sm:$0xff]
  %v5380 = vld [vmem:[%s4242 + $0x291] sm:$0xff]
  %v5381 = vld [vmem:[%s4242 + $0x2a9] sm:$0xff]
  %v5382 = vld [vmem:[%s4242 + $0x2b1] sm:$0xff]
  %v5383 = vld [vmem:[%s4242 + $0x2c9] sm:$0xff]
  %v5384 = vld [vmem:[%s4242 + $0x2d1] sm:$0xff]
  %v5385 = vld [vmem:[%s4242 + $0x2e9] sm:$0xff]
  %v5386 = vld [vmem:[%s4242 + $0x2f1] sm:$0xff]
  %v5387 = vld [vmem:[%s4242 + $0x309] sm:$0xff]
  %v5388 = vld [vmem:[%s4242 + $0x311] sm:$0xff]
  %v5389 = vld [vmem:[%s4242 + $0x329] sm:$0xff]
  %v5390 = vld [vmem:[%s4242 + $0x331] sm:$0xff]
  %v5391 = vld [vmem:[%s4242 + $0x349] sm:$0xff]
  %v5392 = vld [vmem:[%s4242 + $0x351] sm:$0xff]
  %v5393 = vld [vmem:[%s4242 + $0x369] sm:$0xff]
  %v5394 = vld [vmem:[%s4242 + $0x371] sm:$0xff]
  %v5395 = vld [vmem:[%s4242 + $0x389] sm:$0xff]
  %v5396 = vld [vmem:[%s4242 + $0x391] sm:$0xff]
  %v5397 = vld [vmem:[%s4242 + $0x3a9] sm:$0xff]
  %v5398 = vld [vmem:[%s4242 + $0x3b1] sm:$0xff]
  %v5399 = vld [vmem:[%s4242 + $0x3c9] sm:$0xff]
  %v5400 = vld [vmem:[%s4242 + $0x3d1] sm:$0xff]
  %v5401 = vld [vmem:[%s4242 + $0x3e9] sm:$0xff]
  %v5402 = vld [vmem:[%s4242 + $0x3f1] sm:$0xff]
  %v5403 = vld [vmem:[%s4242 + $0x409] sm:$0xff]
  %v5404 = vld [vmem:[%s4242 + $0x411] sm:$0xff]
  %v5405 = vld [vmem:[%s4242 + $0x429] sm:$0xff]
  %v5406 = vld [vmem:[%s4242 + $0x431] sm:$0xff]
  %v5407 = vpack.c.bf16 %v5344, %v5343
  %v5408 = vpack.c.bf16 %v5346, %v5345
  %v5409 = vpack.c.bf16 %v5348, %v5347
  %v5410 = vpack.c.bf16 %v5350, %v5349
  %v5411 = vpack.c.bf16 %v5352, %v5351
  %v5412 = vpack.c.bf16 %v5354, %v5353
  %v5413 = vpack.c.bf16 %v5356, %v5355
  %v5414 = vpack.c.bf16 %v5358, %v5357
  %v5415 = vpack.c.bf16 %v5360, %v5359
  %v5416 = vpack.c.bf16 %v5362, %v5361
  %v5417 = vpack.c.bf16 %v5364, %v5363
  %v5418 = vpack.c.bf16 %v5366, %v5365
  %v5419 = vpack.c.bf16 %v5368, %v5367
  %v5420 = vpack.c.bf16 %v5370, %v5369
  %v5421 = vpack.c.bf16 %v5372, %v5371
  %v5422 = vpack.c.bf16 %v5374, %v5373
  %v5423 = vpack.c.bf16 %v5376, %v5375
  %v5424 = vpack.c.bf16 %v5378, %v5377
  %v5425 = vpack.c.bf16 %v5380, %v5379
  %v5426 = vpack.c.bf16 %v5382, %v5381
  %v5427 = vpack.c.bf16 %v5384, %v5383
  %v5428 = vpack.c.bf16 %v5386, %v5385
  %v5429 = vpack.c.bf16 %v5388, %v5387
  %v5430 = vpack.c.bf16 %v5390, %v5389
  %v5431 = vpack.c.bf16 %v5392, %v5391
  %v5432 = vpack.c.bf16 %v5394, %v5393
  %v5433 = vpack.c.bf16 %v5396, %v5395
  %v5434 = vpack.c.bf16 %v5398, %v5397
  %v5435 = vpack.c.bf16 %v5400, %v5399
  %v5436 = vpack.c.bf16 %v5402, %v5401
  %v5437 = vpack.c.bf16 %v5404, %v5403
  %v5438 = vpack.c.bf16 %v5406, %v5405
  %s5439 = scalar_lea.vmem %s1, 16
  %v5440 = vld [vmem:[%s5439] sm:$0x3]
  %v5442 = vsel %vm96, %v5407, 0
  %v5445 = vsel %vm96, %v5408, 0
  %v5448 = vsel %vm96, %v5409, 0
  %v5451 = vsel %vm96, %v5410, 0
  %v5454 = vsel %vm96, %v5411, 0
  %v5457 = vsel %vm96, %v5412, 0
  %v5460 = vsel %vm96, %v5413, 0
  %v5463 = vsel %vm96, %v5414, 0
  %v5466 = vsel %vm96, %v5415, 0
  %v5469 = vsel %vm96, %v5416, 0
  %v5472 = vsel %vm96, %v5417, 0
  %v5475 = vsel %vm96, %v5418, 0
  %v5478 = vsel %vm96, %v5419, 0
  %v5481 = vsel %vm96, %v5420, 0
  %v5484 = vsel %vm96, %v5421, 0
  %v5487 = vsel %vm96, %v5422, 0
  %v5490 = vsel %vm96, %v5423, 0
  %v5493 = vsel %vm96, %v5424, 0
  %v5496 = vsel %vm96, %v5425, 0
  %v5499 = vsel %vm96, %v5426, 0
  %v5502 = vsel %vm96, %v5427, 0
  %v5505 = vsel %vm96, %v5428, 0
  %v5508 = vsel %vm96, %v5429, 0
  %v5511 = vsel %vm96, %v5430, 0
  %v5514 = vsel %vm96, %v5431, 0
  %v5517 = vsel %vm96, %v5432, 0
  %v5520 = vsel %vm96, %v5433, 0
  %v5523 = vsel %vm96, %v5434, 0
  %v5526 = vsel %vm96, %v5435, 0
  %v5529 = vsel %vm96, %v5436, 0
  %v5532 = vsel %vm96, %v5437, 0
  %v5535 = vsel %vm96, %v5438, 0
  %v5538 = vsel %vm1361, %v5440, 0
  %5540 = vmatprep.subr.bf16.mxu0 0
  %5541 = vmatpush1.bf16.msra.mxu0 %v5538
  %5542 = vmatprep.subr.bf16.mxu0 0
  %5543 = vmatpush1.bf16.msra.mxu0 0
  %5544 = vmatprep.subr.bf16.mxu0 0
  %5545 = vmatpush1.bf16.msra.mxu0 0
  %5546 = vmatprep.subr.bf16.mxu0 0
  %5547 = vmatpush1.bf16.msra.mxu0 0
  %5548 = vmatprep.subr.bf16.mxu0 0
  %5549 = vmatpush1.bf16.msra.mxu0 0
  %5550 = vmatprep.subr.bf16.mxu0 0
  %5551 = vmatpush1.bf16.msra.mxu0 0
  %5552 = vmatprep.subr.bf16.mxu0 0
  %5553 = vmatpush1.bf16.msra.mxu0 0
  %5554 = vmatprep.subr.bf16.mxu0 0
  %5555 = vmatpush1.bf16.msra.mxu0 0
  %5556 = vmatprep.subr.bf16.mxu0 0
  %5557 = vmatpush1.bf16.msra.mxu0 0
  %5558 = vmatprep.subr.bf16.mxu0 0
  %5559 = vmatpush1.bf16.msra.mxu0 0
  %5560 = vmatprep.subr.bf16.mxu0 0
  %5561 = vmatpush1.bf16.msra.mxu0 0
  %5562 = vmatprep.subr.bf16.mxu0 0
  %5563 = vmatpush1.bf16.msra.mxu0 0
  %5564 = vmatprep.subr.bf16.mxu0 0
  %5565 = vmatpush1.bf16.msra.mxu0 0
  %5566 = vmatprep.subr.bf16.mxu0 0
  %5567 = vmatpush1.bf16.msra.mxu0 0
  %5568 = vmatprep.subr.bf16.mxu0 0
  %5569 = vmatpush1.bf16.msra.mxu0 0
  %5570 = vmatprep.subr.bf16.mxu0 0
  %5571 = vmatpush1.bf16.msra.mxu0 0
  %5572 = vmatprep.mubr.bf16.mxu0 0
  %5573 = vmatmul.mubr.bf16.gmra.mrb[0].mxu0 %v5442
  %v5574 = vpop.f32.mrb[0].mxu0
  %v5575 = vadd.f32 0.0, %v5574
  %v5576 = vpop.f32.mrb[0].mxu0
  %v5577 = vpop.f32.mrb[0].mxu0
  %v5578 = vadd.f32 0.0, %v5577
  %v5579 = vpop.f32.mrb[0].mxu0
  %5580 = vmatprep.mubr.bf16.mxu0 0
  %5581 = vmatmul.mubr.bf16.gmra.mrb[0].mxu0 %v5445
  %v5582 = vpop.f32.mrb[0].mxu0
  %v5583 = vadd.f32 0.0, %v5582
  %v5584 = vpop.f32.mrb[0].mxu0
  %v5585 = vpop.f32.mrb[0].mxu0
  %v5586 = vadd.f32 0.0, %v5585
  %v5587 = vpop.f32.mrb[0].mxu0
  %5588 = vmatprep.mubr.bf16.mxu0 0
  %5589 = vmatmul.mubr.bf16.gmra.mrb[0].mxu0 %v5448
  %v5590 = vpop.f32.mrb[0].mxu0
  %v5591 = vadd.f32 0.0, %v5590
  %v5592 = vpop.f32.mrb[0].mxu0
  %v5593 = vpop.f32.mrb[0].mxu0
  %v5594 = vadd.f32 0.0, %v5593
  %v5595 = vpop.f32.mrb[0].mxu0
  %5596 = vmatprep.mubr.bf16.mxu0 0
  %5597 = vmatmul.mubr.bf16.gmra.mrb[0].mxu0 %v5451
  %v5598 = vpop.f32.mrb[0].mxu0
  %v5599 = vadd.f32 0.0, %v5598
  %v5600 = vpop.f32.mrb[0].mxu0
  %v5601 = vpop.f32.mrb[0].mxu0
  %v5602 = vadd.f32 0.0, %v5601
  %v5603 = vpop.f32.mrb[0].mxu0
  %5604 = vmatprep.mubr.bf16.mxu0 0
  %5605 = vmatmul.mubr.bf16.gmra.mrb[0].mxu0 %v5454
  %v5606 = vpop.f32.mrb[0].mxu0
  %v5607 = vadd.f32 0.0, %v5606
  %v5608 = vpop.f32.mrb[0].mxu0
  %v5609 = vpop.f32.mrb[0].mxu0
  %v5610 = vadd.f32 0.0, %v5609
  %v5611 = vpop.f32.mrb[0].mxu0
  %5612 = vmatprep.mubr.bf16.mxu0 0
  %5613 = vmatmul.mubr.bf16.gmra.mrb[0].mxu0 %v5457
  %v5614 = vpop.f32.mrb[0].mxu0
  %v5615 = vadd.f32 0.0, %v5614
  %v5616 = vpop.f32.mrb[0].mxu0
  %v5617 = vpop.f32.mrb[0].mxu0
  %v5618 = vadd.f32 0.0, %v5617
  %v5619 = vpop.f32.mrb[0].mxu0
  %5620 = vmatprep.mubr.bf16.mxu0 0
  %5621 = vmatmul.mubr.bf16.gmra.mrb[0].mxu0 %v5460
  %v5622 = vpop.f32.mrb[0].mxu0
  %v5623 = vadd.f32 0.0, %v5622
  %v5624 = vpop.f32.mrb[0].mxu0
  %v5625 = vpop.f32.mrb[0].mxu0
  %v5626 = vadd.f32 0.0, %v5625
  %v5627 = vpop.f32.mrb[0].mxu0
  %5628 = vmatprep.mubr.bf16.mxu0 0
  %5629 = vmatmul.mubr.bf16.gmra.mrb[0].mxu0 %v5463
  %v5630 = vpop.f32.mrb[0].mxu0
  %v5631 = vadd.f32 0.0, %v5630
  %v5632 = vpop.f32.mrb[0].mxu0
  %v5633 = vpop.f32.mrb[0].mxu0
  %v5634 = vadd.f32 0.0, %v5633
  %v5635 = vpop.f32.mrb[0].mxu0
  %5636 = vmatprep.mubr.bf16.mxu0 0
  %5637 = vmatmul.mubr.bf16.gmra.mrb[0].mxu0 %v5466
  %v5638 = vpop.f32.mrb[0].mxu0
  %v5639 = vadd.f32 0.0, %v5638
  %v5640 = vpop.f32.mrb[0].mxu0
  %v5641 = vpop.f32.mrb[0].mxu0
  %v5642 = vadd.f32 0.0, %v5641
  %v5643 = vpop.f32.mrb[0].mxu0
  %5644 = vmatprep.mubr.bf16.mxu0 0
  %5645 = vmatmul.mubr.bf16.gmra.mrb[0].mxu0 %v5469
  %v5646 = vpop.f32.mrb[0].mxu0
  %v5647 = vadd.f32 0.0, %v5646
  %v5648 = vpop.f32.mrb[0].mxu0
  %v5649 = vpop.f32.mrb[0].mxu0
  %v5650 = vadd.f32 0.0, %v5649
  %v5651 = vpop.f32.mrb[0].mxu0
  %5652 = vmatprep.mubr.bf16.mxu0 0
  %5653 = vmatmul.mubr.bf16.gmra.mrb[0].mxu0 %v5472
  %v5654 = vpop.f32.mrb[0].mxu0
  %v5655 = vadd.f32 0.0, %v5654
  %v5656 = vpop.f32.mrb[0].mxu0
  %v5657 = vpop.f32.mrb[0].mxu0
  %v5658 = vadd.f32 0.0, %v5657
  %v5659 = vpop.f32.mrb[0].mxu0
  %5660 = vmatprep.mubr.bf16.mxu0 0
  %5661 = vmatmul.mubr.bf16.gmra.mrb[0].mxu0 %v5475
  %v5662 = vpop.f32.mrb[0].mxu0
  %v5663 = vadd.f32 0.0, %v5662
  %v5664 = vpop.f32.mrb[0].mxu0
  %v5665 = vpop.f32.mrb[0].mxu0
  %v5666 = vadd.f32 0.0, %v5665
  %v5667 = vpop.f32.mrb[0].mxu0
  %5668 = vmatprep.mubr.bf16.mxu0 0
  %5669 = vmatmul.mubr.bf16.gmra.mrb[0].mxu0 %v5478
  %v5670 = vpop.f32.mrb[0].mxu0
  %v5671 = vadd.f32 0.0, %v5670
  %v5672 = vpop.f32.mrb[0].mxu0
  %v5673 = vpop.f32.mrb[0].mxu0
  %v5674 = vadd.f32 0.0, %v5673
  %v5675 = vpop.f32.mrb[0].mxu0
  %5676 = vmatprep.mubr.bf16.mxu0 0
  %5677 = vmatmul.mubr.bf16.gmra.mrb[0].mxu0 %v5481
  %v5678 = vpop.f32.mrb[0].mxu0
  %v5679 = vadd.f32 0.0, %v5678
  %v5680 = vpop.f32.mrb[0].mxu0
  %v5681 = vpop.f32.mrb[0].mxu0
  %v5682 = vadd.f32 0.0, %v5681
  %v5683 = vpop.f32.mrb[0].mxu0
  %5684 = vmatprep.mubr.bf16.mxu0 0
  %5685 = vmatmul.mubr.bf16.gmra.mrb[0].mxu0 %v5484
  %v5686 = vpop.f32.mrb[0].mxu0
  %v5687 = vadd.f32 0.0, %v5686
  %v5688 = vpop.f32.mrb[0].mxu0
  %v5689 = vpop.f32.mrb[0].mxu0
  %v5690 = vadd.f32 0.0, %v5689
  %v5691 = vpop.f32.mrb[0].mxu0
  %5692 = vmatprep.mubr.bf16.mxu0 0
  %5693 = vmatmul.mubr.bf16.gmra.mrb[0].mxu0 %v5487
  %v5694 = vpop.f32.mrb[0].mxu0
  %v5695 = vadd.f32 0.0, %v5694
  %v5696 = vpop.f32.mrb[0].mxu0
  %v5697 = vpop.f32.mrb[0].mxu0
  %v5698 = vadd.f32 0.0, %v5697
  %v5699 = vpop.f32.mrb[0].mxu0
  %5700 = vmatprep.mubr.bf16.mxu0 0
  %5701 = vmatmul.mubr.bf16.gmra.mrb[0].mxu0 %v5490
  %v5702 = vpop.f32.mrb[0].mxu0
  %v5703 = vadd.f32 0.0, %v5702
  %v5704 = vpop.f32.mrb[0].mxu0
  %v5705 = vpop.f32.mrb[0].mxu0
  %v5706 = vadd.f32 0.0, %v5705
  %v5707 = vpop.f32.mrb[0].mxu0
  %5708 = vmatprep.mubr.bf16.mxu0 0
  %5709 = vmatmul.mubr.bf16.gmra.mrb[0].mxu0 %v5493
  %v5710 = vpop.f32.mrb[0].mxu0
  %v5711 = vadd.f32 0.0, %v5710
  %v5712 = vpop.f32.mrb[0].mxu0
  %v5713 = vpop.f32.mrb[0].mxu0
  %v5714 = vadd.f32 0.0, %v5713
  %v5715 = vpop.f32.mrb[0].mxu0
  %5716 = vmatprep.mubr.bf16.mxu0 0
  %5717 = vmatmul.mubr.bf16.gmra.mrb[0].mxu0 %v5496
  %v5718 = vpop.f32.mrb[0].mxu0
  %v5719 = vadd.f32 0.0, %v5718
  %v5720 = vpop.f32.mrb[0].mxu0
  %v5721 = vpop.f32.mrb[0].mxu0
  %v5722 = vadd.f32 0.0, %v5721
  %v5723 = vpop.f32.mrb[0].mxu0
  %5724 = vmatprep.mubr.bf16.mxu0 0
  %5725 = vmatmul.mubr.bf16.gmra.mrb[0].mxu0 %v5499
  %v5726 = vpop.f32.mrb[0].mxu0
  %v5727 = vadd.f32 0.0, %v5726
  %v5728 = vpop.f32.mrb[0].mxu0
  %v5729 = vpop.f32.mrb[0].mxu0
  %v5730 = vadd.f32 0.0, %v5729
  %v5731 = vpop.f32.mrb[0].mxu0
  %5732 = vmatprep.mubr.bf16.mxu0 0
  %5733 = vmatmul.mubr.bf16.gmra.mrb[0].mxu0 %v5502
  %v5734 = vpop.f32.mrb[0].mxu0
  %v5735 = vadd.f32 0.0, %v5734
  %v5736 = vpop.f32.mrb[0].mxu0
  %v5737 = vpop.f32.mrb[0].mxu0
  %v5738 = vadd.f32 0.0, %v5737
  %v5739 = vpop.f32.mrb[0].mxu0
  %5740 = vmatprep.mubr.bf16.mxu0 0
  %5741 = vmatmul.mubr.bf16.gmra.mrb[0].mxu0 %v5505
  %v5742 = vpop.f32.mrb[0].mxu0
  %v5743 = vadd.f32 0.0, %v5742
  %v5744 = vpop.f32.mrb[0].mxu0
  %v5745 = vpop.f32.mrb[0].mxu0
  %v5746 = vadd.f32 0.0, %v5745
  %v5747 = vpop.f32.mrb[0].mxu0
  %5748 = vmatprep.mubr.bf16.mxu0 0
  %5749 = vmatmul.mubr.bf16.gmra.mrb[0].mxu0 %v5508
  %v5750 = vpop.f32.mrb[0].mxu0
  %v5751 = vadd.f32 0.0, %v5750
  %v5752 = vpop.f32.mrb[0].mxu0
  %v5753 = vpop.f32.mrb[0].mxu0
  %v5754 = vadd.f32 0.0, %v5753
  %v5755 = vpop.f32.mrb[0].mxu0
  %5756 = vmatprep.mubr.bf16.mxu0 0
  %5757 = vmatmul.mubr.bf16.gmra.mrb[0].mxu0 %v5511
  %v5758 = vpop.f32.mrb[0].mxu0
  %v5759 = vadd.f32 0.0, %v5758
  %v5760 = vpop.f32.mrb[0].mxu0
  %v5761 = vpop.f32.mrb[0].mxu0
  %v5762 = vadd.f32 0.0, %v5761
  %v5763 = vpop.f32.mrb[0].mxu0
  %5764 = vmatprep.mubr.bf16.mxu0 0
  %5765 = vmatmul.mubr.bf16.gmra.mrb[0].mxu0 %v5514
  %v5766 = vpop.f32.mrb[0].mxu0
  %v5767 = vadd.f32 0.0, %v5766
  %v5768 = vpop.f32.mrb[0].mxu0
  %v5769 = vpop.f32.mrb[0].mxu0
  %v5770 = vadd.f32 0.0, %v5769
  %v5771 = vpop.f32.mrb[0].mxu0
  %5772 = vmatprep.mubr.bf16.mxu0 0
  %5773 = vmatmul.mubr.bf16.gmra.mrb[0].mxu0 %v5517
  %v5774 = vpop.f32.mrb[0].mxu0
  %v5775 = vadd.f32 0.0, %v5774
  %v5776 = vpop.f32.mrb[0].mxu0
  %v5777 = vpop.f32.mrb[0].mxu0
  %v5778 = vadd.f32 0.0, %v5777
  %v5779 = vpop.f32.mrb[0].mxu0
  %5780 = vmatprep.mubr.bf16.mxu0 0
  %5781 = vmatmul.mubr.bf16.gmra.mrb[0].mxu0 %v5520
  %v5782 = vpop.f32.mrb[0].mxu0
  %v5783 = vadd.f32 0.0, %v5782
  %v5784 = vpop.f32.mrb[0].mxu0
  %v5785 = vpop.f32.mrb[0].mxu0
  %v5786 = vadd.f32 0.0, %v5785
  %v5787 = vpop.f32.mrb[0].mxu0
  %5788 = vmatprep.mubr.bf16.mxu0 0
  %5789 = vmatmul.mubr.bf16.gmra.mrb[0].mxu0 %v5523
  %v5790 = vpop.f32.mrb[0].mxu0
  %v5791 = vadd.f32 0.0, %v5790
  %v5792 = vpop.f32.mrb[0].mxu0
  %v5793 = vpop.f32.mrb[0].mxu0
  %v5794 = vadd.f32 0.0, %v5793
  %v5795 = vpop.f32.mrb[0].mxu0
  %5796 = vmatprep.mubr.bf16.mxu0 0
  %5797 = vmatmul.mubr.bf16.gmra.mrb[0].mxu0 %v5526
  %v5798 = vpop.f32.mrb[0].mxu0
  %v5799 = vadd.f32 0.0, %v5798
  %v5800 = vpop.f32.mrb[0].mxu0
  %v5801 = vpop.f32.mrb[0].mxu0
  %v5802 = vadd.f32 0.0, %v5801
  %v5803 = vpop.f32.mrb[0].mxu0
  %5804 = vmatprep.mubr.bf16.mxu0 0
  %5805 = vmatmul.mubr.bf16.gmra.mrb[0].mxu0 %v5529
  %v5806 = vpop.f32.mrb[0].mxu0
  %v5807 = vadd.f32 0.0, %v5806
  %v5808 = vpop.f32.mrb[0].mxu0
  %v5809 = vpop.f32.mrb[0].mxu0
  %v5810 = vadd.f32 0.0, %v5809
  %v5811 = vpop.f32.mrb[0].mxu0
  %5812 = vmatprep.mubr.bf16.mxu0 0
  %5813 = vmatmul.mubr.bf16.gmra.mrb[0].mxu0 %v5532
  %v5814 = vpop.f32.mrb[0].mxu0
  %v5815 = vadd.f32 0.0, %v5814
  %v5816 = vpop.f32.mrb[0].mxu0
  %v5817 = vpop.f32.mrb[0].mxu0
  %v5818 = vadd.f32 0.0, %v5817
  %v5819 = vpop.f32.mrb[0].mxu0
  %5820 = vmatprep.mubr.bf16.mxu0 0
  %5821 = vmatmul.mubr.bf16.gmra.mrb[0].mxu0 %v5535
  %v5822 = vpop.f32.mrb[0].mxu0
  %v5823 = vadd.f32 0.0, %v5822
  %v5824 = vpop.f32.mrb[0].mxu0
  %v5825 = vpop.f32.mrb[0].mxu0
  %v5826 = vadd.f32 0.0, %v5825
  %v5827 = vpop.f32.mrb[0].mxu0
  %5828 = vdwg.mxu0
  %v5829 = vadd.f32 %v5279, %v5575
  %v5830 = vadd.f32 %v5280, %v5578
  %v5831 = vadd.f32 %v5281, %v5583
  %v5832 = vadd.f32 %v5282, %v5586
  %v5833 = vadd.f32 %v5283, %v5591
  %v5834 = vadd.f32 %v5284, %v5594
  %v5835 = vadd.f32 %v5285, %v5599
  %v5836 = vadd.f32 %v5286, %v5602
  %v5837 = vadd.f32 %v5287, %v5607
  %v5838 = vadd.f32 %v5288, %v5610
  %v5839 = vadd.f32 %v5289, %v5615
  %v5840 = vadd.f32 %v5290, %v5618
  %v5841 = vadd.f32 %v5291, %v5623
  %v5842 = vadd.f32 %v5292, %v5626
  %v5843 = vadd.f32 %v5293, %v5631
  %v5844 = vadd.f32 %v5294, %v5634
  %v5845 = vadd.f32 %v5295, %v5639
  %v5846 = vadd.f32 %v5296, %v5642
  %v5847 = vadd.f32 %v5297, %v5647
  %v5848 = vadd.f32 %v5298, %v5650
  %v5849 = vadd.f32 %v5299, %v5655
  %v5850 = vadd.f32 %v5300, %v5658
  %v5851 = vadd.f32 %v5301, %v5663
  %v5852 = vadd.f32 %v5302, %v5666
  %v5853 = vadd.f32 %v5303, %v5671
  %v5854 = vadd.f32 %v5304, %v5674
  %v5855 = vadd.f32 %v5305, %v5679
  %v5856 = vadd.f32 %v5306, %v5682
  %v5857 = vadd.f32 %v5307, %v5687
  %v5858 = vadd.f32 %v5308, %v5690
  %v5859 = vadd.f32 %v5309, %v5695
  %v5860 = vadd.f32 %v5310, %v5698
  %v5861 = vadd.f32 %v5311, %v5703
  %v5862 = vadd.f32 %v5312, %v5706
  %v5863 = vadd.f32 %v5313, %v5711
  %v5864 = vadd.f32 %v5314, %v5714
  %v5865 = vadd.f32 %v5315, %v5719
  %v5866 = vadd.f32 %v5316, %v5722
  %v5867 = vadd.f32 %v5317, %v5727
  %v5868 = vadd.f32 %v5318, %v5730
  %v5869 = vadd.f32 %v5319, %v5735
  %v5870 = vadd.f32 %v5320, %v5738
  %v5871 = vadd.f32 %v5321, %v5743
  %v5872 = vadd.f32 %v5322, %v5746
  %v5873 = vadd.f32 %v5323, %v5751
  %v5874 = vadd.f32 %v5324, %v5754
  %v5875 = vadd.f32 %v5325, %v5759
  %v5876 = vadd.f32 %v5326, %v5762
  %v5877 = vadd.f32 %v5327, %v5767
  %v5878 = vadd.f32 %v5328, %v5770
  %v5879 = vadd.f32 %v5329, %v5775
  %v5880 = vadd.f32 %v5330, %v5778
  %v5881 = vadd.f32 %v5331, %v5783
  %v5882 = vadd.f32 %v5332, %v5786
  %v5883 = vadd.f32 %v5333, %v5791
  %v5884 = vadd.f32 %v5334, %v5794
  %v5885 = vadd.f32 %v5335, %v5799
  %v5886 = vadd.f32 %v5336, %v5802
  %v5887 = vadd.f32 %v5337, %v5807
  %v5888 = vadd.f32 %v5338, %v5810
  %v5889 = vadd.f32 %v5339, %v5815
  %v5890 = vadd.f32 %v5340, %v5818
  %v5891 = vadd.f32 %v5341, %v5823
  %v5892 = vadd.f32 %v5342, %v5826
  %v5893 = vld [vmem:[%s6] sm:$0x1]
  %v5894 = vld [vmem:[%s7] sm:$0x1]
  %vm5895 = vcmask 64512
  %v5896 = vsel %vm5895, %v5829, 0.0
  %v5897 = vsel %vm5895, %v5830, 0.0
  %v5898 = vadd.f32 %v5896, %v5897
  %v5899 = vsel %vm5895, %v5831, 0.0
  %v5900 = vadd.f32 %v5898, %v5899
  %v5901 = vsel %vm5895, %v5832, 0.0
  %v5902 = vadd.f32 %v5900, %v5901
  %v5903 = vsel %vm5895, %v5833, 0.0
  %v5904 = vadd.f32 %v5902, %v5903
  %v5905 = vsel %vm5895, %v5834, 0.0
  %v5906 = vadd.f32 %v5904, %v5905
  %v5907 = vsel %vm5895, %v5835, 0.0
  %v5908 = vadd.f32 %v5906, %v5907
  %v5909 = vsel %vm5895, %v5836, 0.0
  %v5910 = vadd.f32 %v5908, %v5909
  %v5911 = vsel %vm5895, %v5837, 0.0
  %v5912 = vadd.f32 %v5910, %v5911
  %v5913 = vsel %vm5895, %v5838, 0.0
  %v5914 = vadd.f32 %v5912, %v5913
  %v5915 = vsel %vm5895, %v5839, 0.0
  %v5916 = vadd.f32 %v5914, %v5915
  %v5917 = vsel %vm5895, %v5840, 0.0
  %v5918 = vadd.f32 %v5916, %v5917
  %v5919 = vsel %vm5895, %v5841, 0.0
  %v5920 = vadd.f32 %v5918, %v5919
  %v5921 = vsel %vm5895, %v5842, 0.0
  %v5922 = vadd.f32 %v5920, %v5921
  %v5923 = vsel %vm5895, %v5843, 0.0
  %v5924 = vadd.f32 %v5922, %v5923
  %v5925 = vsel %vm5895, %v5844, 0.0
  %v5926 = vadd.f32 %v5924, %v5925
  %v5927 = vsel %vm5895, %v5845, 0.0
  %v5928 = vadd.f32 %v5926, %v5927
  %v5929 = vsel %vm5895, %v5846, 0.0
  %v5930 = vadd.f32 %v5928, %v5929
  %v5931 = vsel %vm5895, %v5847, 0.0
  %v5932 = vadd.f32 %v5930, %v5931
  %v5933 = vsel %vm5895, %v5848, 0.0
  %v5934 = vadd.f32 %v5932, %v5933
  %v5935 = vsel %vm5895, %v5849, 0.0
  %v5936 = vadd.f32 %v5934, %v5935
  %v5937 = vsel %vm5895, %v5850, 0.0
  %v5938 = vadd.f32 %v5936, %v5937
  %v5939 = vsel %vm5895, %v5851, 0.0
  %v5940 = vadd.f32 %v5938, %v5939
  %v5941 = vsel %vm5895, %v5852, 0.0
  %v5942 = vadd.f32 %v5940, %v5941
  %v5943 = vsel %vm5895, %v5853, 0.0
  %v5944 = vadd.f32 %v5942, %v5943
  %v5945 = vsel %vm5895, %v5854, 0.0
  %v5946 = vadd.f32 %v5944, %v5945
  %v5947 = vsel %vm5895, %v5855, 0.0
  %v5948 = vadd.f32 %v5946, %v5947
  %v5949 = vsel %vm5895, %v5856, 0.0
  %v5950 = vadd.f32 %v5948, %v5949
  %v5951 = vsel %vm5895, %v5857, 0.0
  %v5952 = vadd.f32 %v5950, %v5951
  %v5953 = vsel %vm5895, %v5858, 0.0
  %v5954 = vadd.f32 %v5952, %v5953
  %v5955 = vsel %vm5895, %v5859, 0.0
  %v5956 = vadd.f32 %v5954, %v5955
  %v5957 = vsel %vm5895, %v5860, 0.0
  %v5958 = vadd.f32 %v5956, %v5957
  %v5959 = vsel %vm5895, %v5861, 0.0
  %v5960 = vadd.f32 %v5958, %v5959
  %v5961 = vsel %vm5895, %v5862, 0.0
  %v5962 = vadd.f32 %v5960, %v5961
  %v5963 = vsel %vm5895, %v5863, 0.0
  %v5964 = vadd.f32 %v5962, %v5963
  %v5965 = vsel %vm5895, %v5864, 0.0
  %v5966 = vadd.f32 %v5964, %v5965
  %v5967 = vsel %vm5895, %v5865, 0.0
  %v5968 = vadd.f32 %v5966, %v5967
  %v5969 = vsel %vm5895, %v5866, 0.0
  %v5970 = vadd.f32 %v5968, %v5969
  %v5971 = vsel %vm5895, %v5867, 0.0
  %v5972 = vadd.f32 %v5970, %v5971
  %v5973 = vsel %vm5895, %v5868, 0.0
  %v5974 = vadd.f32 %v5972, %v5973
  %v5975 = vsel %vm5895, %v5869, 0.0
  %v5976 = vadd.f32 %v5974, %v5975
  %v5977 = vsel %vm5895, %v5870, 0.0
  %v5978 = vadd.f32 %v5976, %v5977
  %v5979 = vsel %vm5895, %v5871, 0.0
  %v5980 = vadd.f32 %v5978, %v5979
  %v5981 = vsel %vm5895, %v5872, 0.0
  %v5982 = vadd.f32 %v5980, %v5981
  %v5983 = vsel %vm5895, %v5873, 0.0
  %v5984 = vadd.f32 %v5982, %v5983
  %v5985 = vsel %vm5895, %v5874, 0.0
  %v5986 = vadd.f32 %v5984, %v5985
  %v5987 = vsel %vm5895, %v5875, 0.0
  %v5988 = vadd.f32 %v5986, %v5987
  %v5989 = vsel %vm5895, %v5876, 0.0
  %v5990 = vadd.f32 %v5988, %v5989
  %v5991 = vsel %vm5895, %v5877, 0.0
  %v5992 = vadd.f32 %v5990, %v5991
  %v5993 = vsel %vm5895, %v5878, 0.0
  %v5994 = vadd.f32 %v5992, %v5993
  %v5995 = vsel %vm5895, %v5879, 0.0
  %v5996 = vadd.f32 %v5994, %v5995
  %v5997 = vsel %vm5895, %v5880, 0.0
  %v5998 = vadd.f32 %v5996, %v5997
  %v5999 = vsel %vm5895, %v5881, 0.0
  %v6000 = vadd.f32 %v5998, %v5999
  %v6001 = vsel %vm5895, %v5882, 0.0
  %v6002 = vadd.f32 %v6000, %v6001
  %v6003 = vsel %vm5895, %v5883, 0.0
  %v6004 = vadd.f32 %v6002, %v6003
  %v6005 = vsel %vm5895, %v5884, 0.0
  %v6006 = vadd.f32 %v6004, %v6005
  %v6007 = vsel %vm5895, %v5885, 0.0
  %v6008 = vadd.f32 %v6006, %v6007
  %v6009 = vsel %vm5895, %v5886, 0.0
  %v6010 = vadd.f32 %v6008, %v6009
  %v6011 = vsel %vm5895, %v5887, 0.0
  %v6012 = vadd.f32 %v6010, %v6011
  %v6013 = vsel %vm5895, %v5888, 0.0
  %v6014 = vadd.f32 %v6012, %v6013
  %v6015 = vsel %vm5895, %v5889, 0.0
  %v6016 = vadd.f32 %v6014, %v6015
  %v6017 = vsel %vm5895, %v5890, 0.0
  %v6018 = vadd.f32 %v6016, %v6017
  %v6019 = vsel %vm5895, %v5891, 0.0
  %v6020 = vadd.f32 %v6018, %v6019
  %v6021 = vsel %vm5895, %v5892, 0.0
  %v6022 = vadd.f32 %v6020, %v6021
  %v6023 = vrot.slane %v6022, 4
  %v6024 = vadd.f32 %v6022, %v6023
  %v6025 = vrot.slane %v6024, 2
  %v6026 = vadd.f32 %v6024, %v6025
  %v6027 = vrot.slane %v6026, 1
  %v6028 = vadd.f32 %v6026, %v6027
  %v6029 = vmul.f32 %v6028, 0.001953125
  %v6030 = vsub.f32 %v5829, %v6029
  %v6031 = vsub.f32 %v5830, %v6029
  %v6032 = vsub.f32 %v5831, %v6029
  %v6033 = vsub.f32 %v5832, %v6029
  %v6034 = vsub.f32 %v5833, %v6029
  %v6035 = vsub.f32 %v5834, %v6029
  %v6036 = vsub.f32 %v5835, %v6029
  %v6037 = vsub.f32 %v5836, %v6029
  %v6038 = vsub.f32 %v5837, %v6029
  %v6039 = vsub.f32 %v5838, %v6029
  %v6040 = vsub.f32 %v5839, %v6029
  %v6041 = vsub.f32 %v5840, %v6029
  %v6042 = vsub.f32 %v5841, %v6029
  %v6043 = vsub.f32 %v5842, %v6029
  %v6044 = vsub.f32 %v5843, %v6029
  %v6045 = vsub.f32 %v5844, %v6029
  %v6046 = vsub.f32 %v5845, %v6029
  %v6047 = vsub.f32 %v5846, %v6029
  %v6048 = vsub.f32 %v5847, %v6029
  %v6049 = vsub.f32 %v5848, %v6029
  %v6050 = vsub.f32 %v5849, %v6029
  %v6051 = vsub.f32 %v5850, %v6029
  %v6052 = vsub.f32 %v5851, %v6029
  %v6053 = vsub.f32 %v5852, %v6029
  %v6054 = vsub.f32 %v5853, %v6029
  %v6055 = vsub.f32 %v5854, %v6029
  %v6056 = vsub.f32 %v5855, %v6029
  %v6057 = vsub.f32 %v5856, %v6029
  %v6058 = vsub.f32 %v5857, %v6029
  %v6059 = vsub.f32 %v5858, %v6029
  %v6060 = vsub.f32 %v5859, %v6029
  %v6061 = vsub.f32 %v5860, %v6029
  %v6062 = vsub.f32 %v5861, %v6029
  %v6063 = vsub.f32 %v5862, %v6029
  %v6064 = vsub.f32 %v5863, %v6029
  %v6065 = vsub.f32 %v5864, %v6029
  %v6066 = vsub.f32 %v5865, %v6029
  %v6067 = vsub.f32 %v5866, %v6029
  %v6068 = vsub.f32 %v5867, %v6029
  %v6069 = vsub.f32 %v5868, %v6029
  %v6070 = vsub.f32 %v5869, %v6029
  %v6071 = vsub.f32 %v5870, %v6029
  %v6072 = vsub.f32 %v5871, %v6029
  %v6073 = vsub.f32 %v5872, %v6029
  %v6074 = vsub.f32 %v5873, %v6029
  %v6075 = vsub.f32 %v5874, %v6029
  %v6076 = vsub.f32 %v5875, %v6029
  %v6077 = vsub.f32 %v5876, %v6029
  %v6078 = vsub.f32 %v5877, %v6029
  %v6079 = vsub.f32 %v5878, %v6029
  %v6080 = vsub.f32 %v5879, %v6029
  %v6081 = vsub.f32 %v5880, %v6029
  %v6082 = vsub.f32 %v5881, %v6029
  %v6083 = vsub.f32 %v5882, %v6029
  %v6084 = vsub.f32 %v5883, %v6029
  %v6085 = vsub.f32 %v5884, %v6029
  %v6086 = vsub.f32 %v5885, %v6029
  %v6087 = vsub.f32 %v5886, %v6029
  %v6088 = vsub.f32 %v5887, %v6029
  %v6089 = vsub.f32 %v5888, %v6029
  %v6090 = vsub.f32 %v5889, %v6029
  %v6091 = vsub.f32 %v5890, %v6029
  %v6092 = vsub.f32 %v5891, %v6029
  %v6093 = vsub.f32 %v5892, %v6029
  %v6094 = vmul.f32 %v6030, %v6030
  %v6095 = vmul.f32 %v6031, %v6031
  %v6096 = vmul.f32 %v6032, %v6032
  %v6097 = vmul.f32 %v6033, %v6033
  %v6098 = vmul.f32 %v6034, %v6034
  %v6099 = vmul.f32 %v6035, %v6035
  %v6100 = vmul.f32 %v6036, %v6036
  %v6101 = vmul.f32 %v6037, %v6037
  %v6102 = vmul.f32 %v6038, %v6038
  %v6103 = vmul.f32 %v6039, %v6039
  %v6104 = vmul.f32 %v6040, %v6040
  %v6105 = vmul.f32 %v6041, %v6041
  %v6106 = vmul.f32 %v6042, %v6042
  %v6107 = vmul.f32 %v6043, %v6043
  %v6108 = vmul.f32 %v6044, %v6044
  %v6109 = vmul.f32 %v6045, %v6045
  %v6110 = vmul.f32 %v6046, %v6046
  %v6111 = vmul.f32 %v6047, %v6047
  %v6112 = vmul.f32 %v6048, %v6048
  %v6113 = vmul.f32 %v6049, %v6049
  %v6114 = vmul.f32 %v6050, %v6050
  %v6115 = vmul.f32 %v6051, %v6051
  %v6116 = vmul.f32 %v6052, %v6052
  %v6117 = vmul.f32 %v6053, %v6053
  %v6118 = vmul.f32 %v6054, %v6054
  %v6119 = vmul.f32 %v6055, %v6055
  %v6120 = vmul.f32 %v6056, %v6056
  %v6121 = vmul.f32 %v6057, %v6057
  %v6122 = vmul.f32 %v6058, %v6058
  %v6123 = vmul.f32 %v6059, %v6059
  %v6124 = vmul.f32 %v6060, %v6060
  %v6125 = vmul.f32 %v6061, %v6061
  %v6126 = vmul.f32 %v6062, %v6062
  %v6127 = vmul.f32 %v6063, %v6063
  %v6128 = vmul.f32 %v6064, %v6064
  %v6129 = vmul.f32 %v6065, %v6065
  %v6130 = vmul.f32 %v6066, %v6066
  %v6131 = vmul.f32 %v6067, %v6067
  %v6132 = vmul.f32 %v6068, %v6068
  %v6133 = vmul.f32 %v6069, %v6069
  %v6134 = vmul.f32 %v6070, %v6070
  %v6135 = vmul.f32 %v6071, %v6071
  %v6136 = vmul.f32 %v6072, %v6072
  %v6137 = vmul.f32 %v6073, %v6073
  %v6138 = vmul.f32 %v6074, %v6074
  %v6139 = vmul.f32 %v6075, %v6075
  %v6140 = vmul.f32 %v6076, %v6076
  %v6141 = vmul.f32 %v6077, %v6077
  %v6142 = vmul.f32 %v6078, %v6078
  %v6143 = vmul.f32 %v6079, %v6079
  %v6144 = vmul.f32 %v6080, %v6080
  %v6145 = vmul.f32 %v6081, %v6081
  %v6146 = vmul.f32 %v6082, %v6082
  %v6147 = vmul.f32 %v6083, %v6083
  %v6148 = vmul.f32 %v6084, %v6084
  %v6149 = vmul.f32 %v6085, %v6085
  %v6150 = vmul.f32 %v6086, %v6086
  %v6151 = vmul.f32 %v6087, %v6087
  %v6152 = vmul.f32 %v6088, %v6088
  %v6153 = vmul.f32 %v6089, %v6089
  %v6154 = vmul.f32 %v6090, %v6090
  %v6155 = vmul.f32 %v6091, %v6091
  %v6156 = vmul.f32 %v6092, %v6092
  %v6157 = vmul.f32 %v6093, %v6093
  %v6158 = vsel %vm5895, %v6094, 0.0
  %v6159 = vsel %vm5895, %v6095, 0.0
  %v6160 = vadd.f32 %v6158, %v6159
  %v6161 = vsel %vm5895, %v6096, 0.0
  %v6162 = vadd.f32 %v6160, %v6161
  %v6163 = vsel %vm5895, %v6097, 0.0
  %v6164 = vadd.f32 %v6162, %v6163
  %v6165 = vsel %vm5895, %v6098, 0.0
  %v6166 = vadd.f32 %v6164, %v6165
  %v6167 = vsel %vm5895, %v6099, 0.0
  %v6168 = vadd.f32 %v6166, %v6167
  %v6169 = vsel %vm5895, %v6100, 0.0
  %v6170 = vadd.f32 %v6168, %v6169
  %v6171 = vsel %vm5895, %v6101, 0.0
  %v6172 = vadd.f32 %v6170, %v6171
  %v6173 = vsel %vm5895, %v6102, 0.0
  %v6174 = vadd.f32 %v6172, %v6173
  %v6175 = vsel %vm5895, %v6103, 0.0
  %v6176 = vadd.f32 %v6174, %v6175
  %v6177 = vsel %vm5895, %v6104, 0.0
  %v6178 = vadd.f32 %v6176, %v6177
  %v6179 = vsel %vm5895, %v6105, 0.0
  %v6180 = vadd.f32 %v6178, %v6179
  %v6181 = vsel %vm5895, %v6106, 0.0
  %v6182 = vadd.f32 %v6180, %v6181
  %v6183 = vsel %vm5895, %v6107, 0.0
  %v6184 = vadd.f32 %v6182, %v6183
  %v6185 = vsel %vm5895, %v6108, 0.0
  %v6186 = vadd.f32 %v6184, %v6185
  %v6187 = vsel %vm5895, %v6109, 0.0
  %v6188 = vadd.f32 %v6186, %v6187
  %v6189 = vsel %vm5895, %v6110, 0.0
  %v6190 = vadd.f32 %v6188, %v6189
  %v6191 = vsel %vm5895, %v6111, 0.0
  %v6192 = vadd.f32 %v6190, %v6191
  %v6193 = vsel %vm5895, %v6112, 0.0
  %v6194 = vadd.f32 %v6192, %v6193
  %v6195 = vsel %vm5895, %v6113, 0.0
  %v6196 = vadd.f32 %v6194, %v6195
  %v6197 = vsel %vm5895, %v6114, 0.0
  %v6198 = vadd.f32 %v6196, %v6197
  %v6199 = vsel %vm5895, %v6115, 0.0
  %v6200 = vadd.f32 %v6198, %v6199
  %v6201 = vsel %vm5895, %v6116, 0.0
  %v6202 = vadd.f32 %v6200, %v6201
  %v6203 = vsel %vm5895, %v6117, 0.0
  %v6204 = vadd.f32 %v6202, %v6203
  %v6205 = vsel %vm5895, %v6118, 0.0
  %v6206 = vadd.f32 %v6204, %v6205
  %v6207 = vsel %vm5895, %v6119, 0.0
  %v6208 = vadd.f32 %v6206, %v6207
  %v6209 = vsel %vm5895, %v6120, 0.0
  %v6210 = vadd.f32 %v6208, %v6209
  %v6211 = vsel %vm5895, %v6121, 0.0
  %v6212 = vadd.f32 %v6210, %v6211
  %v6213 = vsel %vm5895, %v6122, 0.0
  %v6214 = vadd.f32 %v6212, %v6213
  %v6215 = vsel %vm5895, %v6123, 0.0
  %v6216 = vadd.f32 %v6214, %v6215
  %v6217 = vsel %vm5895, %v6124, 0.0
  %v6218 = vadd.f32 %v6216, %v6217
  %v6219 = vsel %vm5895, %v6125, 0.0
  %v6220 = vadd.f32 %v6218, %v6219
  %v6221 = vsel %vm5895, %v6126, 0.0
  %v6222 = vadd.f32 %v6220, %v6221
  %v6223 = vsel %vm5895, %v6127, 0.0
  %v6224 = vadd.f32 %v6222, %v6223
  %v6225 = vsel %vm5895, %v6128, 0.0
  %v6226 = vadd.f32 %v6224, %v6225
  %v6227 = vsel %vm5895, %v6129, 0.0
  %v6228 = vadd.f32 %v6226, %v6227
  %v6229 = vsel %vm5895, %v6130, 0.0
  %v6230 = vadd.f32 %v6228, %v6229
  %v6231 = vsel %vm5895, %v6131, 0.0
  %v6232 = vadd.f32 %v6230, %v6231
  %v6233 = vsel %vm5895, %v6132, 0.0
  %v6234 = vadd.f32 %v6232, %v6233
  %v6235 = vsel %vm5895, %v6133, 0.0
  %v6236 = vadd.f32 %v6234, %v6235
  %v6237 = vsel %vm5895, %v6134, 0.0
  %v6238 = vadd.f32 %v6236, %v6237
  %v6239 = vsel %vm5895, %v6135, 0.0
  %v6240 = vadd.f32 %v6238, %v6239
  %v6241 = vsel %vm5895, %v6136, 0.0
  %v6242 = vadd.f32 %v6240, %v6241
  %v6243 = vsel %vm5895, %v6137, 0.0
  %v6244 = vadd.f32 %v6242, %v6243
  %v6245 = vsel %vm5895, %v6138, 0.0
  %v6246 = vadd.f32 %v6244, %v6245
  %v6247 = vsel %vm5895, %v6139, 0.0
  %v6248 = vadd.f32 %v6246, %v6247
  %v6249 = vsel %vm5895, %v6140, 0.0
  %v6250 = vadd.f32 %v6248, %v6249
  %v6251 = vsel %vm5895, %v6141, 0.0
  %v6252 = vadd.f32 %v6250, %v6251
  %v6253 = vsel %vm5895, %v6142, 0.0
  %v6254 = vadd.f32 %v6252, %v6253
  %v6255 = vsel %vm5895, %v6143, 0.0
  %v6256 = vadd.f32 %v6254, %v6255
  %v6257 = vsel %vm5895, %v6144, 0.0
  %v6258 = vadd.f32 %v6256, %v6257
  %v6259 = vsel %vm5895, %v6145, 0.0
  %v6260 = vadd.f32 %v6258, %v6259
  %v6261 = vsel %vm5895, %v6146, 0.0
  %v6262 = vadd.f32 %v6260, %v6261
  %v6263 = vsel %vm5895, %v6147, 0.0
  %v6264 = vadd.f32 %v6262, %v6263
  %v6265 = vsel %vm5895, %v6148, 0.0
  %v6266 = vadd.f32 %v6264, %v6265
  %v6267 = vsel %vm5895, %v6149, 0.0
  %v6268 = vadd.f32 %v6266, %v6267
  %v6269 = vsel %vm5895, %v6150, 0.0
  %v6270 = vadd.f32 %v6268, %v6269
  %v6271 = vsel %vm5895, %v6151, 0.0
  %v6272 = vadd.f32 %v6270, %v6271
  %v6273 = vsel %vm5895, %v6152, 0.0
  %v6274 = vadd.f32 %v6272, %v6273
  %v6275 = vsel %vm5895, %v6153, 0.0
  %v6276 = vadd.f32 %v6274, %v6275
  %v6277 = vsel %vm5895, %v6154, 0.0
  %v6278 = vadd.f32 %v6276, %v6277
  %v6279 = vsel %vm5895, %v6155, 0.0
  %v6280 = vadd.f32 %v6278, %v6279
  %v6281 = vsel %vm5895, %v6156, 0.0
  %v6282 = vadd.f32 %v6280, %v6281
  %v6283 = vsel %vm5895, %v6157, 0.0
  %v6284 = vadd.f32 %v6282, %v6283
  %v6285 = vrot.slane %v6284, 4
  %v6286 = vadd.f32 %v6284, %v6285
  %v6287 = vrot.slane %v6286, 2
  %v6288 = vadd.f32 %v6286, %v6287
  %v6289 = vrot.slane %v6288, 1
  %v6290 = vadd.f32 %v6288, %v6289
  %v6291 = vmul.f32 %v6290, 0.001953125
  %v6292 = vadd.f32 %v6291, 1e-05
  %v6293 = vrsqrt.pop %v6292
  %v6294 = vmul.f32 %v6030, %v6293
  %v6295 = vmul.f32 %v6031, %v6293
  %v6296 = vmul.f32 %v6032, %v6293
  %v6297 = vmul.f32 %v6033, %v6293
  %v6298 = vmul.f32 %v6034, %v6293
  %v6299 = vmul.f32 %v6035, %v6293
  %v6300 = vmul.f32 %v6036, %v6293
  %v6301 = vmul.f32 %v6037, %v6293
  %v6302 = vmul.f32 %v6038, %v6293
  %v6303 = vmul.f32 %v6039, %v6293
  %v6304 = vmul.f32 %v6040, %v6293
  %v6305 = vmul.f32 %v6041, %v6293
  %v6306 = vmul.f32 %v6042, %v6293
  %v6307 = vmul.f32 %v6043, %v6293
  %v6308 = vmul.f32 %v6044, %v6293
  %v6309 = vmul.f32 %v6045, %v6293
  %v6310 = vmul.f32 %v6046, %v6293
  %v6311 = vmul.f32 %v6047, %v6293
  %v6312 = vmul.f32 %v6048, %v6293
  %v6313 = vmul.f32 %v6049, %v6293
  %v6314 = vmul.f32 %v6050, %v6293
  %v6315 = vmul.f32 %v6051, %v6293
  %v6316 = vmul.f32 %v6052, %v6293
  %v6317 = vmul.f32 %v6053, %v6293
  %v6318 = vmul.f32 %v6054, %v6293
  %v6319 = vmul.f32 %v6055, %v6293
  %v6320 = vmul.f32 %v6056, %v6293
  %v6321 = vmul.f32 %v6057, %v6293
  %v6322 = vmul.f32 %v6058, %v6293
  %v6323 = vmul.f32 %v6059, %v6293
  %v6324 = vmul.f32 %v6060, %v6293
  %v6325 = vmul.f32 %v6061, %v6293
  %v6326 = vmul.f32 %v6062, %v6293
  %v6327 = vmul.f32 %v6063, %v6293
  %v6328 = vmul.f32 %v6064, %v6293
  %v6329 = vmul.f32 %v6065, %v6293
  %v6330 = vmul.f32 %v6066, %v6293
  %v6331 = vmul.f32 %v6067, %v6293
  %v6332 = vmul.f32 %v6068, %v6293
  %v6333 = vmul.f32 %v6069, %v6293
  %v6334 = vmul.f32 %v6070, %v6293
  %v6335 = vmul.f32 %v6071, %v6293
  %v6336 = vmul.f32 %v6072, %v6293
  %v6337 = vmul.f32 %v6073, %v6293
  %v6338 = vmul.f32 %v6074, %v6293
  %v6339 = vmul.f32 %v6075, %v6293
  %v6340 = vmul.f32 %v6076, %v6293
  %v6341 = vmul.f32 %v6077, %v6293
  %v6342 = vmul.f32 %v6078, %v6293
  %v6343 = vmul.f32 %v6079, %v6293
  %v6344 = vmul.f32 %v6080, %v6293
  %v6345 = vmul.f32 %v6081, %v6293
  %v6346 = vmul.f32 %v6082, %v6293
  %v6347 = vmul.f32 %v6083, %v6293
  %v6348 = vmul.f32 %v6084, %v6293
  %v6349 = vmul.f32 %v6085, %v6293
  %v6350 = vmul.f32 %v6086, %v6293
  %v6351 = vmul.f32 %v6087, %v6293
  %v6352 = vmul.f32 %v6088, %v6293
  %v6353 = vmul.f32 %v6089, %v6293
  %v6354 = vmul.f32 %v6090, %v6293
  %v6355 = vmul.f32 %v6091, %v6293
  %v6356 = vmul.f32 %v6092, %v6293
  %v6357 = vmul.f32 %v6093, %v6293
  %v6359 = vlaneseq
  %v6360 = vshrl.u32 %v6359, 7
  %v6361 = vsub.s32 0, %v6360
  %v6362 = vrot.slane %v5893, %v6361
  %v6364 = vmul.f32 %v6294, %v6362
  %v6365 = vmul.f32 %v6295, %v6362
  %v6366 = vmul.f32 %v6296, %v6362
  %v6367 = vmul.f32 %v6297, %v6362
  %v6368 = vmul.f32 %v6298, %v6362
  %v6369 = vmul.f32 %v6299, %v6362
  %v6370 = vmul.f32 %v6300, %v6362
  %v6371 = vmul.f32 %v6301, %v6362
  %v6372 = vmul.f32 %v6302, %v6362
  %v6373 = vmul.f32 %v6303, %v6362
  %v6374 = vmul.f32 %v6304, %v6362
  %v6375 = vmul.f32 %v6305, %v6362
  %v6376 = vmul.f32 %v6306, %v6362
  %v6377 = vmul.f32 %v6307, %v6362
  %v6378 = vmul.f32 %v6308, %v6362
  %v6379 = vmul.f32 %v6309, %v6362
  %v6380 = vmul.f32 %v6310, %v6362
  %v6381 = vmul.f32 %v6311, %v6362
  %v6382 = vmul.f32 %v6312, %v6362
  %v6383 = vmul.f32 %v6313, %v6362
  %v6384 = vmul.f32 %v6314, %v6362
  %v6385 = vmul.f32 %v6315, %v6362
  %v6386 = vmul.f32 %v6316, %v6362
  %v6387 = vmul.f32 %v6317, %v6362
  %v6388 = vmul.f32 %v6318, %v6362
  %v6389 = vmul.f32 %v6319, %v6362
  %v6390 = vmul.f32 %v6320, %v6362
  %v6391 = vmul.f32 %v6321, %v6362
  %v6392 = vmul.f32 %v6322, %v6362
  %v6393 = vmul.f32 %v6323, %v6362
  %v6394 = vmul.f32 %v6324, %v6362
  %v6395 = vmul.f32 %v6325, %v6362
  %v6396 = vmul.f32 %v6326, %v6362
  %v6397 = vmul.f32 %v6327, %v6362
  %v6398 = vmul.f32 %v6328, %v6362
  %v6399 = vmul.f32 %v6329, %v6362
  %v6400 = vmul.f32 %v6330, %v6362
  %v6401 = vmul.f32 %v6331, %v6362
  %v6402 = vmul.f32 %v6332, %v6362
  %v6403 = vmul.f32 %v6333, %v6362
  %v6404 = vmul.f32 %v6334, %v6362
  %v6405 = vmul.f32 %v6335, %v6362
  %v6406 = vmul.f32 %v6336, %v6362
  %v6407 = vmul.f32 %v6337, %v6362
  %v6408 = vmul.f32 %v6338, %v6362
  %v6409 = vmul.f32 %v6339, %v6362
  %v6410 = vmul.f32 %v6340, %v6362
  %v6411 = vmul.f32 %v6341, %v6362
  %v6412 = vmul.f32 %v6342, %v6362
  %v6413 = vmul.f32 %v6343, %v6362
  %v6414 = vmul.f32 %v6344, %v6362
  %v6415 = vmul.f32 %v6345, %v6362
  %v6416 = vmul.f32 %v6346, %v6362
  %v6417 = vmul.f32 %v6347, %v6362
  %v6418 = vmul.f32 %v6348, %v6362
  %v6419 = vmul.f32 %v6349, %v6362
  %v6420 = vmul.f32 %v6350, %v6362
  %v6421 = vmul.f32 %v6351, %v6362
  %v6422 = vmul.f32 %v6352, %v6362
  %v6423 = vmul.f32 %v6353, %v6362
  %v6424 = vmul.f32 %v6354, %v6362
  %v6425 = vmul.f32 %v6355, %v6362
  %v6426 = vmul.f32 %v6356, %v6362
  %v6427 = vmul.f32 %v6357, %v6362
  %v6429 = vlaneseq
  %v6430 = vshrl.u32 %v6429, 7
  %v6431 = vsub.s32 0, %v6430
  %v6432 = vrot.slane %v5894, %v6431
  %v6434 = vadd.f32 %v6364, %v6432
  %v6435 = vadd.f32 %v6365, %v6432
  %v6436 = vadd.f32 %v6366, %v6432
  %v6437 = vadd.f32 %v6367, %v6432
  %v6438 = vadd.f32 %v6368, %v6432
  %v6439 = vadd.f32 %v6369, %v6432
  %v6440 = vadd.f32 %v6370, %v6432
  %v6441 = vadd.f32 %v6371, %v6432
  %v6442 = vadd.f32 %v6372, %v6432
  %v6443 = vadd.f32 %v6373, %v6432
  %v6444 = vadd.f32 %v6374, %v6432
  %v6445 = vadd.f32 %v6375, %v6432
  %v6446 = vadd.f32 %v6376, %v6432
  %v6447 = vadd.f32 %v6377, %v6432
  %v6448 = vadd.f32 %v6378, %v6432
  %v6449 = vadd.f32 %v6379, %v6432
  %v6450 = vadd.f32 %v6380, %v6432
  %v6451 = vadd.f32 %v6381, %v6432
  %v6452 = vadd.f32 %v6382, %v6432
  %v6453 = vadd.f32 %v6383, %v6432
  %v6454 = vadd.f32 %v6384, %v6432
  %v6455 = vadd.f32 %v6385, %v6432
  %v6456 = vadd.f32 %v6386, %v6432
  %v6457 = vadd.f32 %v6387, %v6432
  %v6458 = vadd.f32 %v6388, %v6432
  %v6459 = vadd.f32 %v6389, %v6432
  %v6460 = vadd.f32 %v6390, %v6432
  %v6461 = vadd.f32 %v6391, %v6432
  %v6462 = vadd.f32 %v6392, %v6432
  %v6463 = vadd.f32 %v6393, %v6432
  %v6464 = vadd.f32 %v6394, %v6432
  %v6465 = vadd.f32 %v6395, %v6432
  %v6466 = vadd.f32 %v6396, %v6432
  %v6467 = vadd.f32 %v6397, %v6432
  %v6468 = vadd.f32 %v6398, %v6432
  %v6469 = vadd.f32 %v6399, %v6432
  %v6470 = vadd.f32 %v6400, %v6432
  %v6471 = vadd.f32 %v6401, %v6432
  %v6472 = vadd.f32 %v6402, %v6432
  %v6473 = vadd.f32 %v6403, %v6432
  %v6474 = vadd.f32 %v6404, %v6432
  %v6475 = vadd.f32 %v6405, %v6432
  %v6476 = vadd.f32 %v6406, %v6432
  %v6477 = vadd.f32 %v6407, %v6432
  %v6478 = vadd.f32 %v6408, %v6432
  %v6479 = vadd.f32 %v6409, %v6432
  %v6480 = vadd.f32 %v6410, %v6432
  %v6481 = vadd.f32 %v6411, %v6432
  %v6482 = vadd.f32 %v6412, %v6432
  %v6483 = vadd.f32 %v6413, %v6432
  %v6484 = vadd.f32 %v6414, %v6432
  %v6485 = vadd.f32 %v6415, %v6432
  %v6486 = vadd.f32 %v6416, %v6432
  %v6487 = vadd.f32 %v6417, %v6432
  %v6488 = vadd.f32 %v6418, %v6432
  %v6489 = vadd.f32 %v6419, %v6432
  %v6490 = vadd.f32 %v6420, %v6432
  %v6491 = vadd.f32 %v6421, %v6432
  %v6492 = vadd.f32 %v6422, %v6432
  %v6493 = vadd.f32 %v6423, %v6432
  %v6494 = vadd.f32 %v6424, %v6432
  %v6495 = vadd.f32 %v6425, %v6432
  %v6496 = vadd.f32 %v6426, %v6432
  %v6497 = vadd.f32 %v6427, %v6432
  %vm6498 = vcmp.ge.f32.partialorder %v6434, 0.0
  %vm6499 = vcmp.ge.f32.partialorder %v6435, 0.0
  %vm6500 = vcmp.ge.f32.partialorder %v6436, 0.0
  %vm6501 = vcmp.ge.f32.partialorder %v6437, 0.0
  %vm6502 = vcmp.ge.f32.partialorder %v6438, 0.0
  %vm6503 = vcmp.ge.f32.partialorder %v6439, 0.0
  %vm6504 = vcmp.ge.f32.partialorder %v6440, 0.0
  %vm6505 = vcmp.ge.f32.partialorder %v6441, 0.0
  %vm6506 = vcmp.ge.f32.partialorder %v6442, 0.0
  %vm6507 = vcmp.ge.f32.partialorder %v6443, 0.0
  %vm6508 = vcmp.ge.f32.partialorder %v6444, 0.0
  %vm6509 = vcmp.ge.f32.partialorder %v6445, 0.0
  %vm6510 = vcmp.ge.f32.partialorder %v6446, 0.0
  %vm6511 = vcmp.ge.f32.partialorder %v6447, 0.0
  %vm6512 = vcmp.ge.f32.partialorder %v6448, 0.0
  %vm6513 = vcmp.ge.f32.partialorder %v6449, 0.0
  %vm6514 = vcmp.ge.f32.partialorder %v6450, 0.0
  %vm6515 = vcmp.ge.f32.partialorder %v6451, 0.0
  %vm6516 = vcmp.ge.f32.partialorder %v6452, 0.0
  %vm6517 = vcmp.ge.f32.partialorder %v6453, 0.0
  %vm6518 = vcmp.ge.f32.partialorder %v6454, 0.0
  %vm6519 = vcmp.ge.f32.partialorder %v6455, 0.0
  %vm6520 = vcmp.ge.f32.partialorder %v6456, 0.0
  %vm6521 = vcmp.ge.f32.partialorder %v6457, 0.0
  %vm6522 = vcmp.ge.f32.partialorder %v6458, 0.0
  %vm6523 = vcmp.ge.f32.partialorder %v6459, 0.0
  %vm6524 = vcmp.ge.f32.partialorder %v6460, 0.0
  %vm6525 = vcmp.ge.f32.partialorder %v6461, 0.0
  %vm6526 = vcmp.ge.f32.partialorder %v6462, 0.0
  %vm6527 = vcmp.ge.f32.partialorder %v6463, 0.0
  %vm6528 = vcmp.ge.f32.partialorder %v6464, 0.0
  %vm6529 = vcmp.ge.f32.partialorder %v6465, 0.0
  %vm6530 = vcmp.ge.f32.partialorder %v6466, 0.0
  %vm6531 = vcmp.ge.f32.partialorder %v6467, 0.0
  %vm6532 = vcmp.ge.f32.partialorder %v6468, 0.0
  %vm6533 = vcmp.ge.f32.partialorder %v6469, 0.0
  %vm6534 = vcmp.ge.f32.partialorder %v6470, 0.0
  %vm6535 = vcmp.ge.f32.partialorder %v6471, 0.0
  %vm6536 = vcmp.ge.f32.partialorder %v6472, 0.0
  %vm6537 = vcmp.ge.f32.partialorder %v6473, 0.0
  %vm6538 = vcmp.ge.f32.partialorder %v6474, 0.0
  %vm6539 = vcmp.ge.f32.partialorder %v6475, 0.0
  %vm6540 = vcmp.ge.f32.partialorder %v6476, 0.0
  %vm6541 = vcmp.ge.f32.partialorder %v6477, 0.0
  %vm6542 = vcmp.ge.f32.partialorder %v6478, 0.0
  %vm6543 = vcmp.ge.f32.partialorder %v6479, 0.0
  %vm6544 = vcmp.ge.f32.partialorder %v6480, 0.0
  %vm6545 = vcmp.ge.f32.partialorder %v6481, 0.0
  %vm6546 = vcmp.ge.f32.partialorder %v6482, 0.0
  %vm6547 = vcmp.ge.f32.partialorder %v6483, 0.0
  %vm6548 = vcmp.ge.f32.partialorder %v6484, 0.0
  %vm6549 = vcmp.ge.f32.partialorder %v6485, 0.0
  %vm6550 = vcmp.ge.f32.partialorder %v6486, 0.0
  %vm6551 = vcmp.ge.f32.partialorder %v6487, 0.0
  %vm6552 = vcmp.ge.f32.partialorder %v6488, 0.0
  %vm6553 = vcmp.ge.f32.partialorder %v6489, 0.0
  %vm6554 = vcmp.ge.f32.partialorder %v6490, 0.0
  %vm6555 = vcmp.ge.f32.partialorder %v6491, 0.0
  %vm6556 = vcmp.ge.f32.partialorder %v6492, 0.0
  %vm6557 = vcmp.ge.f32.partialorder %v6493, 0.0
  %vm6558 = vcmp.ge.f32.partialorder %v6494, 0.0
  %vm6559 = vcmp.ge.f32.partialorder %v6495, 0.0
  %vm6560 = vcmp.ge.f32.partialorder %v6496, 0.0
  %vm6561 = vcmp.ge.f32.partialorder %v6497, 0.0
  %v6562 = vmul.f32 %v6434, 0.1
  %v6563 = vmul.f32 %v6435, 0.1
  %v6564 = vmul.f32 %v6436, 0.1
  %v6565 = vmul.f32 %v6437, 0.1
  %v6566 = vmul.f32 %v6438, 0.1
  %v6567 = vmul.f32 %v6439, 0.1
  %v6568 = vmul.f32 %v6440, 0.1
  %v6569 = vmul.f32 %v6441, 0.1
  %v6570 = vmul.f32 %v6442, 0.1
  %v6571 = vmul.f32 %v6443, 0.1
  %v6572 = vmul.f32 %v6444, 0.1
  %v6573 = vmul.f32 %v6445, 0.1
  %v6574 = vmul.f32 %v6446, 0.1
  %v6575 = vmul.f32 %v6447, 0.1
  %v6576 = vmul.f32 %v6448, 0.1
  %v6577 = vmul.f32 %v6449, 0.1
  %v6578 = vmul.f32 %v6450, 0.1
  %v6579 = vmul.f32 %v6451, 0.1
  %v6580 = vmul.f32 %v6452, 0.1
  %v6581 = vmul.f32 %v6453, 0.1
  %v6582 = vmul.f32 %v6454, 0.1
  %v6583 = vmul.f32 %v6455, 0.1
  %v6584 = vmul.f32 %v6456, 0.1
  %v6585 = vmul.f32 %v6457, 0.1
  %v6586 = vmul.f32 %v6458, 0.1
  %v6587 = vmul.f32 %v6459, 0.1
  %v6588 = vmul.f32 %v6460, 0.1
  %v6589 = vmul.f32 %v6461, 0.1
  %v6590 = vmul.f32 %v6462, 0.1
  %v6591 = vmul.f32 %v6463, 0.1
  %v6592 = vmul.f32 %v6464, 0.1
  %v6593 = vmul.f32 %v6465, 0.1
  %v6594 = vmul.f32 %v6466, 0.1
  %v6595 = vmul.f32 %v6467, 0.1
  %v6596 = vmul.f32 %v6468, 0.1
  %v6597 = vmul.f32 %v6469, 0.1
  %v6598 = vmul.f32 %v6470, 0.1
  %v6599 = vmul.f32 %v6471, 0.1
  %v6600 = vmul.f32 %v6472, 0.1
  %v6601 = vmul.f32 %v6473, 0.1
  %v6602 = vmul.f32 %v6474, 0.1
  %v6603 = vmul.f32 %v6475, 0.1
  %v6604 = vmul.f32 %v6476, 0.1
  %v6605 = vmul.f32 %v6477, 0.1
  %v6606 = vmul.f32 %v6478, 0.1
  %v6607 = vmul.f32 %v6479, 0.1
  %v6608 = vmul.f32 %v6480, 0.1
  %v6609 = vmul.f32 %v6481, 0.1
  %v6610 = vmul.f32 %v6482, 0.1
  %v6611 = vmul.f32 %v6483, 0.1
  %v6612 = vmul.f32 %v6484, 0.1
  %v6613 = vmul.f32 %v6485, 0.1
  %v6614 = vmul.f32 %v6486, 0.1
  %v6615 = vmul.f32 %v6487, 0.1
  %v6616 = vmul.f32 %v6488, 0.1
  %v6617 = vmul.f32 %v6489, 0.1
  %v6618 = vmul.f32 %v6490, 0.1
  %v6619 = vmul.f32 %v6491, 0.1
  %v6620 = vmul.f32 %v6492, 0.1
  %v6621 = vmul.f32 %v6493, 0.1
  %v6622 = vmul.f32 %v6494, 0.1
  %v6623 = vmul.f32 %v6495, 0.1
  %v6624 = vmul.f32 %v6496, 0.1
  %v6625 = vmul.f32 %v6497, 0.1
  %v6626 = vsel %vm6498, %v6434, %v6562
  %v6627 = vsel %vm6499, %v6435, %v6563
  %v6628 = vsel %vm6500, %v6436, %v6564
  %v6629 = vsel %vm6501, %v6437, %v6565
  %v6630 = vsel %vm6502, %v6438, %v6566
  %v6631 = vsel %vm6503, %v6439, %v6567
  %v6632 = vsel %vm6504, %v6440, %v6568
  %v6633 = vsel %vm6505, %v6441, %v6569
  %v6634 = vsel %vm6506, %v6442, %v6570
  %v6635 = vsel %vm6507, %v6443, %v6571
  %v6636 = vsel %vm6508, %v6444, %v6572
  %v6637 = vsel %vm6509, %v6445, %v6573
  %v6638 = vsel %vm6510, %v6446, %v6574
  %v6639 = vsel %vm6511, %v6447, %v6575
  %v6640 = vsel %vm6512, %v6448, %v6576
  %v6641 = vsel %vm6513, %v6449, %v6577
  %v6642 = vsel %vm6514, %v6450, %v6578
  %v6643 = vsel %vm6515, %v6451, %v6579
  %v6644 = vsel %vm6516, %v6452, %v6580
  %v6645 = vsel %vm6517, %v6453, %v6581
  %v6646 = vsel %vm6518, %v6454, %v6582
  %v6647 = vsel %vm6519, %v6455, %v6583
  %v6648 = vsel %vm6520, %v6456, %v6584
  %v6649 = vsel %vm6521, %v6457, %v6585
  %v6650 = vsel %vm6522, %v6458, %v6586
  %v6651 = vsel %vm6523, %v6459, %v6587
  %v6652 = vsel %vm6524, %v6460, %v6588
  %v6653 = vsel %vm6525, %v6461, %v6589
  %v6654 = vsel %vm6526, %v6462, %v6590
  %v6655 = vsel %vm6527, %v6463, %v6591
  %v6656 = vsel %vm6528, %v6464, %v6592
  %v6657 = vsel %vm6529, %v6465, %v6593
  %v6658 = vsel %vm6530, %v6466, %v6594
  %v6659 = vsel %vm6531, %v6467, %v6595
  %v6660 = vsel %vm6532, %v6468, %v6596
  %v6661 = vsel %vm6533, %v6469, %v6597
  %v6662 = vsel %vm6534, %v6470, %v6598
  %v6663 = vsel %vm6535, %v6471, %v6599
  %v6664 = vsel %vm6536, %v6472, %v6600
  %v6665 = vsel %vm6537, %v6473, %v6601
  %v6666 = vsel %vm6538, %v6474, %v6602
  %v6667 = vsel %vm6539, %v6475, %v6603
  %v6668 = vsel %vm6540, %v6476, %v6604
  %v6669 = vsel %vm6541, %v6477, %v6605
  %v6670 = vsel %vm6542, %v6478, %v6606
  %v6671 = vsel %vm6543, %v6479, %v6607
  %v6672 = vsel %vm6544, %v6480, %v6608
  %v6673 = vsel %vm6545, %v6481, %v6609
  %v6674 = vsel %vm6546, %v6482, %v6610
  %v6675 = vsel %vm6547, %v6483, %v6611
  %v6676 = vsel %vm6548, %v6484, %v6612
  %v6677 = vsel %vm6549, %v6485, %v6613
  %v6678 = vsel %vm6550, %v6486, %v6614
  %v6679 = vsel %vm6551, %v6487, %v6615
  %v6680 = vsel %vm6552, %v6488, %v6616
  %v6681 = vsel %vm6553, %v6489, %v6617
  %v6682 = vsel %vm6554, %v6490, %v6618
  %v6683 = vsel %vm6555, %v6491, %v6619
  %v6684 = vsel %vm6556, %v6492, %v6620
  %v6685 = vsel %vm6557, %v6493, %v6621
  %v6686 = vsel %vm6558, %v6494, %v6622
  %v6687 = vsel %vm6559, %v6495, %v6623
  %v6688 = vsel %vm6560, %v6496, %v6624
  %v6689 = vsel %vm6561, %v6497, %v6625
  %6690 = vst.msk [vmem:[#allocation3] sm:$0xff] %vm5895, 0.0
  %6691 = vst.msk [vmem:[#allocation3 + $0x8] sm:$0xff] %vm5895, 0.0
  %6692 = vst.msk [vmem:[#allocation3 + $0x10] sm:$0xff] %vm5895, 0.0
  %6693 = vst.msk [vmem:[#allocation3 + $0x18] sm:$0xff] %vm5895, 0.0
  %6694 = vst.msk [vmem:[#allocation3 + $0x240] sm:$0xff] %vm5895, 0.0
  %6695 = vst.msk [vmem:[#allocation3 + $0x248] sm:$0xff] %vm5895, 0.0
  %6696 = vst.msk [vmem:[#allocation3 + $0x250] sm:$0xff] %vm5895, 0.0
  %6697 = vst.msk [vmem:[#allocation3 + $0x258] sm:$0xff] %vm5895, 0.0
  %s6698 = scalar_lea.vmem [#allocation3], 544
  %6699 = vst.msk [vmem:[%s6698] sm:$0xff] %vm5895, 0.0
  %6700 = vst.msk [vmem:[%s6698 + $0x8] sm:$0xff] %vm5895, 0.0
  %6701 = vst.msk [vmem:[%s6698 + $0x10] sm:$0xff] %vm5895, 0.0
  %6702 = vst.msk [vmem:[%s6698 + $0x18] sm:$0xff] %vm5895, 0.0
  %6703 = vst.msk [vmem:[%s6698 + $0x240] sm:$0xff] %vm5895, 0.0
  %6704 = vst.msk [vmem:[%s6698 + $0x248] sm:$0xff] %vm5895, 0.0
  %6705 = vst.msk [vmem:[%s6698 + $0x250] sm:$0xff] %vm5895, 0.0
  %6706 = vst.msk [vmem:[%s6698 + $0x258] sm:$0xff] %vm5895, 0.0
  %s6707 = scalar_lea.vmem [#allocation3], 32
  %6708 = vst.msk [vmem:[%s6707] sm:$0xff] %vm5895, 0.0
  %6709 = vst.msk [vmem:[%s6707 + $0x20] sm:$0xff] %vm5895, 0.0
  %6710 = vst.msk [vmem:[%s6707 + $0x40] sm:$0xff] %vm5895, 0.0
  %6711 = vst.msk [vmem:[%s6707 + $0x60] sm:$0xff] %vm5895, 0.0
  %6712 = vst.msk [vmem:[%s6707 + $0x80] sm:$0xff] %vm5895, 0.0
  %6713 = vst.msk [vmem:[%s6707 + $0xa0] sm:$0xff] %vm5895, 0.0
  %6714 = vst.msk [vmem:[%s6707 + $0xc0] sm:$0xff] %vm5895, 0.0
  %6715 = vst.msk [vmem:[%s6707 + $0xe0] sm:$0xff] %vm5895, 0.0
  %6716 = vst.msk [vmem:[%s6707 + $0x100] sm:$0xff] %vm5895, 0.0
  %6717 = vst.msk [vmem:[%s6707 + $0x120] sm:$0xff] %vm5895, 0.0
  %6718 = vst.msk [vmem:[%s6707 + $0x140] sm:$0xff] %vm5895, 0.0
  %6719 = vst.msk [vmem:[%s6707 + $0x160] sm:$0xff] %vm5895, 0.0
  %6720 = vst.msk [vmem:[%s6707 + $0x180] sm:$0xff] %vm5895, 0.0
  %6721 = vst.msk [vmem:[%s6707 + $0x1a0] sm:$0xff] %vm5895, 0.0
  %6722 = vst.msk [vmem:[%s6707 + $0x1c0] sm:$0xff] %vm5895, 0.0
  %6723 = vst.msk [vmem:[%s6707 + $0x1e0] sm:$0xff] %vm5895, 0.0
  %6724 = vst.msk [vmem:[%s6707 + $0x240] sm:$0xff] %vm5895, 0.0
  %6725 = vst.msk [vmem:[%s6707 + $0x260] sm:$0xff] %vm5895, 0.0
  %6726 = vst.msk [vmem:[%s6707 + $0x280] sm:$0xff] %vm5895, 0.0
  %6727 = vst.msk [vmem:[%s6707 + $0x2a0] sm:$0xff] %vm5895, 0.0
  %6728 = vst.msk [vmem:[%s6707 + $0x2c0] sm:$0xff] %vm5895, 0.0
  %6729 = vst.msk [vmem:[%s6707 + $0x2e0] sm:$0xff] %vm5895, 0.0
  %6730 = vst.msk [vmem:[%s6707 + $0x300] sm:$0xff] %vm5895, 0.0
  %6731 = vst.msk [vmem:[%s6707 + $0x320] sm:$0xff] %vm5895, 0.0
  %6732 = vst.msk [vmem:[%s6707 + $0x340] sm:$0xff] %vm5895, 0.0
  %6733 = vst.msk [vmem:[%s6707 + $0x360] sm:$0xff] %vm5895, 0.0
  %6734 = vst.msk [vmem:[%s6707 + $0x380] sm:$0xff] %vm5895, 0.0
  %6735 = vst.msk [vmem:[%s6707 + $0x3a0] sm:$0xff] %vm5895, 0.0
  %6736 = vst.msk [vmem:[%s6707 + $0x3c0] sm:$0xff] %vm5895, 0.0
  %6737 = vst.msk [vmem:[%s6707 + $0x3e0] sm:$0xff] %vm5895, 0.0
  %6738 = vst.msk [vmem:[%s6707 + $0x400] sm:$0xff] %vm5895, 0.0
  %6739 = vst.msk [vmem:[%s6707 + $0x420] sm:$0xff] %vm5895, 0.0
  %6740 = vst.msk [vmem:[%s6707 + $0x18] sm:$0xff] %vm5895, 0.0
  %6741 = vst.msk [vmem:[%s6707 + $0x38] sm:$0xff] %vm5895, 0.0
  %6742 = vst.msk [vmem:[%s6707 + $0x58] sm:$0xff] %vm5895, 0.0
  %6743 = vst.msk [vmem:[%s6707 + $0x78] sm:$0xff] %vm5895, 0.0
  %6744 = vst.msk [vmem:[%s6707 + $0x98] sm:$0xff] %vm5895, 0.0
  %6745 = vst.msk [vmem:[%s6707 + $0xb8] sm:$0xff] %vm5895, 0.0
  %6746 = vst.msk [vmem:[%s6707 + $0xd8] sm:$0xff] %vm5895, 0.0
  %6747 = vst.msk [vmem:[%s6707 + $0xf8] sm:$0xff] %vm5895, 0.0
  %6748 = vst.msk [vmem:[%s6707 + $0x118] sm:$0xff] %vm5895, 0.0
  %6749 = vst.msk [vmem:[%s6707 + $0x138] sm:$0xff] %vm5895, 0.0
  %6750 = vst.msk [vmem:[%s6707 + $0x158] sm:$0xff] %vm5895, 0.0
  %6751 = vst.msk [vmem:[%s6707 + $0x178] sm:$0xff] %vm5895, 0.0
  %6752 = vst.msk [vmem:[%s6707 + $0x198] sm:$0xff] %vm5895, 0.0
  %6753 = vst.msk [vmem:[%s6707 + $0x1b8] sm:$0xff] %vm5895, 0.0
  %6754 = vst.msk [vmem:[%s6707 + $0x1d8] sm:$0xff] %vm5895, 0.0
  %6755 = vst.msk [vmem:[%s6707 + $0x1f8] sm:$0xff] %vm5895, 0.0
  %6756 = vst.msk [vmem:[%s6707 + $0x258] sm:$0xff] %vm5895, 0.0
  %6757 = vst.msk [vmem:[%s6707 + $0x278] sm:$0xff] %vm5895, 0.0
  %6758 = vst.msk [vmem:[%s6707 + $0x298] sm:$0xff] %vm5895, 0.0
  %6759 = vst.msk [vmem:[%s6707 + $0x2b8] sm:$0xff] %vm5895, 0.0
  %6760 = vst.msk [vmem:[%s6707 + $0x2d8] sm:$0xff] %vm5895, 0.0
  %6761 = vst.msk [vmem:[%s6707 + $0x2f8] sm:$0xff] %vm5895, 0.0
  %6762 = vst.msk [vmem:[%s6707 + $0x318] sm:$0xff] %vm5895, 0.0
  %6763 = vst.msk [vmem:[%s6707 + $0x338] sm:$0xff] %vm5895, 0.0
  %6764 = vst.msk [vmem:[%s6707 + $0x358] sm:$0xff] %vm5895, 0.0
  %6765 = vst.msk [vmem:[%s6707 + $0x378] sm:$0xff] %vm5895, 0.0
  %6766 = vst.msk [vmem:[%s6707 + $0x398] sm:$0xff] %vm5895, 0.0
  %6767 = vst.msk [vmem:[%s6707 + $0x3b8] sm:$0xff] %vm5895, 0.0
  %6768 = vst.msk [vmem:[%s6707 + $0x3d8] sm:$0xff] %vm5895, 0.0
  %6769 = vst.msk [vmem:[%s6707 + $0x3f8] sm:$0xff] %vm5895, 0.0
  %6770 = vst.msk [vmem:[%s6707 + $0x418] sm:$0xff] %vm5895, 0.0
  %6771 = vst.msk [vmem:[%s6707 + $0x438] sm:$0xff] %vm5895, 0.0
  %6772 = vst.msk [vmem:[%s6707 + $0x8] sm:$0xff] %vm5895, %v6626
  %6773 = vst.msk [vmem:[%s6707 + $0x10] sm:$0xff] %vm5895, %v6627
  %6774 = vst.msk [vmem:[%s6707 + $0x28] sm:$0xff] %vm5895, %v6628
  %6775 = vst.msk [vmem:[%s6707 + $0x30] sm:$0xff] %vm5895, %v6629
  %6776 = vst.msk [vmem:[%s6707 + $0x48] sm:$0xff] %vm5895, %v6630
  %6777 = vst.msk [vmem:[%s6707 + $0x50] sm:$0xff] %vm5895, %v6631
  %6778 = vst.msk [vmem:[%s6707 + $0x68] sm:$0xff] %vm5895, %v6632
  %6779 = vst.msk [vmem:[%s6707 + $0x70] sm:$0xff] %vm5895, %v6633
  %6780 = vst.msk [vmem:[%s6707 + $0x88] sm:$0xff] %vm5895, %v6634
  %6781 = vst.msk [vmem:[%s6707 + $0x90] sm:$0xff] %vm5895, %v6635
  %6782 = vst.msk [vmem:[%s6707 + $0xa8] sm:$0xff] %vm5895, %v6636
  %6783 = vst.msk [vmem:[%s6707 + $0xb0] sm:$0xff] %vm5895, %v6637
  %6784 = vst.msk [vmem:[%s6707 + $0xc8] sm:$0xff] %vm5895, %v6638
  %6785 = vst.msk [vmem:[%s6707 + $0xd0] sm:$0xff] %vm5895, %v6639
  %6786 = vst.msk [vmem:[%s6707 + $0xe8] sm:$0xff] %vm5895, %v6640
  %6787 = vst.msk [vmem:[%s6707 + $0xf0] sm:$0xff] %vm5895, %v6641
  %6788 = vst.msk [vmem:[%s6707 + $0x108] sm:$0xff] %vm5895, %v6642
  %6789 = vst.msk [vmem:[%s6707 + $0x110] sm:$0xff] %vm5895, %v6643
  %6790 = vst.msk [vmem:[%s6707 + $0x128] sm:$0xff] %vm5895, %v6644
  %6791 = vst.msk [vmem:[%s6707 + $0x130] sm:$0xff] %vm5895, %v6645
  %6792 = vst.msk [vmem:[%s6707 + $0x148] sm:$0xff] %vm5895, %v6646
  %6793 = vst.msk [vmem:[%s6707 + $0x150] sm:$0xff] %vm5895, %v6647
  %6794 = vst.msk [vmem:[%s6707 + $0x168] sm:$0xff] %vm5895, %v6648
  %6795 = vst.msk [vmem:[%s6707 + $0x170] sm:$0xff] %vm5895, %v6649
  %6796 = vst.msk [vmem:[%s6707 + $0x188] sm:$0xff] %vm5895, %v6650
  %6797 = vst.msk [vmem:[%s6707 + $0x190] sm:$0xff] %vm5895, %v6651
  %6798 = vst.msk [vmem:[%s6707 + $0x1a8] sm:$0xff] %vm5895, %v6652
  %6799 = vst.msk [vmem:[%s6707 + $0x1b0] sm:$0xff] %vm5895, %v6653
  %6800 = vst.msk [vmem:[%s6707 + $0x1c8] sm:$0xff] %vm5895, %v6654
  %6801 = vst.msk [vmem:[%s6707 + $0x1d0] sm:$0xff] %vm5895, %v6655
  %6802 = vst.msk [vmem:[%s6707 + $0x1e8] sm:$0xff] %vm5895, %v6656
  %6803 = vst.msk [vmem:[%s6707 + $0x1f0] sm:$0xff] %vm5895, %v6657
  %6804 = vst.msk [vmem:[%s6707 + $0x248] sm:$0xff] %vm5895, %v6658
  %6805 = vst.msk [vmem:[%s6707 + $0x250] sm:$0xff] %vm5895, %v6659
  %6806 = vst.msk [vmem:[%s6707 + $0x268] sm:$0xff] %vm5895, %v6660
  %6807 = vst.msk [vmem:[%s6707 + $0x270] sm:$0xff] %vm5895, %v6661
  %6808 = vst.msk [vmem:[%s6707 + $0x288] sm:$0xff] %vm5895, %v6662
  %6809 = vst.msk [vmem:[%s6707 + $0x290] sm:$0xff] %vm5895, %v6663
  %6810 = vst.msk [vmem:[%s6707 + $0x2a8] sm:$0xff] %vm5895, %v6664
  %6811 = vst.msk [vmem:[%s6707 + $0x2b0] sm:$0xff] %vm5895, %v6665
  %6812 = vst.msk [vmem:[%s6707 + $0x2c8] sm:$0xff] %vm5895, %v6666
  %6813 = vst.msk [vmem:[%s6707 + $0x2d0] sm:$0xff] %vm5895, %v6667
  %6814 = vst.msk [vmem:[%s6707 + $0x2e8] sm:$0xff] %vm5895, %v6668
  %6815 = vst.msk [vmem:[%s6707 + $0x2f0] sm:$0xff] %vm5895, %v6669
  %6816 = vst.msk [vmem:[%s6707 + $0x308] sm:$0xff] %vm5895, %v6670
  %6817 = vst.msk [vmem:[%s6707 + $0x310] sm:$0xff] %vm5895, %v6671
  %6818 = vst.msk [vmem:[%s6707 + $0x328] sm:$0xff] %vm5895, %v6672
  %6819 = vst.msk [vmem:[%s6707 + $0x330] sm:$0xff] %vm5895, %v6673
  %6820 = vst.msk [vmem:[%s6707 + $0x348] sm:$0xff] %vm5895, %v6674
  %6821 = vst.msk [vmem:[%s6707 + $0x350] sm:$0xff] %vm5895, %v6675
  %6822 = vst.msk [vmem:[%s6707 + $0x368] sm:$0xff] %vm5895, %v6676
  %6823 = vst.msk [vmem:[%s6707 + $0x370] sm:$0xff] %vm5895, %v6677
  %6824 = vst.msk [vmem:[%s6707 + $0x388] sm:$0xff] %vm5895, %v6678
  %6825 = vst.msk [vmem:[%s6707 + $0x390] sm:$0xff] %vm5895, %v6679
  %6826 = vst.msk [vmem:[%s6707 + $0x3a8] sm:$0xff] %vm5895, %v6680
  %6827 = vst.msk [vmem:[%s6707 + $0x3b0] sm:$0xff] %vm5895, %v6681
  %6828 = vst.msk [vmem:[%s6707 + $0x3c8] sm:$0xff] %vm5895, %v6682
  %6829 = vst.msk [vmem:[%s6707 + $0x3d0] sm:$0xff] %vm5895, %v6683
  %6830 = vst.msk [vmem:[%s6707 + $0x3e8] sm:$0xff] %vm5895, %v6684
  %6831 = vst.msk [vmem:[%s6707 + $0x3f0] sm:$0xff] %vm5895, %v6685
  %6832 = vst.msk [vmem:[%s6707 + $0x408] sm:$0xff] %vm5895, %v6686
  %6833 = vst.msk [vmem:[%s6707 + $0x410] sm:$0xff] %vm5895, %v6687
  %6834 = vst.msk [vmem:[%s6707 + $0x428] sm:$0xff] %vm5895, %v6688
  %6835 = vst.msk [vmem:[%s6707 + $0x430] sm:$0xff] %vm5895, %v6689
  %v6836 = vld [vmem:[#allocation3 + $0x7] sm:$0xff]
  %v6837 = vld [vmem:[#allocation3 + $0xf] sm:$0xff]
  %v6838 = vld [vmem:[#allocation3 + $0x27] sm:$0xff]
  %v6839 = vld [vmem:[#allocation3 + $0x2f] sm:$0xff]
  %v6840 = vld [vmem:[#allocation3 + $0x47] sm:$0xff]
  %v6841 = vld [vmem:[#allocation3 + $0x4f] sm:$0xff]
  %v6842 = vld [vmem:[#allocation3 + $0x67] sm:$0xff]
  %v6843 = vld [vmem:[#allocation3 + $0x6f] sm:$0xff]
  %v6844 = vld [vmem:[#allocation3 + $0x87] sm:$0xff]
  %v6845 = vld [vmem:[#allocation3 + $0x8f] sm:$0xff]
  %v6846 = vld [vmem:[#allocation3 + $0xa7] sm:$0xff]
  %v6847 = vld [vmem:[#allocation3 + $0xaf] sm:$0xff]
  %v6848 = vld [vmem:[#allocation3 + $0xc7] sm:$0xff]
  %v6849 = vld [vmem:[#allocation3 + $0xcf] sm:$0xff]
  %v6850 = vld [vmem:[#allocation3 + $0xe7] sm:$0xff]
  %v6851 = vld [vmem:[#allocation3 + $0xef] sm:$0xff]
  %v6852 = vld [vmem:[#allocation3 + $0x107] sm:$0xff]
  %v6853 = vld [vmem:[#allocation3 + $0x10f] sm:$0xff]
  %v6854 = vld [vmem:[#allocation3 + $0x127] sm:$0xff]
  %v6855 = vld [vmem:[#allocation3 + $0x12f] sm:$0xff]
  %v6856 = vld [vmem:[#allocation3 + $0x147] sm:$0xff]
  %v6857 = vld [vmem:[#allocation3 + $0x14f] sm:$0xff]
  %v6858 = vld [vmem:[#allocation3 + $0x167] sm:$0xff]
  %v6859 = vld [vmem:[#allocation3 + $0x16f] sm:$0xff]
  %v6860 = vld [vmem:[#allocation3 + $0x187] sm:$0xff]
  %v6861 = vld [vmem:[#allocation3 + $0x18f] sm:$0xff]
  %v6862 = vld [vmem:[#allocation3 + $0x1a7] sm:$0xff]
  %v6863 = vld [vmem:[#allocation3 + $0x1af] sm:$0xff]
  %v6864 = vld [vmem:[#allocation3 + $0x1c7] sm:$0xff]
  %v6865 = vld [vmem:[#allocation3 + $0x1cf] sm:$0xff]
  %v6866 = vld [vmem:[#allocation3 + $0x1e7] sm:$0xff]
  %v6867 = vld [vmem:[#allocation3 + $0x1ef] sm:$0xff]
  %v6868 = vld [vmem:[#allocation3 + $0x247] sm:$0xff]
  %v6869 = vld [vmem:[#allocation3 + $0x24f] sm:$0xff]
  %v6870 = vld [vmem:[#allocation3 + $0x267] sm:$0xff]
  %v6871 = vld [vmem:[#allocation3 + $0x26f] sm:$0xff]
  %v6872 = vld [vmem:[#allocation3 + $0x287] sm:$0xff]
  %v6873 = vld [vmem:[#allocation3 + $0x28f] sm:$0xff]
  %v6874 = vld [vmem:[#allocation3 + $0x2a7] sm:$0xff]
  %v6875 = vld [vmem:[#allocation3 + $0x2af] sm:$0xff]
  %v6876 = vld [vmem:[#allocation3 + $0x2c7] sm:$0xff]
  %v6877 = vld [vmem:[#allocation3 + $0x2cf] sm:$0xff]
  %v6878 = vld [vmem:[#allocation3 + $0x2e7] sm:$0xff]
  %v6879 = vld [vmem:[#allocation3 + $0x2ef] sm:$0xff]
  %v6880 = vld [vmem:[#allocation3 + $0x307] sm:$0xff]
  %v6881 = vld [vmem:[#allocation3 + $0x30f] sm:$0xff]
  %v6882 = vld [vmem:[#allocation3 + $0x327] sm:$0xff]
  %v6883 = vld [vmem:[#allocation3 + $0x32f] sm:$0xff]
  %v6884 = vld [vmem:[#allocation3 + $0x347] sm:$0xff]
  %v6885 = vld [vmem:[#allocation3 + $0x34f] sm:$0xff]
  %v6886 = vld [vmem:[#allocation3 + $0x367] sm:$0xff]
  %v6887 = vld [vmem:[#allocation3 + $0x36f] sm:$0xff]
  %v6888 = vld [vmem:[#allocation3 + $0x387] sm:$0xff]
  %v6889 = vld [vmem:[#allocation3 + $0x38f] sm:$0xff]
  %v6890 = vld [vmem:[#allocation3 + $0x3a7] sm:$0xff]
  %v6891 = vld [vmem:[#allocation3 + $0x3af] sm:$0xff]
  %v6892 = vld [vmem:[#allocation3 + $0x3c7] sm:$0xff]
  %v6893 = vld [vmem:[#allocation3 + $0x3cf] sm:$0xff]
  %v6894 = vld [vmem:[#allocation3 + $0x3e7] sm:$0xff]
  %v6895 = vld [vmem:[#allocation3 + $0x3ef] sm:$0xff]
  %v6896 = vld [vmem:[#allocation3 + $0x407] sm:$0xff]
  %v6897 = vld [vmem:[#allocation3 + $0x40f] sm:$0xff]
  %v6898 = vld [vmem:[#allocation3 + $0x427] sm:$0xff]
  %v6899 = vld [vmem:[#allocation3 + $0x42f] sm:$0xff]
  %v6900 = vpack.c.bf16 %v6837, %v6836
  %v6901 = vpack.c.bf16 %v6839, %v6838
  %v6902 = vpack.c.bf16 %v6841, %v6840
  %v6903 = vpack.c.bf16 %v6843, %v6842
  %v6904 = vpack.c.bf16 %v6845, %v6844
  %v6905 = vpack.c.bf16 %v6847, %v6846
  %v6906 = vpack.c.bf16 %v6849, %v6848
  %v6907 = vpack.c.bf16 %v6851, %v6850
  %v6908 = vpack.c.bf16 %v6853, %v6852
  %v6909 = vpack.c.bf16 %v6855, %v6854
  %v6910 = vpack.c.bf16 %v6857, %v6856
  %v6911 = vpack.c.bf16 %v6859, %v6858
  %v6912 = vpack.c.bf16 %v6861, %v6860
  %v6913 = vpack.c.bf16 %v6863, %v6862
  %v6914 = vpack.c.bf16 %v6865, %v6864
  %v6915 = vpack.c.bf16 %v6867, %v6866
  %v6916 = vpack.c.bf16 %v6869, %v6868
  %v6917 = vpack.c.bf16 %v6871, %v6870
  %v6918 = vpack.c.bf16 %v6873, %v6872
  %v6919 = vpack.c.bf16 %v6875, %v6874
  %v6920 = vpack.c.bf16 %v6877, %v6876
  %v6921 = vpack.c.bf16 %v6879, %v6878
  %v6922 = vpack.c.bf16 %v6881, %v6880
  %v6923 = vpack.c.bf16 %v6883, %v6882
  %v6924 = vpack.c.bf16 %v6885, %v6884
  %v6925 = vpack.c.bf16 %v6887, %v6886
  %v6926 = vpack.c.bf16 %v6889, %v6888
  %v6927 = vpack.c.bf16 %v6891, %v6890
  %v6928 = vpack.c.bf16 %v6893, %v6892
  %v6929 = vpack.c.bf16 %v6895, %v6894
  %v6930 = vpack.c.bf16 %v6897, %v6896
  %v6931 = vpack.c.bf16 %v6899, %v6898
  %v6932 = vld [vmem:[%s2] sm:$0xf]
  %v6934 = vsel %vm5895, %v6900, 0
  %v6937 = vsel %vm5895, %v6901, 0
  %v6940 = vsel %vm5895, %v6902, 0
  %v6943 = vsel %vm5895, %v6903, 0
  %v6946 = vsel %vm5895, %v6904, 0
  %v6949 = vsel %vm5895, %v6905, 0
  %v6952 = vsel %vm5895, %v6906, 0
  %v6955 = vsel %vm5895, %v6907, 0
  %v6958 = vsel %vm5895, %v6908, 0
  %v6961 = vsel %vm5895, %v6909, 0
  %v6964 = vsel %vm5895, %v6910, 0
  %v6967 = vsel %vm5895, %v6911, 0
  %v6970 = vsel %vm5895, %v6912, 0
  %v6973 = vsel %vm5895, %v6913, 0
  %v6976 = vsel %vm5895, %v6914, 0
  %v6979 = vsel %vm5895, %v6915, 0
  %v6982 = vsel %vm5895, %v6916, 0
  %v6985 = vsel %vm5895, %v6917, 0
  %v6988 = vsel %vm5895, %v6918, 0
  %v6991 = vsel %vm5895, %v6919, 0
  %v6994 = vsel %vm5895, %v6920, 0
  %v6997 = vsel %vm5895, %v6921, 0
  %v7000 = vsel %vm5895, %v6922, 0
  %v7003 = vsel %vm5895, %v6923, 0
  %v7006 = vsel %vm5895, %v6924, 0
  %v7009 = vsel %vm5895, %v6925, 0
  %v7012 = vsel %vm5895, %v6926, 0
  %v7015 = vsel %vm5895, %v6927, 0
  %v7018 = vsel %vm5895, %v6928, 0
  %v7021 = vsel %vm5895, %v6929, 0
  %v7024 = vsel %vm5895, %v6930, 0
  %v7027 = vsel %vm5895, %v6931, 0
  %vm7029 = vcmask 1043456
  %v7031 = vsel %vm7029, %v6932, 0
  %7033 = vmatprep.subr.bf16.mxu0 0
  %7034 = vmatpush1.bf16.msra.mxu0 %v7031
  %7035 = vmatprep.subr.bf16.mxu0 0
  %7036 = vmatpush1.bf16.msra.mxu0 0
  %7037 = vmatprep.subr.bf16.mxu0 0
  %7038 = vmatpush1.bf16.msra.mxu0 0
  %7039 = vmatprep.subr.bf16.mxu0 0
  %7040 = vmatpush1.bf16.msra.mxu0 0
  %7041 = vmatprep.subr.bf16.mxu0 0
  %7042 = vmatpush1.bf16.msra.mxu0 0
  %7043 = vmatprep.subr.bf16.mxu0 0
  %7044 = vmatpush1.bf16.msra.mxu0 0
  %7045 = vmatprep.subr.bf16.mxu0 0
  %7046 = vmatpush1.bf16.msra.mxu0 0
  %7047 = vmatprep.subr.bf16.mxu0 0
  %7048 = vmatpush1.bf16.msra.mxu0 0
  %7049 = vmatprep.subr.bf16.mxu0 0
  %7050 = vmatpush1.bf16.msra.mxu0 0
  %7051 = vmatprep.subr.bf16.mxu0 0
  %7052 = vmatpush1.bf16.msra.mxu0 0
  %7053 = vmatprep.subr.bf16.mxu0 0
  %7054 = vmatpush1.bf16.msra.mxu0 0
  %7055 = vmatprep.subr.bf16.mxu0 0
  %7056 = vmatpush1.bf16.msra.mxu0 0
  %7057 = vmatprep.subr.bf16.mxu0 0
  %7058 = vmatpush1.bf16.msra.mxu0 0
  %7059 = vmatprep.subr.bf16.mxu0 0
  %7060 = vmatpush1.bf16.msra.mxu0 0
  %7061 = vmatprep.subr.bf16.mxu0 0
  %7062 = vmatpush1.bf16.msra.mxu0 0
  %7063 = vmatprep.subr.bf16.mxu0 0
  %7064 = vmatpush1.bf16.msra.mxu0 0
  %7065 = vmatprep.mubr.bf16.mxu0 0
  %7066 = vmatmul.mubr.bf16.gmra.mrb[0].mxu0 %v6934
  %v7067 = vpop.f32.mrb[0].mxu0
  %v7068 = vadd.f32 0.0, %v7067
  %v7069 = vpop.f32.mrb[0].mxu0
  %v7070 = vpop.f32.mrb[0].mxu0
  %v7071 = vadd.f32 0.0, %v7070
  %v7072 = vpop.f32.mrb[0].mxu0
  %7073 = vmatprep.mubr.bf16.mxu0 0
  %7074 = vmatmul.mubr.bf16.gmra.mrb[0].mxu0 %v6937
  %v7075 = vpop.f32.mrb[0].mxu0
  %v7076 = vadd.f32 0.0, %v7075
  %v7077 = vpop.f32.mrb[0].mxu0
  %v7078 = vpop.f32.mrb[0].mxu0
  %v7079 = vadd.f32 0.0, %v7078
  %v7080 = vpop.f32.mrb[0].mxu0
  %7081 = vmatprep.mubr.bf16.mxu0 0
  %7082 = vmatmul.mubr.bf16.gmra.mrb[0].mxu0 %v6940
  %v7083 = vpop.f32.mrb[0].mxu0
  %v7084 = vadd.f32 0.0, %v7083
  %v7085 = vpop.f32.mrb[0].mxu0
  %v7086 = vpop.f32.mrb[0].mxu0
  %v7087 = vadd.f32 0.0, %v7086
  %v7088 = vpop.f32.mrb[0].mxu0
  %7089 = vmatprep.mubr.bf16.mxu0 0
  %7090 = vmatmul.mubr.bf16.gmra.mrb[0].mxu0 %v6943
  %v7091 = vpop.f32.mrb[0].mxu0
  %v7092 = vadd.f32 0.0, %v7091
  %v7093 = vpop.f32.mrb[0].mxu0
  %v7094 = vpop.f32.mrb[0].mxu0
  %v7095 = vadd.f32 0.0, %v7094
  %v7096 = vpop.f32.mrb[0].mxu0
  %7097 = vmatprep.mubr.bf16.mxu0 0
  %7098 = vmatmul.mubr.bf16.gmra.mrb[0].mxu0 %v6946
  %v7099 = vpop.f32.mrb[0].mxu0
  %v7100 = vadd.f32 0.0, %v7099
  %v7101 = vpop.f32.mrb[0].mxu0
  %v7102 = vpop.f32.mrb[0].mxu0
  %v7103 = vadd.f32 0.0, %v7102
  %v7104 = vpop.f32.mrb[0].mxu0
  %7105 = vmatprep.mubr.bf16.mxu0 0
  %7106 = vmatmul.mubr.bf16.gmra.mrb[0].mxu0 %v6949
  %v7107 = vpop.f32.mrb[0].mxu0
  %v7108 = vadd.f32 0.0, %v7107
  %v7109 = vpop.f32.mrb[0].mxu0
  %v7110 = vpop.f32.mrb[0].mxu0
  %v7111 = vadd.f32 0.0, %v7110
  %v7112 = vpop.f32.mrb[0].mxu0
  %7113 = vmatprep.mubr.bf16.mxu0 0
  %7114 = vmatmul.mubr.bf16.gmra.mrb[0].mxu0 %v6952
  %v7115 = vpop.f32.mrb[0].mxu0
  %v7116 = vadd.f32 0.0, %v7115
  %v7117 = vpop.f32.mrb[0].mxu0
  %v7118 = vpop.f32.mrb[0].mxu0
  %v7119 = vadd.f32 0.0, %v7118
  %v7120 = vpop.f32.mrb[0].mxu0
  %7121 = vmatprep.mubr.bf16.mxu0 0
  %7122 = vmatmul.mubr.bf16.gmra.mrb[0].mxu0 %v6955
  %v7123 = vpop.f32.mrb[0].mxu0
  %v7124 = vadd.f32 0.0, %v7123
  %v7125 = vpop.f32.mrb[0].mxu0
  %v7126 = vpop.f32.mrb[0].mxu0
  %v7127 = vadd.f32 0.0, %v7126
  %v7128 = vpop.f32.mrb[0].mxu0
  %7129 = vmatprep.mubr.bf16.mxu0 0
  %7130 = vmatmul.mubr.bf16.gmra.mrb[0].mxu0 %v6958
  %v7131 = vpop.f32.mrb[0].mxu0
  %v7132 = vadd.f32 0.0, %v7131
  %v7133 = vpop.f32.mrb[0].mxu0
  %v7134 = vpop.f32.mrb[0].mxu0
  %v7135 = vadd.f32 0.0, %v7134
  %v7136 = vpop.f32.mrb[0].mxu0
  %7137 = vmatprep.mubr.bf16.mxu0 0
  %7138 = vmatmul.mubr.bf16.gmra.mrb[0].mxu0 %v6961
  %v7139 = vpop.f32.mrb[0].mxu0
  %v7140 = vadd.f32 0.0, %v7139
  %v7141 = vpop.f32.mrb[0].mxu0
  %v7142 = vpop.f32.mrb[0].mxu0
  %v7143 = vadd.f32 0.0, %v7142
  %v7144 = vpop.f32.mrb[0].mxu0
  %7145 = vmatprep.mubr.bf16.mxu0 0
  %7146 = vmatmul.mubr.bf16.gmra.mrb[0].mxu0 %v6964
  %v7147 = vpop.f32.mrb[0].mxu0
  %v7148 = vadd.f32 0.0, %v7147
  %v7149 = vpop.f32.mrb[0].mxu0
  %v7150 = vpop.f32.mrb[0].mxu0
  %v7151 = vadd.f32 0.0, %v7150
  %v7152 = vpop.f32.mrb[0].mxu0
  %7153 = vmatprep.mubr.bf16.mxu0 0
  %7154 = vmatmul.mubr.bf16.gmra.mrb[0].mxu0 %v6967
  %v7155 = vpop.f32.mrb[0].mxu0
  %v7156 = vadd.f32 0.0, %v7155
  %v7157 = vpop.f32.mrb[0].mxu0
  %v7158 = vpop.f32.mrb[0].mxu0
  %v7159 = vadd.f32 0.0, %v7158
  %v7160 = vpop.f32.mrb[0].mxu0
  %7161 = vmatprep.mubr.bf16.mxu0 0
  %7162 = vmatmul.mubr.bf16.gmra.mrb[0].mxu0 %v6970
  %v7163 = vpop.f32.mrb[0].mxu0
  %v7164 = vadd.f32 0.0, %v7163
  %v7165 = vpop.f32.mrb[0].mxu0
  %v7166 = vpop.f32.mrb[0].mxu0
  %v7167 = vadd.f32 0.0, %v7166
  %v7168 = vpop.f32.mrb[0].mxu0
  %7169 = vmatprep.mubr.bf16.mxu0 0
  %7170 = vmatmul.mubr.bf16.gmra.mrb[0].mxu0 %v6973
  %v7171 = vpop.f32.mrb[0].mxu0
  %v7172 = vadd.f32 0.0, %v7171
  %v7173 = vpop.f32.mrb[0].mxu0
  %v7174 = vpop.f32.mrb[0].mxu0
  %v7175 = vadd.f32 0.0, %v7174
  %v7176 = vpop.f32.mrb[0].mxu0
  %7177 = vmatprep.mubr.bf16.mxu0 0
  %7178 = vmatmul.mubr.bf16.gmra.mrb[0].mxu0 %v6976
  %v7179 = vpop.f32.mrb[0].mxu0
  %v7180 = vadd.f32 0.0, %v7179
  %v7181 = vpop.f32.mrb[0].mxu0
  %v7182 = vpop.f32.mrb[0].mxu0
  %v7183 = vadd.f32 0.0, %v7182
  %v7184 = vpop.f32.mrb[0].mxu0
  %7185 = vmatprep.mubr.bf16.mxu0 0
  %7186 = vmatmul.mubr.bf16.gmra.mrb[0].mxu0 %v6979
  %v7187 = vpop.f32.mrb[0].mxu0
  %v7188 = vadd.f32 0.0, %v7187
  %v7189 = vpop.f32.mrb[0].mxu0
  %v7190 = vpop.f32.mrb[0].mxu0
  %v7191 = vadd.f32 0.0, %v7190
  %v7192 = vpop.f32.mrb[0].mxu0
  %7193 = vmatprep.mubr.bf16.mxu0 0
  %7194 = vmatmul.mubr.bf16.gmra.mrb[0].mxu0 %v6982
  %v7195 = vpop.f32.mrb[0].mxu0
  %v7196 = vadd.f32 0.0, %v7195
  %v7197 = vpop.f32.mrb[0].mxu0
  %v7198 = vpop.f32.mrb[0].mxu0
  %v7199 = vadd.f32 0.0, %v7198
  %v7200 = vpop.f32.mrb[0].mxu0
  %7201 = vmatprep.mubr.bf16.mxu0 0
  %7202 = vmatmul.mubr.bf16.gmra.mrb[0].mxu0 %v6985
  %v7203 = vpop.f32.mrb[0].mxu0
  %v7204 = vadd.f32 0.0, %v7203
  %v7205 = vpop.f32.mrb[0].mxu0
  %v7206 = vpop.f32.mrb[0].mxu0
  %v7207 = vadd.f32 0.0, %v7206
  %v7208 = vpop.f32.mrb[0].mxu0
  %7209 = vmatprep.mubr.bf16.mxu0 0
  %7210 = vmatmul.mubr.bf16.gmra.mrb[0].mxu0 %v6988
  %v7211 = vpop.f32.mrb[0].mxu0
  %v7212 = vadd.f32 0.0, %v7211
  %v7213 = vpop.f32.mrb[0].mxu0
  %v7214 = vpop.f32.mrb[0].mxu0
  %v7215 = vadd.f32 0.0, %v7214
  %v7216 = vpop.f32.mrb[0].mxu0
  %7217 = vmatprep.mubr.bf16.mxu0 0
  %7218 = vmatmul.mubr.bf16.gmra.mrb[0].mxu0 %v6991
  %v7219 = vpop.f32.mrb[0].mxu0
  %v7220 = vadd.f32 0.0, %v7219
  %v7221 = vpop.f32.mrb[0].mxu0
  %v7222 = vpop.f32.mrb[0].mxu0
  %v7223 = vadd.f32 0.0, %v7222
  %v7224 = vpop.f32.mrb[0].mxu0
  %7225 = vmatprep.mubr.bf16.mxu0 0
  %7226 = vmatmul.mubr.bf16.gmra.mrb[0].mxu0 %v6994
  %v7227 = vpop.f32.mrb[0].mxu0
  %v7228 = vadd.f32 0.0, %v7227
  %v7229 = vpop.f32.mrb[0].mxu0
  %v7230 = vpop.f32.mrb[0].mxu0
  %v7231 = vadd.f32 0.0, %v7230
  %v7232 = vpop.f32.mrb[0].mxu0
  %7233 = vmatprep.mubr.bf16.mxu0 0
  %7234 = vmatmul.mubr.bf16.gmra.mrb[0].mxu0 %v6997
  %v7235 = vpop.f32.mrb[0].mxu0
  %v7236 = vadd.f32 0.0, %v7235
  %v7237 = vpop.f32.mrb[0].mxu0
  %v7238 = vpop.f32.mrb[0].mxu0
  %v7239 = vadd.f32 0.0, %v7238
  %v7240 = vpop.f32.mrb[0].mxu0
  %7241 = vmatprep.mubr.bf16.mxu0 0
  %7242 = vmatmul.mubr.bf16.gmra.mrb[0].mxu0 %v7000
  %v7243 = vpop.f32.mrb[0].mxu0
  %v7244 = vadd.f32 0.0, %v7243
  %v7245 = vpop.f32.mrb[0].mxu0
  %v7246 = vpop.f32.mrb[0].mxu0
  %v7247 = vadd.f32 0.0, %v7246
  %v7248 = vpop.f32.mrb[0].mxu0
  %7249 = vmatprep.mubr.bf16.mxu0 0
  %7250 = vmatmul.mubr.bf16.gmra.mrb[0].mxu0 %v7003
  %v7251 = vpop.f32.mrb[0].mxu0
  %v7252 = vadd.f32 0.0, %v7251
  %v7253 = vpop.f32.mrb[0].mxu0
  %v7254 = vpop.f32.mrb[0].mxu0
  %v7255 = vadd.f32 0.0, %v7254
  %v7256 = vpop.f32.mrb[0].mxu0
  %7257 = vmatprep.mubr.bf16.mxu0 0
  %7258 = vmatmul.mubr.bf16.gmra.mrb[0].mxu0 %v7006
  %v7259 = vpop.f32.mrb[0].mxu0
  %v7260 = vadd.f32 0.0, %v7259
  %v7261 = vpop.f32.mrb[0].mxu0
  %v7262 = vpop.f32.mrb[0].mxu0
  %v7263 = vadd.f32 0.0, %v7262
  %v7264 = vpop.f32.mrb[0].mxu0
  %7265 = vmatprep.mubr.bf16.mxu0 0
  %7266 = vmatmul.mubr.bf16.gmra.mrb[0].mxu0 %v7009
  %v7267 = vpop.f32.mrb[0].mxu0
  %v7268 = vadd.f32 0.0, %v7267
  %v7269 = vpop.f32.mrb[0].mxu0
  %v7270 = vpop.f32.mrb[0].mxu0
  %v7271 = vadd.f32 0.0, %v7270
  %v7272 = vpop.f32.mrb[0].mxu0
  %7273 = vmatprep.mubr.bf16.mxu0 0
  %7274 = vmatmul.mubr.bf16.gmra.mrb[0].mxu0 %v7012
  %v7275 = vpop.f32.mrb[0].mxu0
  %v7276 = vadd.f32 0.0, %v7275
  %v7277 = vpop.f32.mrb[0].mxu0
  %v7278 = vpop.f32.mrb[0].mxu0
  %v7279 = vadd.f32 0.0, %v7278
  %v7280 = vpop.f32.mrb[0].mxu0
  %7281 = vmatprep.mubr.bf16.mxu0 0
  %7282 = vmatmul.mubr.bf16.gmra.mrb[0].mxu0 %v7015
  %v7283 = vpop.f32.mrb[0].mxu0
  %v7284 = vadd.f32 0.0, %v7283
  %v7285 = vpop.f32.mrb[0].mxu0
  %v7286 = vpop.f32.mrb[0].mxu0
  %v7287 = vadd.f32 0.0, %v7286
  %v7288 = vpop.f32.mrb[0].mxu0
  %7289 = vmatprep.mubr.bf16.mxu0 0
  %7290 = vmatmul.mubr.bf16.gmra.mrb[0].mxu0 %v7018
  %v7291 = vpop.f32.mrb[0].mxu0
  %v7292 = vadd.f32 0.0, %v7291
  %v7293 = vpop.f32.mrb[0].mxu0
  %v7294 = vpop.f32.mrb[0].mxu0
  %v7295 = vadd.f32 0.0, %v7294
  %v7296 = vpop.f32.mrb[0].mxu0
  %7297 = vmatprep.mubr.bf16.mxu0 0
  %7298 = vmatmul.mubr.bf16.gmra.mrb[0].mxu0 %v7021
  %v7299 = vpop.f32.mrb[0].mxu0
  %v7300 = vadd.f32 0.0, %v7299
  %v7301 = vpop.f32.mrb[0].mxu0
  %v7302 = vpop.f32.mrb[0].mxu0
  %v7303 = vadd.f32 0.0, %v7302
  %v7304 = vpop.f32.mrb[0].mxu0
  %7305 = vmatprep.mubr.bf16.mxu0 0
  %7306 = vmatmul.mubr.bf16.gmra.mrb[0].mxu0 %v7024
  %v7307 = vpop.f32.mrb[0].mxu0
  %v7308 = vadd.f32 0.0, %v7307
  %v7309 = vpop.f32.mrb[0].mxu0
  %v7310 = vpop.f32.mrb[0].mxu0
  %v7311 = vadd.f32 0.0, %v7310
  %v7312 = vpop.f32.mrb[0].mxu0
  %7313 = vmatprep.mubr.bf16.mxu0 0
  %7314 = vmatmul.mubr.bf16.gmra.mrb[0].mxu0 %v7027
  %v7315 = vpop.f32.mrb[0].mxu0
  %v7316 = vadd.f32 0.0, %v7315
  %v7317 = vpop.f32.mrb[0].mxu0
  %v7318 = vpop.f32.mrb[0].mxu0
  %v7319 = vadd.f32 0.0, %v7318
  %v7320 = vpop.f32.mrb[0].mxu0
  %7321 = vdwg.mxu0
  %v7323 = vsel %vm96, %v891, 0
  %v7326 = vsel %vm96, %v892, 0
  %v7329 = vsel %vm96, %v893, 0
  %v7332 = vsel %vm96, %v894, 0
  %v7335 = vsel %vm96, %v895, 0
  %v7338 = vsel %vm96, %v896, 0
  %v7341 = vsel %vm96, %v897, 0
  %v7344 = vsel %vm96, %v898, 0
  %v7347 = vsel %vm96, %v899, 0
  %v7350 = vsel %vm96, %v900, 0
  %v7353 = vsel %vm96, %v901, 0
  %v7356 = vsel %vm96, %v902, 0
  %v7359 = vsel %vm96, %v903, 0
  %v7362 = vsel %vm96, %v904, 0
  %v7365 = vsel %vm96, %v905, 0
  %v7368 = vsel %vm96, %v906, 0
  %v7371 = vsel %vm96, %v907, 0
  %v7374 = vsel %vm96, %v908, 0
  %v7377 = vsel %vm96, %v909, 0
  %v7380 = vsel %vm96, %v910, 0
  %v7383 = vsel %vm96, %v911, 0
  %v7386 = vsel %vm96, %v912, 0
  %v7389 = vsel %vm96, %v913, 0
  %v7392 = vsel %vm96, %v914, 0
  %v7395 = vsel %vm96, %v915, 0
  %v7398 = vsel %vm96, %v916, 0
  %v7401 = vsel %vm96, %v917, 0
  %v7404 = vsel %vm96, %v918, 0
  %v7407 = vsel %vm96, %v919, 0
  %v7410 = vsel %vm96, %v920, 0
  %v7413 = vsel %vm96, %v921, 0
  %v7416 = vsel %vm96, %v922, 0
  %v7419 = vsel %vm1361, %v923, 0
  %7421 = vmatprep.subr.bf16.mxu0 0
  %7422 = vmatpush1.bf16.msra.mxu0 %v7419
  %7423 = vmatprep.subr.bf16.mxu0 0
  %7424 = vmatpush1.bf16.msra.mxu0 0
  %7425 = vmatprep.subr.bf16.mxu0 0
  %7426 = vmatpush1.bf16.msra.mxu0 0
  %7427 = vmatprep.subr.bf16.mxu0 0
  %7428 = vmatpush1.bf16.msra.mxu0 0
  %7429 = vmatprep.subr.bf16.mxu0 0
  %7430 = vmatpush1.bf16.msra.mxu0 0
  %7431 = vmatprep.subr.bf16.mxu0 0
  %7432 = vmatpush1.bf16.msra.mxu0 0
  %7433 = vmatprep.subr.bf16.mxu0 0
  %7434 = vmatpush1.bf16.msra.mxu0 0
  %7435 = vmatprep.subr.bf16.mxu0 0
  %7436 = vmatpush1.bf16.msra.mxu0 0
  %7437 = vmatprep.subr.bf16.mxu0 0
  %7438 = vmatpush1.bf16.msra.mxu0 0
  %7439 = vmatprep.subr.bf16.mxu0 0
  %7440 = vmatpush1.bf16.msra.mxu0 0
  %7441 = vmatprep.subr.bf16.mxu0 0
  %7442 = vmatpush1.bf16.msra.mxu0 0
  %7443 = vmatprep.subr.bf16.mxu0 0
  %7444 = vmatpush1.bf16.msra.mxu0 0
  %7445 = vmatprep.subr.bf16.mxu0 0
  %7446 = vmatpush1.bf16.msra.mxu0 0
  %7447 = vmatprep.subr.bf16.mxu0 0
  %7448 = vmatpush1.bf16.msra.mxu0 0
  %7449 = vmatprep.subr.bf16.mxu0 0
  %7450 = vmatpush1.bf16.msra.mxu0 0
  %7451 = vmatprep.subr.bf16.mxu0 0
  %7452 = vmatpush1.bf16.msra.mxu0 0
  %7453 = vmatprep.mubr.bf16.mxu0 0
  %7454 = vmatmul.mubr.bf16.gmra.mrb[0].mxu0 %v7323
  %v7455 = vpop.f32.mrb[0].mxu0
  %v7456 = vadd.f32 %v7068, %v7455
  %v7457 = vpop.f32.mrb[0].mxu0
  %v7458 = vpop.f32.mrb[0].mxu0
  %v7459 = vadd.f32 %v7071, %v7458
  %v7460 = vpop.f32.mrb[0].mxu0
  %7461 = vmatprep.mubr.bf16.mxu0 0
  %7462 = vmatmul.mubr.bf16.gmra.mrb[0].mxu0 %v7326
  %v7463 = vpop.f32.mrb[0].mxu0
  %v7464 = vadd.f32 %v7076, %v7463
  %v7465 = vpop.f32.mrb[0].mxu0
  %v7466 = vpop.f32.mrb[0].mxu0
  %v7467 = vadd.f32 %v7079, %v7466
  %v7468 = vpop.f32.mrb[0].mxu0
  %7469 = vmatprep.mubr.bf16.mxu0 0
  %7470 = vmatmul.mubr.bf16.gmra.mrb[0].mxu0 %v7329
  %v7471 = vpop.f32.mrb[0].mxu0
  %v7472 = vadd.f32 %v7084, %v7471
  %v7473 = vpop.f32.mrb[0].mxu0
  %v7474 = vpop.f32.mrb[0].mxu0
  %v7475 = vadd.f32 %v7087, %v7474
  %v7476 = vpop.f32.mrb[0].mxu0
  %7477 = vmatprep.mubr.bf16.mxu0 0
  %7478 = vmatmul.mubr.bf16.gmra.mrb[0].mxu0 %v7332
  %v7479 = vpop.f32.mrb[0].mxu0
  %v7480 = vadd.f32 %v7092, %v7479
  %v7481 = vpop.f32.mrb[0].mxu0
  %v7482 = vpop.f32.mrb[0].mxu0
  %v7483 = vadd.f32 %v7095, %v7482
  %v7484 = vpop.f32.mrb[0].mxu0
  %7485 = vmatprep.mubr.bf16.mxu0 0
  %7486 = vmatmul.mubr.bf16.gmra.mrb[0].mxu0 %v7335
  %v7487 = vpop.f32.mrb[0].mxu0
  %v7488 = vadd.f32 %v7100, %v7487
  %v7489 = vpop.f32.mrb[0].mxu0
  %v7490 = vpop.f32.mrb[0].mxu0
  %v7491 = vadd.f32 %v7103, %v7490
  %v7492 = vpop.f32.mrb[0].mxu0
  %7493 = vmatprep.mubr.bf16.mxu0 0
  %7494 = vmatmul.mubr.bf16.gmra.mrb[0].mxu0 %v7338
  %v7495 = vpop.f32.mrb[0].mxu0
  %v7496 = vadd.f32 %v7108, %v7495
  %v7497 = vpop.f32.mrb[0].mxu0
  %v7498 = vpop.f32.mrb[0].mxu0
  %v7499 = vadd.f32 %v7111, %v7498
  %v7500 = vpop.f32.mrb[0].mxu0
  %7501 = vmatprep.mubr.bf16.mxu0 0
  %7502 = vmatmul.mubr.bf16.gmra.mrb[0].mxu0 %v7341
  %v7503 = vpop.f32.mrb[0].mxu0
  %v7504 = vadd.f32 %v7116, %v7503
  %v7505 = vpop.f32.mrb[0].mxu0
  %v7506 = vpop.f32.mrb[0].mxu0
  %v7507 = vadd.f32 %v7119, %v7506
  %v7508 = vpop.f32.mrb[0].mxu0
  %7509 = vmatprep.mubr.bf16.mxu0 0
  %7510 = vmatmul.mubr.bf16.gmra.mrb[0].mxu0 %v7344
  %v7511 = vpop.f32.mrb[0].mxu0
  %v7512 = vadd.f32 %v7124, %v7511
  %v7513 = vpop.f32.mrb[0].mxu0
  %v7514 = vpop.f32.mrb[0].mxu0
  %v7515 = vadd.f32 %v7127, %v7514
  %v7516 = vpop.f32.mrb[0].mxu0
  %7517 = vmatprep.mubr.bf16.mxu0 0
  %7518 = vmatmul.mubr.bf16.gmra.mrb[0].mxu0 %v7347
  %v7519 = vpop.f32.mrb[0].mxu0
  %v7520 = vadd.f32 %v7132, %v7519
  %v7521 = vpop.f32.mrb[0].mxu0
  %v7522 = vpop.f32.mrb[0].mxu0
  %v7523 = vadd.f32 %v7135, %v7522
  %v7524 = vpop.f32.mrb[0].mxu0
  %7525 = vmatprep.mubr.bf16.mxu0 0
  %7526 = vmatmul.mubr.bf16.gmra.mrb[0].mxu0 %v7350
  %v7527 = vpop.f32.mrb[0].mxu0
  %v7528 = vadd.f32 %v7140, %v7527
  %v7529 = vpop.f32.mrb[0].mxu0
  %v7530 = vpop.f32.mrb[0].mxu0
  %v7531 = vadd.f32 %v7143, %v7530
  %v7532 = vpop.f32.mrb[0].mxu0
  %7533 = vmatprep.mubr.bf16.mxu0 0
  %7534 = vmatmul.mubr.bf16.gmra.mrb[0].mxu0 %v7353
  %v7535 = vpop.f32.mrb[0].mxu0
  %v7536 = vadd.f32 %v7148, %v7535
  %v7537 = vpop.f32.mrb[0].mxu0
  %v7538 = vpop.f32.mrb[0].mxu0
  %v7539 = vadd.f32 %v7151, %v7538
  %v7540 = vpop.f32.mrb[0].mxu0
  %7541 = vmatprep.mubr.bf16.mxu0 0
  %7542 = vmatmul.mubr.bf16.gmra.mrb[0].mxu0 %v7356
  %v7543 = vpop.f32.mrb[0].mxu0
  %v7544 = vadd.f32 %v7156, %v7543
  %v7545 = vpop.f32.mrb[0].mxu0
  %v7546 = vpop.f32.mrb[0].mxu0
  %v7547 = vadd.f32 %v7159, %v7546
  %v7548 = vpop.f32.mrb[0].mxu0
  %7549 = vmatprep.mubr.bf16.mxu0 0
  %7550 = vmatmul.mubr.bf16.gmra.mrb[0].mxu0 %v7359
  %v7551 = vpop.f32.mrb[0].mxu0
  %v7552 = vadd.f32 %v7164, %v7551
  %v7553 = vpop.f32.mrb[0].mxu0
  %v7554 = vpop.f32.mrb[0].mxu0
  %v7555 = vadd.f32 %v7167, %v7554
  %v7556 = vpop.f32.mrb[0].mxu0
  %7557 = vmatprep.mubr.bf16.mxu0 0
  %7558 = vmatmul.mubr.bf16.gmra.mrb[0].mxu0 %v7362
  %v7559 = vpop.f32.mrb[0].mxu0
  %v7560 = vadd.f32 %v7172, %v7559
  %v7561 = vpop.f32.mrb[0].mxu0
  %v7562 = vpop.f32.mrb[0].mxu0
  %v7563 = vadd.f32 %v7175, %v7562
  %v7564 = vpop.f32.mrb[0].mxu0
  %7565 = vmatprep.mubr.bf16.mxu0 0
  %7566 = vmatmul.mubr.bf16.gmra.mrb[0].mxu0 %v7365
  %v7567 = vpop.f32.mrb[0].mxu0
  %v7568 = vadd.f32 %v7180, %v7567
  %v7569 = vpop.f32.mrb[0].mxu0
  %v7570 = vpop.f32.mrb[0].mxu0
  %v7571 = vadd.f32 %v7183, %v7570
  %v7572 = vpop.f32.mrb[0].mxu0
  %7573 = vmatprep.mubr.bf16.mxu0 0
  %7574 = vmatmul.mubr.bf16.gmra.mrb[0].mxu0 %v7368
  %v7575 = vpop.f32.mrb[0].mxu0
  %v7576 = vadd.f32 %v7188, %v7575
  %v7577 = vpop.f32.mrb[0].mxu0
  %v7578 = vpop.f32.mrb[0].mxu0
  %v7579 = vadd.f32 %v7191, %v7578
  %v7580 = vpop.f32.mrb[0].mxu0
  %7581 = vmatprep.mubr.bf16.mxu0 0
  %7582 = vmatmul.mubr.bf16.gmra.mrb[0].mxu0 %v7371
  %v7583 = vpop.f32.mrb[0].mxu0
  %v7584 = vadd.f32 %v7196, %v7583
  %v7585 = vpop.f32.mrb[0].mxu0
  %v7586 = vpop.f32.mrb[0].mxu0
  %v7587 = vadd.f32 %v7199, %v7586
  %v7588 = vpop.f32.mrb[0].mxu0
  %7589 = vmatprep.mubr.bf16.mxu0 0
  %7590 = vmatmul.mubr.bf16.gmra.mrb[0].mxu0 %v7374
  %v7591 = vpop.f32.mrb[0].mxu0
  %v7592 = vadd.f32 %v7204, %v7591
  %v7593 = vpop.f32.mrb[0].mxu0
  %v7594 = vpop.f32.mrb[0].mxu0
  %v7595 = vadd.f32 %v7207, %v7594
  %v7596 = vpop.f32.mrb[0].mxu0
  %7597 = vmatprep.mubr.bf16.mxu0 0
  %7598 = vmatmul.mubr.bf16.gmra.mrb[0].mxu0 %v7377
  %v7599 = vpop.f32.mrb[0].mxu0
  %v7600 = vadd.f32 %v7212, %v7599
  %v7601 = vpop.f32.mrb[0].mxu0
  %v7602 = vpop.f32.mrb[0].mxu0
  %v7603 = vadd.f32 %v7215, %v7602
  %v7604 = vpop.f32.mrb[0].mxu0
  %7605 = vmatprep.mubr.bf16.mxu0 0
  %7606 = vmatmul.mubr.bf16.gmra.mrb[0].mxu0 %v7380
  %v7607 = vpop.f32.mrb[0].mxu0
  %v7608 = vadd.f32 %v7220, %v7607
  %v7609 = vpop.f32.mrb[0].mxu0
  %v7610 = vpop.f32.mrb[0].mxu0
  %v7611 = vadd.f32 %v7223, %v7610
  %v7612 = vpop.f32.mrb[0].mxu0
  %7613 = vmatprep.mubr.bf16.mxu0 0
  %7614 = vmatmul.mubr.bf16.gmra.mrb[0].mxu0 %v7383
  %v7615 = vpop.f32.mrb[0].mxu0
  %v7616 = vadd.f32 %v7228, %v7615
  %v7617 = vpop.f32.mrb[0].mxu0
  %v7618 = vpop.f32.mrb[0].mxu0
  %v7619 = vadd.f32 %v7231, %v7618
  %v7620 = vpop.f32.mrb[0].mxu0
  %7621 = vmatprep.mubr.bf16.mxu0 0
  %7622 = vmatmul.mubr.bf16.gmra.mrb[0].mxu0 %v7386
  %v7623 = vpop.f32.mrb[0].mxu0
  %v7624 = vadd.f32 %v7236, %v7623
  %v7625 = vpop.f32.mrb[0].mxu0
  %v7626 = vpop.f32.mrb[0].mxu0
  %v7627 = vadd.f32 %v7239, %v7626
  %v7628 = vpop.f32.mrb[0].mxu0
  %7629 = vmatprep.mubr.bf16.mxu0 0
  %7630 = vmatmul.mubr.bf16.gmra.mrb[0].mxu0 %v7389
  %v7631 = vpop.f32.mrb[0].mxu0
  %v7632 = vadd.f32 %v7244, %v7631
  %v7633 = vpop.f32.mrb[0].mxu0
  %v7634 = vpop.f32.mrb[0].mxu0
  %v7635 = vadd.f32 %v7247, %v7634
  %v7636 = vpop.f32.mrb[0].mxu0
  %7637 = vmatprep.mubr.bf16.mxu0 0
  %7638 = vmatmul.mubr.bf16.gmra.mrb[0].mxu0 %v7392
  %v7639 = vpop.f32.mrb[0].mxu0
  %v7640 = vadd.f32 %v7252, %v7639
  %v7641 = vpop.f32.mrb[0].mxu0
  %v7642 = vpop.f32.mrb[0].mxu0
  %v7643 = vadd.f32 %v7255, %v7642
  %v7644 = vpop.f32.mrb[0].mxu0
  %7645 = vmatprep.mubr.bf16.mxu0 0
  %7646 = vmatmul.mubr.bf16.gmra.mrb[0].mxu0 %v7395
  %v7647 = vpop.f32.mrb[0].mxu0
  %v7648 = vadd.f32 %v7260, %v7647
  %v7649 = vpop.f32.mrb[0].mxu0
  %v7650 = vpop.f32.mrb[0].mxu0
  %v7651 = vadd.f32 %v7263, %v7650
  %v7652 = vpop.f32.mrb[0].mxu0
  %7653 = vmatprep.mubr.bf16.mxu0 0
  %7654 = vmatmul.mubr.bf16.gmra.mrb[0].mxu0 %v7398
  %v7655 = vpop.f32.mrb[0].mxu0
  %v7656 = vadd.f32 %v7268, %v7655
  %v7657 = vpop.f32.mrb[0].mxu0
  %v7658 = vpop.f32.mrb[0].mxu0
  %v7659 = vadd.f32 %v7271, %v7658
  %v7660 = vpop.f32.mrb[0].mxu0
  %7661 = vmatprep.mubr.bf16.mxu0 0
  %7662 = vmatmul.mubr.bf16.gmra.mrb[0].mxu0 %v7401
  %v7663 = vpop.f32.mrb[0].mxu0
  %v7664 = vadd.f32 %v7276, %v7663
  %v7665 = vpop.f32.mrb[0].mxu0
  %v7666 = vpop.f32.mrb[0].mxu0
  %v7667 = vadd.f32 %v7279, %v7666
  %v7668 = vpop.f32.mrb[0].mxu0
  %7669 = vmatprep.mubr.bf16.mxu0 0
  %7670 = vmatmul.mubr.bf16.gmra.mrb[0].mxu0 %v7404
  %v7671 = vpop.f32.mrb[0].mxu0
  %v7672 = vadd.f32 %v7284, %v7671
  %v7673 = vpop.f32.mrb[0].mxu0
  %v7674 = vpop.f32.mrb[0].mxu0
  %v7675 = vadd.f32 %v7287, %v7674
  %v7676 = vpop.f32.mrb[0].mxu0
  %7677 = vmatprep.mubr.bf16.mxu0 0
  %7678 = vmatmul.mubr.bf16.gmra.mrb[0].mxu0 %v7407
  %v7679 = vpop.f32.mrb[0].mxu0
  %v7680 = vadd.f32 %v7292, %v7679
  %v7681 = vpop.f32.mrb[0].mxu0
  %v7682 = vpop.f32.mrb[0].mxu0
  %v7683 = vadd.f32 %v7295, %v7682
  %v7684 = vpop.f32.mrb[0].mxu0
  %7685 = vmatprep.mubr.bf16.mxu0 0
  %7686 = vmatmul.mubr.bf16.gmra.mrb[0].mxu0 %v7410
  %v7687 = vpop.f32.mrb[0].mxu0
  %v7688 = vadd.f32 %v7300, %v7687
  %v7689 = vpop.f32.mrb[0].mxu0
  %v7690 = vpop.f32.mrb[0].mxu0
  %v7691 = vadd.f32 %v7303, %v7690
  %v7692 = vpop.f32.mrb[0].mxu0
  %7693 = vmatprep.mubr.bf16.mxu0 0
  %7694 = vmatmul.mubr.bf16.gmra.mrb[0].mxu0 %v7413
  %v7695 = vpop.f32.mrb[0].mxu0
  %v7696 = vadd.f32 %v7308, %v7695
  %v7697 = vpop.f32.mrb[0].mxu0
  %v7698 = vpop.f32.mrb[0].mxu0
  %v7699 = vadd.f32 %v7311, %v7698
  %v7700 = vpop.f32.mrb[0].mxu0
  %7701 = vmatprep.mubr.bf16.mxu0 0
  %7702 = vmatmul.mubr.bf16.gmra.mrb[0].mxu0 %v7416
  %v7703 = vpop.f32.mrb[0].mxu0
  %v7704 = vadd.f32 %v7316, %v7703
  %v7705 = vpop.f32.mrb[0].mxu0
  %v7706 = vpop.f32.mrb[0].mxu0
  %v7707 = vadd.f32 %v7319, %v7706
  %v7708 = vpop.f32.mrb[0].mxu0
  %7709 = vdwg.mxu0
  %v7710 = vld [vmem:[#allocation3 + $0x8] sm:$0xff]
  %v7711 = vld [vmem:[#allocation3 + $0x10] sm:$0xff]
  %v7712 = vld [vmem:[#allocation3 + $0x28] sm:$0xff]
  %v7713 = vld [vmem:[#allocation3 + $0x30] sm:$0xff]
  %v7714 = vld [vmem:[#allocation3 + $0x48] sm:$0xff]
  %v7715 = vld [vmem:[#allocation3 + $0x50] sm:$0xff]
  %v7716 = vld [vmem:[#allocation3 + $0x68] sm:$0xff]
  %v7717 = vld [vmem:[#allocation3 + $0x70] sm:$0xff]
  %v7718 = vld [vmem:[#allocation3 + $0x88] sm:$0xff]
  %v7719 = vld [vmem:[#allocation3 + $0x90] sm:$0xff]
  %v7720 = vld [vmem:[#allocation3 + $0xa8] sm:$0xff]
  %v7721 = vld [vmem:[#allocation3 + $0xb0] sm:$0xff]
  %v7722 = vld [vmem:[#allocation3 + $0xc8] sm:$0xff]
  %v7723 = vld [vmem:[#allocation3 + $0xd0] sm:$0xff]
  %v7724 = vld [vmem:[#allocation3 + $0xe8] sm:$0xff]
  %v7725 = vld [vmem:[#allocation3 + $0xf0] sm:$0xff]
  %v7726 = vld [vmem:[#allocation3 + $0x108] sm:$0xff]
  %v7727 = vld [vmem:[#allocation3 + $0x110] sm:$0xff]
  %v7728 = vld [vmem:[#allocation3 + $0x128] sm:$0xff]
  %v7729 = vld [vmem:[#allocation3 + $0x130] sm:$0xff]
  %v7730 = vld [vmem:[#allocation3 + $0x148] sm:$0xff]
  %v7731 = vld [vmem:[#allocation3 + $0x150] sm:$0xff]
  %v7732 = vld [vmem:[#allocation3 + $0x168] sm:$0xff]
  %v7733 = vld [vmem:[#allocation3 + $0x170] sm:$0xff]
  %v7734 = vld [vmem:[#allocation3 + $0x188] sm:$0xff]
  %v7735 = vld [vmem:[#allocation3 + $0x190] sm:$0xff]
  %v7736 = vld [vmem:[#allocation3 + $0x1a8] sm:$0xff]
  %v7737 = vld [vmem:[#allocation3 + $0x1b0] sm:$0xff]
  %v7738 = vld [vmem:[#allocation3 + $0x1c8] sm:$0xff]
  %v7739 = vld [vmem:[#allocation3 + $0x1d0] sm:$0xff]
  %v7740 = vld [vmem:[#allocation3 + $0x1e8] sm:$0xff]
  %v7741 = vld [vmem:[#allocation3 + $0x1f0] sm:$0xff]
  %v7742 = vld [vmem:[#allocation3 + $0x248] sm:$0xff]
  %v7743 = vld [vmem:[#allocation3 + $0x250] sm:$0xff]
  %v7744 = vld [vmem:[#allocation3 + $0x268] sm:$0xff]
  %v7745 = vld [vmem:[#allocation3 + $0x270] sm:$0xff]
  %v7746 = vld [vmem:[#allocation3 + $0x288] sm:$0xff]
  %v7747 = vld [vmem:[#allocation3 + $0x290] sm:$0xff]
  %v7748 = vld [vmem:[#allocation3 + $0x2a8] sm:$0xff]
  %v7749 = vld [vmem:[#allocation3 + $0x2b0] sm:$0xff]
  %v7750 = vld [vmem:[#allocation3 + $0x2c8] sm:$0xff]
  %v7751 = vld [vmem:[#allocation3 + $0x2d0] sm:$0xff]
  %v7752 = vld [vmem:[#allocation3 + $0x2e8] sm:$0xff]
  %v7753 = vld [vmem:[#allocation3 + $0x2f0] sm:$0xff]
  %v7754 = vld [vmem:[#allocation3 + $0x308] sm:$0xff]
  %v7755 = vld [vmem:[#allocation3 + $0x310] sm:$0xff]
  %v7756 = vld [vmem:[#allocation3 + $0x328] sm:$0xff]
  %v7757 = vld [vmem:[#allocation3 + $0x330] sm:$0xff]
  %v7758 = vld [vmem:[#allocation3 + $0x348] sm:$0xff]
  %v7759 = vld [vmem:[#allocation3 + $0x350] sm:$0xff]
  %v7760 = vld [vmem:[#allocation3 + $0x368] sm:$0xff]
  %v7761 = vld [vmem:[#allocation3 + $0x370] sm:$0xff]
  %v7762 = vld [vmem:[#allocation3 + $0x388] sm:$0xff]
  %v7763 = vld [vmem:[#allocation3 + $0x390] sm:$0xff]
  %v7764 = vld [vmem:[#allocation3 + $0x3a8] sm:$0xff]
  %v7765 = vld [vmem:[#allocation3 + $0x3b0] sm:$0xff]
  %v7766 = vld [vmem:[#allocation3 + $0x3c8] sm:$0xff]
  %v7767 = vld [vmem:[#allocation3 + $0x3d0] sm:$0xff]
  %v7768 = vld [vmem:[#allocation3 + $0x3e8] sm:$0xff]
  %v7769 = vld [vmem:[#allocation3 + $0x3f0] sm:$0xff]
  %v7770 = vld [vmem:[#allocation3 + $0x408] sm:$0xff]
  %v7771 = vld [vmem:[#allocation3 + $0x410] sm:$0xff]
  %v7772 = vld [vmem:[#allocation3 + $0x428] sm:$0xff]
  %v7773 = vld [vmem:[#allocation3 + $0x430] sm:$0xff]
  %v7774 = vpack.c.bf16 %v7711, %v7710
  %v7775 = vpack.c.bf16 %v7713, %v7712
  %v7776 = vpack.c.bf16 %v7715, %v7714
  %v7777 = vpack.c.bf16 %v7717, %v7716
  %v7778 = vpack.c.bf16 %v7719, %v7718
  %v7779 = vpack.c.bf16 %v7721, %v7720
  %v7780 = vpack.c.bf16 %v7723, %v7722
  %v7781 = vpack.c.bf16 %v7725, %v7724
  %v7782 = vpack.c.bf16 %v7727, %v7726
  %v7783 = vpack.c.bf16 %v7729, %v7728
  %v7784 = vpack.c.bf16 %v7731, %v7730
  %v7785 = vpack.c.bf16 %v7733, %v7732
  %v7786 = vpack.c.bf16 %v7735, %v7734
  %v7787 = vpack.c.bf16 %v7737, %v7736
  %v7788 = vpack.c.bf16 %v7739, %v7738
  %v7789 = vpack.c.bf16 %v7741, %v7740
  %v7790 = vpack.c.bf16 %v7743, %v7742
  %v7791 = vpack.c.bf16 %v7745, %v7744
  %v7792 = vpack.c.bf16 %v7747, %v7746
  %v7793 = vpack.c.bf16 %v7749, %v7748
  %v7794 = vpack.c.bf16 %v7751, %v7750
  %v7795 = vpack.c.bf16 %v7753, %v7752
  %v7796 = vpack.c.bf16 %v7755, %v7754
  %v7797 = vpack.c.bf16 %v7757, %v7756
  %v7798 = vpack.c.bf16 %v7759, %v7758
  %v7799 = vpack.c.bf16 %v7761, %v7760
  %v7800 = vpack.c.bf16 %v7763, %v7762
  %v7801 = vpack.c.bf16 %v7765, %v7764
  %v7802 = vpack.c.bf16 %v7767, %v7766
  %v7803 = vpack.c.bf16 %v7769, %v7768
  %v7804 = vpack.c.bf16 %v7771, %v7770
  %v7805 = vpack.c.bf16 %v7773, %v7772
  %s7806 = scalar_lea.vmem %s2, 4
  %v7807 = vld [vmem:[%s7806] sm:$0xf]
  %v7809 = vsel %vm5895, %v7774, 0
  %v7812 = vsel %vm5895, %v7775, 0
  %v7815 = vsel %vm5895, %v7776, 0
  %v7818 = vsel %vm5895, %v7777, 0
  %v7821 = vsel %vm5895, %v7778, 0
  %v7824 = vsel %vm5895, %v7779, 0
  %v7827 = vsel %vm5895, %v7780, 0
  %v7830 = vsel %vm5895, %v7781, 0
  %v7833 = vsel %vm5895, %v7782, 0
  %v7836 = vsel %vm5895, %v7783, 0
  %v7839 = vsel %vm5895, %v7784, 0
  %v7842 = vsel %vm5895, %v7785, 0
  %v7845 = vsel %vm5895, %v7786, 0
  %v7848 = vsel %vm5895, %v7787, 0
  %v7851 = vsel %vm5895, %v7788, 0
  %v7854 = vsel %vm5895, %v7789, 0
  %v7857 = vsel %vm5895, %v7790, 0
  %v7860 = vsel %vm5895, %v7791, 0
  %v7863 = vsel %vm5895, %v7792, 0
  %v7866 = vsel %vm5895, %v7793, 0
  %v7869 = vsel %vm5895, %v7794, 0
  %v7872 = vsel %vm5895, %v7795, 0
  %v7875 = vsel %vm5895, %v7796, 0
  %v7878 = vsel %vm5895, %v7797, 0
  %v7881 = vsel %vm5895, %v7798, 0
  %v7884 = vsel %vm5895, %v7799, 0
  %v7887 = vsel %vm5895, %v7800, 0
  %v7890 = vsel %vm5895, %v7801, 0
  %v7893 = vsel %vm5895, %v7802, 0
  %v7896 = vsel %vm5895, %v7803, 0
  %v7899 = vsel %vm5895, %v7804, 0
  %v7902 = vsel %vm5895, %v7805, 0
  %v7905 = vsel %vm7029, %v7807, 0
  %7907 = vmatprep.subr.bf16.mxu0 0
  %7908 = vmatpush1.bf16.msra.mxu0 %v7905
  %7909 = vmatprep.subr.bf16.mxu0 0
  %7910 = vmatpush1.bf16.msra.mxu0 0
  %7911 = vmatprep.subr.bf16.mxu0 0
  %7912 = vmatpush1.bf16.msra.mxu0 0
  %7913 = vmatprep.subr.bf16.mxu0 0
  %7914 = vmatpush1.bf16.msra.mxu0 0
  %7915 = vmatprep.subr.bf16.mxu0 0
  %7916 = vmatpush1.bf16.msra.mxu0 0
  %7917 = vmatprep.subr.bf16.mxu0 0
  %7918 = vmatpush1.bf16.msra.mxu0 0
  %7919 = vmatprep.subr.bf16.mxu0 0
  %7920 = vmatpush1.bf16.msra.mxu0 0
  %7921 = vmatprep.subr.bf16.mxu0 0
  %7922 = vmatpush1.bf16.msra.mxu0 0
  %7923 = vmatprep.subr.bf16.mxu0 0
  %7924 = vmatpush1.bf16.msra.mxu0 0
  %7925 = vmatprep.subr.bf16.mxu0 0
  %7926 = vmatpush1.bf16.msra.mxu0 0
  %7927 = vmatprep.subr.bf16.mxu0 0
  %7928 = vmatpush1.bf16.msra.mxu0 0
  %7929 = vmatprep.subr.bf16.mxu0 0
  %7930 = vmatpush1.bf16.msra.mxu0 0
  %7931 = vmatprep.subr.bf16.mxu0 0
  %7932 = vmatpush1.bf16.msra.mxu0 0
  %7933 = vmatprep.subr.bf16.mxu0 0
  %7934 = vmatpush1.bf16.msra.mxu0 0
  %7935 = vmatprep.subr.bf16.mxu0 0
  %7936 = vmatpush1.bf16.msra.mxu0 0
  %7937 = vmatprep.subr.bf16.mxu0 0
  %7938 = vmatpush1.bf16.msra.mxu0 0
  %7939 = vmatprep.mubr.bf16.mxu0 0
  %7940 = vmatmul.mubr.bf16.gmra.mrb[0].mxu0 %v7809
  %v7941 = vpop.f32.mrb[0].mxu0
  %v7942 = vadd.f32 0.0, %v7941
  %v7943 = vpop.f32.mrb[0].mxu0
  %v7944 = vpop.f32.mrb[0].mxu0
  %v7945 = vadd.f32 0.0, %v7944
  %v7946 = vpop.f32.mrb[0].mxu0
  %7947 = vmatprep.mubr.bf16.mxu0 0
  %7948 = vmatmul.mubr.bf16.gmra.mrb[0].mxu0 %v7812
  %v7949 = vpop.f32.mrb[0].mxu0
  %v7950 = vadd.f32 0.0, %v7949
  %v7951 = vpop.f32.mrb[0].mxu0
  %v7952 = vpop.f32.mrb[0].mxu0
  %v7953 = vadd.f32 0.0, %v7952
  %v7954 = vpop.f32.mrb[0].mxu0
  %7955 = vmatprep.mubr.bf16.mxu0 0
  %7956 = vmatmul.mubr.bf16.gmra.mrb[0].mxu0 %v7815
  %v7957 = vpop.f32.mrb[0].mxu0
  %v7958 = vadd.f32 0.0, %v7957
  %v7959 = vpop.f32.mrb[0].mxu0
  %v7960 = vpop.f32.mrb[0].mxu0
  %v7961 = vadd.f32 0.0, %v7960
  %v7962 = vpop.f32.mrb[0].mxu0
  %7963 = vmatprep.mubr.bf16.mxu0 0
  %7964 = vmatmul.mubr.bf16.gmra.mrb[0].mxu0 %v7818
  %v7965 = vpop.f32.mrb[0].mxu0
  %v7966 = vadd.f32 0.0, %v7965
  %v7967 = vpop.f32.mrb[0].mxu0
  %v7968 = vpop.f32.mrb[0].mxu0
  %v7969 = vadd.f32 0.0, %v7968
  %v7970 = vpop.f32.mrb[0].mxu0
  %7971 = vmatprep.mubr.bf16.mxu0 0
  %7972 = vmatmul.mubr.bf16.gmra.mrb[0].mxu0 %v7821
  %v7973 = vpop.f32.mrb[0].mxu0
  %v7974 = vadd.f32 0.0, %v7973
  %v7975 = vpop.f32.mrb[0].mxu0
  %v7976 = vpop.f32.mrb[0].mxu0
  %v7977 = vadd.f32 0.0, %v7976
  %v7978 = vpop.f32.mrb[0].mxu0
  %7979 = vmatprep.mubr.bf16.mxu0 0
  %7980 = vmatmul.mubr.bf16.gmra.mrb[0].mxu0 %v7824
  %v7981 = vpop.f32.mrb[0].mxu0
  %v7982 = vadd.f32 0.0, %v7981
  %v7983 = vpop.f32.mrb[0].mxu0
  %v7984 = vpop.f32.mrb[0].mxu0
  %v7985 = vadd.f32 0.0, %v7984
  %v7986 = vpop.f32.mrb[0].mxu0
  %7987 = vmatprep.mubr.bf16.mxu0 0
  %7988 = vmatmul.mubr.bf16.gmra.mrb[0].mxu0 %v7827
  %v7989 = vpop.f32.mrb[0].mxu0
  %v7990 = vadd.f32 0.0, %v7989
  %v7991 = vpop.f32.mrb[0].mxu0
  %v7992 = vpop.f32.mrb[0].mxu0
  %v7993 = vadd.f32 0.0, %v7992
  %v7994 = vpop.f32.mrb[0].mxu0
  %7995 = vmatprep.mubr.bf16.mxu0 0
  %7996 = vmatmul.mubr.bf16.gmra.mrb[0].mxu0 %v7830
  %v7997 = vpop.f32.mrb[0].mxu0
  %v7998 = vadd.f32 0.0, %v7997
  %v7999 = vpop.f32.mrb[0].mxu0
  %v8000 = vpop.f32.mrb[0].mxu0
  %v8001 = vadd.f32 0.0, %v8000
  %v8002 = vpop.f32.mrb[0].mxu0
  %8003 = vmatprep.mubr.bf16.mxu0 0
  %8004 = vmatmul.mubr.bf16.gmra.mrb[0].mxu0 %v7833
  %v8005 = vpop.f32.mrb[0].mxu0
  %v8006 = vadd.f32 0.0, %v8005
  %v8007 = vpop.f32.mrb[0].mxu0
  %v8008 = vpop.f32.mrb[0].mxu0
  %v8009 = vadd.f32 0.0, %v8008
  %v8010 = vpop.f32.mrb[0].mxu0
  %8011 = vmatprep.mubr.bf16.mxu0 0
  %8012 = vmatmul.mubr.bf16.gmra.mrb[0].mxu0 %v7836
  %v8013 = vpop.f32.mrb[0].mxu0
  %v8014 = vadd.f32 0.0, %v8013
  %v8015 = vpop.f32.mrb[0].mxu0
  %v8016 = vpop.f32.mrb[0].mxu0
  %v8017 = vadd.f32 0.0, %v8016
  %v8018 = vpop.f32.mrb[0].mxu0
  %8019 = vmatprep.mubr.bf16.mxu0 0
  %8020 = vmatmul.mubr.bf16.gmra.mrb[0].mxu0 %v7839
  %v8021 = vpop.f32.mrb[0].mxu0
  %v8022 = vadd.f32 0.0, %v8021
  %v8023 = vpop.f32.mrb[0].mxu0
  %v8024 = vpop.f32.mrb[0].mxu0
  %v8025 = vadd.f32 0.0, %v8024
  %v8026 = vpop.f32.mrb[0].mxu0
  %8027 = vmatprep.mubr.bf16.mxu0 0
  %8028 = vmatmul.mubr.bf16.gmra.mrb[0].mxu0 %v7842
  %v8029 = vpop.f32.mrb[0].mxu0
  %v8030 = vadd.f32 0.0, %v8029
  %v8031 = vpop.f32.mrb[0].mxu0
  %v8032 = vpop.f32.mrb[0].mxu0
  %v8033 = vadd.f32 0.0, %v8032
  %v8034 = vpop.f32.mrb[0].mxu0
  %8035 = vmatprep.mubr.bf16.mxu0 0
  %8036 = vmatmul.mubr.bf16.gmra.mrb[0].mxu0 %v7845
  %v8037 = vpop.f32.mrb[0].mxu0
  %v8038 = vadd.f32 0.0, %v8037
  %v8039 = vpop.f32.mrb[0].mxu0
  %v8040 = vpop.f32.mrb[0].mxu0
  %v8041 = vadd.f32 0.0, %v8040
  %v8042 = vpop.f32.mrb[0].mxu0
  %8043 = vmatprep.mubr.bf16.mxu0 0
  %8044 = vmatmul.mubr.bf16.gmra.mrb[0].mxu0 %v7848
  %v8045 = vpop.f32.mrb[0].mxu0
  %v8046 = vadd.f32 0.0, %v8045
  %v8047 = vpop.f32.mrb[0].mxu0
  %v8048 = vpop.f32.mrb[0].mxu0
  %v8049 = vadd.f32 0.0, %v8048
  %v8050 = vpop.f32.mrb[0].mxu0
  %8051 = vmatprep.mubr.bf16.mxu0 0
  %8052 = vmatmul.mubr.bf16.gmra.mrb[0].mxu0 %v7851
  %v8053 = vpop.f32.mrb[0].mxu0
  %v8054 = vadd.f32 0.0, %v8053
  %v8055 = vpop.f32.mrb[0].mxu0
  %v8056 = vpop.f32.mrb[0].mxu0
  %v8057 = vadd.f32 0.0, %v8056
  %v8058 = vpop.f32.mrb[0].mxu0
  %8059 = vmatprep.mubr.bf16.mxu0 0
  %8060 = vmatmul.mubr.bf16.gmra.mrb[0].mxu0 %v7854
  %v8061 = vpop.f32.mrb[0].mxu0
  %v8062 = vadd.f32 0.0, %v8061
  %v8063 = vpop.f32.mrb[0].mxu0
  %v8064 = vpop.f32.mrb[0].mxu0
  %v8065 = vadd.f32 0.0, %v8064
  %v8066 = vpop.f32.mrb[0].mxu0
  %8067 = vmatprep.mubr.bf16.mxu0 0
  %8068 = vmatmul.mubr.bf16.gmra.mrb[0].mxu0 %v7857
  %v8069 = vpop.f32.mrb[0].mxu0
  %v8070 = vadd.f32 0.0, %v8069
  %v8071 = vpop.f32.mrb[0].mxu0
  %v8072 = vpop.f32.mrb[0].mxu0
  %v8073 = vadd.f32 0.0, %v8072
  %v8074 = vpop.f32.mrb[0].mxu0
  %8075 = vmatprep.mubr.bf16.mxu0 0
  %8076 = vmatmul.mubr.bf16.gmra.mrb[0].mxu0 %v7860
  %v8077 = vpop.f32.mrb[0].mxu0
  %v8078 = vadd.f32 0.0, %v8077
  %v8079 = vpop.f32.mrb[0].mxu0
  %v8080 = vpop.f32.mrb[0].mxu0
  %v8081 = vadd.f32 0.0, %v8080
  %v8082 = vpop.f32.mrb[0].mxu0
  %8083 = vmatprep.mubr.bf16.mxu0 0
  %8084 = vmatmul.mubr.bf16.gmra.mrb[0].mxu0 %v7863
  %v8085 = vpop.f32.mrb[0].mxu0
  %v8086 = vadd.f32 0.0, %v8085
  %v8087 = vpop.f32.mrb[0].mxu0
  %v8088 = vpop.f32.mrb[0].mxu0
  %v8089 = vadd.f32 0.0, %v8088
  %v8090 = vpop.f32.mrb[0].mxu0
  %8091 = vmatprep.mubr.bf16.mxu0 0
  %8092 = vmatmul.mubr.bf16.gmra.mrb[0].mxu0 %v7866
  %v8093 = vpop.f32.mrb[0].mxu0
  %v8094 = vadd.f32 0.0, %v8093
  %v8095 = vpop.f32.mrb[0].mxu0
  %v8096 = vpop.f32.mrb[0].mxu0
  %v8097 = vadd.f32 0.0, %v8096
  %v8098 = vpop.f32.mrb[0].mxu0
  %8099 = vmatprep.mubr.bf16.mxu0 0
  %8100 = vmatmul.mubr.bf16.gmra.mrb[0].mxu0 %v7869
  %v8101 = vpop.f32.mrb[0].mxu0
  %v8102 = vadd.f32 0.0, %v8101
  %v8103 = vpop.f32.mrb[0].mxu0
  %v8104 = vpop.f32.mrb[0].mxu0
  %v8105 = vadd.f32 0.0, %v8104
  %v8106 = vpop.f32.mrb[0].mxu0
  %8107 = vmatprep.mubr.bf16.mxu0 0
  %8108 = vmatmul.mubr.bf16.gmra.mrb[0].mxu0 %v7872
  %v8109 = vpop.f32.mrb[0].mxu0
  %v8110 = vadd.f32 0.0, %v8109
  %v8111 = vpop.f32.mrb[0].mxu0
  %v8112 = vpop.f32.mrb[0].mxu0
  %v8113 = vadd.f32 0.0, %v8112
  %v8114 = vpop.f32.mrb[0].mxu0
  %8115 = vmatprep.mubr.bf16.mxu0 0
  %8116 = vmatmul.mubr.bf16.gmra.mrb[0].mxu0 %v7875
  %v8117 = vpop.f32.mrb[0].mxu0
  %v8118 = vadd.f32 0.0, %v8117
  %v8119 = vpop.f32.mrb[0].mxu0
  %v8120 = vpop.f32.mrb[0].mxu0
  %v8121 = vadd.f32 0.0, %v8120
  %v8122 = vpop.f32.mrb[0].mxu0
  %8123 = vmatprep.mubr.bf16.mxu0 0
  %8124 = vmatmul.mubr.bf16.gmra.mrb[0].mxu0 %v7878
  %v8125 = vpop.f32.mrb[0].mxu0
  %v8126 = vadd.f32 0.0, %v8125
  %v8127 = vpop.f32.mrb[0].mxu0
  %v8128 = vpop.f32.mrb[0].mxu0
  %v8129 = vadd.f32 0.0, %v8128
  %v8130 = vpop.f32.mrb[0].mxu0
  %8131 = vmatprep.mubr.bf16.mxu0 0
  %8132 = vmatmul.mubr.bf16.gmra.mrb[0].mxu0 %v7881
  %v8133 = vpop.f32.mrb[0].mxu0
  %v8134 = vadd.f32 0.0, %v8133
  %v8135 = vpop.f32.mrb[0].mxu0
  %v8136 = vpop.f32.mrb[0].mxu0
  %v8137 = vadd.f32 0.0, %v8136
  %v8138 = vpop.f32.mrb[0].mxu0
  %8139 = vmatprep.mubr.bf16.mxu0 0
  %8140 = vmatmul.mubr.bf16.gmra.mrb[0].mxu0 %v7884
  %v8141 = vpop.f32.mrb[0].mxu0
  %v8142 = vadd.f32 0.0, %v8141
  %v8143 = vpop.f32.mrb[0].mxu0
  %v8144 = vpop.f32.mrb[0].mxu0
  %v8145 = vadd.f32 0.0, %v8144
  %v8146 = vpop.f32.mrb[0].mxu0
  %8147 = vmatprep.mubr.bf16.mxu0 0
  %8148 = vmatmul.mubr.bf16.gmra.mrb[0].mxu0 %v7887
  %v8149 = vpop.f32.mrb[0].mxu0
  %v8150 = vadd.f32 0.0, %v8149
  %v8151 = vpop.f32.mrb[0].mxu0
  %v8152 = vpop.f32.mrb[0].mxu0
  %v8153 = vadd.f32 0.0, %v8152
  %v8154 = vpop.f32.mrb[0].mxu0
  %8155 = vmatprep.mubr.bf16.mxu0 0
  %8156 = vmatmul.mubr.bf16.gmra.mrb[0].mxu0 %v7890
  %v8157 = vpop.f32.mrb[0].mxu0
  %v8158 = vadd.f32 0.0, %v8157
  %v8159 = vpop.f32.mrb[0].mxu0
  %v8160 = vpop.f32.mrb[0].mxu0
  %v8161 = vadd.f32 0.0, %v8160
  %v8162 = vpop.f32.mrb[0].mxu0
  %8163 = vmatprep.mubr.bf16.mxu0 0
  %8164 = vmatmul.mubr.bf16.gmra.mrb[0].mxu0 %v7893
  %v8165 = vpop.f32.mrb[0].mxu0
  %v8166 = vadd.f32 0.0, %v8165
  %v8167 = vpop.f32.mrb[0].mxu0
  %v8168 = vpop.f32.mrb[0].mxu0
  %v8169 = vadd.f32 0.0, %v8168
  %v8170 = vpop.f32.mrb[0].mxu0
  %8171 = vmatprep.mubr.bf16.mxu0 0
  %8172 = vmatmul.mubr.bf16.gmra.mrb[0].mxu0 %v7896
  %v8173 = vpop.f32.mrb[0].mxu0
  %v8174 = vadd.f32 0.0, %v8173
  %v8175 = vpop.f32.mrb[0].mxu0
  %v8176 = vpop.f32.mrb[0].mxu0
  %v8177 = vadd.f32 0.0, %v8176
  %v8178 = vpop.f32.mrb[0].mxu0
  %8179 = vmatprep.mubr.bf16.mxu0 0
  %8180 = vmatmul.mubr.bf16.gmra.mrb[0].mxu0 %v7899
  %v8181 = vpop.f32.mrb[0].mxu0
  %v8182 = vadd.f32 0.0, %v8181
  %v8183 = vpop.f32.mrb[0].mxu0
  %v8184 = vpop.f32.mrb[0].mxu0
  %v8185 = vadd.f32 0.0, %v8184
  %v8186 = vpop.f32.mrb[0].mxu0
  %8187 = vmatprep.mubr.bf16.mxu0 0
  %8188 = vmatmul.mubr.bf16.gmra.mrb[0].mxu0 %v7902
  %v8189 = vpop.f32.mrb[0].mxu0
  %v8190 = vadd.f32 0.0, %v8189
  %v8191 = vpop.f32.mrb[0].mxu0
  %v8192 = vpop.f32.mrb[0].mxu0
  %v8193 = vadd.f32 0.0, %v8192
  %v8194 = vpop.f32.mrb[0].mxu0
  %8195 = vdwg.mxu0
  %v8196 = vadd.f32 %v7456, %v7942
  %v8197 = vadd.f32 %v7459, %v7945
  %v8198 = vadd.f32 %v7464, %v7950
  %v8199 = vadd.f32 %v7467, %v7953
  %v8200 = vadd.f32 %v7472, %v7958
  %v8201 = vadd.f32 %v7475, %v7961
  %v8202 = vadd.f32 %v7480, %v7966
  %v8203 = vadd.f32 %v7483, %v7969
  %v8204 = vadd.f32 %v7488, %v7974
  %v8205 = vadd.f32 %v7491, %v7977
  %v8206 = vadd.f32 %v7496, %v7982
  %v8207 = vadd.f32 %v7499, %v7985
  %v8208 = vadd.f32 %v7504, %v7990
  %v8209 = vadd.f32 %v7507, %v7993
  %v8210 = vadd.f32 %v7512, %v7998
  %v8211 = vadd.f32 %v7515, %v8001
  %v8212 = vadd.f32 %v7520, %v8006
  %v8213 = vadd.f32 %v7523, %v8009
  %v8214 = vadd.f32 %v7528, %v8014
  %v8215 = vadd.f32 %v7531, %v8017
  %v8216 = vadd.f32 %v7536, %v8022
  %v8217 = vadd.f32 %v7539, %v8025
  %v8218 = vadd.f32 %v7544, %v8030
  %v8219 = vadd.f32 %v7547, %v8033
  %v8220 = vadd.f32 %v7552, %v8038
  %v8221 = vadd.f32 %v7555, %v8041
  %v8222 = vadd.f32 %v7560, %v8046
  %v8223 = vadd.f32 %v7563, %v8049
  %v8224 = vadd.f32 %v7568, %v8054
  %v8225 = vadd.f32 %v7571, %v8057
  %v8226 = vadd.f32 %v7576, %v8062
  %v8227 = vadd.f32 %v7579, %v8065
  %v8228 = vadd.f32 %v7584, %v8070
  %v8229 = vadd.f32 %v7587, %v8073
  %v8230 = vadd.f32 %v7592, %v8078
  %v8231 = vadd.f32 %v7595, %v8081
  %v8232 = vadd.f32 %v7600, %v8086
  %v8233 = vadd.f32 %v7603, %v8089
  %v8234 = vadd.f32 %v7608, %v8094
  %v8235 = vadd.f32 %v7611, %v8097
  %v8236 = vadd.f32 %v7616, %v8102
  %v8237 = vadd.f32 %v7619, %v8105
  %v8238 = vadd.f32 %v7624, %v8110
  %v8239 = vadd.f32 %v7627, %v8113
  %v8240 = vadd.f32 %v7632, %v8118
  %v8241 = vadd.f32 %v7635, %v8121
  %v8242 = vadd.f32 %v7640, %v8126
  %v8243 = vadd.f32 %v7643, %v8129
  %v8244 = vadd.f32 %v7648, %v8134
  %v8245 = vadd.f32 %v7651, %v8137
  %v8246 = vadd.f32 %v7656, %v8142
  %v8247 = vadd.f32 %v7659, %v8145
  %v8248 = vadd.f32 %v7664, %v8150
  %v8249 = vadd.f32 %v7667, %v8153
  %v8250 = vadd.f32 %v7672, %v8158
  %v8251 = vadd.f32 %v7675, %v8161
  %v8252 = vadd.f32 %v7680, %v8166
  %v8253 = vadd.f32 %v7683, %v8169
  %v8254 = vadd.f32 %v7688, %v8174
  %v8255 = vadd.f32 %v7691, %v8177
  %v8256 = vadd.f32 %v7696, %v8182
  %v8257 = vadd.f32 %v7699, %v8185
  %v8258 = vadd.f32 %v7704, %v8190
  %v8259 = vadd.f32 %v7707, %v8193
  %v8260 = vld [vmem:[#allocation3 + $0x9] sm:$0xff]
  %v8261 = vld [vmem:[#allocation3 + $0x11] sm:$0xff]
  %v8262 = vld [vmem:[#allocation3 + $0x29] sm:$0xff]
  %v8263 = vld [vmem:[#allocation3 + $0x31] sm:$0xff]
  %v8264 = vld [vmem:[#allocation3 + $0x49] sm:$0xff]
  %v8265 = vld [vmem:[#allocation3 + $0x51] sm:$0xff]
  %v8266 = vld [vmem:[#allocation3 + $0x69] sm:$0xff]
  %v8267 = vld [vmem:[#allocation3 + $0x71] sm:$0xff]
  %v8268 = vld [vmem:[#allocation3 + $0x89] sm:$0xff]
  %v8269 = vld [vmem:[#allocation3 + $0x91] sm:$0xff]
  %v8270 = vld [vmem:[#allocation3 + $0xa9] sm:$0xff]
  %v8271 = vld [vmem:[#allocation3 + $0xb1] sm:$0xff]
  %v8272 = vld [vmem:[#allocation3 + $0xc9] sm:$0xff]
  %v8273 = vld [vmem:[#allocation3 + $0xd1] sm:$0xff]
  %v8274 = vld [vmem:[#allocation3 + $0xe9] sm:$0xff]
  %v8275 = vld [vmem:[#allocation3 + $0xf1] sm:$0xff]
  %v8276 = vld [vmem:[#allocation3 + $0x109] sm:$0xff]
  %v8277 = vld [vmem:[#allocation3 + $0x111] sm:$0xff]
  %v8278 = vld [vmem:[#allocation3 + $0x129] sm:$0xff]
  %v8279 = vld [vmem:[#allocation3 + $0x131] sm:$0xff]
  %v8280 = vld [vmem:[#allocation3 + $0x149] sm:$0xff]
  %v8281 = vld [vmem:[#allocation3 + $0x151] sm:$0xff]
  %v8282 = vld [vmem:[#allocation3 + $0x169] sm:$0xff]
  %v8283 = vld [vmem:[#allocation3 + $0x171] sm:$0xff]
  %v8284 = vld [vmem:[#allocation3 + $0x189] sm:$0xff]
  %v8285 = vld [vmem:[#allocation3 + $0x191] sm:$0xff]
  %v8286 = vld [vmem:[#allocation3 + $0x1a9] sm:$0xff]
  %v8287 = vld [vmem:[#allocation3 + $0x1b1] sm:$0xff]
  %v8288 = vld [vmem:[#allocation3 + $0x1c9] sm:$0xff]
  %v8289 = vld [vmem:[#allocation3 + $0x1d1] sm:$0xff]
  %v8290 = vld [vmem:[#allocation3 + $0x1e9] sm:$0xff]
  %v8291 = vld [vmem:[#allocation3 + $0x1f1] sm:$0xff]
  %v8292 = vld [vmem:[#allocation3 + $0x249] sm:$0xff]
  %v8293 = vld [vmem:[#allocation3 + $0x251] sm:$0xff]
  %v8294 = vld [vmem:[#allocation3 + $0x269] sm:$0xff]
  %v8295 = vld [vmem:[#allocation3 + $0x271] sm:$0xff]
  %v8296 = vld [vmem:[#allocation3 + $0x289] sm:$0xff]
  %v8297 = vld [vmem:[#allocation3 + $0x291] sm:$0xff]
  %v8298 = vld [vmem:[#allocation3 + $0x2a9] sm:$0xff]
  %v8299 = vld [vmem:[#allocation3 + $0x2b1] sm:$0xff]
  %v8300 = vld [vmem:[#allocation3 + $0x2c9] sm:$0xff]
  %v8301 = vld [vmem:[#allocation3 + $0x2d1] sm:$0xff]
  %v8302 = vld [vmem:[#allocation3 + $0x2e9] sm:$0xff]
  %v8303 = vld [vmem:[#allocation3 + $0x2f1] sm:$0xff]
  %v8304 = vld [vmem:[#allocation3 + $0x309] sm:$0xff]
  %v8305 = vld [vmem:[#allocation3 + $0x311] sm:$0xff]
  %v8306 = vld [vmem:[#allocation3 + $0x329] sm:$0xff]
  %v8307 = vld [vmem:[#allocation3 + $0x331] sm:$0xff]
  %v8308 = vld [vmem:[#allocation3 + $0x349] sm:$0xff]
  %v8309 = vld [vmem:[#allocation3 + $0x351] sm:$0xff]
  %v8310 = vld [vmem:[#allocation3 + $0x369] sm:$0xff]
  %v8311 = vld [vmem:[#allocation3 + $0x371] sm:$0xff]
  %v8312 = vld [vmem:[#allocation3 + $0x389] sm:$0xff]
  %v8313 = vld [vmem:[#allocation3 + $0x391] sm:$0xff]
  %v8314 = vld [vmem:[#allocation3 + $0x3a9] sm:$0xff]
  %v8315 = vld [vmem:[#allocation3 + $0x3b1] sm:$0xff]
  %v8316 = vld [vmem:[#allocation3 + $0x3c9] sm:$0xff]
  %v8317 = vld [vmem:[#allocation3 + $0x3d1] sm:$0xff]
  %v8318 = vld [vmem:[#allocation3 + $0x3e9] sm:$0xff]
  %v8319 = vld [vmem:[#allocation3 + $0x3f1] sm:$0xff]
  %v8320 = vld [vmem:[#allocation3 + $0x409] sm:$0xff]
  %v8321 = vld [vmem:[#allocation3 + $0x411] sm:$0xff]
  %v8322 = vld [vmem:[#allocation3 + $0x429] sm:$0xff]
  %v8323 = vld [vmem:[#allocation3 + $0x431] sm:$0xff]
  %v8324 = vpack.c.bf16 %v8261, %v8260
  %v8325 = vpack.c.bf16 %v8263, %v8262
  %v8326 = vpack.c.bf16 %v8265, %v8264
  %v8327 = vpack.c.bf16 %v8267, %v8266
  %v8328 = vpack.c.bf16 %v8269, %v8268
  %v8329 = vpack.c.bf16 %v8271, %v8270
  %v8330 = vpack.c.bf16 %v8273, %v8272
  %v8331 = vpack.c.bf16 %v8275, %v8274
  %v8332 = vpack.c.bf16 %v8277, %v8276
  %v8333 = vpack.c.bf16 %v8279, %v8278
  %v8334 = vpack.c.bf16 %v8281, %v8280
  %v8335 = vpack.c.bf16 %v8283, %v8282
  %v8336 = vpack.c.bf16 %v8285, %v8284
  %v8337 = vpack.c.bf16 %v8287, %v8286
  %v8338 = vpack.c.bf16 %v8289, %v8288
  %v8339 = vpack.c.bf16 %v8291, %v8290
  %v8340 = vpack.c.bf16 %v8293, %v8292
  %v8341 = vpack.c.bf16 %v8295, %v8294
  %v8342 = vpack.c.bf16 %v8297, %v8296
  %v8343 = vpack.c.bf16 %v8299, %v8298
  %v8344 = vpack.c.bf16 %v8301, %v8300
  %v8345 = vpack.c.bf16 %v8303, %v8302
  %v8346 = vpack.c.bf16 %v8305, %v8304
  %v8347 = vpack.c.bf16 %v8307, %v8306
  %v8348 = vpack.c.bf16 %v8309, %v8308
  %v8349 = vpack.c.bf16 %v8311, %v8310
  %v8350 = vpack.c.bf16 %v8313, %v8312
  %v8351 = vpack.c.bf16 %v8315, %v8314
  %v8352 = vpack.c.bf16 %v8317, %v8316
  %v8353 = vpack.c.bf16 %v8319, %v8318
  %v8354 = vpack.c.bf16 %v8321, %v8320
  %v8355 = vpack.c.bf16 %v8323, %v8322
  %s8356 = scalar_lea.vmem %s2, 8
  %v8357 = vld [vmem:[%s8356] sm:$0xf]
  %v8359 = vsel %vm5895, %v8324, 0
  %v8362 = vsel %vm5895, %v8325, 0
  %v8365 = vsel %vm5895, %v8326, 0
  %v8368 = vsel %vm5895, %v8327, 0
  %v8371 = vsel %vm5895, %v8328, 0
  %v8374 = vsel %vm5895, %v8329, 0
  %v8377 = vsel %vm5895, %v8330, 0
  %v8380 = vsel %vm5895, %v8331, 0
  %v8383 = vsel %vm5895, %v8332, 0
  %v8386 = vsel %vm5895, %v8333, 0
  %v8389 = vsel %vm5895, %v8334, 0
  %v8392 = vsel %vm5895, %v8335, 0
  %v8395 = vsel %vm5895, %v8336, 0
  %v8398 = vsel %vm5895, %v8337, 0
  %v8401 = vsel %vm5895, %v8338, 0
  %v8404 = vsel %vm5895, %v8339, 0
  %v8407 = vsel %vm5895, %v8340, 0
  %v8410 = vsel %vm5895, %v8341, 0
  %v8413 = vsel %vm5895, %v8342, 0
  %v8416 = vsel %vm5895, %v8343, 0
  %v8419 = vsel %vm5895, %v8344, 0
  %v8422 = vsel %vm5895, %v8345, 0
  %v8425 = vsel %vm5895, %v8346, 0
  %v8428 = vsel %vm5895, %v8347, 0
  %v8431 = vsel %vm5895, %v8348, 0
  %v8434 = vsel %vm5895, %v8349, 0
  %v8437 = vsel %vm5895, %v8350, 0
  %v8440 = vsel %vm5895, %v8351, 0
  %v8443 = vsel %vm5895, %v8352, 0
  %v8446 = vsel %vm5895, %v8353, 0
  %v8449 = vsel %vm5895, %v8354, 0
  %v8452 = vsel %vm5895, %v8355, 0
  %v8455 = vsel %vm7029, %v8357, 0
  %8457 = vmatprep.subr.bf16.mxu0 0
  %8458 = vmatpush1.bf16.msra.mxu0 %v8455
  %8459 = vmatprep.subr.bf16.mxu0 0
  %8460 = vmatpush1.bf16.msra.mxu0 0
  %8461 = vmatprep.subr.bf16.mxu0 0
  %8462 = vmatpush1.bf16.msra.mxu0 0
  %8463 = vmatprep.subr.bf16.mxu0 0
  %8464 = vmatpush1.bf16.msra.mxu0 0
  %8465 = vmatprep.subr.bf16.mxu0 0
  %8466 = vmatpush1.bf16.msra.mxu0 0
  %8467 = vmatprep.subr.bf16.mxu0 0
  %8468 = vmatpush1.bf16.msra.mxu0 0
  %8469 = vmatprep.subr.bf16.mxu0 0
  %8470 = vmatpush1.bf16.msra.mxu0 0
  %8471 = vmatprep.subr.bf16.mxu0 0
  %8472 = vmatpush1.bf16.msra.mxu0 0
  %8473 = vmatprep.subr.bf16.mxu0 0
  %8474 = vmatpush1.bf16.msra.mxu0 0
  %8475 = vmatprep.subr.bf16.mxu0 0
  %8476 = vmatpush1.bf16.msra.mxu0 0
  %8477 = vmatprep.subr.bf16.mxu0 0
  %8478 = vmatpush1.bf16.msra.mxu0 0
  %8479 = vmatprep.subr.bf16.mxu0 0
  %8480 = vmatpush1.bf16.msra.mxu0 0
  %8481 = vmatprep.subr.bf16.mxu0 0
  %8482 = vmatpush1.bf16.msra.mxu0 0
  %8483 = vmatprep.subr.bf16.mxu0 0
  %8484 = vmatpush1.bf16.msra.mxu0 0
  %8485 = vmatprep.subr.bf16.mxu0 0
  %8486 = vmatpush1.bf16.msra.mxu0 0
  %8487 = vmatprep.subr.bf16.mxu0 0
  %8488 = vmatpush1.bf16.msra.mxu0 0
  %8489 = vmatprep.mubr.bf16.mxu0 0
  %8490 = vmatmul.mubr.bf16.gmra.mrb[0].mxu0 %v8359
  %v8491 = vpop.f32.mrb[0].mxu0
  %v8492 = vadd.f32 0.0, %v8491
  %v8493 = vpop.f32.mrb[0].mxu0
  %v8494 = vpop.f32.mrb[0].mxu0
  %v8495 = vadd.f32 0.0, %v8494
  %v8496 = vpop.f32.mrb[0].mxu0
  %8497 = vmatprep.mubr.bf16.mxu0 0
  %8498 = vmatmul.mubr.bf16.gmra.mrb[0].mxu0 %v8362
  %v8499 = vpop.f32.mrb[0].mxu0
  %v8500 = vadd.f32 0.0, %v8499
  %v8501 = vpop.f32.mrb[0].mxu0
  %v8502 = vpop.f32.mrb[0].mxu0
  %v8503 = vadd.f32 0.0, %v8502
  %v8504 = vpop.f32.mrb[0].mxu0
  %8505 = vmatprep.mubr.bf16.mxu0 0
  %8506 = vmatmul.mubr.bf16.gmra.mrb[0].mxu0 %v8365
  %v8507 = vpop.f32.mrb[0].mxu0
  %v8508 = vadd.f32 0.0, %v8507
  %v8509 = vpop.f32.mrb[0].mxu0
  %v8510 = vpop.f32.mrb[0].mxu0
  %v8511 = vadd.f32 0.0, %v8510
  %v8512 = vpop.f32.mrb[0].mxu0
  %8513 = vmatprep.mubr.bf16.mxu0 0
  %8514 = vmatmul.mubr.bf16.gmra.mrb[0].mxu0 %v8368
  %v8515 = vpop.f32.mrb[0].mxu0
  %v8516 = vadd.f32 0.0, %v8515
  %v8517 = vpop.f32.mrb[0].mxu0
  %v8518 = vpop.f32.mrb[0].mxu0
  %v8519 = vadd.f32 0.0, %v8518
  %v8520 = vpop.f32.mrb[0].mxu0
  %8521 = vmatprep.mubr.bf16.mxu0 0
  %8522 = vmatmul.mubr.bf16.gmra.mrb[0].mxu0 %v8371
  %v8523 = vpop.f32.mrb[0].mxu0
  %v8524 = vadd.f32 0.0, %v8523
  %v8525 = vpop.f32.mrb[0].mxu0
  %v8526 = vpop.f32.mrb[0].mxu0
  %v8527 = vadd.f32 0.0, %v8526
  %v8528 = vpop.f32.mrb[0].mxu0
  %8529 = vmatprep.mubr.bf16.mxu0 0
  %8530 = vmatmul.mubr.bf16.gmra.mrb[0].mxu0 %v8374
  %v8531 = vpop.f32.mrb[0].mxu0
  %v8532 = vadd.f32 0.0, %v8531
  %v8533 = vpop.f32.mrb[0].mxu0
  %v8534 = vpop.f32.mrb[0].mxu0
  %v8535 = vadd.f32 0.0, %v8534
  %v8536 = vpop.f32.mrb[0].mxu0
  %8537 = vmatprep.mubr.bf16.mxu0 0
  %8538 = vmatmul.mubr.bf16.gmra.mrb[0].mxu0 %v8377
  %v8539 = vpop.f32.mrb[0].mxu0
  %v8540 = vadd.f32 0.0, %v8539
  %v8541 = vpop.f32.mrb[0].mxu0
  %v8542 = vpop.f32.mrb[0].mxu0
  %v8543 = vadd.f32 0.0, %v8542
  %v8544 = vpop.f32.mrb[0].mxu0
  %8545 = vmatprep.mubr.bf16.mxu0 0
  %8546 = vmatmul.mubr.bf16.gmra.mrb[0].mxu0 %v8380
  %v8547 = vpop.f32.mrb[0].mxu0
  %v8548 = vadd.f32 0.0, %v8547
  %v8549 = vpop.f32.mrb[0].mxu0
  %v8550 = vpop.f32.mrb[0].mxu0
  %v8551 = vadd.f32 0.0, %v8550
  %v8552 = vpop.f32.mrb[0].mxu0
  %8553 = vmatprep.mubr.bf16.mxu0 0
  %8554 = vmatmul.mubr.bf16.gmra.mrb[0].mxu0 %v8383
  %v8555 = vpop.f32.mrb[0].mxu0
  %v8556 = vadd.f32 0.0, %v8555
  %v8557 = vpop.f32.mrb[0].mxu0
  %v8558 = vpop.f32.mrb[0].mxu0
  %v8559 = vadd.f32 0.0, %v8558
  %v8560 = vpop.f32.mrb[0].mxu0
  %8561 = vmatprep.mubr.bf16.mxu0 0
  %8562 = vmatmul.mubr.bf16.gmra.mrb[0].mxu0 %v8386
  %v8563 = vpop.f32.mrb[0].mxu0
  %v8564 = vadd.f32 0.0, %v8563
  %v8565 = vpop.f32.mrb[0].mxu0
  %v8566 = vpop.f32.mrb[0].mxu0
  %v8567 = vadd.f32 0.0, %v8566
  %v8568 = vpop.f32.mrb[0].mxu0
  %8569 = vmatprep.mubr.bf16.mxu0 0
  %8570 = vmatmul.mubr.bf16.gmra.mrb[0].mxu0 %v8389
  %v8571 = vpop.f32.mrb[0].mxu0
  %v8572 = vadd.f32 0.0, %v8571
  %v8573 = vpop.f32.mrb[0].mxu0
  %v8574 = vpop.f32.mrb[0].mxu0
  %v8575 = vadd.f32 0.0, %v8574
  %v8576 = vpop.f32.mrb[0].mxu0
  %8577 = vmatprep.mubr.bf16.mxu0 0
  %8578 = vmatmul.mubr.bf16.gmra.mrb[0].mxu0 %v8392
  %v8579 = vpop.f32.mrb[0].mxu0
  %v8580 = vadd.f32 0.0, %v8579
  %v8581 = vpop.f32.mrb[0].mxu0
  %v8582 = vpop.f32.mrb[0].mxu0
  %v8583 = vadd.f32 0.0, %v8582
  %v8584 = vpop.f32.mrb[0].mxu0
  %8585 = vmatprep.mubr.bf16.mxu0 0
  %8586 = vmatmul.mubr.bf16.gmra.mrb[0].mxu0 %v8395
  %v8587 = vpop.f32.mrb[0].mxu0
  %v8588 = vadd.f32 0.0, %v8587
  %v8589 = vpop.f32.mrb[0].mxu0
  %v8590 = vpop.f32.mrb[0].mxu0
  %v8591 = vadd.f32 0.0, %v8590
  %v8592 = vpop.f32.mrb[0].mxu0
  %8593 = vmatprep.mubr.bf16.mxu0 0
  %8594 = vmatmul.mubr.bf16.gmra.mrb[0].mxu0 %v8398
  %v8595 = vpop.f32.mrb[0].mxu0
  %v8596 = vadd.f32 0.0, %v8595
  %v8597 = vpop.f32.mrb[0].mxu0
  %v8598 = vpop.f32.mrb[0].mxu0
  %v8599 = vadd.f32 0.0, %v8598
  %v8600 = vpop.f32.mrb[0].mxu0
  %8601 = vmatprep.mubr.bf16.mxu0 0
  %8602 = vmatmul.mubr.bf16.gmra.mrb[0].mxu0 %v8401
  %v8603 = vpop.f32.mrb[0].mxu0
  %v8604 = vadd.f32 0.0, %v8603
  %v8605 = vpop.f32.mrb[0].mxu0
  %v8606 = vpop.f32.mrb[0].mxu0
  %v8607 = vadd.f32 0.0, %v8606
  %v8608 = vpop.f32.mrb[0].mxu0
  %8609 = vmatprep.mubr.bf16.mxu0 0
  %8610 = vmatmul.mubr.bf16.gmra.mrb[0].mxu0 %v8404
  %v8611 = vpop.f32.mrb[0].mxu0
  %v8612 = vadd.f32 0.0, %v8611
  %v8613 = vpop.f32.mrb[0].mxu0
  %v8614 = vpop.f32.mrb[0].mxu0
  %v8615 = vadd.f32 0.0, %v8614
  %v8616 = vpop.f32.mrb[0].mxu0
  %8617 = vmatprep.mubr.bf16.mxu0 0
  %8618 = vmatmul.mubr.bf16.gmra.mrb[0].mxu0 %v8407
  %v8619 = vpop.f32.mrb[0].mxu0
  %v8620 = vadd.f32 0.0, %v8619
  %v8621 = vpop.f32.mrb[0].mxu0
  %v8622 = vpop.f32.mrb[0].mxu0
  %v8623 = vadd.f32 0.0, %v8622
  %v8624 = vpop.f32.mrb[0].mxu0
  %8625 = vmatprep.mubr.bf16.mxu0 0
  %8626 = vmatmul.mubr.bf16.gmra.mrb[0].mxu0 %v8410
  %v8627 = vpop.f32.mrb[0].mxu0
  %v8628 = vadd.f32 0.0, %v8627
  %v8629 = vpop.f32.mrb[0].mxu0
  %v8630 = vpop.f32.mrb[0].mxu0
  %v8631 = vadd.f32 0.0, %v8630
  %v8632 = vpop.f32.mrb[0].mxu0
  %8633 = vmatprep.mubr.bf16.mxu0 0
  %8634 = vmatmul.mubr.bf16.gmra.mrb[0].mxu0 %v8413
  %v8635 = vpop.f32.mrb[0].mxu0
  %v8636 = vadd.f32 0.0, %v8635
  %v8637 = vpop.f32.mrb[0].mxu0
  %v8638 = vpop.f32.mrb[0].mxu0
  %v8639 = vadd.f32 0.0, %v8638
  %v8640 = vpop.f32.mrb[0].mxu0
  %8641 = vmatprep.mubr.bf16.mxu0 0
  %8642 = vmatmul.mubr.bf16.gmra.mrb[0].mxu0 %v8416
  %v8643 = vpop.f32.mrb[0].mxu0
  %v8644 = vadd.f32 0.0, %v8643
  %v8645 = vpop.f32.mrb[0].mxu0
  %v8646 = vpop.f32.mrb[0].mxu0
  %v8647 = vadd.f32 0.0, %v8646
  %v8648 = vpop.f32.mrb[0].mxu0
  %8649 = vmatprep.mubr.bf16.mxu0 0
  %8650 = vmatmul.mubr.bf16.gmra.mrb[0].mxu0 %v8419
  %v8651 = vpop.f32.mrb[0].mxu0
  %v8652 = vadd.f32 0.0, %v8651
  %v8653 = vpop.f32.mrb[0].mxu0
  %v8654 = vpop.f32.mrb[0].mxu0
  %v8655 = vadd.f32 0.0, %v8654
  %v8656 = vpop.f32.mrb[0].mxu0
  %8657 = vmatprep.mubr.bf16.mxu0 0
  %8658 = vmatmul.mubr.bf16.gmra.mrb[0].mxu0 %v8422
  %v8659 = vpop.f32.mrb[0].mxu0
  %v8660 = vadd.f32 0.0, %v8659
  %v8661 = vpop.f32.mrb[0].mxu0
  %v8662 = vpop.f32.mrb[0].mxu0
  %v8663 = vadd.f32 0.0, %v8662
  %v8664 = vpop.f32.mrb[0].mxu0
  %8665 = vmatprep.mubr.bf16.mxu0 0
  %8666 = vmatmul.mubr.bf16.gmra.mrb[0].mxu0 %v8425
  %v8667 = vpop.f32.mrb[0].mxu0
  %v8668 = vadd.f32 0.0, %v8667
  %v8669 = vpop.f32.mrb[0].mxu0
  %v8670 = vpop.f32.mrb[0].mxu0
  %v8671 = vadd.f32 0.0, %v8670
  %v8672 = vpop.f32.mrb[0].mxu0
  %8673 = vmatprep.mubr.bf16.mxu0 0
  %8674 = vmatmul.mubr.bf16.gmra.mrb[0].mxu0 %v8428
  %v8675 = vpop.f32.mrb[0].mxu0
  %v8676 = vadd.f32 0.0, %v8675
  %v8677 = vpop.f32.mrb[0].mxu0
  %v8678 = vpop.f32.mrb[0].mxu0
  %v8679 = vadd.f32 0.0, %v8678
  %v8680 = vpop.f32.mrb[0].mxu0
  %8681 = vmatprep.mubr.bf16.mxu0 0
  %8682 = vmatmul.mubr.bf16.gmra.mrb[0].mxu0 %v8431
  %v8683 = vpop.f32.mrb[0].mxu0
  %v8684 = vadd.f32 0.0, %v8683
  %v8685 = vpop.f32.mrb[0].mxu0
  %v8686 = vpop.f32.mrb[0].mxu0
  %v8687 = vadd.f32 0.0, %v8686
  %v8688 = vpop.f32.mrb[0].mxu0
  %8689 = vmatprep.mubr.bf16.mxu0 0
  %8690 = vmatmul.mubr.bf16.gmra.mrb[0].mxu0 %v8434
  %v8691 = vpop.f32.mrb[0].mxu0
  %v8692 = vadd.f32 0.0, %v8691
  %v8693 = vpop.f32.mrb[0].mxu0
  %v8694 = vpop.f32.mrb[0].mxu0
  %v8695 = vadd.f32 0.0, %v8694
  %v8696 = vpop.f32.mrb[0].mxu0
  %8697 = vmatprep.mubr.bf16.mxu0 0
  %8698 = vmatmul.mubr.bf16.gmra.mrb[0].mxu0 %v8437
  %v8699 = vpop.f32.mrb[0].mxu0
  %v8700 = vadd.f32 0.0, %v8699
  %v8701 = vpop.f32.mrb[0].mxu0
  %v8702 = vpop.f32.mrb[0].mxu0
  %v8703 = vadd.f32 0.0, %v8702
  %v8704 = vpop.f32.mrb[0].mxu0
  %8705 = vmatprep.mubr.bf16.mxu0 0
  %8706 = vmatmul.mubr.bf16.gmra.mrb[0].mxu0 %v8440
  %v8707 = vpop.f32.mrb[0].mxu0
  %v8708 = vadd.f32 0.0, %v8707
  %v8709 = vpop.f32.mrb[0].mxu0
  %v8710 = vpop.f32.mrb[0].mxu0
  %v8711 = vadd.f32 0.0, %v8710
  %v8712 = vpop.f32.mrb[0].mxu0
  %8713 = vmatprep.mubr.bf16.mxu0 0
  %8714 = vmatmul.mubr.bf16.gmra.mrb[0].mxu0 %v8443
  %v8715 = vpop.f32.mrb[0].mxu0
  %v8716 = vadd.f32 0.0, %v8715
  %v8717 = vpop.f32.mrb[0].mxu0
  %v8718 = vpop.f32.mrb[0].mxu0
  %v8719 = vadd.f32 0.0, %v8718
  %v8720 = vpop.f32.mrb[0].mxu0
  %8721 = vmatprep.mubr.bf16.mxu0 0
  %8722 = vmatmul.mubr.bf16.gmra.mrb[0].mxu0 %v8446
  %v8723 = vpop.f32.mrb[0].mxu0
  %v8724 = vadd.f32 0.0, %v8723
  %v8725 = vpop.f32.mrb[0].mxu0
  %v8726 = vpop.f32.mrb[0].mxu0
  %v8727 = vadd.f32 0.0, %v8726
  %v8728 = vpop.f32.mrb[0].mxu0
  %8729 = vmatprep.mubr.bf16.mxu0 0
  %8730 = vmatmul.mubr.bf16.gmra.mrb[0].mxu0 %v8449
  %v8731 = vpop.f32.mrb[0].mxu0
  %v8732 = vadd.f32 0.0, %v8731
  %v8733 = vpop.f32.mrb[0].mxu0
  %v8734 = vpop.f32.mrb[0].mxu0
  %v8735 = vadd.f32 0.0, %v8734
  %v8736 = vpop.f32.mrb[0].mxu0
  %8737 = vmatprep.mubr.bf16.mxu0 0
  %8738 = vmatmul.mubr.bf16.gmra.mrb[0].mxu0 %v8452
  %v8739 = vpop.f32.mrb[0].mxu0
  %v8740 = vadd.f32 0.0, %v8739
  %v8741 = vpop.f32.mrb[0].mxu0
  %v8742 = vpop.f32.mrb[0].mxu0
  %v8743 = vadd.f32 0.0, %v8742
  %v8744 = vpop.f32.mrb[0].mxu0
  %8745 = vdwg.mxu0
  %v8746 = vadd.f32 %v8196, %v8492
  %v8747 = vadd.f32 %v8197, %v8495
  %v8748 = vadd.f32 %v8198, %v8500
  %v8749 = vadd.f32 %v8199, %v8503
  %v8750 = vadd.f32 %v8200, %v8508
  %v8751 = vadd.f32 %v8201, %v8511
  %v8752 = vadd.f32 %v8202, %v8516
  %v8753 = vadd.f32 %v8203, %v8519
  %v8754 = vadd.f32 %v8204, %v8524
  %v8755 = vadd.f32 %v8205, %v8527
  %v8756 = vadd.f32 %v8206, %v8532
  %v8757 = vadd.f32 %v8207, %v8535
  %v8758 = vadd.f32 %v8208, %v8540
  %v8759 = vadd.f32 %v8209, %v8543
  %v8760 = vadd.f32 %v8210, %v8548
  %v8761 = vadd.f32 %v8211, %v8551
  %v8762 = vadd.f32 %v8212, %v8556
  %v8763 = vadd.f32 %v8213, %v8559
  %v8764 = vadd.f32 %v8214, %v8564
  %v8765 = vadd.f32 %v8215, %v8567
  %v8766 = vadd.f32 %v8216, %v8572
  %v8767 = vadd.f32 %v8217, %v8575
  %v8768 = vadd.f32 %v8218, %v8580
  %v8769 = vadd.f32 %v8219, %v8583
  %v8770 = vadd.f32 %v8220, %v8588
  %v8771 = vadd.f32 %v8221, %v8591
  %v8772 = vadd.f32 %v8222, %v8596
  %v8773 = vadd.f32 %v8223, %v8599
  %v8774 = vadd.f32 %v8224, %v8604
  %v8775 = vadd.f32 %v8225, %v8607
  %v8776 = vadd.f32 %v8226, %v8612
  %v8777 = vadd.f32 %v8227, %v8615
  %v8778 = vadd.f32 %v8228, %v8620
  %v8779 = vadd.f32 %v8229, %v8623
  %v8780 = vadd.f32 %v8230, %v8628
  %v8781 = vadd.f32 %v8231, %v8631
  %v8782 = vadd.f32 %v8232, %v8636
  %v8783 = vadd.f32 %v8233, %v8639
  %v8784 = vadd.f32 %v8234, %v8644
  %v8785 = vadd.f32 %v8235, %v8647
  %v8786 = vadd.f32 %v8236, %v8652
  %v8787 = vadd.f32 %v8237, %v8655
  %v8788 = vadd.f32 %v8238, %v8660
  %v8789 = vadd.f32 %v8239, %v8663
  %v8790 = vadd.f32 %v8240, %v8668
  %v8791 = vadd.f32 %v8241, %v8671
  %v8792 = vadd.f32 %v8242, %v8676
  %v8793 = vadd.f32 %v8243, %v8679
  %v8794 = vadd.f32 %v8244, %v8684
  %v8795 = vadd.f32 %v8245, %v8687
  %v8796 = vadd.f32 %v8246, %v8692
  %v8797 = vadd.f32 %v8247, %v8695
  %v8798 = vadd.f32 %v8248, %v8700
  %v8799 = vadd.f32 %v8249, %v8703
  %v8800 = vadd.f32 %v8250, %v8708
  %v8801 = vadd.f32 %v8251, %v8711
  %v8802 = vadd.f32 %v8252, %v8716
  %v8803 = vadd.f32 %v8253, %v8719
  %v8804 = vadd.f32 %v8254, %v8724
  %v8805 = vadd.f32 %v8255, %v8727
  %v8806 = vadd.f32 %v8256, %v8732
  %v8807 = vadd.f32 %v8257, %v8735
  %v8808 = vadd.f32 %v8258, %v8740
  %v8809 = vadd.f32 %v8259, %v8743
  %v8810 = vld [vmem:[%s6707 + $0x7] sm:$0xff]
  %v8811 = vld [vmem:[%s6707 + $0xf] sm:$0xff]
  %v8812 = vld [vmem:[%s6707 + $0x27] sm:$0xff]
  %v8813 = vld [vmem:[%s6707 + $0x2f] sm:$0xff]
  %v8814 = vld [vmem:[%s6707 + $0x47] sm:$0xff]
  %v8815 = vld [vmem:[%s6707 + $0x4f] sm:$0xff]
  %v8816 = vld [vmem:[%s6707 + $0x67] sm:$0xff]
  %v8817 = vld [vmem:[%s6707 + $0x6f] sm:$0xff]
  %v8818 = vld [vmem:[%s6707 + $0x87] sm:$0xff]
  %v8819 = vld [vmem:[%s6707 + $0x8f] sm:$0xff]
  %v8820 = vld [vmem:[%s6707 + $0xa7] sm:$0xff]
  %v8821 = vld [vmem:[%s6707 + $0xaf] sm:$0xff]
  %v8822 = vld [vmem:[%s6707 + $0xc7] sm:$0xff]
  %v8823 = vld [vmem:[%s6707 + $0xcf] sm:$0xff]
  %v8824 = vld [vmem:[%s6707 + $0xe7] sm:$0xff]
  %v8825 = vld [vmem:[%s6707 + $0xef] sm:$0xff]
  %v8826 = vld [vmem:[%s6707 + $0x107] sm:$0xff]
  %v8827 = vld [vmem:[%s6707 + $0x10f] sm:$0xff]
  %v8828 = vld [vmem:[%s6707 + $0x127] sm:$0xff]
  %v8829 = vld [vmem:[%s6707 + $0x12f] sm:$0xff]
  %v8830 = vld [vmem:[%s6707 + $0x147] sm:$0xff]
  %v8831 = vld [vmem:[%s6707 + $0x14f] sm:$0xff]
  %v8832 = vld [vmem:[%s6707 + $0x167] sm:$0xff]
  %v8833 = vld [vmem:[%s6707 + $0x16f] sm:$0xff]
  %v8834 = vld [vmem:[%s6707 + $0x187] sm:$0xff]
  %v8835 = vld [vmem:[%s6707 + $0x18f] sm:$0xff]
  %v8836 = vld [vmem:[%s6707 + $0x1a7] sm:$0xff]
  %v8837 = vld [vmem:[%s6707 + $0x1af] sm:$0xff]
  %v8838 = vld [vmem:[%s6707 + $0x1c7] sm:$0xff]
  %v8839 = vld [vmem:[%s6707 + $0x1cf] sm:$0xff]
  %v8840 = vld [vmem:[%s6707 + $0x1e7] sm:$0xff]
  %v8841 = vld [vmem:[%s6707 + $0x1ef] sm:$0xff]
  %v8842 = vld [vmem:[%s6707 + $0x247] sm:$0xff]
  %v8843 = vld [vmem:[%s6707 + $0x24f] sm:$0xff]
  %v8844 = vld [vmem:[%s6707 + $0x267] sm:$0xff]
  %v8845 = vld [vmem:[%s6707 + $0x26f] sm:$0xff]
  %v8846 = vld [vmem:[%s6707 + $0x287] sm:$0xff]
  %v8847 = vld [vmem:[%s6707 + $0x28f] sm:$0xff]
  %v8848 = vld [vmem:[%s6707 + $0x2a7] sm:$0xff]
  %v8849 = vld [vmem:[%s6707 + $0x2af] sm:$0xff]
  %v8850 = vld [vmem:[%s6707 + $0x2c7] sm:$0xff]
  %v8851 = vld [vmem:[%s6707 + $0x2cf] sm:$0xff]
  %v8852 = vld [vmem:[%s6707 + $0x2e7] sm:$0xff]
  %v8853 = vld [vmem:[%s6707 + $0x2ef] sm:$0xff]
  %v8854 = vld [vmem:[%s6707 + $0x307] sm:$0xff]
  %v8855 = vld [vmem:[%s6707 + $0x30f] sm:$0xff]
  %v8856 = vld [vmem:[%s6707 + $0x327] sm:$0xff]
  %v8857 = vld [vmem:[%s6707 + $0x32f] sm:$0xff]
  %v8858 = vld [vmem:[%s6707 + $0x347] sm:$0xff]
  %v8859 = vld [vmem:[%s6707 + $0x34f] sm:$0xff]
  %v8860 = vld [vmem:[%s6707 + $0x367] sm:$0xff]
  %v8861 = vld [vmem:[%s6707 + $0x36f] sm:$0xff]
  %v8862 = vld [vmem:[%s6707 + $0x387] sm:$0xff]
  %v8863 = vld [vmem:[%s6707 + $0x38f] sm:$0xff]
  %v8864 = vld [vmem:[%s6707 + $0x3a7] sm:$0xff]
  %v8865 = vld [vmem:[%s6707 + $0x3af] sm:$0xff]
  %v8866 = vld [vmem:[%s6707 + $0x3c7] sm:$0xff]
  %v8867 = vld [vmem:[%s6707 + $0x3cf] sm:$0xff]
  %v8868 = vld [vmem:[%s6707 + $0x3e7] sm:$0xff]
  %v8869 = vld [vmem:[%s6707 + $0x3ef] sm:$0xff]
  %v8870 = vld [vmem:[%s6707 + $0x407] sm:$0xff]
  %v8871 = vld [vmem:[%s6707 + $0x40f] sm:$0xff]
  %v8872 = vld [vmem:[%s6707 + $0x427] sm:$0xff]
  %v8873 = vld [vmem:[%s6707 + $0x42f] sm:$0xff]
  %v8874 = vpack.c.bf16 %v8811, %v8810
  %v8875 = vpack.c.bf16 %v8813, %v8812
  %v8876 = vpack.c.bf16 %v8815, %v8814
  %v8877 = vpack.c.bf16 %v8817, %v8816
  %v8878 = vpack.c.bf16 %v8819, %v8818
  %v8879 = vpack.c.bf16 %v8821, %v8820
  %v8880 = vpack.c.bf16 %v8823, %v8822
  %v8881 = vpack.c.bf16 %v8825, %v8824
  %v8882 = vpack.c.bf16 %v8827, %v8826
  %v8883 = vpack.c.bf16 %v8829, %v8828
  %v8884 = vpack.c.bf16 %v8831, %v8830
  %v8885 = vpack.c.bf16 %v8833, %v8832
  %v8886 = vpack.c.bf16 %v8835, %v8834
  %v8887 = vpack.c.bf16 %v8837, %v8836
  %v8888 = vpack.c.bf16 %v8839, %v8838
  %v8889 = vpack.c.bf16 %v8841, %v8840
  %v8890 = vpack.c.bf16 %v8843, %v8842
  %v8891 = vpack.c.bf16 %v8845, %v8844
  %v8892 = vpack.c.bf16 %v8847, %v8846
  %v8893 = vpack.c.bf16 %v8849, %v8848
  %v8894 = vpack.c.bf16 %v8851, %v8850
  %v8895 = vpack.c.bf16 %v8853, %v8852
  %v8896 = vpack.c.bf16 %v8855, %v8854
  %v8897 = vpack.c.bf16 %v8857, %v8856
  %v8898 = vpack.c.bf16 %v8859, %v8858
  %v8899 = vpack.c.bf16 %v8861, %v8860
  %v8900 = vpack.c.bf16 %v8863, %v8862
  %v8901 = vpack.c.bf16 %v8865, %v8864
  %v8902 = vpack.c.bf16 %v8867, %v8866
  %v8903 = vpack.c.bf16 %v8869, %v8868
  %v8904 = vpack.c.bf16 %v8871, %v8870
  %v8905 = vpack.c.bf16 %v8873, %v8872
  %s8906 = scalar_lea.vmem %s2, 12
  %v8907 = vld [vmem:[%s8906] sm:$0xf]
  %v8909 = vsel %vm5895, %v8874, 0
  %v8912 = vsel %vm5895, %v8875, 0
  %v8915 = vsel %vm5895, %v8876, 0
  %v8918 = vsel %vm5895, %v8877, 0
  %v8921 = vsel %vm5895, %v8878, 0
  %v8924 = vsel %vm5895, %v8879, 0
  %v8927 = vsel %vm5895, %v8880, 0
  %v8930 = vsel %vm5895, %v8881, 0
  %v8933 = vsel %vm5895, %v8882, 0
  %v8936 = vsel %vm5895, %v8883, 0
  %v8939 = vsel %vm5895, %v8884, 0
  %v8942 = vsel %vm5895, %v8885, 0
  %v8945 = vsel %vm5895, %v8886, 0
  %v8948 = vsel %vm5895, %v8887, 0
  %v8951 = vsel %vm5895, %v8888, 0
  %v8954 = vsel %vm5895, %v8889, 0
  %v8957 = vsel %vm5895, %v8890, 0
  %v8960 = vsel %vm5895, %v8891, 0
  %v8963 = vsel %vm5895, %v8892, 0
  %v8966 = vsel %vm5895, %v8893, 0
  %v8969 = vsel %vm5895, %v8894, 0
  %v8972 = vsel %vm5895, %v8895, 0
  %v8975 = vsel %vm5895, %v8896, 0
  %v8978 = vsel %vm5895, %v8897, 0
  %v8981 = vsel %vm5895, %v8898, 0
  %v8984 = vsel %vm5895, %v8899, 0
  %v8987 = vsel %vm5895, %v8900, 0
  %v8990 = vsel %vm5895, %v8901, 0
  %v8993 = vsel %vm5895, %v8902, 0
  %v8996 = vsel %vm5895, %v8903, 0
  %v8999 = vsel %vm5895, %v8904, 0
  %v9002 = vsel %vm5895, %v8905, 0
  %v9005 = vsel %vm7029, %v8907, 0
  %9007 = vmatprep.subr.bf16.mxu0 0
  %9008 = vmatpush1.bf16.msra.mxu0 %v9005
  %9009 = vmatprep.subr.bf16.mxu0 0
  %9010 = vmatpush1.bf16.msra.mxu0 0
  %9011 = vmatprep.subr.bf16.mxu0 0
  %9012 = vmatpush1.bf16.msra.mxu0 0
  %9013 = vmatprep.subr.bf16.mxu0 0
  %9014 = vmatpush1.bf16.msra.mxu0 0
  %9015 = vmatprep.subr.bf16.mxu0 0
  %9016 = vmatpush1.bf16.msra.mxu0 0
  %9017 = vmatprep.subr.bf16.mxu0 0
  %9018 = vmatpush1.bf16.msra.mxu0 0
  %9019 = vmatprep.subr.bf16.mxu0 0
  %9020 = vmatpush1.bf16.msra.mxu0 0
  %9021 = vmatprep.subr.bf16.mxu0 0
  %9022 = vmatpush1.bf16.msra.mxu0 0
  %9023 = vmatprep.subr.bf16.mxu0 0
  %9024 = vmatpush1.bf16.msra.mxu0 0
  %9025 = vmatprep.subr.bf16.mxu0 0
  %9026 = vmatpush1.bf16.msra.mxu0 0
  %9027 = vmatprep.subr.bf16.mxu0 0
  %9028 = vmatpush1.bf16.msra.mxu0 0
  %9029 = vmatprep.subr.bf16.mxu0 0
  %9030 = vmatpush1.bf16.msra.mxu0 0
  %9031 = vmatprep.subr.bf16.mxu0 0
  %9032 = vmatpush1.bf16.msra.mxu0 0
  %9033 = vmatprep.subr.bf16.mxu0 0
  %9034 = vmatpush1.bf16.msra.mxu0 0
  %9035 = vmatprep.subr.bf16.mxu0 0
  %9036 = vmatpush1.bf16.msra.mxu0 0
  %9037 = vmatprep.subr.bf16.mxu0 0
  %9038 = vmatpush1.bf16.msra.mxu0 0
  %9039 = vmatprep.mubr.bf16.mxu0 0
  %9040 = vmatmul.mubr.bf16.gmra.mrb[0].mxu0 %v8909
  %v9041 = vpop.f32.mrb[0].mxu0
  %v9042 = vadd.f32 0.0, %v9041
  %v9043 = vpop.f32.mrb[0].mxu0
  %v9044 = vpop.f32.mrb[0].mxu0
  %v9045 = vadd.f32 0.0, %v9044
  %v9046 = vpop.f32.mrb[0].mxu0
  %9047 = vmatprep.mubr.bf16.mxu0 0
  %9048 = vmatmul.mubr.bf16.gmra.mrb[0].mxu0 %v8912
  %v9049 = vpop.f32.mrb[0].mxu0
  %v9050 = vadd.f32 0.0, %v9049
  %v9051 = vpop.f32.mrb[0].mxu0
  %v9052 = vpop.f32.mrb[0].mxu0
  %v9053 = vadd.f32 0.0, %v9052
  %v9054 = vpop.f32.mrb[0].mxu0
  %9055 = vmatprep.mubr.bf16.mxu0 0
  %9056 = vmatmul.mubr.bf16.gmra.mrb[0].mxu0 %v8915
  %v9057 = vpop.f32.mrb[0].mxu0
  %v9058 = vadd.f32 0.0, %v9057
  %v9059 = vpop.f32.mrb[0].mxu0
  %v9060 = vpop.f32.mrb[0].mxu0
  %v9061 = vadd.f32 0.0, %v9060
  %v9062 = vpop.f32.mrb[0].mxu0
  %9063 = vmatprep.mubr.bf16.mxu0 0
  %9064 = vmatmul.mubr.bf16.gmra.mrb[0].mxu0 %v8918
  %v9065 = vpop.f32.mrb[0].mxu0
  %v9066 = vadd.f32 0.0, %v9065
  %v9067 = vpop.f32.mrb[0].mxu0
  %v9068 = vpop.f32.mrb[0].mxu0
  %v9069 = vadd.f32 0.0, %v9068
  %v9070 = vpop.f32.mrb[0].mxu0
  %9071 = vmatprep.mubr.bf16.mxu0 0
  %9072 = vmatmul.mubr.bf16.gmra.mrb[0].mxu0 %v8921
  %v9073 = vpop.f32.mrb[0].mxu0
  %v9074 = vadd.f32 0.0, %v9073
  %v9075 = vpop.f32.mrb[0].mxu0
  %v9076 = vpop.f32.mrb[0].mxu0
  %v9077 = vadd.f32 0.0, %v9076
  %v9078 = vpop.f32.mrb[0].mxu0
  %9079 = vmatprep.mubr.bf16.mxu0 0
  %9080 = vmatmul.mubr.bf16.gmra.mrb[0].mxu0 %v8924
  %v9081 = vpop.f32.mrb[0].mxu0
  %v9082 = vadd.f32 0.0, %v9081
  %v9083 = vpop.f32.mrb[0].mxu0
  %v9084 = vpop.f32.mrb[0].mxu0
  %v9085 = vadd.f32 0.0, %v9084
  %v9086 = vpop.f32.mrb[0].mxu0
  %9087 = vmatprep.mubr.bf16.mxu0 0
  %9088 = vmatmul.mubr.bf16.gmra.mrb[0].mxu0 %v8927
  %v9089 = vpop.f32.mrb[0].mxu0
  %v9090 = vadd.f32 0.0, %v9089
  %v9091 = vpop.f32.mrb[0].mxu0
  %v9092 = vpop.f32.mrb[0].mxu0
  %v9093 = vadd.f32 0.0, %v9092
  %v9094 = vpop.f32.mrb[0].mxu0
  %9095 = vmatprep.mubr.bf16.mxu0 0
  %9096 = vmatmul.mubr.bf16.gmra.mrb[0].mxu0 %v8930
  %v9097 = vpop.f32.mrb[0].mxu0
  %v9098 = vadd.f32 0.0, %v9097
  %v9099 = vpop.f32.mrb[0].mxu0
  %v9100 = vpop.f32.mrb[0].mxu0
  %v9101 = vadd.f32 0.0, %v9100
  %v9102 = vpop.f32.mrb[0].mxu0
  %9103 = vmatprep.mubr.bf16.mxu0 0
  %9104 = vmatmul.mubr.bf16.gmra.mrb[0].mxu0 %v8933
  %v9105 = vpop.f32.mrb[0].mxu0
  %v9106 = vadd.f32 0.0, %v9105
  %v9107 = vpop.f32.mrb[0].mxu0
  %v9108 = vpop.f32.mrb[0].mxu0
  %v9109 = vadd.f32 0.0, %v9108
  %v9110 = vpop.f32.mrb[0].mxu0
  %9111 = vmatprep.mubr.bf16.mxu0 0
  %9112 = vmatmul.mubr.bf16.gmra.mrb[0].mxu0 %v8936
  %v9113 = vpop.f32.mrb[0].mxu0
  %v9114 = vadd.f32 0.0, %v9113
  %v9115 = vpop.f32.mrb[0].mxu0
  %v9116 = vpop.f32.mrb[0].mxu0
  %v9117 = vadd.f32 0.0, %v9116
  %v9118 = vpop.f32.mrb[0].mxu0
  %9119 = vmatprep.mubr.bf16.mxu0 0
  %9120 = vmatmul.mubr.bf16.gmra.mrb[0].mxu0 %v8939
  %v9121 = vpop.f32.mrb[0].mxu0
  %v9122 = vadd.f32 0.0, %v9121
  %v9123 = vpop.f32.mrb[0].mxu0
  %v9124 = vpop.f32.mrb[0].mxu0
  %v9125 = vadd.f32 0.0, %v9124
  %v9126 = vpop.f32.mrb[0].mxu0
  %9127 = vmatprep.mubr.bf16.mxu0 0
  %9128 = vmatmul.mubr.bf16.gmra.mrb[0].mxu0 %v8942
  %v9129 = vpop.f32.mrb[0].mxu0
  %v9130 = vadd.f32 0.0, %v9129
  %v9131 = vpop.f32.mrb[0].mxu0
  %v9132 = vpop.f32.mrb[0].mxu0
  %v9133 = vadd.f32 0.0, %v9132
  %v9134 = vpop.f32.mrb[0].mxu0
  %9135 = vmatprep.mubr.bf16.mxu0 0
  %9136 = vmatmul.mubr.bf16.gmra.mrb[0].mxu0 %v8945
  %v9137 = vpop.f32.mrb[0].mxu0
  %v9138 = vadd.f32 0.0, %v9137
  %v9139 = vpop.f32.mrb[0].mxu0
  %v9140 = vpop.f32.mrb[0].mxu0
  %v9141 = vadd.f32 0.0, %v9140
  %v9142 = vpop.f32.mrb[0].mxu0
  %9143 = vmatprep.mubr.bf16.mxu0 0
  %9144 = vmatmul.mubr.bf16.gmra.mrb[0].mxu0 %v8948
  %v9145 = vpop.f32.mrb[0].mxu0
  %v9146 = vadd.f32 0.0, %v9145
  %v9147 = vpop.f32.mrb[0].mxu0
  %v9148 = vpop.f32.mrb[0].mxu0
  %v9149 = vadd.f32 0.0, %v9148
  %v9150 = vpop.f32.mrb[0].mxu0
  %9151 = vmatprep.mubr.bf16.mxu0 0
  %9152 = vmatmul.mubr.bf16.gmra.mrb[0].mxu0 %v8951
  %v9153 = vpop.f32.mrb[0].mxu0
  %v9154 = vadd.f32 0.0, %v9153
  %v9155 = vpop.f32.mrb[0].mxu0
  %v9156 = vpop.f32.mrb[0].mxu0
  %v9157 = vadd.f32 0.0, %v9156
  %v9158 = vpop.f32.mrb[0].mxu0
  %9159 = vmatprep.mubr.bf16.mxu0 0
  %9160 = vmatmul.mubr.bf16.gmra.mrb[0].mxu0 %v8954
  %v9161 = vpop.f32.mrb[0].mxu0
  %v9162 = vadd.f32 0.0, %v9161
  %v9163 = vpop.f32.mrb[0].mxu0
  %v9164 = vpop.f32.mrb[0].mxu0
  %v9165 = vadd.f32 0.0, %v9164
  %v9166 = vpop.f32.mrb[0].mxu0
  %9167 = vmatprep.mubr.bf16.mxu0 0
  %9168 = vmatmul.mubr.bf16.gmra.mrb[0].mxu0 %v8957
  %v9169 = vpop.f32.mrb[0].mxu0
  %v9170 = vadd.f32 0.0, %v9169
  %v9171 = vpop.f32.mrb[0].mxu0
  %v9172 = vpop.f32.mrb[0].mxu0
  %v9173 = vadd.f32 0.0, %v9172
  %v9174 = vpop.f32.mrb[0].mxu0
  %9175 = vmatprep.mubr.bf16.mxu0 0
  %9176 = vmatmul.mubr.bf16.gmra.mrb[0].mxu0 %v8960
  %v9177 = vpop.f32.mrb[0].mxu0
  %v9178 = vadd.f32 0.0, %v9177
  %v9179 = vpop.f32.mrb[0].mxu0
  %v9180 = vpop.f32.mrb[0].mxu0
  %v9181 = vadd.f32 0.0, %v9180
  %v9182 = vpop.f32.mrb[0].mxu0
  %9183 = vmatprep.mubr.bf16.mxu0 0
  %9184 = vmatmul.mubr.bf16.gmra.mrb[0].mxu0 %v8963
  %v9185 = vpop.f32.mrb[0].mxu0
  %v9186 = vadd.f32 0.0, %v9185
  %v9187 = vpop.f32.mrb[0].mxu0
  %v9188 = vpop.f32.mrb[0].mxu0
  %v9189 = vadd.f32 0.0, %v9188
  %v9190 = vpop.f32.mrb[0].mxu0
  %9191 = vmatprep.mubr.bf16.mxu0 0
  %9192 = vmatmul.mubr.bf16.gmra.mrb[0].mxu0 %v8966
  %v9193 = vpop.f32.mrb[0].mxu0
  %v9194 = vadd.f32 0.0, %v9193
  %v9195 = vpop.f32.mrb[0].mxu0
  %v9196 = vpop.f32.mrb[0].mxu0
  %v9197 = vadd.f32 0.0, %v9196
  %v9198 = vpop.f32.mrb[0].mxu0
  %9199 = vmatprep.mubr.bf16.mxu0 0
  %9200 = vmatmul.mubr.bf16.gmra.mrb[0].mxu0 %v8969
  %v9201 = vpop.f32.mrb[0].mxu0
  %v9202 = vadd.f32 0.0, %v9201
  %v9203 = vpop.f32.mrb[0].mxu0
  %v9204 = vpop.f32.mrb[0].mxu0
  %v9205 = vadd.f32 0.0, %v9204
  %v9206 = vpop.f32.mrb[0].mxu0
  %9207 = vmatprep.mubr.bf16.mxu0 0
  %9208 = vmatmul.mubr.bf16.gmra.mrb[0].mxu0 %v8972
  %v9209 = vpop.f32.mrb[0].mxu0
  %v9210 = vadd.f32 0.0, %v9209
  %v9211 = vpop.f32.mrb[0].mxu0
  %v9212 = vpop.f32.mrb[0].mxu0
  %v9213 = vadd.f32 0.0, %v9212
  %v9214 = vpop.f32.mrb[0].mxu0
  %9215 = vmatprep.mubr.bf16.mxu0 0
  %9216 = vmatmul.mubr.bf16.gmra.mrb[0].mxu0 %v8975
  %v9217 = vpop.f32.mrb[0].mxu0
  %v9218 = vadd.f32 0.0, %v9217
  %v9219 = vpop.f32.mrb[0].mxu0
  %v9220 = vpop.f32.mrb[0].mxu0
  %v9221 = vadd.f32 0.0, %v9220
  %v9222 = vpop.f32.mrb[0].mxu0
  %9223 = vmatprep.mubr.bf16.mxu0 0
  %9224 = vmatmul.mubr.bf16.gmra.mrb[0].mxu0 %v8978
  %v9225 = vpop.f32.mrb[0].mxu0
  %v9226 = vadd.f32 0.0, %v9225
  %v9227 = vpop.f32.mrb[0].mxu0
  %v9228 = vpop.f32.mrb[0].mxu0
  %v9229 = vadd.f32 0.0, %v9228
  %v9230 = vpop.f32.mrb[0].mxu0
  %9231 = vmatprep.mubr.bf16.mxu0 0
  %9232 = vmatmul.mubr.bf16.gmra.mrb[0].mxu0 %v8981
  %v9233 = vpop.f32.mrb[0].mxu0
  %v9234 = vadd.f32 0.0, %v9233
  %v9235 = vpop.f32.mrb[0].mxu0
  %v9236 = vpop.f32.mrb[0].mxu0
  %v9237 = vadd.f32 0.0, %v9236
  %v9238 = vpop.f32.mrb[0].mxu0
  %9239 = vmatprep.mubr.bf16.mxu0 0
  %9240 = vmatmul.mubr.bf16.gmra.mrb[0].mxu0 %v8984
  %v9241 = vpop.f32.mrb[0].mxu0
  %v9242 = vadd.f32 0.0, %v9241
  %v9243 = vpop.f32.mrb[0].mxu0
  %v9244 = vpop.f32.mrb[0].mxu0
  %v9245 = vadd.f32 0.0, %v9244
  %v9246 = vpop.f32.mrb[0].mxu0
  %9247 = vmatprep.mubr.bf16.mxu0 0
  %9248 = vmatmul.mubr.bf16.gmra.mrb[0].mxu0 %v8987
  %v9249 = vpop.f32.mrb[0].mxu0
  %v9250 = vadd.f32 0.0, %v9249
  %v9251 = vpop.f32.mrb[0].mxu0
  %v9252 = vpop.f32.mrb[0].mxu0
  %v9253 = vadd.f32 0.0, %v9252
  %v9254 = vpop.f32.mrb[0].mxu0
  %9255 = vmatprep.mubr.bf16.mxu0 0
  %9256 = vmatmul.mubr.bf16.gmra.mrb[0].mxu0 %v8990
  %v9257 = vpop.f32.mrb[0].mxu0
  %v9258 = vadd.f32 0.0, %v9257
  %v9259 = vpop.f32.mrb[0].mxu0
  %v9260 = vpop.f32.mrb[0].mxu0
  %v9261 = vadd.f32 0.0, %v9260
  %v9262 = vpop.f32.mrb[0].mxu0
  %9263 = vmatprep.mubr.bf16.mxu0 0
  %9264 = vmatmul.mubr.bf16.gmra.mrb[0].mxu0 %v8993
  %v9265 = vpop.f32.mrb[0].mxu0
  %v9266 = vadd.f32 0.0, %v9265
  %v9267 = vpop.f32.mrb[0].mxu0
  %v9268 = vpop.f32.mrb[0].mxu0
  %v9269 = vadd.f32 0.0, %v9268
  %v9270 = vpop.f32.mrb[0].mxu0
  %9271 = vmatprep.mubr.bf16.mxu0 0
  %9272 = vmatmul.mubr.bf16.gmra.mrb[0].mxu0 %v8996
  %v9273 = vpop.f32.mrb[0].mxu0
  %v9274 = vadd.f32 0.0, %v9273
  %v9275 = vpop.f32.mrb[0].mxu0
  %v9276 = vpop.f32.mrb[0].mxu0
  %v9277 = vadd.f32 0.0, %v9276
  %v9278 = vpop.f32.mrb[0].mxu0
  %9279 = vmatprep.mubr.bf16.mxu0 0
  %9280 = vmatmul.mubr.bf16.gmra.mrb[0].mxu0 %v8999
  %v9281 = vpop.f32.mrb[0].mxu0
  %v9282 = vadd.f32 0.0, %v9281
  %v9283 = vpop.f32.mrb[0].mxu0
  %v9284 = vpop.f32.mrb[0].mxu0
  %v9285 = vadd.f32 0.0, %v9284
  %v9286 = vpop.f32.mrb[0].mxu0
  %9287 = vmatprep.mubr.bf16.mxu0 0
  %9288 = vmatmul.mubr.bf16.gmra.mrb[0].mxu0 %v9002
  %v9289 = vpop.f32.mrb[0].mxu0
  %v9290 = vadd.f32 0.0, %v9289
  %v9291 = vpop.f32.mrb[0].mxu0
  %v9292 = vpop.f32.mrb[0].mxu0
  %v9293 = vadd.f32 0.0, %v9292
  %v9294 = vpop.f32.mrb[0].mxu0
  %9295 = vdwg.mxu0
  %v9296 = vadd.f32 %v8746, %v9042
  %v9297 = vadd.f32 %v8747, %v9045
  %v9298 = vadd.f32 %v8748, %v9050
  %v9299 = vadd.f32 %v8749, %v9053
  %v9300 = vadd.f32 %v8750, %v9058
  %v9301 = vadd.f32 %v8751, %v9061
  %v9302 = vadd.f32 %v8752, %v9066
  %v9303 = vadd.f32 %v8753, %v9069
  %v9304 = vadd.f32 %v8754, %v9074
  %v9305 = vadd.f32 %v8755, %v9077
  %v9306 = vadd.f32 %v8756, %v9082
  %v9307 = vadd.f32 %v8757, %v9085
  %v9308 = vadd.f32 %v8758, %v9090
  %v9309 = vadd.f32 %v8759, %v9093
  %v9310 = vadd.f32 %v8760, %v9098
  %v9311 = vadd.f32 %v8761, %v9101
  %v9312 = vadd.f32 %v8762, %v9106
  %v9313 = vadd.f32 %v8763, %v9109
  %v9314 = vadd.f32 %v8764, %v9114
  %v9315 = vadd.f32 %v8765, %v9117
  %v9316 = vadd.f32 %v8766, %v9122
  %v9317 = vadd.f32 %v8767, %v9125
  %v9318 = vadd.f32 %v8768, %v9130
  %v9319 = vadd.f32 %v8769, %v9133
  %v9320 = vadd.f32 %v8770, %v9138
  %v9321 = vadd.f32 %v8771, %v9141
  %v9322 = vadd.f32 %v8772, %v9146
  %v9323 = vadd.f32 %v8773, %v9149
  %v9324 = vadd.f32 %v8774, %v9154
  %v9325 = vadd.f32 %v8775, %v9157
  %v9326 = vadd.f32 %v8776, %v9162
  %v9327 = vadd.f32 %v8777, %v9165
  %v9328 = vadd.f32 %v8778, %v9170
  %v9329 = vadd.f32 %v8779, %v9173
  %v9330 = vadd.f32 %v8780, %v9178
  %v9331 = vadd.f32 %v8781, %v9181
  %v9332 = vadd.f32 %v8782, %v9186
  %v9333 = vadd.f32 %v8783, %v9189
  %v9334 = vadd.f32 %v8784, %v9194
  %v9335 = vadd.f32 %v8785, %v9197
  %v9336 = vadd.f32 %v8786, %v9202
  %v9337 = vadd.f32 %v8787, %v9205
  %v9338 = vadd.f32 %v8788, %v9210
  %v9339 = vadd.f32 %v8789, %v9213
  %v9340 = vadd.f32 %v8790, %v9218
  %v9341 = vadd.f32 %v8791, %v9221
  %v9342 = vadd.f32 %v8792, %v9226
  %v9343 = vadd.f32 %v8793, %v9229
  %v9344 = vadd.f32 %v8794, %v9234
  %v9345 = vadd.f32 %v8795, %v9237
  %v9346 = vadd.f32 %v8796, %v9242
  %v9347 = vadd.f32 %v8797, %v9245
  %v9348 = vadd.f32 %v8798, %v9250
  %v9349 = vadd.f32 %v8799, %v9253
  %v9350 = vadd.f32 %v8800, %v9258
  %v9351 = vadd.f32 %v8801, %v9261
  %v9352 = vadd.f32 %v8802, %v9266
  %v9353 = vadd.f32 %v8803, %v9269
  %v9354 = vadd.f32 %v8804, %v9274
  %v9355 = vadd.f32 %v8805, %v9277
  %v9356 = vadd.f32 %v8806, %v9282
  %v9357 = vadd.f32 %v8807, %v9285
  %v9358 = vadd.f32 %v8808, %v9290
  %v9359 = vadd.f32 %v8809, %v9293
  %v9360 = vld [vmem:[%s6707 + $0x8] sm:$0xff]
  %v9361 = vld [vmem:[%s6707 + $0x10] sm:$0xff]
  %v9362 = vld [vmem:[%s6707 + $0x28] sm:$0xff]
  %v9363 = vld [vmem:[%s6707 + $0x30] sm:$0xff]
  %v9364 = vld [vmem:[%s6707 + $0x48] sm:$0xff]
  %v9365 = vld [vmem:[%s6707 + $0x50] sm:$0xff]
  %v9366 = vld [vmem:[%s6707 + $0x68] sm:$0xff]
  %v9367 = vld [vmem:[%s6707 + $0x70] sm:$0xff]
  %v9368 = vld [vmem:[%s6707 + $0x88] sm:$0xff]
  %v9369 = vld [vmem:[%s6707 + $0x90] sm:$0xff]
  %v9370 = vld [vmem:[%s6707 + $0xa8] sm:$0xff]
  %v9371 = vld [vmem:[%s6707 + $0xb0] sm:$0xff]
  %v9372 = vld [vmem:[%s6707 + $0xc8] sm:$0xff]
  %v9373 = vld [vmem:[%s6707 + $0xd0] sm:$0xff]
  %v9374 = vld [vmem:[%s6707 + $0xe8] sm:$0xff]
  %v9375 = vld [vmem:[%s6707 + $0xf0] sm:$0xff]
  %v9376 = vld [vmem:[%s6707 + $0x108] sm:$0xff]
  %v9377 = vld [vmem:[%s6707 + $0x110] sm:$0xff]
  %v9378 = vld [vmem:[%s6707 + $0x128] sm:$0xff]
  %v9379 = vld [vmem:[%s6707 + $0x130] sm:$0xff]
  %v9380 = vld [vmem:[%s6707 + $0x148] sm:$0xff]
  %v9381 = vld [vmem:[%s6707 + $0x150] sm:$0xff]
  %v9382 = vld [vmem:[%s6707 + $0x168] sm:$0xff]
  %v9383 = vld [vmem:[%s6707 + $0x170] sm:$0xff]
  %v9384 = vld [vmem:[%s6707 + $0x188] sm:$0xff]
  %v9385 = vld [vmem:[%s6707 + $0x190] sm:$0xff]
  %v9386 = vld [vmem:[%s6707 + $0x1a8] sm:$0xff]
  %v9387 = vld [vmem:[%s6707 + $0x1b0] sm:$0xff]
  %v9388 = vld [vmem:[%s6707 + $0x1c8] sm:$0xff]
  %v9389 = vld [vmem:[%s6707 + $0x1d0] sm:$0xff]
  %v9390 = vld [vmem:[%s6707 + $0x1e8] sm:$0xff]
  %v9391 = vld [vmem:[%s6707 + $0x1f0] sm:$0xff]
  %v9392 = vld [vmem:[%s6707 + $0x248] sm:$0xff]
  %v9393 = vld [vmem:[%s6707 + $0x250] sm:$0xff]
  %v9394 = vld [vmem:[%s6707 + $0x268] sm:$0xff]
  %v9395 = vld [vmem:[%s6707 + $0x270] sm:$0xff]
  %v9396 = vld [vmem:[%s6707 + $0x288] sm:$0xff]
  %v9397 = vld [vmem:[%s6707 + $0x290] sm:$0xff]
  %v9398 = vld [vmem:[%s6707 + $0x2a8] sm:$0xff]
  %v9399 = vld [vmem:[%s6707 + $0x2b0] sm:$0xff]
  %v9400 = vld [vmem:[%s6707 + $0x2c8] sm:$0xff]
  %v9401 = vld [vmem:[%s6707 + $0x2d0] sm:$0xff]
  %v9402 = vld [vmem:[%s6707 + $0x2e8] sm:$0xff]
  %v9403 = vld [vmem:[%s6707 + $0x2f0] sm:$0xff]
  %v9404 = vld [vmem:[%s6707 + $0x308] sm:$0xff]
  %v9405 = vld [vmem:[%s6707 + $0x310] sm:$0xff]
  %v9406 = vld [vmem:[%s6707 + $0x328] sm:$0xff]
  %v9407 = vld [vmem:[%s6707 + $0x330] sm:$0xff]
  %v9408 = vld [vmem:[%s6707 + $0x348] sm:$0xff]
  %v9409 = vld [vmem:[%s6707 + $0x350] sm:$0xff]
  %v9410 = vld [vmem:[%s6707 + $0x368] sm:$0xff]
  %v9411 = vld [vmem:[%s6707 + $0x370] sm:$0xff]
  %v9412 = vld [vmem:[%s6707 + $0x388] sm:$0xff]
  %v9413 = vld [vmem:[%s6707 + $0x390] sm:$0xff]
  %v9414 = vld [vmem:[%s6707 + $0x3a8] sm:$0xff]
  %v9415 = vld [vmem:[%s6707 + $0x3b0] sm:$0xff]
  %v9416 = vld [vmem:[%s6707 + $0x3c8] sm:$0xff]
  %v9417 = vld [vmem:[%s6707 + $0x3d0] sm:$0xff]
  %v9418 = vld [vmem:[%s6707 + $0x3e8] sm:$0xff]
  %v9419 = vld [vmem:[%s6707 + $0x3f0] sm:$0xff]
  %v9420 = vld [vmem:[%s6707 + $0x408] sm:$0xff]
  %v9421 = vld [vmem:[%s6707 + $0x410] sm:$0xff]
  %v9422 = vld [vmem:[%s6707 + $0x428] sm:$0xff]
  %v9423 = vld [vmem:[%s6707 + $0x430] sm:$0xff]
  %v9424 = vpack.c.bf16 %v9361, %v9360
  %v9425 = vpack.c.bf16 %v9363, %v9362
  %v9426 = vpack.c.bf16 %v9365, %v9364
  %v9427 = vpack.c.bf16 %v9367, %v9366
  %v9428 = vpack.c.bf16 %v9369, %v9368
  %v9429 = vpack.c.bf16 %v9371, %v9370
  %v9430 = vpack.c.bf16 %v9373, %v9372
  %v9431 = vpack.c.bf16 %v9375, %v9374
  %v9432 = vpack.c.bf16 %v9377, %v9376
  %v9433 = vpack.c.bf16 %v9379, %v9378
  %v9434 = vpack.c.bf16 %v9381, %v9380
  %v9435 = vpack.c.bf16 %v9383, %v9382
  %v9436 = vpack.c.bf16 %v9385, %v9384
  %v9437 = vpack.c.bf16 %v9387, %v9386
  %v9438 = vpack.c.bf16 %v9389, %v9388
  %v9439 = vpack.c.bf16 %v9391, %v9390
  %v9440 = vpack.c.bf16 %v9393, %v9392
  %v9441 = vpack.c.bf16 %v9395, %v9394
  %v9442 = vpack.c.bf16 %v9397, %v9396
  %v9443 = vpack.c.bf16 %v9399, %v9398
  %v9444 = vpack.c.bf16 %v9401, %v9400
  %v9445 = vpack.c.bf16 %v9403, %v9402
  %v9446 = vpack.c.bf16 %v9405, %v9404
  %v9447 = vpack.c.bf16 %v9407, %v9406
  %v9448 = vpack.c.bf16 %v9409, %v9408
  %v9449 = vpack.c.bf16 %v9411, %v9410
  %v9450 = vpack.c.bf16 %v9413, %v9412
  %v9451 = vpack.c.bf16 %v9415, %v9414
  %v9452 = vpack.c.bf16 %v9417, %v9416
  %v9453 = vpack.c.bf16 %v9419, %v9418
  %v9454 = vpack.c.bf16 %v9421, %v9420
  %v9455 = vpack.c.bf16 %v9423, %v9422
  %s9456 = scalar_lea.vmem %s2, 16
  %v9457 = vld [vmem:[%s9456] sm:$0xf]
  %v9459 = vsel %vm5895, %v9424, 0
  %v9462 = vsel %vm5895, %v9425, 0
  %v9465 = vsel %vm5895, %v9426, 0
  %v9468 = vsel %vm5895, %v9427, 0
  %v9471 = vsel %vm5895, %v9428, 0
  %v9474 = vsel %vm5895, %v9429, 0
  %v9477 = vsel %vm5895, %v9430, 0
  %v9480 = vsel %vm5895, %v9431, 0
  %v9483 = vsel %vm5895, %v9432, 0
  %v9486 = vsel %vm5895, %v9433, 0
  %v9489 = vsel %vm5895, %v9434, 0
  %v9492 = vsel %vm5895, %v9435, 0
  %v9495 = vsel %vm5895, %v9436, 0
  %v9498 = vsel %vm5895, %v9437, 0
  %v9501 = vsel %vm5895, %v9438, 0
  %v9504 = vsel %vm5895, %v9439, 0
  %v9507 = vsel %vm5895, %v9440, 0
  %v9510 = vsel %vm5895, %v9441, 0
  %v9513 = vsel %vm5895, %v9442, 0
  %v9516 = vsel %vm5895, %v9443, 0
  %v9519 = vsel %vm5895, %v9444, 0
  %v9522 = vsel %vm5895, %v9445, 0
  %v9525 = vsel %vm5895, %v9446, 0
  %v9528 = vsel %vm5895, %v9447, 0
  %v9531 = vsel %vm5895, %v9448, 0
  %v9534 = vsel %vm5895, %v9449, 0
  %v9537 = vsel %vm5895, %v9450, 0
  %v9540 = vsel %vm5895, %v9451, 0
  %v9543 = vsel %vm5895, %v9452, 0
  %v9546 = vsel %vm5895, %v9453, 0
  %v9549 = vsel %vm5895, %v9454, 0
  %v9552 = vsel %vm5895, %v9455, 0
  %v9555 = vsel %vm7029, %v9457, 0
  %9557 = vmatprep.subr.bf16.mxu0 0
  %9558 = vmatpush1.bf16.msra.mxu0 %v9555
  %9559 = vmatprep.subr.bf16.mxu0 0
  %9560 = vmatpush1.bf16.msra.mxu0 0
  %9561 = vmatprep.subr.bf16.mxu0 0
  %9562 = vmatpush1.bf16.msra.mxu0 0
  %9563 = vmatprep.subr.bf16.mxu0 0
  %9564 = vmatpush1.bf16.msra.mxu0 0
  %9565 = vmatprep.subr.bf16.mxu0 0
  %9566 = vmatpush1.bf16.msra.mxu0 0
  %9567 = vmatprep.subr.bf16.mxu0 0
  %9568 = vmatpush1.bf16.msra.mxu0 0
  %9569 = vmatprep.subr.bf16.mxu0 0
  %9570 = vmatpush1.bf16.msra.mxu0 0
  %9571 = vmatprep.subr.bf16.mxu0 0
  %9572 = vmatpush1.bf16.msra.mxu0 0
  %9573 = vmatprep.subr.bf16.mxu0 0
  %9574 = vmatpush1.bf16.msra.mxu0 0
  %9575 = vmatprep.subr.bf16.mxu0 0
  %9576 = vmatpush1.bf16.msra.mxu0 0
  %9577 = vmatprep.subr.bf16.mxu0 0
  %9578 = vmatpush1.bf16.msra.mxu0 0
  %9579 = vmatprep.subr.bf16.mxu0 0
  %9580 = vmatpush1.bf16.msra.mxu0 0
  %9581 = vmatprep.subr.bf16.mxu0 0
  %9582 = vmatpush1.bf16.msra.mxu0 0
  %9583 = vmatprep.subr.bf16.mxu0 0
  %9584 = vmatpush1.bf16.msra.mxu0 0
  %9585 = vmatprep.subr.bf16.mxu0 0
  %9586 = vmatpush1.bf16.msra.mxu0 0
  %9587 = vmatprep.subr.bf16.mxu0 0
  %9588 = vmatpush1.bf16.msra.mxu0 0
  %9589 = vmatprep.mubr.bf16.mxu0 0
  %9590 = vmatmul.mubr.bf16.gmra.mrb[0].mxu0 %v9459
  %v9591 = vpop.f32.mrb[0].mxu0
  %v9592 = vadd.f32 0.0, %v9591
  %v9593 = vpop.f32.mrb[0].mxu0
  %v9594 = vpop.f32.mrb[0].mxu0
  %v9595 = vadd.f32 0.0, %v9594
  %v9596 = vpop.f32.mrb[0].mxu0
  %9597 = vmatprep.mubr.bf16.mxu0 0
  %9598 = vmatmul.mubr.bf16.gmra.mrb[0].mxu0 %v9462
  %v9599 = vpop.f32.mrb[0].mxu0
  %v9600 = vadd.f32 0.0, %v9599
  %v9601 = vpop.f32.mrb[0].mxu0
  %v9602 = vpop.f32.mrb[0].mxu0
  %v9603 = vadd.f32 0.0, %v9602
  %v9604 = vpop.f32.mrb[0].mxu0
  %9605 = vmatprep.mubr.bf16.mxu0 0
  %9606 = vmatmul.mubr.bf16.gmra.mrb[0].mxu0 %v9465
  %v9607 = vpop.f32.mrb[0].mxu0
  %v9608 = vadd.f32 0.0, %v9607
  %v9609 = vpop.f32.mrb[0].mxu0
  %v9610 = vpop.f32.mrb[0].mxu0
  %v9611 = vadd.f32 0.0, %v9610
  %v9612 = vpop.f32.mrb[0].mxu0
  %9613 = vmatprep.mubr.bf16.mxu0 0
  %9614 = vmatmul.mubr.bf16.gmra.mrb[0].mxu0 %v9468
  %v9615 = vpop.f32.mrb[0].mxu0
  %v9616 = vadd.f32 0.0, %v9615
  %v9617 = vpop.f32.mrb[0].mxu0
  %v9618 = vpop.f32.mrb[0].mxu0
  %v9619 = vadd.f32 0.0, %v9618
  %v9620 = vpop.f32.mrb[0].mxu0
  %9621 = vmatprep.mubr.bf16.mxu0 0
  %9622 = vmatmul.mubr.bf16.gmra.mrb[0].mxu0 %v9471
  %v9623 = vpop.f32.mrb[0].mxu0
  %v9624 = vadd.f32 0.0, %v9623
  %v9625 = vpop.f32.mrb[0].mxu0
  %v9626 = vpop.f32.mrb[0].mxu0
  %v9627 = vadd.f32 0.0, %v9626
  %v9628 = vpop.f32.mrb[0].mxu0
  %9629 = vmatprep.mubr.bf16.mxu0 0
  %9630 = vmatmul.mubr.bf16.gmra.mrb[0].mxu0 %v9474
  %v9631 = vpop.f32.mrb[0].mxu0
  %v9632 = vadd.f32 0.0, %v9631
  %v9633 = vpop.f32.mrb[0].mxu0
  %v9634 = vpop.f32.mrb[0].mxu0
  %v9635 = vadd.f32 0.0, %v9634
  %v9636 = vpop.f32.mrb[0].mxu0
  %9637 = vmatprep.mubr.bf16.mxu0 0
  %9638 = vmatmul.mubr.bf16.gmra.mrb[0].mxu0 %v9477
  %v9639 = vpop.f32.mrb[0].mxu0
  %v9640 = vadd.f32 0.0, %v9639
  %v9641 = vpop.f32.mrb[0].mxu0
  %v9642 = vpop.f32.mrb[0].mxu0
  %v9643 = vadd.f32 0.0, %v9642
  %v9644 = vpop.f32.mrb[0].mxu0
  %9645 = vmatprep.mubr.bf16.mxu0 0
  %9646 = vmatmul.mubr.bf16.gmra.mrb[0].mxu0 %v9480
  %v9647 = vpop.f32.mrb[0].mxu0
  %v9648 = vadd.f32 0.0, %v9647
  %v9649 = vpop.f32.mrb[0].mxu0
  %v9650 = vpop.f32.mrb[0].mxu0
  %v9651 = vadd.f32 0.0, %v9650
  %v9652 = vpop.f32.mrb[0].mxu0
  %9653 = vmatprep.mubr.bf16.mxu0 0
  %9654 = vmatmul.mubr.bf16.gmra.mrb[0].mxu0 %v9483
  %v9655 = vpop.f32.mrb[0].mxu0
  %v9656 = vadd.f32 0.0, %v9655
  %v9657 = vpop.f32.mrb[0].mxu0
  %v9658 = vpop.f32.mrb[0].mxu0
  %v9659 = vadd.f32 0.0, %v9658
  %v9660 = vpop.f32.mrb[0].mxu0
  %9661 = vmatprep.mubr.bf16.mxu0 0
  %9662 = vmatmul.mubr.bf16.gmra.mrb[0].mxu0 %v9486
  %v9663 = vpop.f32.mrb[0].mxu0
  %v9664 = vadd.f32 0.0, %v9663
  %v9665 = vpop.f32.mrb[0].mxu0
  %v9666 = vpop.f32.mrb[0].mxu0
  %v9667 = vadd.f32 0.0, %v9666
  %v9668 = vpop.f32.mrb[0].mxu0
  %9669 = vmatprep.mubr.bf16.mxu0 0
  %9670 = vmatmul.mubr.bf16.gmra.mrb[0].mxu0 %v9489
  %v9671 = vpop.f32.mrb[0].mxu0
  %v9672 = vadd.f32 0.0, %v9671
  %v9673 = vpop.f32.mrb[0].mxu0
  %v9674 = vpop.f32.mrb[0].mxu0
  %v9675 = vadd.f32 0.0, %v9674
  %v9676 = vpop.f32.mrb[0].mxu0
  %9677 = vmatprep.mubr.bf16.mxu0 0
  %9678 = vmatmul.mubr.bf16.gmra.mrb[0].mxu0 %v9492
  %v9679 = vpop.f32.mrb[0].mxu0
  %v9680 = vadd.f32 0.0, %v9679
  %v9681 = vpop.f32.mrb[0].mxu0
  %v9682 = vpop.f32.mrb[0].mxu0
  %v9683 = vadd.f32 0.0, %v9682
  %v9684 = vpop.f32.mrb[0].mxu0
  %9685 = vmatprep.mubr.bf16.mxu0 0
  %9686 = vmatmul.mubr.bf16.gmra.mrb[0].mxu0 %v9495
  %v9687 = vpop.f32.mrb[0].mxu0
  %v9688 = vadd.f32 0.0, %v9687
  %v9689 = vpop.f32.mrb[0].mxu0
  %v9690 = vpop.f32.mrb[0].mxu0
  %v9691 = vadd.f32 0.0, %v9690
  %v9692 = vpop.f32.mrb[0].mxu0
  %9693 = vmatprep.mubr.bf16.mxu0 0
  %9694 = vmatmul.mubr.bf16.gmra.mrb[0].mxu0 %v9498
  %v9695 = vpop.f32.mrb[0].mxu0
  %v9696 = vadd.f32 0.0, %v9695
  %v9697 = vpop.f32.mrb[0].mxu0
  %v9698 = vpop.f32.mrb[0].mxu0
  %v9699 = vadd.f32 0.0, %v9698
  %v9700 = vpop.f32.mrb[0].mxu0
  %9701 = vmatprep.mubr.bf16.mxu0 0
  %9702 = vmatmul.mubr.bf16.gmra.mrb[0].mxu0 %v9501
  %v9703 = vpop.f32.mrb[0].mxu0
  %v9704 = vadd.f32 0.0, %v9703
  %v9705 = vpop.f32.mrb[0].mxu0
  %v9706 = vpop.f32.mrb[0].mxu0
  %v9707 = vadd.f32 0.0, %v9706
  %v9708 = vpop.f32.mrb[0].mxu0
  %9709 = vmatprep.mubr.bf16.mxu0 0
  %9710 = vmatmul.mubr.bf16.gmra.mrb[0].mxu0 %v9504
  %v9711 = vpop.f32.mrb[0].mxu0
  %v9712 = vadd.f32 0.0, %v9711
  %v9713 = vpop.f32.mrb[0].mxu0
  %v9714 = vpop.f32.mrb[0].mxu0
  %v9715 = vadd.f32 0.0, %v9714
  %v9716 = vpop.f32.mrb[0].mxu0
  %9717 = vmatprep.mubr.bf16.mxu0 0
  %9718 = vmatmul.mubr.bf16.gmra.mrb[0].mxu0 %v9507
  %v9719 = vpop.f32.mrb[0].mxu0
  %v9720 = vadd.f32 0.0, %v9719
  %v9721 = vpop.f32.mrb[0].mxu0
  %v9722 = vpop.f32.mrb[0].mxu0
  %v9723 = vadd.f32 0.0, %v9722
  %v9724 = vpop.f32.mrb[0].mxu0
  %9725 = vmatprep.mubr.bf16.mxu0 0
  %9726 = vmatmul.mubr.bf16.gmra.mrb[0].mxu0 %v9510
  %v9727 = vpop.f32.mrb[0].mxu0
  %v9728 = vadd.f32 0.0, %v9727
  %v9729 = vpop.f32.mrb[0].mxu0
  %v9730 = vpop.f32.mrb[0].mxu0
  %v9731 = vadd.f32 0.0, %v9730
  %v9732 = vpop.f32.mrb[0].mxu0
  %9733 = vmatprep.mubr.bf16.mxu0 0
  %9734 = vmatmul.mubr.bf16.gmra.mrb[0].mxu0 %v9513
  %v9735 = vpop.f32.mrb[0].mxu0
  %v9736 = vadd.f32 0.0, %v9735
  %v9737 = vpop.f32.mrb[0].mxu0
  %v9738 = vpop.f32.mrb[0].mxu0
  %v9739 = vadd.f32 0.0, %v9738
  %v9740 = vpop.f32.mrb[0].mxu0
  %9741 = vmatprep.mubr.bf16.mxu0 0
  %9742 = vmatmul.mubr.bf16.gmra.mrb[0].mxu0 %v9516
  %v9743 = vpop.f32.mrb[0].mxu0
  %v9744 = vadd.f32 0.0, %v9743
  %v9745 = vpop.f32.mrb[0].mxu0
  %v9746 = vpop.f32.mrb[0].mxu0
  %v9747 = vadd.f32 0.0, %v9746
  %v9748 = vpop.f32.mrb[0].mxu0
  %9749 = vmatprep.mubr.bf16.mxu0 0
  %9750 = vmatmul.mubr.bf16.gmra.mrb[0].mxu0 %v9519
  %v9751 = vpop.f32.mrb[0].mxu0
  %v9752 = vadd.f32 0.0, %v9751
  %v9753 = vpop.f32.mrb[0].mxu0
  %v9754 = vpop.f32.mrb[0].mxu0
  %v9755 = vadd.f32 0.0, %v9754
  %v9756 = vpop.f32.mrb[0].mxu0
  %9757 = vmatprep.mubr.bf16.mxu0 0
  %9758 = vmatmul.mubr.bf16.gmra.mrb[0].mxu0 %v9522
  %v9759 = vpop.f32.mrb[0].mxu0
  %v9760 = vadd.f32 0.0, %v9759
  %v9761 = vpop.f32.mrb[0].mxu0
  %v9762 = vpop.f32.mrb[0].mxu0
  %v9763 = vadd.f32 0.0, %v9762
  %v9764 = vpop.f32.mrb[0].mxu0
  %9765 = vmatprep.mubr.bf16.mxu0 0
  %9766 = vmatmul.mubr.bf16.gmra.mrb[0].mxu0 %v9525
  %v9767 = vpop.f32.mrb[0].mxu0
  %v9768 = vadd.f32 0.0, %v9767
  %v9769 = vpop.f32.mrb[0].mxu0
  %v9770 = vpop.f32.mrb[0].mxu0
  %v9771 = vadd.f32 0.0, %v9770
  %v9772 = vpop.f32.mrb[0].mxu0
  %9773 = vmatprep.mubr.bf16.mxu0 0
  %9774 = vmatmul.mubr.bf16.gmra.mrb[0].mxu0 %v9528
  %v9775 = vpop.f32.mrb[0].mxu0
  %v9776 = vadd.f32 0.0, %v9775
  %v9777 = vpop.f32.mrb[0].mxu0
  %v9778 = vpop.f32.mrb[0].mxu0
  %v9779 = vadd.f32 0.0, %v9778
  %v9780 = vpop.f32.mrb[0].mxu0
  %9781 = vmatprep.mubr.bf16.mxu0 0
  %9782 = vmatmul.mubr.bf16.gmra.mrb[0].mxu0 %v9531
  %v9783 = vpop.f32.mrb[0].mxu0
  %v9784 = vadd.f32 0.0, %v9783
  %v9785 = vpop.f32.mrb[0].mxu0
  %v9786 = vpop.f32.mrb[0].mxu0
  %v9787 = vadd.f32 0.0, %v9786
  %v9788 = vpop.f32.mrb[0].mxu0
  %9789 = vmatprep.mubr.bf16.mxu0 0
  %9790 = vmatmul.mubr.bf16.gmra.mrb[0].mxu0 %v9534
  %v9791 = vpop.f32.mrb[0].mxu0
  %v9792 = vadd.f32 0.0, %v9791
  %v9793 = vpop.f32.mrb[0].mxu0
  %v9794 = vpop.f32.mrb[0].mxu0
  %v9795 = vadd.f32 0.0, %v9794
  %v9796 = vpop.f32.mrb[0].mxu0
  %9797 = vmatprep.mubr.bf16.mxu0 0
  %9798 = vmatmul.mubr.bf16.gmra.mrb[0].mxu0 %v9537
  %v9799 = vpop.f32.mrb[0].mxu0
  %v9800 = vadd.f32 0.0, %v9799
  %v9801 = vpop.f32.mrb[0].mxu0
  %v9802 = vpop.f32.mrb[0].mxu0
  %v9803 = vadd.f32 0.0, %v9802
  %v9804 = vpop.f32.mrb[0].mxu0
  %9805 = vmatprep.mubr.bf16.mxu0 0
  %9806 = vmatmul.mubr.bf16.gmra.mrb[0].mxu0 %v9540
  %v9807 = vpop.f32.mrb[0].mxu0
  %v9808 = vadd.f32 0.0, %v9807
  %v9809 = vpop.f32.mrb[0].mxu0
  %v9810 = vpop.f32.mrb[0].mxu0
  %v9811 = vadd.f32 0.0, %v9810
  %v9812 = vpop.f32.mrb[0].mxu0
  %9813 = vmatprep.mubr.bf16.mxu0 0
  %9814 = vmatmul.mubr.bf16.gmra.mrb[0].mxu0 %v9543
  %v9815 = vpop.f32.mrb[0].mxu0
  %v9816 = vadd.f32 0.0, %v9815
  %v9817 = vpop.f32.mrb[0].mxu0
  %v9818 = vpop.f32.mrb[0].mxu0
  %v9819 = vadd.f32 0.0, %v9818
  %v9820 = vpop.f32.mrb[0].mxu0
  %9821 = vmatprep.mubr.bf16.mxu0 0
  %9822 = vmatmul.mubr.bf16.gmra.mrb[0].mxu0 %v9546
  %v9823 = vpop.f32.mrb[0].mxu0
  %v9824 = vadd.f32 0.0, %v9823
  %v9825 = vpop.f32.mrb[0].mxu0
  %v9826 = vpop.f32.mrb[0].mxu0
  %v9827 = vadd.f32 0.0, %v9826
  %v9828 = vpop.f32.mrb[0].mxu0
  %9829 = vmatprep.mubr.bf16.mxu0 0
  %9830 = vmatmul.mubr.bf16.gmra.mrb[0].mxu0 %v9549
  %v9831 = vpop.f32.mrb[0].mxu0
  %v9832 = vadd.f32 0.0, %v9831
  %v9833 = vpop.f32.mrb[0].mxu0
  %v9834 = vpop.f32.mrb[0].mxu0
  %v9835 = vadd.f32 0.0, %v9834
  %v9836 = vpop.f32.mrb[0].mxu0
  %9837 = vmatprep.mubr.bf16.mxu0 0
  %9838 = vmatmul.mubr.bf16.gmra.mrb[0].mxu0 %v9552
  %v9839 = vpop.f32.mrb[0].mxu0
  %v9840 = vadd.f32 0.0, %v9839
  %v9841 = vpop.f32.mrb[0].mxu0
  %v9842 = vpop.f32.mrb[0].mxu0
  %v9843 = vadd.f32 0.0, %v9842
  %v9844 = vpop.f32.mrb[0].mxu0
  %9845 = vdwg.mxu0
  %v9846 = vadd.f32 %v9296, %v9592
  %v9847 = vadd.f32 %v9297, %v9595
  %v9848 = vadd.f32 %v9298, %v9600
  %v9849 = vadd.f32 %v9299, %v9603
  %v9850 = vadd.f32 %v9300, %v9608
  %v9851 = vadd.f32 %v9301, %v9611
  %v9852 = vadd.f32 %v9302, %v9616
  %v9853 = vadd.f32 %v9303, %v9619
  %v9854 = vadd.f32 %v9304, %v9624
  %v9855 = vadd.f32 %v9305, %v9627
  %v9856 = vadd.f32 %v9306, %v9632
  %v9857 = vadd.f32 %v9307, %v9635
  %v9858 = vadd.f32 %v9308, %v9640
  %v9859 = vadd.f32 %v9309, %v9643
  %v9860 = vadd.f32 %v9310, %v9648
  %v9861 = vadd.f32 %v9311, %v9651
  %v9862 = vadd.f32 %v9312, %v9656
  %v9863 = vadd.f32 %v9313, %v9659
  %v9864 = vadd.f32 %v9314, %v9664
  %v9865 = vadd.f32 %v9315, %v9667
  %v9866 = vadd.f32 %v9316, %v9672
  %v9867 = vadd.f32 %v9317, %v9675
  %v9868 = vadd.f32 %v9318, %v9680
  %v9869 = vadd.f32 %v9319, %v9683
  %v9870 = vadd.f32 %v9320, %v9688
  %v9871 = vadd.f32 %v9321, %v9691
  %v9872 = vadd.f32 %v9322, %v9696
  %v9873 = vadd.f32 %v9323, %v9699
  %v9874 = vadd.f32 %v9324, %v9704
  %v9875 = vadd.f32 %v9325, %v9707
  %v9876 = vadd.f32 %v9326, %v9712
  %v9877 = vadd.f32 %v9327, %v9715
  %v9878 = vadd.f32 %v9328, %v9720
  %v9879 = vadd.f32 %v9329, %v9723
  %v9880 = vadd.f32 %v9330, %v9728
  %v9881 = vadd.f32 %v9331, %v9731
  %v9882 = vadd.f32 %v9332, %v9736
  %v9883 = vadd.f32 %v9333, %v9739
  %v9884 = vadd.f32 %v9334, %v9744
  %v9885 = vadd.f32 %v9335, %v9747
  %v9886 = vadd.f32 %v9336, %v9752
  %v9887 = vadd.f32 %v9337, %v9755
  %v9888 = vadd.f32 %v9338, %v9760
  %v9889 = vadd.f32 %v9339, %v9763
  %v9890 = vadd.f32 %v9340, %v9768
  %v9891 = vadd.f32 %v9341, %v9771
  %v9892 = vadd.f32 %v9342, %v9776
  %v9893 = vadd.f32 %v9343, %v9779
  %v9894 = vadd.f32 %v9344, %v9784
  %v9895 = vadd.f32 %v9345, %v9787
  %v9896 = vadd.f32 %v9346, %v9792
  %v9897 = vadd.f32 %v9347, %v9795
  %v9898 = vadd.f32 %v9348, %v9800
  %v9899 = vadd.f32 %v9349, %v9803
  %v9900 = vadd.f32 %v9350, %v9808
  %v9901 = vadd.f32 %v9351, %v9811
  %v9902 = vadd.f32 %v9352, %v9816
  %v9903 = vadd.f32 %v9353, %v9819
  %v9904 = vadd.f32 %v9354, %v9824
  %v9905 = vadd.f32 %v9355, %v9827
  %v9906 = vadd.f32 %v9356, %v9832
  %v9907 = vadd.f32 %v9357, %v9835
  %v9908 = vadd.f32 %v9358, %v9840
  %v9909 = vadd.f32 %v9359, %v9843
  %v9910 = vld [vmem:[%s6707 + $0x9] sm:$0xff]
  %v9911 = vld [vmem:[%s6707 + $0x11] sm:$0xff]
  %v9912 = vld [vmem:[%s6707 + $0x29] sm:$0xff]
  %v9913 = vld [vmem:[%s6707 + $0x31] sm:$0xff]
  %v9914 = vld [vmem:[%s6707 + $0x49] sm:$0xff]
  %v9915 = vld [vmem:[%s6707 + $0x51] sm:$0xff]
  %v9916 = vld [vmem:[%s6707 + $0x69] sm:$0xff]
  %v9917 = vld [vmem:[%s6707 + $0x71] sm:$0xff]
  %v9918 = vld [vmem:[%s6707 + $0x89] sm:$0xff]
  %v9919 = vld [vmem:[%s6707 + $0x91] sm:$0xff]
  %v9920 = vld [vmem:[%s6707 + $0xa9] sm:$0xff]
  %v9921 = vld [vmem:[%s6707 + $0xb1] sm:$0xff]
  %v9922 = vld [vmem:[%s6707 + $0xc9] sm:$0xff]
  %v9923 = vld [vmem:[%s6707 + $0xd1] sm:$0xff]
  %v9924 = vld [vmem:[%s6707 + $0xe9] sm:$0xff]
  %v9925 = vld [vmem:[%s6707 + $0xf1] sm:$0xff]
  %v9926 = vld [vmem:[%s6707 + $0x109] sm:$0xff]
  %v9927 = vld [vmem:[%s6707 + $0x111] sm:$0xff]
  %v9928 = vld [vmem:[%s6707 + $0x129] sm:$0xff]
  %v9929 = vld [vmem:[%s6707 + $0x131] sm:$0xff]
  %v9930 = vld [vmem:[%s6707 + $0x149] sm:$0xff]
  %v9931 = vld [vmem:[%s6707 + $0x151] sm:$0xff]
  %v9932 = vld [vmem:[%s6707 + $0x169] sm:$0xff]
  %v9933 = vld [vmem:[%s6707 + $0x171] sm:$0xff]
  %v9934 = vld [vmem:[%s6707 + $0x189] sm:$0xff]
  %v9935 = vld [vmem:[%s6707 + $0x191] sm:$0xff]
  %v9936 = vld [vmem:[%s6707 + $0x1a9] sm:$0xff]
  %v9937 = vld [vmem:[%s6707 + $0x1b1] sm:$0xff]
  %v9938 = vld [vmem:[%s6707 + $0x1c9] sm:$0xff]
  %v9939 = vld [vmem:[%s6707 + $0x1d1] sm:$0xff]
  %v9940 = vld [vmem:[%s6707 + $0x1e9] sm:$0xff]
  %v9941 = vld [vmem:[%s6707 + $0x1f1] sm:$0xff]
  %v9942 = vld [vmem:[%s6707 + $0x249] sm:$0xff]
  %v9943 = vld [vmem:[%s6707 + $0x251] sm:$0xff]
  %v9944 = vld [vmem:[%s6707 + $0x269] sm:$0xff]
  %v9945 = vld [vmem:[%s6707 + $0x271] sm:$0xff]
  %v9946 = vld [vmem:[%s6707 + $0x289] sm:$0xff]
  %v9947 = vld [vmem:[%s6707 + $0x291] sm:$0xff]
  %v9948 = vld [vmem:[%s6707 + $0x2a9] sm:$0xff]
  %v9949 = vld [vmem:[%s6707 + $0x2b1] sm:$0xff]
  %v9950 = vld [vmem:[%s6707 + $0x2c9] sm:$0xff]
  %v9951 = vld [vmem:[%s6707 + $0x2d1] sm:$0xff]
  %v9952 = vld [vmem:[%s6707 + $0x2e9] sm:$0xff]
  %v9953 = vld [vmem:[%s6707 + $0x2f1] sm:$0xff]
  %v9954 = vld [vmem:[%s6707 + $0x309] sm:$0xff]
  %v9955 = vld [vmem:[%s6707 + $0x311] sm:$0xff]
  %v9956 = vld [vmem:[%s6707 + $0x329] sm:$0xff]
  %v9957 = vld [vmem:[%s6707 + $0x331] sm:$0xff]
  %v9958 = vld [vmem:[%s6707 + $0x349] sm:$0xff]
  %v9959 = vld [vmem:[%s6707 + $0x351] sm:$0xff]
  %v9960 = vld [vmem:[%s6707 + $0x369] sm:$0xff]
  %v9961 = vld [vmem:[%s6707 + $0x371] sm:$0xff]
  %v9962 = vld [vmem:[%s6707 + $0x389] sm:$0xff]
  %v9963 = vld [vmem:[%s6707 + $0x391] sm:$0xff]
  %v9964 = vld [vmem:[%s6707 + $0x3a9] sm:$0xff]
  %v9965 = vld [vmem:[%s6707 + $0x3b1] sm:$0xff]
  %v9966 = vld [vmem:[%s6707 + $0x3c9] sm:$0xff]
  %v9967 = vld [vmem:[%s6707 + $0x3d1] sm:$0xff]
  %v9968 = vld [vmem:[%s6707 + $0x3e9] sm:$0xff]
  %v9969 = vld [vmem:[%s6707 + $0x3f1] sm:$0xff]
  %v9970 = vld [vmem:[%s6707 + $0x409] sm:$0xff]
  %v9971 = vld [vmem:[%s6707 + $0x411] sm:$0xff]
  %v9972 = vld [vmem:[%s6707 + $0x429] sm:$0xff]
  %v9973 = vld [vmem:[%s6707 + $0x431] sm:$0xff]
  %v9974 = vpack.c.bf16 %v9911, %v9910
  %v9975 = vpack.c.bf16 %v9913, %v9912
  %v9976 = vpack.c.bf16 %v9915, %v9914
  %v9977 = vpack.c.bf16 %v9917, %v9916
  %v9978 = vpack.c.bf16 %v9919, %v9918
  %v9979 = vpack.c.bf16 %v9921, %v9920
  %v9980 = vpack.c.bf16 %v9923, %v9922
  %v9981 = vpack.c.bf16 %v9925, %v9924
  %v9982 = vpack.c.bf16 %v9927, %v9926
  %v9983 = vpack.c.bf16 %v9929, %v9928
  %v9984 = vpack.c.bf16 %v9931, %v9930
  %v9985 = vpack.c.bf16 %v9933, %v9932
  %v9986 = vpack.c.bf16 %v9935, %v9934
  %v9987 = vpack.c.bf16 %v9937, %v9936
  %v9988 = vpack.c.bf16 %v9939, %v9938
  %v9989 = vpack.c.bf16 %v9941, %v9940
  %v9990 = vpack.c.bf16 %v9943, %v9942
  %v9991 = vpack.c.bf16 %v9945, %v9944
  %v9992 = vpack.c.bf16 %v9947, %v9946
  %v9993 = vpack.c.bf16 %v9949, %v9948
  %v9994 = vpack.c.bf16 %v9951, %v9950
  %v9995 = vpack.c.bf16 %v9953, %v9952
  %v9996 = vpack.c.bf16 %v9955, %v9954
  %v9997 = vpack.c.bf16 %v9957, %v9956
  %v9998 = vpack.c.bf16 %v9959, %v9958
  %v9999 = vpack.c.bf16 %v9961, %v9960
  %v10000 = vpack.c.bf16 %v9963, %v9962
  %v10001 = vpack.c.bf16 %v9965, %v9964
  %v10002 = vpack.c.bf16 %v9967, %v9966
  %v10003 = vpack.c.bf16 %v9969, %v9968
  %v10004 = vpack.c.bf16 %v9971, %v9970
  %v10005 = vpack.c.bf16 %v9973, %v9972
  %s10006 = scalar_lea.vmem %s2, 20
  %v10007 = vld [vmem:[%s10006] sm:$0xf]
  %v10009 = vsel %vm5895, %v9974, 0
  %v10012 = vsel %vm5895, %v9975, 0
  %v10015 = vsel %vm5895, %v9976, 0
  %v10018 = vsel %vm5895, %v9977, 0
  %v10021 = vsel %vm5895, %v9978, 0
  %v10024 = vsel %vm5895, %v9979, 0
  %v10027 = vsel %vm5895, %v9980, 0
  %v10030 = vsel %vm5895, %v9981, 0
  %v10033 = vsel %vm5895, %v9982, 0
  %v10036 = vsel %vm5895, %v9983, 0
  %v10039 = vsel %vm5895, %v9984, 0
  %v10042 = vsel %vm5895, %v9985, 0
  %v10045 = vsel %vm5895, %v9986, 0
  %v10048 = vsel %vm5895, %v9987, 0
  %v10051 = vsel %vm5895, %v9988, 0
  %v10054 = vsel %vm5895, %v9989, 0
  %v10057 = vsel %vm5895, %v9990, 0
  %v10060 = vsel %vm5895, %v9991, 0
  %v10063 = vsel %vm5895, %v9992, 0
  %v10066 = vsel %vm5895, %v9993, 0
  %v10069 = vsel %vm5895, %v9994, 0
  %v10072 = vsel %vm5895, %v9995, 0
  %v10075 = vsel %vm5895, %v9996, 0
  %v10078 = vsel %vm5895, %v9997, 0
  %v10081 = vsel %vm5895, %v9998, 0
  %v10084 = vsel %vm5895, %v9999, 0
  %v10087 = vsel %vm5895, %v10000, 0
  %v10090 = vsel %vm5895, %v10001, 0
  %v10093 = vsel %vm5895, %v10002, 0
  %v10096 = vsel %vm5895, %v10003, 0
  %v10099 = vsel %vm5895, %v10004, 0
  %v10102 = vsel %vm5895, %v10005, 0
  %v10105 = vsel %vm7029, %v10007, 0
  %10107 = vmatprep.subr.bf16.mxu0 0
  %10108 = vmatpush1.bf16.msra.mxu0 %v10105
  %10109 = vmatprep.subr.bf16.mxu0 0
  %10110 = vmatpush1.bf16.msra.mxu0 0
  %10111 = vmatprep.subr.bf16.mxu0 0
  %10112 = vmatpush1.bf16.msra.mxu0 0
  %10113 = vmatprep.subr.bf16.mxu0 0
  %10114 = vmatpush1.bf16.msra.mxu0 0
  %10115 = vmatprep.subr.bf16.mxu0 0
  %10116 = vmatpush1.bf16.msra.mxu0 0
  %10117 = vmatprep.subr.bf16.mxu0 0
  %10118 = vmatpush1.bf16.msra.mxu0 0
  %10119 = vmatprep.subr.bf16.mxu0 0
  %10120 = vmatpush1.bf16.msra.mxu0 0
  %10121 = vmatprep.subr.bf16.mxu0 0
  %10122 = vmatpush1.bf16.msra.mxu0 0
  %10123 = vmatprep.subr.bf16.mxu0 0
  %10124 = vmatpush1.bf16.msra.mxu0 0
  %10125 = vmatprep.subr.bf16.mxu0 0
  %10126 = vmatpush1.bf16.msra.mxu0 0
  %10127 = vmatprep.subr.bf16.mxu0 0
  %10128 = vmatpush1.bf16.msra.mxu0 0
  %10129 = vmatprep.subr.bf16.mxu0 0
  %10130 = vmatpush1.bf16.msra.mxu0 0
  %10131 = vmatprep.subr.bf16.mxu0 0
  %10132 = vmatpush1.bf16.msra.mxu0 0
  %10133 = vmatprep.subr.bf16.mxu0 0
  %10134 = vmatpush1.bf16.msra.mxu0 0
  %10135 = vmatprep.subr.bf16.mxu0 0
  %10136 = vmatpush1.bf16.msra.mxu0 0
  %10137 = vmatprep.subr.bf16.mxu0 0
  %10138 = vmatpush1.bf16.msra.mxu0 0
  %10139 = vmatprep.mubr.bf16.mxu0 0
  %10140 = vmatmul.mubr.bf16.gmra.mrb[0].mxu0 %v10009
  %v10141 = vpop.f32.mrb[0].mxu0
  %v10142 = vadd.f32 0.0, %v10141
  %v10143 = vpop.f32.mrb[0].mxu0
  %v10144 = vpop.f32.mrb[0].mxu0
  %v10145 = vadd.f32 0.0, %v10144
  %v10146 = vpop.f32.mrb[0].mxu0
  %10147 = vmatprep.mubr.bf16.mxu0 0
  %10148 = vmatmul.mubr.bf16.gmra.mrb[0].mxu0 %v10012
  %v10149 = vpop.f32.mrb[0].mxu0
  %v10150 = vadd.f32 0.0, %v10149
  %v10151 = vpop.f32.mrb[0].mxu0
  %v10152 = vpop.f32.mrb[0].mxu0
  %v10153 = vadd.f32 0.0, %v10152
  %v10154 = vpop.f32.mrb[0].mxu0
  %10155 = vmatprep.mubr.bf16.mxu0 0
  %10156 = vmatmul.mubr.bf16.gmra.mrb[0].mxu0 %v10015
  %v10157 = vpop.f32.mrb[0].mxu0
  %v10158 = vadd.f32 0.0, %v10157
  %v10159 = vpop.f32.mrb[0].mxu0
  %v10160 = vpop.f32.mrb[0].mxu0
  %v10161 = vadd.f32 0.0, %v10160
  %v10162 = vpop.f32.mrb[0].mxu0
  %10163 = vmatprep.mubr.bf16.mxu0 0
  %10164 = vmatmul.mubr.bf16.gmra.mrb[0].mxu0 %v10018
  %v10165 = vpop.f32.mrb[0].mxu0
  %v10166 = vadd.f32 0.0, %v10165
  %v10167 = vpop.f32.mrb[0].mxu0
  %v10168 = vpop.f32.mrb[0].mxu0
  %v10169 = vadd.f32 0.0, %v10168
  %v10170 = vpop.f32.mrb[0].mxu0
  %10171 = vmatprep.mubr.bf16.mxu0 0
  %10172 = vmatmul.mubr.bf16.gmra.mrb[0].mxu0 %v10021
  %v10173 = vpop.f32.mrb[0].mxu0
  %v10174 = vadd.f32 0.0, %v10173
  %v10175 = vpop.f32.mrb[0].mxu0
  %v10176 = vpop.f32.mrb[0].mxu0
  %v10177 = vadd.f32 0.0, %v10176
  %v10178 = vpop.f32.mrb[0].mxu0
  %10179 = vmatprep.mubr.bf16.mxu0 0
  %10180 = vmatmul.mubr.bf16.gmra.mrb[0].mxu0 %v10024
  %v10181 = vpop.f32.mrb[0].mxu0
  %v10182 = vadd.f32 0.0, %v10181
  %v10183 = vpop.f32.mrb[0].mxu0
  %v10184 = vpop.f32.mrb[0].mxu0
  %v10185 = vadd.f32 0.0, %v10184
  %v10186 = vpop.f32.mrb[0].mxu0
  %10187 = vmatprep.mubr.bf16.mxu0 0
  %10188 = vmatmul.mubr.bf16.gmra.mrb[0].mxu0 %v10027
  %v10189 = vpop.f32.mrb[0].mxu0
  %v10190 = vadd.f32 0.0, %v10189
  %v10191 = vpop.f32.mrb[0].mxu0
  %v10192 = vpop.f32.mrb[0].mxu0
  %v10193 = vadd.f32 0.0, %v10192
  %v10194 = vpop.f32.mrb[0].mxu0
  %10195 = vmatprep.mubr.bf16.mxu0 0
  %10196 = vmatmul.mubr.bf16.gmra.mrb[0].mxu0 %v10030
  %v10197 = vpop.f32.mrb[0].mxu0
  %v10198 = vadd.f32 0.0, %v10197
  %v10199 = vpop.f32.mrb[0].mxu0
  %v10200 = vpop.f32.mrb[0].mxu0
  %v10201 = vadd.f32 0.0, %v10200
  %v10202 = vpop.f32.mrb[0].mxu0
  %10203 = vmatprep.mubr.bf16.mxu0 0
  %10204 = vmatmul.mubr.bf16.gmra.mrb[0].mxu0 %v10033
  %v10205 = vpop.f32.mrb[0].mxu0
  %v10206 = vadd.f32 0.0, %v10205
  %v10207 = vpop.f32.mrb[0].mxu0
  %v10208 = vpop.f32.mrb[0].mxu0
  %v10209 = vadd.f32 0.0, %v10208
  %v10210 = vpop.f32.mrb[0].mxu0
  %10211 = vmatprep.mubr.bf16.mxu0 0
  %10212 = vmatmul.mubr.bf16.gmra.mrb[0].mxu0 %v10036
  %v10213 = vpop.f32.mrb[0].mxu0
  %v10214 = vadd.f32 0.0, %v10213
  %v10215 = vpop.f32.mrb[0].mxu0
  %v10216 = vpop.f32.mrb[0].mxu0
  %v10217 = vadd.f32 0.0, %v10216
  %v10218 = vpop.f32.mrb[0].mxu0
  %10219 = vmatprep.mubr.bf16.mxu0 0
  %10220 = vmatmul.mubr.bf16.gmra.mrb[0].mxu0 %v10039
  %v10221 = vpop.f32.mrb[0].mxu0
  %v10222 = vadd.f32 0.0, %v10221
  %v10223 = vpop.f32.mrb[0].mxu0
  %v10224 = vpop.f32.mrb[0].mxu0
  %v10225 = vadd.f32 0.0, %v10224
  %v10226 = vpop.f32.mrb[0].mxu0
  %10227 = vmatprep.mubr.bf16.mxu0 0
  %10228 = vmatmul.mubr.bf16.gmra.mrb[0].mxu0 %v10042
  %v10229 = vpop.f32.mrb[0].mxu0
  %v10230 = vadd.f32 0.0, %v10229
  %v10231 = vpop.f32.mrb[0].mxu0
  %v10232 = vpop.f32.mrb[0].mxu0
  %v10233 = vadd.f32 0.0, %v10232
  %v10234 = vpop.f32.mrb[0].mxu0
  %10235 = vmatprep.mubr.bf16.mxu0 0
  %10236 = vmatmul.mubr.bf16.gmra.mrb[0].mxu0 %v10045
  %v10237 = vpop.f32.mrb[0].mxu0
  %v10238 = vadd.f32 0.0, %v10237
  %v10239 = vpop.f32.mrb[0].mxu0
  %v10240 = vpop.f32.mrb[0].mxu0
  %v10241 = vadd.f32 0.0, %v10240
  %v10242 = vpop.f32.mrb[0].mxu0
  %10243 = vmatprep.mubr.bf16.mxu0 0
  %10244 = vmatmul.mubr.bf16.gmra.mrb[0].mxu0 %v10048
  %v10245 = vpop.f32.mrb[0].mxu0
  %v10246 = vadd.f32 0.0, %v10245
  %v10247 = vpop.f32.mrb[0].mxu0
  %v10248 = vpop.f32.mrb[0].mxu0
  %v10249 = vadd.f32 0.0, %v10248
  %v10250 = vpop.f32.mrb[0].mxu0
  %10251 = vmatprep.mubr.bf16.mxu0 0
  %10252 = vmatmul.mubr.bf16.gmra.mrb[0].mxu0 %v10051
  %v10253 = vpop.f32.mrb[0].mxu0
  %v10254 = vadd.f32 0.0, %v10253
  %v10255 = vpop.f32.mrb[0].mxu0
  %v10256 = vpop.f32.mrb[0].mxu0
  %v10257 = vadd.f32 0.0, %v10256
  %v10258 = vpop.f32.mrb[0].mxu0
  %10259 = vmatprep.mubr.bf16.mxu0 0
  %10260 = vmatmul.mubr.bf16.gmra.mrb[0].mxu0 %v10054
  %v10261 = vpop.f32.mrb[0].mxu0
  %v10262 = vadd.f32 0.0, %v10261
  %v10263 = vpop.f32.mrb[0].mxu0
  %v10264 = vpop.f32.mrb[0].mxu0
  %v10265 = vadd.f32 0.0, %v10264
  %v10266 = vpop.f32.mrb[0].mxu0
  %10267 = vmatprep.mubr.bf16.mxu0 0
  %10268 = vmatmul.mubr.bf16.gmra.mrb[0].mxu0 %v10057
  %v10269 = vpop.f32.mrb[0].mxu0
  %v10270 = vadd.f32 0.0, %v10269
  %v10271 = vpop.f32.mrb[0].mxu0
  %v10272 = vpop.f32.mrb[0].mxu0
  %v10273 = vadd.f32 0.0, %v10272
  %v10274 = vpop.f32.mrb[0].mxu0
  %10275 = vmatprep.mubr.bf16.mxu0 0
  %10276 = vmatmul.mubr.bf16.gmra.mrb[0].mxu0 %v10060
  %v10277 = vpop.f32.mrb[0].mxu0
  %v10278 = vadd.f32 0.0, %v10277
  %v10279 = vpop.f32.mrb[0].mxu0
  %v10280 = vpop.f32.mrb[0].mxu0
  %v10281 = vadd.f32 0.0, %v10280
  %v10282 = vpop.f32.mrb[0].mxu0
  %10283 = vmatprep.mubr.bf16.mxu0 0
  %10284 = vmatmul.mubr.bf16.gmra.mrb[0].mxu0 %v10063
  %v10285 = vpop.f32.mrb[0].mxu0
  %v10286 = vadd.f32 0.0, %v10285
  %v10287 = vpop.f32.mrb[0].mxu0
  %v10288 = vpop.f32.mrb[0].mxu0
  %v10289 = vadd.f32 0.0, %v10288
  %v10290 = vpop.f32.mrb[0].mxu0
  %10291 = vmatprep.mubr.bf16.mxu0 0
  %10292 = vmatmul.mubr.bf16.gmra.mrb[0].mxu0 %v10066
  %v10293 = vpop.f32.mrb[0].mxu0
  %v10294 = vadd.f32 0.0, %v10293
  %v10295 = vpop.f32.mrb[0].mxu0
  %v10296 = vpop.f32.mrb[0].mxu0
  %v10297 = vadd.f32 0.0, %v10296
  %v10298 = vpop.f32.mrb[0].mxu0
  %10299 = vmatprep.mubr.bf16.mxu0 0
  %10300 = vmatmul.mubr.bf16.gmra.mrb[0].mxu0 %v10069
  %v10301 = vpop.f32.mrb[0].mxu0
  %v10302 = vadd.f32 0.0, %v10301
  %v10303 = vpop.f32.mrb[0].mxu0
  %v10304 = vpop.f32.mrb[0].mxu0
  %v10305 = vadd.f32 0.0, %v10304
  %v10306 = vpop.f32.mrb[0].mxu0
  %10307 = vmatprep.mubr.bf16.mxu0 0
  %10308 = vmatmul.mubr.bf16.gmra.mrb[0].mxu0 %v10072
  %v10309 = vpop.f32.mrb[0].mxu0
  %v10310 = vadd.f32 0.0, %v10309
  %v10311 = vpop.f32.mrb[0].mxu0
  %v10312 = vpop.f32.mrb[0].mxu0
  %v10313 = vadd.f32 0.0, %v10312
  %v10314 = vpop.f32.mrb[0].mxu0
  %10315 = vmatprep.mubr.bf16.mxu0 0
  %10316 = vmatmul.mubr.bf16.gmra.mrb[0].mxu0 %v10075
  %v10317 = vpop.f32.mrb[0].mxu0
  %v10318 = vadd.f32 0.0, %v10317
  %v10319 = vpop.f32.mrb[0].mxu0
  %v10320 = vpop.f32.mrb[0].mxu0
  %v10321 = vadd.f32 0.0, %v10320
  %v10322 = vpop.f32.mrb[0].mxu0
  %10323 = vmatprep.mubr.bf16.mxu0 0
  %10324 = vmatmul.mubr.bf16.gmra.mrb[0].mxu0 %v10078
  %v10325 = vpop.f32.mrb[0].mxu0
  %v10326 = vadd.f32 0.0, %v10325
  %v10327 = vpop.f32.mrb[0].mxu0
  %v10328 = vpop.f32.mrb[0].mxu0
  %v10329 = vadd.f32 0.0, %v10328
  %v10330 = vpop.f32.mrb[0].mxu0
  %10331 = vmatprep.mubr.bf16.mxu0 0
  %10332 = vmatmul.mubr.bf16.gmra.mrb[0].mxu0 %v10081
  %v10333 = vpop.f32.mrb[0].mxu0
  %v10334 = vadd.f32 0.0, %v10333
  %v10335 = vpop.f32.mrb[0].mxu0
  %v10336 = vpop.f32.mrb[0].mxu0
  %v10337 = vadd.f32 0.0, %v10336
  %v10338 = vpop.f32.mrb[0].mxu0
  %10339 = vmatprep.mubr.bf16.mxu0 0
  %10340 = vmatmul.mubr.bf16.gmra.mrb[0].mxu0 %v10084
  %v10341 = vpop.f32.mrb[0].mxu0
  %v10342 = vadd.f32 0.0, %v10341
  %v10343 = vpop.f32.mrb[0].mxu0
  %v10344 = vpop.f32.mrb[0].mxu0
  %v10345 = vadd.f32 0.0, %v10344
  %v10346 = vpop.f32.mrb[0].mxu0
  %10347 = vmatprep.mubr.bf16.mxu0 0
  %10348 = vmatmul.mubr.bf16.gmra.mrb[0].mxu0 %v10087
  %v10349 = vpop.f32.mrb[0].mxu0
  %v10350 = vadd.f32 0.0, %v10349
  %v10351 = vpop.f32.mrb[0].mxu0
  %v10352 = vpop.f32.mrb[0].mxu0
  %v10353 = vadd.f32 0.0, %v10352
  %v10354 = vpop.f32.mrb[0].mxu0
  %10355 = vmatprep.mubr.bf16.mxu0 0
  %10356 = vmatmul.mubr.bf16.gmra.mrb[0].mxu0 %v10090
  %v10357 = vpop.f32.mrb[0].mxu0
  %v10358 = vadd.f32 0.0, %v10357
  %v10359 = vpop.f32.mrb[0].mxu0
  %v10360 = vpop.f32.mrb[0].mxu0
  %v10361 = vadd.f32 0.0, %v10360
  %v10362 = vpop.f32.mrb[0].mxu0
  %10363 = vmatprep.mubr.bf16.mxu0 0
  %10364 = vmatmul.mubr.bf16.gmra.mrb[0].mxu0 %v10093
  %v10365 = vpop.f32.mrb[0].mxu0
  %v10366 = vadd.f32 0.0, %v10365
  %v10367 = vpop.f32.mrb[0].mxu0
  %v10368 = vpop.f32.mrb[0].mxu0
  %v10369 = vadd.f32 0.0, %v10368
  %v10370 = vpop.f32.mrb[0].mxu0
  %10371 = vmatprep.mubr.bf16.mxu0 0
  %10372 = vmatmul.mubr.bf16.gmra.mrb[0].mxu0 %v10096
  %v10373 = vpop.f32.mrb[0].mxu0
  %v10374 = vadd.f32 0.0, %v10373
  %v10375 = vpop.f32.mrb[0].mxu0
  %v10376 = vpop.f32.mrb[0].mxu0
  %v10377 = vadd.f32 0.0, %v10376
  %v10378 = vpop.f32.mrb[0].mxu0
  %10379 = vmatprep.mubr.bf16.mxu0 0
  %10380 = vmatmul.mubr.bf16.gmra.mrb[0].mxu0 %v10099
  %v10381 = vpop.f32.mrb[0].mxu0
  %v10382 = vadd.f32 0.0, %v10381
  %v10383 = vpop.f32.mrb[0].mxu0
  %v10384 = vpop.f32.mrb[0].mxu0
  %v10385 = vadd.f32 0.0, %v10384
  %v10386 = vpop.f32.mrb[0].mxu0
  %10387 = vmatprep.mubr.bf16.mxu0 0
  %10388 = vmatmul.mubr.bf16.gmra.mrb[0].mxu0 %v10102
  %v10389 = vpop.f32.mrb[0].mxu0
  %v10390 = vadd.f32 0.0, %v10389
  %v10391 = vpop.f32.mrb[0].mxu0
  %v10392 = vpop.f32.mrb[0].mxu0
  %v10393 = vadd.f32 0.0, %v10392
  %v10394 = vpop.f32.mrb[0].mxu0
  %10395 = vdwg.mxu0
  %v10396 = vadd.f32 %v9846, %v10142
  %v10397 = vadd.f32 %v9847, %v10145
  %v10398 = vadd.f32 %v9848, %v10150
  %v10399 = vadd.f32 %v9849, %v10153
  %v10400 = vadd.f32 %v9850, %v10158
  %v10401 = vadd.f32 %v9851, %v10161
  %v10402 = vadd.f32 %v9852, %v10166
  %v10403 = vadd.f32 %v9853, %v10169
  %v10404 = vadd.f32 %v9854, %v10174
  %v10405 = vadd.f32 %v9855, %v10177
  %v10406 = vadd.f32 %v9856, %v10182
  %v10407 = vadd.f32 %v9857, %v10185
  %v10408 = vadd.f32 %v9858, %v10190
  %v10409 = vadd.f32 %v9859, %v10193
  %v10410 = vadd.f32 %v9860, %v10198
  %v10411 = vadd.f32 %v9861, %v10201
  %v10412 = vadd.f32 %v9862, %v10206
  %v10413 = vadd.f32 %v9863, %v10209
  %v10414 = vadd.f32 %v9864, %v10214
  %v10415 = vadd.f32 %v9865, %v10217
  %v10416 = vadd.f32 %v9866, %v10222
  %v10417 = vadd.f32 %v9867, %v10225
  %v10418 = vadd.f32 %v9868, %v10230
  %v10419 = vadd.f32 %v9869, %v10233
  %v10420 = vadd.f32 %v9870, %v10238
  %v10421 = vadd.f32 %v9871, %v10241
  %v10422 = vadd.f32 %v9872, %v10246
  %v10423 = vadd.f32 %v9873, %v10249
  %v10424 = vadd.f32 %v9874, %v10254
  %v10425 = vadd.f32 %v9875, %v10257
  %v10426 = vadd.f32 %v9876, %v10262
  %v10427 = vadd.f32 %v9877, %v10265
  %v10428 = vadd.f32 %v9878, %v10270
  %v10429 = vadd.f32 %v9879, %v10273
  %v10430 = vadd.f32 %v9880, %v10278
  %v10431 = vadd.f32 %v9881, %v10281
  %v10432 = vadd.f32 %v9882, %v10286
  %v10433 = vadd.f32 %v9883, %v10289
  %v10434 = vadd.f32 %v9884, %v10294
  %v10435 = vadd.f32 %v9885, %v10297
  %v10436 = vadd.f32 %v9886, %v10302
  %v10437 = vadd.f32 %v9887, %v10305
  %v10438 = vadd.f32 %v9888, %v10310
  %v10439 = vadd.f32 %v9889, %v10313
  %v10440 = vadd.f32 %v9890, %v10318
  %v10441 = vadd.f32 %v9891, %v10321
  %v10442 = vadd.f32 %v9892, %v10326
  %v10443 = vadd.f32 %v9893, %v10329
  %v10444 = vadd.f32 %v9894, %v10334
  %v10445 = vadd.f32 %v9895, %v10337
  %v10446 = vadd.f32 %v9896, %v10342
  %v10447 = vadd.f32 %v9897, %v10345
  %v10448 = vadd.f32 %v9898, %v10350
  %v10449 = vadd.f32 %v9899, %v10353
  %v10450 = vadd.f32 %v9900, %v10358
  %v10451 = vadd.f32 %v9901, %v10361
  %v10452 = vadd.f32 %v9902, %v10366
  %v10453 = vadd.f32 %v9903, %v10369
  %v10454 = vadd.f32 %v9904, %v10374
  %v10455 = vadd.f32 %v9905, %v10377
  %v10456 = vadd.f32 %v9906, %v10382
  %v10457 = vadd.f32 %v9907, %v10385
  %v10458 = vadd.f32 %v9908, %v10390
  %v10459 = vadd.f32 %v9909, %v10393
  %s10460 = scalar_lea.vmem [#allocation3], 64
  %v10461 = vld [vmem:[%s10460 + $0x7] sm:$0xff]
  %v10462 = vld [vmem:[%s10460 + $0xf] sm:$0xff]
  %v10463 = vld [vmem:[%s10460 + $0x27] sm:$0xff]
  %v10464 = vld [vmem:[%s10460 + $0x2f] sm:$0xff]
  %v10465 = vld [vmem:[%s10460 + $0x47] sm:$0xff]
  %v10466 = vld [vmem:[%s10460 + $0x4f] sm:$0xff]
  %v10467 = vld [vmem:[%s10460 + $0x67] sm:$0xff]
  %v10468 = vld [vmem:[%s10460 + $0x6f] sm:$0xff]
  %v10469 = vld [vmem:[%s10460 + $0x87] sm:$0xff]
  %v10470 = vld [vmem:[%s10460 + $0x8f] sm:$0xff]
  %v10471 = vld [vmem:[%s10460 + $0xa7] sm:$0xff]
  %v10472 = vld [vmem:[%s10460 + $0xaf] sm:$0xff]
  %v10473 = vld [vmem:[%s10460 + $0xc7] sm:$0xff]
  %v10474 = vld [vmem:[%s10460 + $0xcf] sm:$0xff]
  %v10475 = vld [vmem:[%s10460 + $0xe7] sm:$0xff]
  %v10476 = vld [vmem:[%s10460 + $0xef] sm:$0xff]
  %v10477 = vld [vmem:[%s10460 + $0x107] sm:$0xff]
  %v10478 = vld [vmem:[%s10460 + $0x10f] sm:$0xff]
  %v10479 = vld [vmem:[%s10460 + $0x127] sm:$0xff]
  %v10480 = vld [vmem:[%s10460 + $0x12f] sm:$0xff]
  %v10481 = vld [vmem:[%s10460 + $0x147] sm:$0xff]
  %v10482 = vld [vmem:[%s10460 + $0x14f] sm:$0xff]
  %v10483 = vld [vmem:[%s10460 + $0x167] sm:$0xff]
  %v10484 = vld [vmem:[%s10460 + $0x16f] sm:$0xff]
  %v10485 = vld [vmem:[%s10460 + $0x187] sm:$0xff]
  %v10486 = vld [vmem:[%s10460 + $0x18f] sm:$0xff]
  %v10487 = vld [vmem:[%s10460 + $0x1a7] sm:$0xff]
  %v10488 = vld [vmem:[%s10460 + $0x1af] sm:$0xff]
  %v10489 = vld [vmem:[%s10460 + $0x1c7] sm:$0xff]
  %v10490 = vld [vmem:[%s10460 + $0x1cf] sm:$0xff]
  %v10491 = vld [vmem:[%s10460 + $0x1e7] sm:$0xff]
  %v10492 = vld [vmem:[%s10460 + $0x1ef] sm:$0xff]
  %v10493 = vld [vmem:[%s10460 + $0x247] sm:$0xff]
  %v10494 = vld [vmem:[%s10460 + $0x24f] sm:$0xff]
  %v10495 = vld [vmem:[%s10460 + $0x267] sm:$0xff]
  %v10496 = vld [vmem:[%s10460 + $0x26f] sm:$0xff]
  %v10497 = vld [vmem:[%s10460 + $0x287] sm:$0xff]
  %v10498 = vld [vmem:[%s10460 + $0x28f] sm:$0xff]
  %v10499 = vld [vmem:[%s10460 + $0x2a7] sm:$0xff]
  %v10500 = vld [vmem:[%s10460 + $0x2af] sm:$0xff]
  %v10501 = vld [vmem:[%s10460 + $0x2c7] sm:$0xff]
  %v10502 = vld [vmem:[%s10460 + $0x2cf] sm:$0xff]
  %v10503 = vld [vmem:[%s10460 + $0x2e7] sm:$0xff]
  %v10504 = vld [vmem:[%s10460 + $0x2ef] sm:$0xff]
  %v10505 = vld [vmem:[%s10460 + $0x307] sm:$0xff]
  %v10506 = vld [vmem:[%s10460 + $0x30f] sm:$0xff]
  %v10507 = vld [vmem:[%s10460 + $0x327] sm:$0xff]
  %v10508 = vld [vmem:[%s10460 + $0x32f] sm:$0xff]
  %v10509 = vld [vmem:[%s10460 + $0x347] sm:$0xff]
  %v10510 = vld [vmem:[%s10460 + $0x34f] sm:$0xff]
  %v10511 = vld [vmem:[%s10460 + $0x367] sm:$0xff]
  %v10512 = vld [vmem:[%s10460 + $0x36f] sm:$0xff]
  %v10513 = vld [vmem:[%s10460 + $0x387] sm:$0xff]
  %v10514 = vld [vmem:[%s10460 + $0x38f] sm:$0xff]
  %v10515 = vld [vmem:[%s10460 + $0x3a7] sm:$0xff]
  %v10516 = vld [vmem:[%s10460 + $0x3af] sm:$0xff]
  %v10517 = vld [vmem:[%s10460 + $0x3c7] sm:$0xff]
  %v10518 = vld [vmem:[%s10460 + $0x3cf] sm:$0xff]
  %v10519 = vld [vmem:[%s10460 + $0x3e7] sm:$0xff]
  %v10520 = vld [vmem:[%s10460 + $0x3ef] sm:$0xff]
  %v10521 = vld [vmem:[%s10460 + $0x407] sm:$0xff]
  %v10522 = vld [vmem:[%s10460 + $0x40f] sm:$0xff]
  %v10523 = vld [vmem:[%s10460 + $0x427] sm:$0xff]
  %v10524 = vld [vmem:[%s10460 + $0x42f] sm:$0xff]
  %v10525 = vpack.c.bf16 %v10462, %v10461
  %v10526 = vpack.c.bf16 %v10464, %v10463
  %v10527 = vpack.c.bf16 %v10466, %v10465
  %v10528 = vpack.c.bf16 %v10468, %v10467
  %v10529 = vpack.c.bf16 %v10470, %v10469
  %v10530 = vpack.c.bf16 %v10472, %v10471
  %v10531 = vpack.c.bf16 %v10474, %v10473
  %v10532 = vpack.c.bf16 %v10476, %v10475
  %v10533 = vpack.c.bf16 %v10478, %v10477
  %v10534 = vpack.c.bf16 %v10480, %v10479
  %v10535 = vpack.c.bf16 %v10482, %v10481
  %v10536 = vpack.c.bf16 %v10484, %v10483
  %v10537 = vpack.c.bf16 %v10486, %v10485
  %v10538 = vpack.c.bf16 %v10488, %v10487
  %v10539 = vpack.c.bf16 %v10490, %v10489
  %v10540 = vpack.c.bf16 %v10492, %v10491
  %v10541 = vpack.c.bf16 %v10494, %v10493
  %v10542 = vpack.c.bf16 %v10496, %v10495
  %v10543 = vpack.c.bf16 %v10498, %v10497
  %v10544 = vpack.c.bf16 %v10500, %v10499
  %v10545 = vpack.c.bf16 %v10502, %v10501
  %v10546 = vpack.c.bf16 %v10504, %v10503
  %v10547 = vpack.c.bf16 %v10506, %v10505
  %v10548 = vpack.c.bf16 %v10508, %v10507
  %v10549 = vpack.c.bf16 %v10510, %v10509
  %v10550 = vpack.c.bf16 %v10512, %v10511
  %v10551 = vpack.c.bf16 %v10514, %v10513
  %v10552 = vpack.c.bf16 %v10516, %v10515
  %v10553 = vpack.c.bf16 %v10518, %v10517
  %v10554 = vpack.c.bf16 %v10520, %v10519
  %v10555 = vpack.c.bf16 %v10522, %v10521
  %v10556 = vpack.c.bf16 %v10524, %v10523
  %s10557 = scalar_lea.vmem %s2, 24
  %v10558 = vld [vmem:[%s10557] sm:$0xf]
  %v10560 = vsel %vm5895, %v10525, 0
  %v10563 = vsel %vm5895, %v10526, 0
  %v10566 = vsel %vm5895, %v10527, 0
  %v10569 = vsel %vm5895, %v10528, 0
  %v10572 = vsel %vm5895, %v10529, 0
  %v10575 = vsel %vm5895, %v10530, 0
  %v10578 = vsel %vm5895, %v10531, 0
  %v10581 = vsel %vm5895, %v10532, 0
  %v10584 = vsel %vm5895, %v10533, 0
  %v10587 = vsel %vm5895, %v10534, 0
  %v10590 = vsel %vm5895, %v10535, 0
  %v10593 = vsel %vm5895, %v10536, 0
  %v10596 = vsel %vm5895, %v10537, 0
  %v10599 = vsel %vm5895, %v10538, 0
  %v10602 = vsel %vm5895, %v10539, 0
  %v10605 = vsel %vm5895, %v10540, 0
  %v10608 = vsel %vm5895, %v10541, 0
  %v10611 = vsel %vm5895, %v10542, 0
  %v10614 = vsel %vm5895, %v10543, 0
  %v10617 = vsel %vm5895, %v10544, 0
  %v10620 = vsel %vm5895, %v10545, 0
  %v10623 = vsel %vm5895, %v10546, 0
  %v10626 = vsel %vm5895, %v10547, 0
  %v10629 = vsel %vm5895, %v10548, 0
  %v10632 = vsel %vm5895, %v10549, 0
  %v10635 = vsel %vm5895, %v10550, 0
  %v10638 = vsel %vm5895, %v10551, 0
  %v10641 = vsel %vm5895, %v10552, 0
  %v10644 = vsel %vm5895, %v10553, 0
  %v10647 = vsel %vm5895, %v10554, 0
  %v10650 = vsel %vm5895, %v10555, 0
  %v10653 = vsel %vm5895, %v10556, 0
  %v10656 = vsel %vm7029, %v10558, 0
  %10658 = vmatprep.subr.bf16.mxu0 0
  %10659 = vmatpush1.bf16.msra.mxu0 %v10656
  %10660 = vmatprep.subr.bf16.mxu0 0
  %10661 = vmatpush1.bf16.msra.mxu0 0
  %10662 = vmatprep.subr.bf16.mxu0 0
  %10663 = vmatpush1.bf16.msra.mxu0 0
  %10664 = vmatprep.subr.bf16.mxu0 0
  %10665 = vmatpush1.bf16.msra.mxu0 0
  %10666 = vmatprep.subr.bf16.mxu0 0
  %10667 = vmatpush1.bf16.msra.mxu0 0
  %10668 = vmatprep.subr.bf16.mxu0 0
  %10669 = vmatpush1.bf16.msra.mxu0 0
  %10670 = vmatprep.subr.bf16.mxu0 0
  %10671 = vmatpush1.bf16.msra.mxu0 0
  %10672 = vmatprep.subr.bf16.mxu0 0
  %10673 = vmatpush1.bf16.msra.mxu0 0
  %10674 = vmatprep.subr.bf16.mxu0 0
  %10675 = vmatpush1.bf16.msra.mxu0 0
  %10676 = vmatprep.subr.bf16.mxu0 0
  %10677 = vmatpush1.bf16.msra.mxu0 0
  %10678 = vmatprep.subr.bf16.mxu0 0
  %10679 = vmatpush1.bf16.msra.mxu0 0
  %10680 = vmatprep.subr.bf16.mxu0 0
  %10681 = vmatpush1.bf16.msra.mxu0 0
  %10682 = vmatprep.subr.bf16.mxu0 0
  %10683 = vmatpush1.bf16.msra.mxu0 0
  %10684 = vmatprep.subr.bf16.mxu0 0
  %10685 = vmatpush1.bf16.msra.mxu0 0
  %10686 = vmatprep.subr.bf16.mxu0 0
  %10687 = vmatpush1.bf16.msra.mxu0 0
  %10688 = vmatprep.subr.bf16.mxu0 0
  %10689 = vmatpush1.bf16.msra.mxu0 0
  %10690 = vmatprep.mubr.bf16.mxu0 0
  %10691 = vmatmul.mubr.bf16.gmra.mrb[0].mxu0 %v10560
  %v10692 = vpop.f32.mrb[0].mxu0
  %v10693 = vadd.f32 0.0, %v10692
  %v10694 = vpop.f32.mrb[0].mxu0
  %v10695 = vpop.f32.mrb[0].mxu0
  %v10696 = vadd.f32 0.0, %v10695
  %v10697 = vpop.f32.mrb[0].mxu0
  %10698 = vmatprep.mubr.bf16.mxu0 0
  %10699 = vmatmul.mubr.bf16.gmra.mrb[0].mxu0 %v10563
  %v10700 = vpop.f32.mrb[0].mxu0
  %v10701 = vadd.f32 0.0, %v10700
  %v10702 = vpop.f32.mrb[0].mxu0
  %v10703 = vpop.f32.mrb[0].mxu0
  %v10704 = vadd.f32 0.0, %v10703
  %v10705 = vpop.f32.mrb[0].mxu0
  %10706 = vmatprep.mubr.bf16.mxu0 0
  %10707 = vmatmul.mubr.bf16.gmra.mrb[0].mxu0 %v10566
  %v10708 = vpop.f32.mrb[0].mxu0
  %v10709 = vadd.f32 0.0, %v10708
  %v10710 = vpop.f32.mrb[0].mxu0
  %v10711 = vpop.f32.mrb[0].mxu0
  %v10712 = vadd.f32 0.0, %v10711
  %v10713 = vpop.f32.mrb[0].mxu0
  %10714 = vmatprep.mubr.bf16.mxu0 0
  %10715 = vmatmul.mubr.bf16.gmra.mrb[0].mxu0 %v10569
  %v10716 = vpop.f32.mrb[0].mxu0
  %v10717 = vadd.f32 0.0, %v10716
  %v10718 = vpop.f32.mrb[0].mxu0
  %v10719 = vpop.f32.mrb[0].mxu0
  %v10720 = vadd.f32 0.0, %v10719
  %v10721 = vpop.f32.mrb[0].mxu0
  %10722 = vmatprep.mubr.bf16.mxu0 0
  %10723 = vmatmul.mubr.bf16.gmra.mrb[0].mxu0 %v10572
  %v10724 = vpop.f32.mrb[0].mxu0
  %v10725 = vadd.f32 0.0, %v10724
  %v10726 = vpop.f32.mrb[0].mxu0
  %v10727 = vpop.f32.mrb[0].mxu0
  %v10728 = vadd.f32 0.0, %v10727
  %v10729 = vpop.f32.mrb[0].mxu0
  %10730 = vmatprep.mubr.bf16.mxu0 0
  %10731 = vmatmul.mubr.bf16.gmra.mrb[0].mxu0 %v10575
  %v10732 = vpop.f32.mrb[0].mxu0
  %v10733 = vadd.f32 0.0, %v10732
  %v10734 = vpop.f32.mrb[0].mxu0
  %v10735 = vpop.f32.mrb[0].mxu0
  %v10736 = vadd.f32 0.0, %v10735
  %v10737 = vpop.f32.mrb[0].mxu0
  %10738 = vmatprep.mubr.bf16.mxu0 0
  %10739 = vmatmul.mubr.bf16.gmra.mrb[0].mxu0 %v10578
  %v10740 = vpop.f32.mrb[0].mxu0
  %v10741 = vadd.f32 0.0, %v10740
  %v10742 = vpop.f32.mrb[0].mxu0
  %v10743 = vpop.f32.mrb[0].mxu0
  %v10744 = vadd.f32 0.0, %v10743
  %v10745 = vpop.f32.mrb[0].mxu0
  %10746 = vmatprep.mubr.bf16.mxu0 0
  %10747 = vmatmul.mubr.bf16.gmra.mrb[0].mxu0 %v10581
  %v10748 = vpop.f32.mrb[0].mxu0
  %v10749 = vadd.f32 0.0, %v10748
  %v10750 = vpop.f32.mrb[0].mxu0
  %v10751 = vpop.f32.mrb[0].mxu0
  %v10752 = vadd.f32 0.0, %v10751
  %v10753 = vpop.f32.mrb[0].mxu0
  %10754 = vmatprep.mubr.bf16.mxu0 0
  %10755 = vmatmul.mubr.bf16.gmra.mrb[0].mxu0 %v10584
  %v10756 = vpop.f32.mrb[0].mxu0
  %v10757 = vadd.f32 0.0, %v10756
  %v10758 = vpop.f32.mrb[0].mxu0
  %v10759 = vpop.f32.mrb[0].mxu0
  %v10760 = vadd.f32 0.0, %v10759
  %v10761 = vpop.f32.mrb[0].mxu0
  %10762 = vmatprep.mubr.bf16.mxu0 0
  %10763 = vmatmul.mubr.bf16.gmra.mrb[0].mxu0 %v10587
  %v10764 = vpop.f32.mrb[0].mxu0
  %v10765 = vadd.f32 0.0, %v10764
  %v10766 = vpop.f32.mrb[0].mxu0
  %v10767 = vpop.f32.mrb[0].mxu0
  %v10768 = vadd.f32 0.0, %v10767
  %v10769 = vpop.f32.mrb[0].mxu0
  %10770 = vmatprep.mubr.bf16.mxu0 0
  %10771 = vmatmul.mubr.bf16.gmra.mrb[0].mxu0 %v10590
  %v10772 = vpop.f32.mrb[0].mxu0
  %v10773 = vadd.f32 0.0, %v10772
  %v10774 = vpop.f32.mrb[0].mxu0
  %v10775 = vpop.f32.mrb[0].mxu0
  %v10776 = vadd.f32 0.0, %v10775
  %v10777 = vpop.f32.mrb[0].mxu0
  %10778 = vmatprep.mubr.bf16.mxu0 0
  %10779 = vmatmul.mubr.bf16.gmra.mrb[0].mxu0 %v10593
  %v10780 = vpop.f32.mrb[0].mxu0
  %v10781 = vadd.f32 0.0, %v10780
  %v10782 = vpop.f32.mrb[0].mxu0
  %v10783 = vpop.f32.mrb[0].mxu0
  %v10784 = vadd.f32 0.0, %v10783
  %v10785 = vpop.f32.mrb[0].mxu0
  %10786 = vmatprep.mubr.bf16.mxu0 0
  %10787 = vmatmul.mubr.bf16.gmra.mrb[0].mxu0 %v10596
  %v10788 = vpop.f32.mrb[0].mxu0
  %v10789 = vadd.f32 0.0, %v10788
  %v10790 = vpop.f32.mrb[0].mxu0
  %v10791 = vpop.f32.mrb[0].mxu0
  %v10792 = vadd.f32 0.0, %v10791
  %v10793 = vpop.f32.mrb[0].mxu0
  %10794 = vmatprep.mubr.bf16.mxu0 0
  %10795 = vmatmul.mubr.bf16.gmra.mrb[0].mxu0 %v10599
  %v10796 = vpop.f32.mrb[0].mxu0
  %v10797 = vadd.f32 0.0, %v10796
  %v10798 = vpop.f32.mrb[0].mxu0
  %v10799 = vpop.f32.mrb[0].mxu0
  %v10800 = vadd.f32 0.0, %v10799
  %v10801 = vpop.f32.mrb[0].mxu0
  %10802 = vmatprep.mubr.bf16.mxu0 0
  %10803 = vmatmul.mubr.bf16.gmra.mrb[0].mxu0 %v10602
  %v10804 = vpop.f32.mrb[0].mxu0
  %v10805 = vadd.f32 0.0, %v10804
  %v10806 = vpop.f32.mrb[0].mxu0
  %v10807 = vpop.f32.mrb[0].mxu0
  %v10808 = vadd.f32 0.0, %v10807
  %v10809 = vpop.f32.mrb[0].mxu0
  %10810 = vmatprep.mubr.bf16.mxu0 0
  %10811 = vmatmul.mubr.bf16.gmra.mrb[0].mxu0 %v10605
  %v10812 = vpop.f32.mrb[0].mxu0
  %v10813 = vadd.f32 0.0, %v10812
  %v10814 = vpop.f32.mrb[0].mxu0
  %v10815 = vpop.f32.mrb[0].mxu0
  %v10816 = vadd.f32 0.0, %v10815
  %v10817 = vpop.f32.mrb[0].mxu0
  %10818 = vmatprep.mubr.bf16.mxu0 0
  %10819 = vmatmul.mubr.bf16.gmra.mrb[0].mxu0 %v10608
  %v10820 = vpop.f32.mrb[0].mxu0
  %v10821 = vadd.f32 0.0, %v10820
  %v10822 = vpop.f32.mrb[0].mxu0
  %v10823 = vpop.f32.mrb[0].mxu0
  %v10824 = vadd.f32 0.0, %v10823
  %v10825 = vpop.f32.mrb[0].mxu0
  %10826 = vmatprep.mubr.bf16.mxu0 0
  %10827 = vmatmul.mubr.bf16.gmra.mrb[0].mxu0 %v10611
  %v10828 = vpop.f32.mrb[0].mxu0
  %v10829 = vadd.f32 0.0, %v10828
  %v10830 = vpop.f32.mrb[0].mxu0
  %v10831 = vpop.f32.mrb[0].mxu0
  %v10832 = vadd.f32 0.0, %v10831
  %v10833 = vpop.f32.mrb[0].mxu0
  %10834 = vmatprep.mubr.bf16.mxu0 0
  %10835 = vmatmul.mubr.bf16.gmra.mrb[0].mxu0 %v10614
  %v10836 = vpop.f32.mrb[0].mxu0
  %v10837 = vadd.f32 0.0, %v10836
  %v10838 = vpop.f32.mrb[0].mxu0
  %v10839 = vpop.f32.mrb[0].mxu0
  %v10840 = vadd.f32 0.0, %v10839
  %v10841 = vpop.f32.mrb[0].mxu0
  %10842 = vmatprep.mubr.bf16.mxu0 0
  %10843 = vmatmul.mubr.bf16.gmra.mrb[0].mxu0 %v10617
  %v10844 = vpop.f32.mrb[0].mxu0
  %v10845 = vadd.f32 0.0, %v10844
  %v10846 = vpop.f32.mrb[0].mxu0
  %v10847 = vpop.f32.mrb[0].mxu0
  %v10848 = vadd.f32 0.0, %v10847
  %v10849 = vpop.f32.mrb[0].mxu0
  %10850 = vmatprep.mubr.bf16.mxu0 0
  %10851 = vmatmul.mubr.bf16.gmra.mrb[0].mxu0 %v10620
  %v10852 = vpop.f32.mrb[0].mxu0
  %v10853 = vadd.f32 0.0, %v10852
  %v10854 = vpop.f32.mrb[0].mxu0
  %v10855 = vpop.f32.mrb[0].mxu0
  %v10856 = vadd.f32 0.0, %v10855
  %v10857 = vpop.f32.mrb[0].mxu0
  %10858 = vmatprep.mubr.bf16.mxu0 0
  %10859 = vmatmul.mubr.bf16.gmra.mrb[0].mxu0 %v10623
  %v10860 = vpop.f32.mrb[0].mxu0
  %v10861 = vadd.f32 0.0, %v10860
  %v10862 = vpop.f32.mrb[0].mxu0
  %v10863 = vpop.f32.mrb[0].mxu0
  %v10864 = vadd.f32 0.0, %v10863
  %v10865 = vpop.f32.mrb[0].mxu0
  %10866 = vmatprep.mubr.bf16.mxu0 0
  %10867 = vmatmul.mubr.bf16.gmra.mrb[0].mxu0 %v10626
  %v10868 = vpop.f32.mrb[0].mxu0
  %v10869 = vadd.f32 0.0, %v10868
  %v10870 = vpop.f32.mrb[0].mxu0
  %v10871 = vpop.f32.mrb[0].mxu0
  %v10872 = vadd.f32 0.0, %v10871
  %v10873 = vpop.f32.mrb[0].mxu0
  %10874 = vmatprep.mubr.bf16.mxu0 0
  %10875 = vmatmul.mubr.bf16.gmra.mrb[0].mxu0 %v10629
  %v10876 = vpop.f32.mrb[0].mxu0
  %v10877 = vadd.f32 0.0, %v10876
  %v10878 = vpop.f32.mrb[0].mxu0
  %v10879 = vpop.f32.mrb[0].mxu0
  %v10880 = vadd.f32 0.0, %v10879
  %v10881 = vpop.f32.mrb[0].mxu0
  %10882 = vmatprep.mubr.bf16.mxu0 0
  %10883 = vmatmul.mubr.bf16.gmra.mrb[0].mxu0 %v10632
  %v10884 = vpop.f32.mrb[0].mxu0
  %v10885 = vadd.f32 0.0, %v10884
  %v10886 = vpop.f32.mrb[0].mxu0
  %v10887 = vpop.f32.mrb[0].mxu0
  %v10888 = vadd.f32 0.0, %v10887
  %v10889 = vpop.f32.mrb[0].mxu0
  %10890 = vmatprep.mubr.bf16.mxu0 0
  %10891 = vmatmul.mubr.bf16.gmra.mrb[0].mxu0 %v10635
  %v10892 = vpop.f32.mrb[0].mxu0
  %v10893 = vadd.f32 0.0, %v10892
  %v10894 = vpop.f32.mrb[0].mxu0
  %v10895 = vpop.f32.mrb[0].mxu0
  %v10896 = vadd.f32 0.0, %v10895
  %v10897 = vpop.f32.mrb[0].mxu0
  %10898 = vmatprep.mubr.bf16.mxu0 0
  %10899 = vmatmul.mubr.bf16.gmra.mrb[0].mxu0 %v10638
  %v10900 = vpop.f32.mrb[0].mxu0
  %v10901 = vadd.f32 0.0, %v10900
  %v10902 = vpop.f32.mrb[0].mxu0
  %v10903 = vpop.f32.mrb[0].mxu0
  %v10904 = vadd.f32 0.0, %v10903
  %v10905 = vpop.f32.mrb[0].mxu0
  %10906 = vmatprep.mubr.bf16.mxu0 0
  %10907 = vmatmul.mubr.bf16.gmra.mrb[0].mxu0 %v10641
  %v10908 = vpop.f32.mrb[0].mxu0
  %v10909 = vadd.f32 0.0, %v10908
  %v10910 = vpop.f32.mrb[0].mxu0
  %v10911 = vpop.f32.mrb[0].mxu0
  %v10912 = vadd.f32 0.0, %v10911
  %v10913 = vpop.f32.mrb[0].mxu0
  %10914 = vmatprep.mubr.bf16.mxu0 0
  %10915 = vmatmul.mubr.bf16.gmra.mrb[0].mxu0 %v10644
  %v10916 = vpop.f32.mrb[0].mxu0
  %v10917 = vadd.f32 0.0, %v10916
  %v10918 = vpop.f32.mrb[0].mxu0
  %v10919 = vpop.f32.mrb[0].mxu0
  %v10920 = vadd.f32 0.0, %v10919
  %v10921 = vpop.f32.mrb[0].mxu0
  %10922 = vmatprep.mubr.bf16.mxu0 0
  %10923 = vmatmul.mubr.bf16.gmra.mrb[0].mxu0 %v10647
  %v10924 = vpop.f32.mrb[0].mxu0
  %v10925 = vadd.f32 0.0, %v10924
  %v10926 = vpop.f32.mrb[0].mxu0
  %v10927 = vpop.f32.mrb[0].mxu0
  %v10928 = vadd.f32 0.0, %v10927
  %v10929 = vpop.f32.mrb[0].mxu0
  %10930 = vmatprep.mubr.bf16.mxu0 0
  %10931 = vmatmul.mubr.bf16.gmra.mrb[0].mxu0 %v10650
  %v10932 = vpop.f32.mrb[0].mxu0
  %v10933 = vadd.f32 0.0, %v10932
  %v10934 = vpop.f32.mrb[0].mxu0
  %v10935 = vpop.f32.mrb[0].mxu0
  %v10936 = vadd.f32 0.0, %v10935
  %v10937 = vpop.f32.mrb[0].mxu0
  %10938 = vmatprep.mubr.bf16.mxu0 0
  %10939 = vmatmul.mubr.bf16.gmra.mrb[0].mxu0 %v10653
  %v10940 = vpop.f32.mrb[0].mxu0
  %v10941 = vadd.f32 0.0, %v10940
  %v10942 = vpop.f32.mrb[0].mxu0
  %v10943 = vpop.f32.mrb[0].mxu0
  %v10944 = vadd.f32 0.0, %v10943
  %v10945 = vpop.f32.mrb[0].mxu0
  %10946 = vdwg.mxu0
  %v10947 = vadd.f32 %v10396, %v10693
  %v10948 = vadd.f32 %v10397, %v10696
  %v10949 = vadd.f32 %v10398, %v10701
  %v10950 = vadd.f32 %v10399, %v10704
  %v10951 = vadd.f32 %v10400, %v10709
  %v10952 = vadd.f32 %v10401, %v10712
  %v10953 = vadd.f32 %v10402, %v10717
  %v10954 = vadd.f32 %v10403, %v10720
  %v10955 = vadd.f32 %v10404, %v10725
  %v10956 = vadd.f32 %v10405, %v10728
  %v10957 = vadd.f32 %v10406, %v10733
  %v10958 = vadd.f32 %v10407, %v10736
  %v10959 = vadd.f32 %v10408, %v10741
  %v10960 = vadd.f32 %v10409, %v10744
  %v10961 = vadd.f32 %v10410, %v10749
  %v10962 = vadd.f32 %v10411, %v10752
  %v10963 = vadd.f32 %v10412, %v10757
  %v10964 = vadd.f32 %v10413, %v10760
  %v10965 = vadd.f32 %v10414, %v10765
  %v10966 = vadd.f32 %v10415, %v10768
  %v10967 = vadd.f32 %v10416, %v10773
  %v10968 = vadd.f32 %v10417, %v10776
  %v10969 = vadd.f32 %v10418, %v10781
  %v10970 = vadd.f32 %v10419, %v10784
  %v10971 = vadd.f32 %v10420, %v10789
  %v10972 = vadd.f32 %v10421, %v10792
  %v10973 = vadd.f32 %v10422, %v10797
  %v10974 = vadd.f32 %v10423, %v10800
  %v10975 = vadd.f32 %v10424, %v10805
  %v10976 = vadd.f32 %v10425, %v10808
  %v10977 = vadd.f32 %v10426, %v10813
  %v10978 = vadd.f32 %v10427, %v10816
  %v10979 = vadd.f32 %v10428, %v10821
  %v10980 = vadd.f32 %v10429, %v10824
  %v10981 = vadd.f32 %v10430, %v10829
  %v10982 = vadd.f32 %v10431, %v10832
  %v10983 = vadd.f32 %v10432, %v10837
  %v10984 = vadd.f32 %v10433, %v10840
  %v10985 = vadd.f32 %v10434, %v10845
  %v10986 = vadd.f32 %v10435, %v10848
  %v10987 = vadd.f32 %v10436, %v10853
  %v10988 = vadd.f32 %v10437, %v10856
  %v10989 = vadd.f32 %v10438, %v10861
  %v10990 = vadd.f32 %v10439, %v10864
  %v10991 = vadd.f32 %v10440, %v10869
  %v10992 = vadd.f32 %v10441, %v10872
  %v10993 = vadd.f32 %v10442, %v10877
  %v10994 = vadd.f32 %v10443, %v10880
  %v10995 = vadd.f32 %v10444, %v10885
  %v10996 = vadd.f32 %v10445, %v10888
  %v10997 = vadd.f32 %v10446, %v10893
  %v10998 = vadd.f32 %v10447, %v10896
  %v10999 = vadd.f32 %v10448, %v10901
  %v11000 = vadd.f32 %v10449, %v10904
  %v11001 = vadd.f32 %v10450, %v10909
  %v11002 = vadd.f32 %v10451, %v10912
  %v11003 = vadd.f32 %v10452, %v10917
  %v11004 = vadd.f32 %v10453, %v10920
  %v11005 = vadd.f32 %v10454, %v10925
  %v11006 = vadd.f32 %v10455, %v10928
  %v11007 = vadd.f32 %v10456, %v10933
  %v11008 = vadd.f32 %v10457, %v10936
  %v11009 = vadd.f32 %v10458, %v10941
  %v11010 = vadd.f32 %v10459, %v10944
  %v11011 = vld [vmem:[%s10460 + $0x8] sm:$0xff]
  %v11012 = vld [vmem:[%s10460 + $0x10] sm:$0xff]
  %v11013 = vld [vmem:[%s10460 + $0x28] sm:$0xff]
  %v11014 = vld [vmem:[%s10460 + $0x30] sm:$0xff]
  %v11015 = vld [vmem:[%s10460 + $0x48] sm:$0xff]
  %v11016 = vld [vmem:[%s10460 + $0x50] sm:$0xff]
  %v11017 = vld [vmem:[%s10460 + $0x68] sm:$0xff]
  %v11018 = vld [vmem:[%s10460 + $0x70] sm:$0xff]
  %v11019 = vld [vmem:[%s10460 + $0x88] sm:$0xff]
  %v11020 = vld [vmem:[%s10460 + $0x90] sm:$0xff]
  %v11021 = vld [vmem:[%s10460 + $0xa8] sm:$0xff]
  %v11022 = vld [vmem:[%s10460 + $0xb0] sm:$0xff]
  %v11023 = vld [vmem:[%s10460 + $0xc8] sm:$0xff]
  %v11024 = vld [vmem:[%s10460 + $0xd0] sm:$0xff]
  %v11025 = vld [vmem:[%s10460 + $0xe8] sm:$0xff]
  %v11026 = vld [vmem:[%s10460 + $0xf0] sm:$0xff]
  %v11027 = vld [vmem:[%s10460 + $0x108] sm:$0xff]
  %v11028 = vld [vmem:[%s10460 + $0x110] sm:$0xff]
  %v11029 = vld [vmem:[%s10460 + $0x128] sm:$0xff]
  %v11030 = vld [vmem:[%s10460 + $0x130] sm:$0xff]
  %v11031 = vld [vmem:[%s10460 + $0x148] sm:$0xff]
  %v11032 = vld [vmem:[%s10460 + $0x150] sm:$0xff]
  %v11033 = vld [vmem:[%s10460 + $0x168] sm:$0xff]
  %v11034 = vld [vmem:[%s10460 + $0x170] sm:$0xff]
  %v11035 = vld [vmem:[%s10460 + $0x188] sm:$0xff]
  %v11036 = vld [vmem:[%s10460 + $0x190] sm:$0xff]
  %v11037 = vld [vmem:[%s10460 + $0x1a8] sm:$0xff]
  %v11038 = vld [vmem:[%s10460 + $0x1b0] sm:$0xff]
  %v11039 = vld [vmem:[%s10460 + $0x1c8] sm:$0xff]
  %v11040 = vld [vmem:[%s10460 + $0x1d0] sm:$0xff]
  %v11041 = vld [vmem:[%s10460 + $0x1e8] sm:$0xff]
  %v11042 = vld [vmem:[%s10460 + $0x1f0] sm:$0xff]
  %v11043 = vld [vmem:[%s10460 + $0x248] sm:$0xff]
  %v11044 = vld [vmem:[%s10460 + $0x250] sm:$0xff]
  %v11045 = vld [vmem:[%s10460 + $0x268] sm:$0xff]
  %v11046 = vld [vmem:[%s10460 + $0x270] sm:$0xff]
  %v11047 = vld [vmem:[%s10460 + $0x288] sm:$0xff]
  %v11048 = vld [vmem:[%s10460 + $0x290] sm:$0xff]
  %v11049 = vld [vmem:[%s10460 + $0x2a8] sm:$0xff]
  %v11050 = vld [vmem:[%s10460 + $0x2b0] sm:$0xff]
  %v11051 = vld [vmem:[%s10460 + $0x2c8] sm:$0xff]
  %v11052 = vld [vmem:[%s10460 + $0x2d0] sm:$0xff]
  %v11053 = vld [vmem:[%s10460 + $0x2e8] sm:$0xff]
  %v11054 = vld [vmem:[%s10460 + $0x2f0] sm:$0xff]
  %v11055 = vld [vmem:[%s10460 + $0x308] sm:$0xff]
  %v11056 = vld [vmem:[%s10460 + $0x310] sm:$0xff]
  %v11057 = vld [vmem:[%s10460 + $0x328] sm:$0xff]
  %v11058 = vld [vmem:[%s10460 + $0x330] sm:$0xff]
  %v11059 = vld [vmem:[%s10460 + $0x348] sm:$0xff]
  %v11060 = vld [vmem:[%s10460 + $0x350] sm:$0xff]
  %v11061 = vld [vmem:[%s10460 + $0x368] sm:$0xff]
  %v11062 = vld [vmem:[%s10460 + $0x370] sm:$0xff]
  %v11063 = vld [vmem:[%s10460 + $0x388] sm:$0xff]
  %v11064 = vld [vmem:[%s10460 + $0x390] sm:$0xff]
  %v11065 = vld [vmem:[%s10460 + $0x3a8] sm:$0xff]
  %v11066 = vld [vmem:[%s10460 + $0x3b0] sm:$0xff]
  %v11067 = vld [vmem:[%s10460 + $0x3c8] sm:$0xff]
  %v11068 = vld [vmem:[%s10460 + $0x3d0] sm:$0xff]
  %v11069 = vld [vmem:[%s10460 + $0x3e8] sm:$0xff]
  %v11070 = vld [vmem:[%s10460 + $0x3f0] sm:$0xff]
  %v11071 = vld [vmem:[%s10460 + $0x408] sm:$0xff]
  %v11072 = vld [vmem:[%s10460 + $0x410] sm:$0xff]
  %v11073 = vld [vmem:[%s10460 + $0x428] sm:$0xff]
  %v11074 = vld [vmem:[%s10460 + $0x430] sm:$0xff]
  %v11075 = vpack.c.bf16 %v11012, %v11011
  %v11076 = vpack.c.bf16 %v11014, %v11013
  %v11077 = vpack.c.bf16 %v11016, %v11015
  %v11078 = vpack.c.bf16 %v11018, %v11017
  %v11079 = vpack.c.bf16 %v11020, %v11019
  %v11080 = vpack.c.bf16 %v11022, %v11021
  %v11081 = vpack.c.bf16 %v11024, %v11023
  %v11082 = vpack.c.bf16 %v11026, %v11025
  %v11083 = vpack.c.bf16 %v11028, %v11027
  %v11084 = vpack.c.bf16 %v11030, %v11029
  %v11085 = vpack.c.bf16 %v11032, %v11031
  %v11086 = vpack.c.bf16 %v11034, %v11033
  %v11087 = vpack.c.bf16 %v11036, %v11035
  %v11088 = vpack.c.bf16 %v11038, %v11037
  %v11089 = vpack.c.bf16 %v11040, %v11039
  %v11090 = vpack.c.bf16 %v11042, %v11041
  %v11091 = vpack.c.bf16 %v11044, %v11043
  %v11092 = vpack.c.bf16 %v11046, %v11045
  %v11093 = vpack.c.bf16 %v11048, %v11047
  %v11094 = vpack.c.bf16 %v11050, %v11049
  %v11095 = vpack.c.bf16 %v11052, %v11051
  %v11096 = vpack.c.bf16 %v11054, %v11053
  %v11097 = vpack.c.bf16 %v11056, %v11055
  %v11098 = vpack.c.bf16 %v11058, %v11057
  %v11099 = vpack.c.bf16 %v11060, %v11059
  %v11100 = vpack.c.bf16 %v11062, %v11061
  %v11101 = vpack.c.bf16 %v11064, %v11063
  %v11102 = vpack.c.bf16 %v11066, %v11065
  %v11103 = vpack.c.bf16 %v11068, %v11067
  %v11104 = vpack.c.bf16 %v11070, %v11069
  %v11105 = vpack.c.bf16 %v11072, %v11071
  %v11106 = vpack.c.bf16 %v11074, %v11073
  %s11107 = scalar_lea.vmem %s2, 28
  %v11108 = vld [vmem:[%s11107] sm:$0xf]
  %v11110 = vsel %vm5895, %v11075, 0
  %v11113 = vsel %vm5895, %v11076, 0
  %v11116 = vsel %vm5895, %v11077, 0
  %v11119 = vsel %vm5895, %v11078, 0
  %v11122 = vsel %vm5895, %v11079, 0
  %v11125 = vsel %vm5895, %v11080, 0
  %v11128 = vsel %vm5895, %v11081, 0
  %v11131 = vsel %vm5895, %v11082, 0
  %v11134 = vsel %vm5895, %v11083, 0
  %v11137 = vsel %vm5895, %v11084, 0
  %v11140 = vsel %vm5895, %v11085, 0
  %v11143 = vsel %vm5895, %v11086, 0
  %v11146 = vsel %vm5895, %v11087, 0
  %v11149 = vsel %vm5895, %v11088, 0
  %v11152 = vsel %vm5895, %v11089, 0
  %v11155 = vsel %vm5895, %v11090, 0
  %v11158 = vsel %vm5895, %v11091, 0
  %v11161 = vsel %vm5895, %v11092, 0
  %v11164 = vsel %vm5895, %v11093, 0
  %v11167 = vsel %vm5895, %v11094, 0
  %v11170 = vsel %vm5895, %v11095, 0
  %v11173 = vsel %vm5895, %v11096, 0
  %v11176 = vsel %vm5895, %v11097, 0
  %v11179 = vsel %vm5895, %v11098, 0
  %v11182 = vsel %vm5895, %v11099, 0
  %v11185 = vsel %vm5895, %v11100, 0
  %v11188 = vsel %vm5895, %v11101, 0
  %v11191 = vsel %vm5895, %v11102, 0
  %v11194 = vsel %vm5895, %v11103, 0
  %v11197 = vsel %vm5895, %v11104, 0
  %v11200 = vsel %vm5895, %v11105, 0
  %v11203 = vsel %vm5895, %v11106, 0
  %v11206 = vsel %vm7029, %v11108, 0
  %11208 = vmatprep.subr.bf16.mxu0 0
  %11209 = vmatpush1.bf16.msra.mxu0 %v11206
  %11210 = vmatprep.subr.bf16.mxu0 0
  %11211 = vmatpush1.bf16.msra.mxu0 0
  %11212 = vmatprep.subr.bf16.mxu0 0
  %11213 = vmatpush1.bf16.msra.mxu0 0
  %11214 = vmatprep.subr.bf16.mxu0 0
  %11215 = vmatpush1.bf16.msra.mxu0 0
  %11216 = vmatprep.subr.bf16.mxu0 0
  %11217 = vmatpush1.bf16.msra.mxu0 0
  %11218 = vmatprep.subr.bf16.mxu0 0
  %11219 = vmatpush1.bf16.msra.mxu0 0
  %11220 = vmatprep.subr.bf16.mxu0 0
  %11221 = vmatpush1.bf16.msra.mxu0 0
  %11222 = vmatprep.subr.bf16.mxu0 0
  %11223 = vmatpush1.bf16.msra.mxu0 0
  %11224 = vmatprep.subr.bf16.mxu0 0
  %11225 = vmatpush1.bf16.msra.mxu0 0
  %11226 = vmatprep.subr.bf16.mxu0 0
  %11227 = vmatpush1.bf16.msra.mxu0 0
  %11228 = vmatprep.subr.bf16.mxu0 0
  %11229 = vmatpush1.bf16.msra.mxu0 0
  %11230 = vmatprep.subr.bf16.mxu0 0
  %11231 = vmatpush1.bf16.msra.mxu0 0
  %11232 = vmatprep.subr.bf16.mxu0 0
  %11233 = vmatpush1.bf16.msra.mxu0 0
  %11234 = vmatprep.subr.bf16.mxu0 0
  %11235 = vmatpush1.bf16.msra.mxu0 0
  %11236 = vmatprep.subr.bf16.mxu0 0
  %11237 = vmatpush1.bf16.msra.mxu0 0
  %11238 = vmatprep.subr.bf16.mxu0 0
  %11239 = vmatpush1.bf16.msra.mxu0 0
  %11240 = vmatprep.mubr.bf16.mxu0 0
  %11241 = vmatmul.mubr.bf16.gmra.mrb[0].mxu0 %v11110
  %v11242 = vpop.f32.mrb[0].mxu0
  %v11243 = vadd.f32 0.0, %v11242
  %v11244 = vpop.f32.mrb[0].mxu0
  %v11245 = vpop.f32.mrb[0].mxu0
  %v11246 = vadd.f32 0.0, %v11245
  %v11247 = vpop.f32.mrb[0].mxu0
  %11248 = vmatprep.mubr.bf16.mxu0 0
  %11249 = vmatmul.mubr.bf16.gmra.mrb[0].mxu0 %v11113
  %v11250 = vpop.f32.mrb[0].mxu0
  %v11251 = vadd.f32 0.0, %v11250
  %v11252 = vpop.f32.mrb[0].mxu0
  %v11253 = vpop.f32.mrb[0].mxu0
  %v11254 = vadd.f32 0.0, %v11253
  %v11255 = vpop.f32.mrb[0].mxu0
  %11256 = vmatprep.mubr.bf16.mxu0 0
  %11257 = vmatmul.mubr.bf16.gmra.mrb[0].mxu0 %v11116
  %v11258 = vpop.f32.mrb[0].mxu0
  %v11259 = vadd.f32 0.0, %v11258
  %v11260 = vpop.f32.mrb[0].mxu0
  %v11261 = vpop.f32.mrb[0].mxu0
  %v11262 = vadd.f32 0.0, %v11261
  %v11263 = vpop.f32.mrb[0].mxu0
  %11264 = vmatprep.mubr.bf16.mxu0 0
  %11265 = vmatmul.mubr.bf16.gmra.mrb[0].mxu0 %v11119
  %v11266 = vpop.f32.mrb[0].mxu0
  %v11267 = vadd.f32 0.0, %v11266
  %v11268 = vpop.f32.mrb[0].mxu0
  %v11269 = vpop.f32.mrb[0].mxu0
  %v11270 = vadd.f32 0.0, %v11269
  %v11271 = vpop.f32.mrb[0].mxu0
  %11272 = vmatprep.mubr.bf16.mxu0 0
  %11273 = vmatmul.mubr.bf16.gmra.mrb[0].mxu0 %v11122
  %v11274 = vpop.f32.mrb[0].mxu0
  %v11275 = vadd.f32 0.0, %v11274
  %v11276 = vpop.f32.mrb[0].mxu0
  %v11277 = vpop.f32.mrb[0].mxu0
  %v11278 = vadd.f32 0.0, %v11277
  %v11279 = vpop.f32.mrb[0].mxu0
  %11280 = vmatprep.mubr.bf16.mxu0 0
  %11281 = vmatmul.mubr.bf16.gmra.mrb[0].mxu0 %v11125
  %v11282 = vpop.f32.mrb[0].mxu0
  %v11283 = vadd.f32 0.0, %v11282
  %v11284 = vpop.f32.mrb[0].mxu0
  %v11285 = vpop.f32.mrb[0].mxu0
  %v11286 = vadd.f32 0.0, %v11285
  %v11287 = vpop.f32.mrb[0].mxu0
  %11288 = vmatprep.mubr.bf16.mxu0 0
  %11289 = vmatmul.mubr.bf16.gmra.mrb[0].mxu0 %v11128
  %v11290 = vpop.f32.mrb[0].mxu0
  %v11291 = vadd.f32 0.0, %v11290
  %v11292 = vpop.f32.mrb[0].mxu0
  %v11293 = vpop.f32.mrb[0].mxu0
  %v11294 = vadd.f32 0.0, %v11293
  %v11295 = vpop.f32.mrb[0].mxu0
  %11296 = vmatprep.mubr.bf16.mxu0 0
  %11297 = vmatmul.mubr.bf16.gmra.mrb[0].mxu0 %v11131
  %v11298 = vpop.f32.mrb[0].mxu0
  %v11299 = vadd.f32 0.0, %v11298
  %v11300 = vpop.f32.mrb[0].mxu0
  %v11301 = vpop.f32.mrb[0].mxu0
  %v11302 = vadd.f32 0.0, %v11301
  %v11303 = vpop.f32.mrb[0].mxu0
  %11304 = vmatprep.mubr.bf16.mxu0 0
  %11305 = vmatmul.mubr.bf16.gmra.mrb[0].mxu0 %v11134
  %v11306 = vpop.f32.mrb[0].mxu0
  %v11307 = vadd.f32 0.0, %v11306
  %v11308 = vpop.f32.mrb[0].mxu0
  %v11309 = vpop.f32.mrb[0].mxu0
  %v11310 = vadd.f32 0.0, %v11309
  %v11311 = vpop.f32.mrb[0].mxu0
  %11312 = vmatprep.mubr.bf16.mxu0 0
  %11313 = vmatmul.mubr.bf16.gmra.mrb[0].mxu0 %v11137
  %v11314 = vpop.f32.mrb[0].mxu0
  %v11315 = vadd.f32 0.0, %v11314
  %v11316 = vpop.f32.mrb[0].mxu0
  %v11317 = vpop.f32.mrb[0].mxu0
  %v11318 = vadd.f32 0.0, %v11317
  %v11319 = vpop.f32.mrb[0].mxu0
  %11320 = vmatprep.mubr.bf16.mxu0 0
  %11321 = vmatmul.mubr.bf16.gmra.mrb[0].mxu0 %v11140
  %v11322 = vpop.f32.mrb[0].mxu0
  %v11323 = vadd.f32 0.0, %v11322
  %v11324 = vpop.f32.mrb[0].mxu0
  %v11325 = vpop.f32.mrb[0].mxu0
  %v11326 = vadd.f32 0.0, %v11325
  %v11327 = vpop.f32.mrb[0].mxu0
  %11328 = vmatprep.mubr.bf16.mxu0 0
  %11329 = vmatmul.mubr.bf16.gmra.mrb[0].mxu0 %v11143
  %v11330 = vpop.f32.mrb[0].mxu0
  %v11331 = vadd.f32 0.0, %v11330
  %v11332 = vpop.f32.mrb[0].mxu0
  %v11333 = vpop.f32.mrb[0].mxu0
  %v11334 = vadd.f32 0.0, %v11333
  %v11335 = vpop.f32.mrb[0].mxu0
  %11336 = vmatprep.mubr.bf16.mxu0 0
  %11337 = vmatmul.mubr.bf16.gmra.mrb[0].mxu0 %v11146
  %v11338 = vpop.f32.mrb[0].mxu0
  %v11339 = vadd.f32 0.0, %v11338
  %v11340 = vpop.f32.mrb[0].mxu0
  %v11341 = vpop.f32.mrb[0].mxu0
  %v11342 = vadd.f32 0.0, %v11341
  %v11343 = vpop.f32.mrb[0].mxu0
  %11344 = vmatprep.mubr.bf16.mxu0 0
  %11345 = vmatmul.mubr.bf16.gmra.mrb[0].mxu0 %v11149
  %v11346 = vpop.f32.mrb[0].mxu0
  %v11347 = vadd.f32 0.0, %v11346
  %v11348 = vpop.f32.mrb[0].mxu0
  %v11349 = vpop.f32.mrb[0].mxu0
  %v11350 = vadd.f32 0.0, %v11349
  %v11351 = vpop.f32.mrb[0].mxu0
  %11352 = vmatprep.mubr.bf16.mxu0 0
  %11353 = vmatmul.mubr.bf16.gmra.mrb[0].mxu0 %v11152
  %v11354 = vpop.f32.mrb[0].mxu0
  %v11355 = vadd.f32 0.0, %v11354
  %v11356 = vpop.f32.mrb[0].mxu0
  %v11357 = vpop.f32.mrb[0].mxu0
  %v11358 = vadd.f32 0.0, %v11357
  %v11359 = vpop.f32.mrb[0].mxu0
  %11360 = vmatprep.mubr.bf16.mxu0 0
  %11361 = vmatmul.mubr.bf16.gmra.mrb[0].mxu0 %v11155
  %v11362 = vpop.f32.mrb[0].mxu0
  %v11363 = vadd.f32 0.0, %v11362
  %v11364 = vpop.f32.mrb[0].mxu0
  %v11365 = vpop.f32.mrb[0].mxu0
  %v11366 = vadd.f32 0.0, %v11365
  %v11367 = vpop.f32.mrb[0].mxu0
  %11368 = vmatprep.mubr.bf16.mxu0 0
  %11369 = vmatmul.mubr.bf16.gmra.mrb[0].mxu0 %v11158
  %v11370 = vpop.f32.mrb[0].mxu0
  %v11371 = vadd.f32 0.0, %v11370
  %v11372 = vpop.f32.mrb[0].mxu0
  %v11373 = vpop.f32.mrb[0].mxu0
  %v11374 = vadd.f32 0.0, %v11373
  %v11375 = vpop.f32.mrb[0].mxu0
  %11376 = vmatprep.mubr.bf16.mxu0 0
  %11377 = vmatmul.mubr.bf16.gmra.mrb[0].mxu0 %v11161
  %v11378 = vpop.f32.mrb[0].mxu0
  %v11379 = vadd.f32 0.0, %v11378
  %v11380 = vpop.f32.mrb[0].mxu0
  %v11381 = vpop.f32.mrb[0].mxu0
  %v11382 = vadd.f32 0.0, %v11381
  %v11383 = vpop.f32.mrb[0].mxu0
  %11384 = vmatprep.mubr.bf16.mxu0 0
  %11385 = vmatmul.mubr.bf16.gmra.mrb[0].mxu0 %v11164
  %v11386 = vpop.f32.mrb[0].mxu0
  %v11387 = vadd.f32 0.0, %v11386
  %v11388 = vpop.f32.mrb[0].mxu0
  %v11389 = vpop.f32.mrb[0].mxu0
  %v11390 = vadd.f32 0.0, %v11389
  %v11391 = vpop.f32.mrb[0].mxu0
  %11392 = vmatprep.mubr.bf16.mxu0 0
  %11393 = vmatmul.mubr.bf16.gmra.mrb[0].mxu0 %v11167
  %v11394 = vpop.f32.mrb[0].mxu0
  %v11395 = vadd.f32 0.0, %v11394
  %v11396 = vpop.f32.mrb[0].mxu0
  %v11397 = vpop.f32.mrb[0].mxu0
  %v11398 = vadd.f32 0.0, %v11397
  %v11399 = vpop.f32.mrb[0].mxu0
  %11400 = vmatprep.mubr.bf16.mxu0 0
  %11401 = vmatmul.mubr.bf16.gmra.mrb[0].mxu0 %v11170
  %v11402 = vpop.f32.mrb[0].mxu0
  %v11403 = vadd.f32 0.0, %v11402
  %v11404 = vpop.f32.mrb[0].mxu0
  %v11405 = vpop.f32.mrb[0].mxu0
  %v11406 = vadd.f32 0.0, %v11405
  %v11407 = vpop.f32.mrb[0].mxu0
  %11408 = vmatprep.mubr.bf16.mxu0 0
  %11409 = vmatmul.mubr.bf16.gmra.mrb[0].mxu0 %v11173
  %v11410 = vpop.f32.mrb[0].mxu0
  %v11411 = vadd.f32 0.0, %v11410
  %v11412 = vpop.f32.mrb[0].mxu0
  %v11413 = vpop.f32.mrb[0].mxu0
  %v11414 = vadd.f32 0.0, %v11413
  %v11415 = vpop.f32.mrb[0].mxu0
  %11416 = vmatprep.mubr.bf16.mxu0 0
  %11417 = vmatmul.mubr.bf16.gmra.mrb[0].mxu0 %v11176
  %v11418 = vpop.f32.mrb[0].mxu0
  %v11419 = vadd.f32 0.0, %v11418
  %v11420 = vpop.f32.mrb[0].mxu0
  %v11421 = vpop.f32.mrb[0].mxu0
  %v11422 = vadd.f32 0.0, %v11421
  %v11423 = vpop.f32.mrb[0].mxu0
  %11424 = vmatprep.mubr.bf16.mxu0 0
  %11425 = vmatmul.mubr.bf16.gmra.mrb[0].mxu0 %v11179
  %v11426 = vpop.f32.mrb[0].mxu0
  %v11427 = vadd.f32 0.0, %v11426
  %v11428 = vpop.f32.mrb[0].mxu0
  %v11429 = vpop.f32.mrb[0].mxu0
  %v11430 = vadd.f32 0.0, %v11429
  %v11431 = vpop.f32.mrb[0].mxu0
  %11432 = vmatprep.mubr.bf16.mxu0 0
  %11433 = vmatmul.mubr.bf16.gmra.mrb[0].mxu0 %v11182
  %v11434 = vpop.f32.mrb[0].mxu0
  %v11435 = vadd.f32 0.0, %v11434
  %v11436 = vpop.f32.mrb[0].mxu0
  %v11437 = vpop.f32.mrb[0].mxu0
  %v11438 = vadd.f32 0.0, %v11437
  %v11439 = vpop.f32.mrb[0].mxu0
  %11440 = vmatprep.mubr.bf16.mxu0 0
  %11441 = vmatmul.mubr.bf16.gmra.mrb[0].mxu0 %v11185
  %v11442 = vpop.f32.mrb[0].mxu0
  %v11443 = vadd.f32 0.0, %v11442
  %v11444 = vpop.f32.mrb[0].mxu0
  %v11445 = vpop.f32.mrb[0].mxu0
  %v11446 = vadd.f32 0.0, %v11445
  %v11447 = vpop.f32.mrb[0].mxu0
  %11448 = vmatprep.mubr.bf16.mxu0 0
  %11449 = vmatmul.mubr.bf16.gmra.mrb[0].mxu0 %v11188
  %v11450 = vpop.f32.mrb[0].mxu0
  %v11451 = vadd.f32 0.0, %v11450
  %v11452 = vpop.f32.mrb[0].mxu0
  %v11453 = vpop.f32.mrb[0].mxu0
  %v11454 = vadd.f32 0.0, %v11453
  %v11455 = vpop.f32.mrb[0].mxu0
  %11456 = vmatprep.mubr.bf16.mxu0 0
  %11457 = vmatmul.mubr.bf16.gmra.mrb[0].mxu0 %v11191
  %v11458 = vpop.f32.mrb[0].mxu0
  %v11459 = vadd.f32 0.0, %v11458
  %v11460 = vpop.f32.mrb[0].mxu0
  %v11461 = vpop.f32.mrb[0].mxu0
  %v11462 = vadd.f32 0.0, %v11461
  %v11463 = vpop.f32.mrb[0].mxu0
  %11464 = vmatprep.mubr.bf16.mxu0 0
  %11465 = vmatmul.mubr.bf16.gmra.mrb[0].mxu0 %v11194
  %v11466 = vpop.f32.mrb[0].mxu0
  %v11467 = vadd.f32 0.0, %v11466
  %v11468 = vpop.f32.mrb[0].mxu0
  %v11469 = vpop.f32.mrb[0].mxu0
  %v11470 = vadd.f32 0.0, %v11469
  %v11471 = vpop.f32.mrb[0].mxu0
  %11472 = vmatprep.mubr.bf16.mxu0 0
  %11473 = vmatmul.mubr.bf16.gmra.mrb[0].mxu0 %v11197
  %v11474 = vpop.f32.mrb[0].mxu0
  %v11475 = vadd.f32 0.0, %v11474
  %v11476 = vpop.f32.mrb[0].mxu0
  %v11477 = vpop.f32.mrb[0].mxu0
  %v11478 = vadd.f32 0.0, %v11477
  %v11479 = vpop.f32.mrb[0].mxu0
  %11480 = vmatprep.mubr.bf16.mxu0 0
  %11481 = vmatmul.mubr.bf16.gmra.mrb[0].mxu0 %v11200
  %v11482 = vpop.f32.mrb[0].mxu0
  %v11483 = vadd.f32 0.0, %v11482
  %v11484 = vpop.f32.mrb[0].mxu0
  %v11485 = vpop.f32.mrb[0].mxu0
  %v11486 = vadd.f32 0.0, %v11485
  %v11487 = vpop.f32.mrb[0].mxu0
  %11488 = vmatprep.mubr.bf16.mxu0 0
  %11489 = vmatmul.mubr.bf16.gmra.mrb[0].mxu0 %v11203
  %v11490 = vpop.f32.mrb[0].mxu0
  %v11491 = vadd.f32 0.0, %v11490
  %v11492 = vpop.f32.mrb[0].mxu0
  %v11493 = vpop.f32.mrb[0].mxu0
  %v11494 = vadd.f32 0.0, %v11493
  %v11495 = vpop.f32.mrb[0].mxu0
  %11496 = vdwg.mxu0
  %v11497 = vadd.f32 %v10947, %v11243
  %v11498 = vadd.f32 %v10948, %v11246
  %v11499 = vadd.f32 %v10949, %v11251
  %v11500 = vadd.f32 %v10950, %v11254
  %v11501 = vadd.f32 %v10951, %v11259
  %v11502 = vadd.f32 %v10952, %v11262
  %v11503 = vadd.f32 %v10953, %v11267
  %v11504 = vadd.f32 %v10954, %v11270
  %v11505 = vadd.f32 %v10955, %v11275
  %v11506 = vadd.f32 %v10956, %v11278
  %v11507 = vadd.f32 %v10957, %v11283
  %v11508 = vadd.f32 %v10958, %v11286
  %v11509 = vadd.f32 %v10959, %v11291
  %v11510 = vadd.f32 %v10960, %v11294
  %v11511 = vadd.f32 %v10961, %v11299
  %v11512 = vadd.f32 %v10962, %v11302
  %v11513 = vadd.f32 %v10963, %v11307
  %v11514 = vadd.f32 %v10964, %v11310
  %v11515 = vadd.f32 %v10965, %v11315
  %v11516 = vadd.f32 %v10966, %v11318
  %v11517 = vadd.f32 %v10967, %v11323
  %v11518 = vadd.f32 %v10968, %v11326
  %v11519 = vadd.f32 %v10969, %v11331
  %v11520 = vadd.f32 %v10970, %v11334
  %v11521 = vadd.f32 %v10971, %v11339
  %v11522 = vadd.f32 %v10972, %v11342
  %v11523 = vadd.f32 %v10973, %v11347
  %v11524 = vadd.f32 %v10974, %v11350
  %v11525 = vadd.f32 %v10975, %v11355
  %v11526 = vadd.f32 %v10976, %v11358
  %v11527 = vadd.f32 %v10977, %v11363
  %v11528 = vadd.f32 %v10978, %v11366
  %v11529 = vadd.f32 %v10979, %v11371
  %v11530 = vadd.f32 %v10980, %v11374
  %v11531 = vadd.f32 %v10981, %v11379
  %v11532 = vadd.f32 %v10982, %v11382
  %v11533 = vadd.f32 %v10983, %v11387
  %v11534 = vadd.f32 %v10984, %v11390
  %v11535 = vadd.f32 %v10985, %v11395
  %v11536 = vadd.f32 %v10986, %v11398
  %v11537 = vadd.f32 %v10987, %v11403
  %v11538 = vadd.f32 %v10988, %v11406
  %v11539 = vadd.f32 %v10989, %v11411
  %v11540 = vadd.f32 %v10990, %v11414
  %v11541 = vadd.f32 %v10991, %v11419
  %v11542 = vadd.f32 %v10992, %v11422
  %v11543 = vadd.f32 %v10993, %v11427
  %v11544 = vadd.f32 %v10994, %v11430
  %v11545 = vadd.f32 %v10995, %v11435
  %v11546 = vadd.f32 %v10996, %v11438
  %v11547 = vadd.f32 %v10997, %v11443
  %v11548 = vadd.f32 %v10998, %v11446
  %v11549 = vadd.f32 %v10999, %v11451
  %v11550 = vadd.f32 %v11000, %v11454
  %v11551 = vadd.f32 %v11001, %v11459
  %v11552 = vadd.f32 %v11002, %v11462
  %v11553 = vadd.f32 %v11003, %v11467
  %v11554 = vadd.f32 %v11004, %v11470
  %v11555 = vadd.f32 %v11005, %v11475
  %v11556 = vadd.f32 %v11006, %v11478
  %v11557 = vadd.f32 %v11007, %v11483
  %v11558 = vadd.f32 %v11008, %v11486
  %v11559 = vadd.f32 %v11009, %v11491
  %v11560 = vadd.f32 %v11010, %v11494
  %v11561 = vld [vmem:[%s10460 + $0x9] sm:$0xff]
  %v11562 = vld [vmem:[%s10460 + $0x11] sm:$0xff]
  %v11563 = vld [vmem:[%s10460 + $0x29] sm:$0xff]
  %v11564 = vld [vmem:[%s10460 + $0x31] sm:$0xff]
  %v11565 = vld [vmem:[%s10460 + $0x49] sm:$0xff]
  %v11566 = vld [vmem:[%s10460 + $0x51] sm:$0xff]
  %v11567 = vld [vmem:[%s10460 + $0x69] sm:$0xff]
  %v11568 = vld [vmem:[%s10460 + $0x71] sm:$0xff]
  %v11569 = vld [vmem:[%s10460 + $0x89] sm:$0xff]
  %v11570 = vld [vmem:[%s10460 + $0x91] sm:$0xff]
  %v11571 = vld [vmem:[%s10460 + $0xa9] sm:$0xff]
  %v11572 = vld [vmem:[%s10460 + $0xb1] sm:$0xff]
  %v11573 = vld [vmem:[%s10460 + $0xc9] sm:$0xff]
  %v11574 = vld [vmem:[%s10460 + $0xd1] sm:$0xff]
  %v11575 = vld [vmem:[%s10460 + $0xe9] sm:$0xff]
  %v11576 = vld [vmem:[%s10460 + $0xf1] sm:$0xff]
  %v11577 = vld [vmem:[%s10460 + $0x109] sm:$0xff]
  %v11578 = vld [vmem:[%s10460 + $0x111] sm:$0xff]
  %v11579 = vld [vmem:[%s10460 + $0x129] sm:$0xff]
  %v11580 = vld [vmem:[%s10460 + $0x131] sm:$0xff]
  %v11581 = vld [vmem:[%s10460 + $0x149] sm:$0xff]
  %v11582 = vld [vmem:[%s10460 + $0x151] sm:$0xff]
  %v11583 = vld [vmem:[%s10460 + $0x169] sm:$0xff]
  %v11584 = vld [vmem:[%s10460 + $0x171] sm:$0xff]
  %v11585 = vld [vmem:[%s10460 + $0x189] sm:$0xff]
  %v11586 = vld [vmem:[%s10460 + $0x191] sm:$0xff]
  %v11587 = vld [vmem:[%s10460 + $0x1a9] sm:$0xff]
  %v11588 = vld [vmem:[%s10460 + $0x1b1] sm:$0xff]
  %v11589 = vld [vmem:[%s10460 + $0x1c9] sm:$0xff]
  %v11590 = vld [vmem:[%s10460 + $0x1d1] sm:$0xff]
  %v11591 = vld [vmem:[%s10460 + $0x1e9] sm:$0xff]
  %v11592 = vld [vmem:[%s10460 + $0x1f1] sm:$0xff]
  %v11593 = vld [vmem:[%s10460 + $0x249] sm:$0xff]
  %v11594 = vld [vmem:[%s10460 + $0x251] sm:$0xff]
  %v11595 = vld [vmem:[%s10460 + $0x269] sm:$0xff]
  %v11596 = vld [vmem:[%s10460 + $0x271] sm:$0xff]
  %v11597 = vld [vmem:[%s10460 + $0x289] sm:$0xff]
  %v11598 = vld [vmem:[%s10460 + $0x291] sm:$0xff]
  %v11599 = vld [vmem:[%s10460 + $0x2a9] sm:$0xff]
  %v11600 = vld [vmem:[%s10460 + $0x2b1] sm:$0xff]
  %v11601 = vld [vmem:[%s10460 + $0x2c9] sm:$0xff]
  %v11602 = vld [vmem:[%s10460 + $0x2d1] sm:$0xff]
  %v11603 = vld [vmem:[%s10460 + $0x2e9] sm:$0xff]
  %v11604 = vld [vmem:[%s10460 + $0x2f1] sm:$0xff]
  %v11605 = vld [vmem:[%s10460 + $0x309] sm:$0xff]
  %v11606 = vld [vmem:[%s10460 + $0x311] sm:$0xff]
  %v11607 = vld [vmem:[%s10460 + $0x329] sm:$0xff]
  %v11608 = vld [vmem:[%s10460 + $0x331] sm:$0xff]
  %v11609 = vld [vmem:[%s10460 + $0x349] sm:$0xff]
  %v11610 = vld [vmem:[%s10460 + $0x351] sm:$0xff]
  %v11611 = vld [vmem:[%s10460 + $0x369] sm:$0xff]
  %v11612 = vld [vmem:[%s10460 + $0x371] sm:$0xff]
  %v11613 = vld [vmem:[%s10460 + $0x389] sm:$0xff]
  %v11614 = vld [vmem:[%s10460 + $0x391] sm:$0xff]
  %v11615 = vld [vmem:[%s10460 + $0x3a9] sm:$0xff]
  %v11616 = vld [vmem:[%s10460 + $0x3b1] sm:$0xff]
  %v11617 = vld [vmem:[%s10460 + $0x3c9] sm:$0xff]
  %v11618 = vld [vmem:[%s10460 + $0x3d1] sm:$0xff]
  %v11619 = vld [vmem:[%s10460 + $0x3e9] sm:$0xff]
  %v11620 = vld [vmem:[%s10460 + $0x3f1] sm:$0xff]
  %v11621 = vld [vmem:[%s10460 + $0x409] sm:$0xff]
  %v11622 = vld [vmem:[%s10460 + $0x411] sm:$0xff]
  %v11623 = vld [vmem:[%s10460 + $0x429] sm:$0xff]
  %v11624 = vld [vmem:[%s10460 + $0x431] sm:$0xff]
  %v11625 = vpack.c.bf16 %v11562, %v11561
  %v11626 = vpack.c.bf16 %v11564, %v11563
  %v11627 = vpack.c.bf16 %v11566, %v11565
  %v11628 = vpack.c.bf16 %v11568, %v11567
  %v11629 = vpack.c.bf16 %v11570, %v11569
  %v11630 = vpack.c.bf16 %v11572, %v11571
  %v11631 = vpack.c.bf16 %v11574, %v11573
  %v11632 = vpack.c.bf16 %v11576, %v11575
  %v11633 = vpack.c.bf16 %v11578, %v11577
  %v11634 = vpack.c.bf16 %v11580, %v11579
  %v11635 = vpack.c.bf16 %v11582, %v11581
  %v11636 = vpack.c.bf16 %v11584, %v11583
  %v11637 = vpack.c.bf16 %v11586, %v11585
  %v11638 = vpack.c.bf16 %v11588, %v11587
  %v11639 = vpack.c.bf16 %v11590, %v11589
  %v11640 = vpack.c.bf16 %v11592, %v11591
  %v11641 = vpack.c.bf16 %v11594, %v11593
  %v11642 = vpack.c.bf16 %v11596, %v11595
  %v11643 = vpack.c.bf16 %v11598, %v11597
  %v11644 = vpack.c.bf16 %v11600, %v11599
  %v11645 = vpack.c.bf16 %v11602, %v11601
  %v11646 = vpack.c.bf16 %v11604, %v11603
  %v11647 = vpack.c.bf16 %v11606, %v11605
  %v11648 = vpack.c.bf16 %v11608, %v11607
  %v11649 = vpack.c.bf16 %v11610, %v11609
  %v11650 = vpack.c.bf16 %v11612, %v11611
  %v11651 = vpack.c.bf16 %v11614, %v11613
  %v11652 = vpack.c.bf16 %v11616, %v11615
  %v11653 = vpack.c.bf16 %v11618, %v11617
  %v11654 = vpack.c.bf16 %v11620, %v11619
  %v11655 = vpack.c.bf16 %v11622, %v11621
  %v11656 = vpack.c.bf16 %v11624, %v11623
  %s11657 = scalar_lea.vmem %s2, 32
  %v11658 = vld [vmem:[%s11657] sm:$0xf]
  %v11660 = vsel %vm5895, %v11625, 0
  %v11663 = vsel %vm5895, %v11626, 0
  %v11666 = vsel %vm5895, %v11627, 0
  %v11669 = vsel %vm5895, %v11628, 0
  %v11672 = vsel %vm5895, %v11629, 0
  %v11675 = vsel %vm5895, %v11630, 0
  %v11678 = vsel %vm5895, %v11631, 0
  %v11681 = vsel %vm5895, %v11632, 0
  %v11684 = vsel %vm5895, %v11633, 0
  %v11687 = vsel %vm5895, %v11634, 0
  %v11690 = vsel %vm5895, %v11635, 0
  %v11693 = vsel %vm5895, %v11636, 0
  %v11696 = vsel %vm5895, %v11637, 0
  %v11699 = vsel %vm5895, %v11638, 0
  %v11702 = vsel %vm5895, %v11639, 0
  %v11705 = vsel %vm5895, %v11640, 0
  %v11708 = vsel %vm5895, %v11641, 0
  %v11711 = vsel %vm5895, %v11642, 0
  %v11714 = vsel %vm5895, %v11643, 0
  %v11717 = vsel %vm5895, %v11644, 0
  %v11720 = vsel %vm5895, %v11645, 0
  %v11723 = vsel %vm5895, %v11646, 0
  %v11726 = vsel %vm5895, %v11647, 0
  %v11729 = vsel %vm5895, %v11648, 0
  %v11732 = vsel %vm5895, %v11649, 0
  %v11735 = vsel %vm5895, %v11650, 0
  %v11738 = vsel %vm5895, %v11651, 0
  %v11741 = vsel %vm5895, %v11652, 0
  %v11744 = vsel %vm5895, %v11653, 0
  %v11747 = vsel %vm5895, %v11654, 0
  %v11750 = vsel %vm5895, %v11655, 0
  %v11753 = vsel %vm5895, %v11656, 0
  %v11756 = vsel %vm7029, %v11658, 0
  %11758 = vmatprep.subr.bf16.mxu0 0
  %11759 = vmatpush1.bf16.msra.mxu0 %v11756
  %11760 = vmatprep.subr.bf16.mxu0 0
  %11761 = vmatpush1.bf16.msra.mxu0 0
  %11762 = vmatprep.subr.bf16.mxu0 0
  %11763 = vmatpush1.bf16.msra.mxu0 0
  %11764 = vmatprep.subr.bf16.mxu0 0
  %11765 = vmatpush1.bf16.msra.mxu0 0
  %11766 = vmatprep.subr.bf16.mxu0 0
  %11767 = vmatpush1.bf16.msra.mxu0 0
  %11768 = vmatprep.subr.bf16.mxu0 0
  %11769 = vmatpush1.bf16.msra.mxu0 0
  %11770 = vmatprep.subr.bf16.mxu0 0
  %11771 = vmatpush1.bf16.msra.mxu0 0
  %11772 = vmatprep.subr.bf16.mxu0 0
  %11773 = vmatpush1.bf16.msra.mxu0 0
  %11774 = vmatprep.subr.bf16.mxu0 0
  %11775 = vmatpush1.bf16.msra.mxu0 0
  %11776 = vmatprep.subr.bf16.mxu0 0
  %11777 = vmatpush1.bf16.msra.mxu0 0
  %11778 = vmatprep.subr.bf16.mxu0 0
  %11779 = vmatpush1.bf16.msra.mxu0 0
  %11780 = vmatprep.subr.bf16.mxu0 0
  %11781 = vmatpush1.bf16.msra.mxu0 0
  %11782 = vmatprep.subr.bf16.mxu0 0
  %11783 = vmatpush1.bf16.msra.mxu0 0
  %11784 = vmatprep.subr.bf16.mxu0 0
  %11785 = vmatpush1.bf16.msra.mxu0 0
  %11786 = vmatprep.subr.bf16.mxu0 0
  %11787 = vmatpush1.bf16.msra.mxu0 0
  %11788 = vmatprep.subr.bf16.mxu0 0
  %11789 = vmatpush1.bf16.msra.mxu0 0
  %11790 = vmatprep.mubr.bf16.mxu0 0
  %11791 = vmatmul.mubr.bf16.gmra.mrb[0].mxu0 %v11660
  %v11792 = vpop.f32.mrb[0].mxu0
  %v11793 = vadd.f32 0.0, %v11792
  %v11794 = vpop.f32.mrb[0].mxu0
  %v11795 = vpop.f32.mrb[0].mxu0
  %v11796 = vadd.f32 0.0, %v11795
  %v11797 = vpop.f32.mrb[0].mxu0
  %11798 = vmatprep.mubr.bf16.mxu0 0
  %11799 = vmatmul.mubr.bf16.gmra.mrb[0].mxu0 %v11663
  %v11800 = vpop.f32.mrb[0].mxu0
  %v11801 = vadd.f32 0.0, %v11800
  %v11802 = vpop.f32.mrb[0].mxu0
  %v11803 = vpop.f32.mrb[0].mxu0
  %v11804 = vadd.f32 0.0, %v11803
  %v11805 = vpop.f32.mrb[0].mxu0
  %11806 = vmatprep.mubr.bf16.mxu0 0
  %11807 = vmatmul.mubr.bf16.gmra.mrb[0].mxu0 %v11666
  %v11808 = vpop.f32.mrb[0].mxu0
  %v11809 = vadd.f32 0.0, %v11808
  %v11810 = vpop.f32.mrb[0].mxu0
  %v11811 = vpop.f32.mrb[0].mxu0
  %v11812 = vadd.f32 0.0, %v11811
  %v11813 = vpop.f32.mrb[0].mxu0
  %11814 = vmatprep.mubr.bf16.mxu0 0
  %11815 = vmatmul.mubr.bf16.gmra.mrb[0].mxu0 %v11669
  %v11816 = vpop.f32.mrb[0].mxu0
  %v11817 = vadd.f32 0.0, %v11816
  %v11818 = vpop.f32.mrb[0].mxu0
  %v11819 = vpop.f32.mrb[0].mxu0
  %v11820 = vadd.f32 0.0, %v11819
  %v11821 = vpop.f32.mrb[0].mxu0
  %11822 = vmatprep.mubr.bf16.mxu0 0
  %11823 = vmatmul.mubr.bf16.gmra.mrb[0].mxu0 %v11672
  %v11824 = vpop.f32.mrb[0].mxu0
  %v11825 = vadd.f32 0.0, %v11824
  %v11826 = vpop.f32.mrb[0].mxu0
  %v11827 = vpop.f32.mrb[0].mxu0
  %v11828 = vadd.f32 0.0, %v11827
  %v11829 = vpop.f32.mrb[0].mxu0
  %11830 = vmatprep.mubr.bf16.mxu0 0
  %11831 = vmatmul.mubr.bf16.gmra.mrb[0].mxu0 %v11675
  %v11832 = vpop.f32.mrb[0].mxu0
  %v11833 = vadd.f32 0.0, %v11832
  %v11834 = vpop.f32.mrb[0].mxu0
  %v11835 = vpop.f32.mrb[0].mxu0
  %v11836 = vadd.f32 0.0, %v11835
  %v11837 = vpop.f32.mrb[0].mxu0
  %11838 = vmatprep.mubr.bf16.mxu0 0
  %11839 = vmatmul.mubr.bf16.gmra.mrb[0].mxu0 %v11678
  %v11840 = vpop.f32.mrb[0].mxu0
  %v11841 = vadd.f32 0.0, %v11840
  %v11842 = vpop.f32.mrb[0].mxu0
  %v11843 = vpop.f32.mrb[0].mxu0
  %v11844 = vadd.f32 0.0, %v11843
  %v11845 = vpop.f32.mrb[0].mxu0
  %11846 = vmatprep.mubr.bf16.mxu0 0
  %11847 = vmatmul.mubr.bf16.gmra.mrb[0].mxu0 %v11681
  %v11848 = vpop.f32.mrb[0].mxu0
  %v11849 = vadd.f32 0.0, %v11848
  %v11850 = vpop.f32.mrb[0].mxu0
  %v11851 = vpop.f32.mrb[0].mxu0
  %v11852 = vadd.f32 0.0, %v11851
  %v11853 = vpop.f32.mrb[0].mxu0
  %11854 = vmatprep.mubr.bf16.mxu0 0
  %11855 = vmatmul.mubr.bf16.gmra.mrb[0].mxu0 %v11684
  %v11856 = vpop.f32.mrb[0].mxu0
  %v11857 = vadd.f32 0.0, %v11856
  %v11858 = vpop.f32.mrb[0].mxu0
  %v11859 = vpop.f32.mrb[0].mxu0
  %v11860 = vadd.f32 0.0, %v11859
  %v11861 = vpop.f32.mrb[0].mxu0
  %11862 = vmatprep.mubr.bf16.mxu0 0
  %11863 = vmatmul.mubr.bf16.gmra.mrb[0].mxu0 %v11687
  %v11864 = vpop.f32.mrb[0].mxu0
  %v11865 = vadd.f32 0.0, %v11864
  %v11866 = vpop.f32.mrb[0].mxu0
  %v11867 = vpop.f32.mrb[0].mxu0
  %v11868 = vadd.f32 0.0, %v11867
  %v11869 = vpop.f32.mrb[0].mxu0
  %11870 = vmatprep.mubr.bf16.mxu0 0
  %11871 = vmatmul.mubr.bf16.gmra.mrb[0].mxu0 %v11690
  %v11872 = vpop.f32.mrb[0].mxu0
  %v11873 = vadd.f32 0.0, %v11872
  %v11874 = vpop.f32.mrb[0].mxu0
  %v11875 = vpop.f32.mrb[0].mxu0
  %v11876 = vadd.f32 0.0, %v11875
  %v11877 = vpop.f32.mrb[0].mxu0
  %11878 = vmatprep.mubr.bf16.mxu0 0
  %11879 = vmatmul.mubr.bf16.gmra.mrb[0].mxu0 %v11693
  %v11880 = vpop.f32.mrb[0].mxu0
  %v11881 = vadd.f32 0.0, %v11880
  %v11882 = vpop.f32.mrb[0].mxu0
  %v11883 = vpop.f32.mrb[0].mxu0
  %v11884 = vadd.f32 0.0, %v11883
  %v11885 = vpop.f32.mrb[0].mxu0
  %11886 = vmatprep.mubr.bf16.mxu0 0
  %11887 = vmatmul.mubr.bf16.gmra.mrb[0].mxu0 %v11696
  %v11888 = vpop.f32.mrb[0].mxu0
  %v11889 = vadd.f32 0.0, %v11888
  %v11890 = vpop.f32.mrb[0].mxu0
  %v11891 = vpop.f32.mrb[0].mxu0
  %v11892 = vadd.f32 0.0, %v11891
  %v11893 = vpop.f32.mrb[0].mxu0
  %11894 = vmatprep.mubr.bf16.mxu0 0
  %11895 = vmatmul.mubr.bf16.gmra.mrb[0].mxu0 %v11699
  %v11896 = vpop.f32.mrb[0].mxu0
  %v11897 = vadd.f32 0.0, %v11896
  %v11898 = vpop.f32.mrb[0].mxu0
  %v11899 = vpop.f32.mrb[0].mxu0
  %v11900 = vadd.f32 0.0, %v11899
  %v11901 = vpop.f32.mrb[0].mxu0
  %11902 = vmatprep.mubr.bf16.mxu0 0
  %11903 = vmatmul.mubr.bf16.gmra.mrb[0].mxu0 %v11702
  %v11904 = vpop.f32.mrb[0].mxu0
  %v11905 = vadd.f32 0.0, %v11904
  %v11906 = vpop.f32.mrb[0].mxu0
  %v11907 = vpop.f32.mrb[0].mxu0
  %v11908 = vadd.f32 0.0, %v11907
  %v11909 = vpop.f32.mrb[0].mxu0
  %11910 = vmatprep.mubr.bf16.mxu0 0
  %11911 = vmatmul.mubr.bf16.gmra.mrb[0].mxu0 %v11705
  %v11912 = vpop.f32.mrb[0].mxu0
  %v11913 = vadd.f32 0.0, %v11912
  %v11914 = vpop.f32.mrb[0].mxu0
  %v11915 = vpop.f32.mrb[0].mxu0
  %v11916 = vadd.f32 0.0, %v11915
  %v11917 = vpop.f32.mrb[0].mxu0
  %11918 = vmatprep.mubr.bf16.mxu0 0
  %11919 = vmatmul.mubr.bf16.gmra.mrb[0].mxu0 %v11708
  %v11920 = vpop.f32.mrb[0].mxu0
  %v11921 = vadd.f32 0.0, %v11920
  %v11922 = vpop.f32.mrb[0].mxu0
  %v11923 = vpop.f32.mrb[0].mxu0
  %v11924 = vadd.f32 0.0, %v11923
  %v11925 = vpop.f32.mrb[0].mxu0
  %11926 = vmatprep.mubr.bf16.mxu0 0
  %11927 = vmatmul.mubr.bf16.gmra.mrb[0].mxu0 %v11711
  %v11928 = vpop.f32.mrb[0].mxu0
  %v11929 = vadd.f32 0.0, %v11928
  %v11930 = vpop.f32.mrb[0].mxu0
  %v11931 = vpop.f32.mrb[0].mxu0
  %v11932 = vadd.f32 0.0, %v11931
  %v11933 = vpop.f32.mrb[0].mxu0
  %11934 = vmatprep.mubr.bf16.mxu0 0
  %11935 = vmatmul.mubr.bf16.gmra.mrb[0].mxu0 %v11714
  %v11936 = vpop.f32.mrb[0].mxu0
  %v11937 = vadd.f32 0.0, %v11936
  %v11938 = vpop.f32.mrb[0].mxu0
  %v11939 = vpop.f32.mrb[0].mxu0
  %v11940 = vadd.f32 0.0, %v11939
  %v11941 = vpop.f32.mrb[0].mxu0
  %11942 = vmatprep.mubr.bf16.mxu0 0
  %11943 = vmatmul.mubr.bf16.gmra.mrb[0].mxu0 %v11717
  %v11944 = vpop.f32.mrb[0].mxu0
  %v11945 = vadd.f32 0.0, %v11944
  %v11946 = vpop.f32.mrb[0].mxu0
  %v11947 = vpop.f32.mrb[0].mxu0
  %v11948 = vadd.f32 0.0, %v11947
  %v11949 = vpop.f32.mrb[0].mxu0
  %11950 = vmatprep.mubr.bf16.mxu0 0
  %11951 = vmatmul.mubr.bf16.gmra.mrb[0].mxu0 %v11720
  %v11952 = vpop.f32.mrb[0].mxu0
  %v11953 = vadd.f32 0.0, %v11952
  %v11954 = vpop.f32.mrb[0].mxu0
  %v11955 = vpop.f32.mrb[0].mxu0
  %v11956 = vadd.f32 0.0, %v11955
  %v11957 = vpop.f32.mrb[0].mxu0
  %11958 = vmatprep.mubr.bf16.mxu0 0
  %11959 = vmatmul.mubr.bf16.gmra.mrb[0].mxu0 %v11723
  %v11960 = vpop.f32.mrb[0].mxu0
  %v11961 = vadd.f32 0.0, %v11960
  %v11962 = vpop.f32.mrb[0].mxu0
  %v11963 = vpop.f32.mrb[0].mxu0
  %v11964 = vadd.f32 0.0, %v11963
  %v11965 = vpop.f32.mrb[0].mxu0
  %11966 = vmatprep.mubr.bf16.mxu0 0
  %11967 = vmatmul.mubr.bf16.gmra.mrb[0].mxu0 %v11726
  %v11968 = vpop.f32.mrb[0].mxu0
  %v11969 = vadd.f32 0.0, %v11968
  %v11970 = vpop.f32.mrb[0].mxu0
  %v11971 = vpop.f32.mrb[0].mxu0
  %v11972 = vadd.f32 0.0, %v11971
  %v11973 = vpop.f32.mrb[0].mxu0
  %11974 = vmatprep.mubr.bf16.mxu0 0
  %11975 = vmatmul.mubr.bf16.gmra.mrb[0].mxu0 %v11729
  %v11976 = vpop.f32.mrb[0].mxu0
  %v11977 = vadd.f32 0.0, %v11976
  %v11978 = vpop.f32.mrb[0].mxu0
  %v11979 = vpop.f32.mrb[0].mxu0
  %v11980 = vadd.f32 0.0, %v11979
  %v11981 = vpop.f32.mrb[0].mxu0
  %11982 = vmatprep.mubr.bf16.mxu0 0
  %11983 = vmatmul.mubr.bf16.gmra.mrb[0].mxu0 %v11732
  %v11984 = vpop.f32.mrb[0].mxu0
  %v11985 = vadd.f32 0.0, %v11984
  %v11986 = vpop.f32.mrb[0].mxu0
  %v11987 = vpop.f32.mrb[0].mxu0
  %v11988 = vadd.f32 0.0, %v11987
  %v11989 = vpop.f32.mrb[0].mxu0
  %11990 = vmatprep.mubr.bf16.mxu0 0
  %11991 = vmatmul.mubr.bf16.gmra.mrb[0].mxu0 %v11735
  %v11992 = vpop.f32.mrb[0].mxu0
  %v11993 = vadd.f32 0.0, %v11992
  %v11994 = vpop.f32.mrb[0].mxu0
  %v11995 = vpop.f32.mrb[0].mxu0
  %v11996 = vadd.f32 0.0, %v11995
  %v11997 = vpop.f32.mrb[0].mxu0
  %11998 = vmatprep.mubr.bf16.mxu0 0
  %11999 = vmatmul.mubr.bf16.gmra.mrb[0].mxu0 %v11738
  %v12000 = vpop.f32.mrb[0].mxu0
  %v12001 = vadd.f32 0.0, %v12000
  %v12002 = vpop.f32.mrb[0].mxu0
  %v12003 = vpop.f32.mrb[0].mxu0
  %v12004 = vadd.f32 0.0, %v12003
  %v12005 = vpop.f32.mrb[0].mxu0
  %12006 = vmatprep.mubr.bf16.mxu0 0
  %12007 = vmatmul.mubr.bf16.gmra.mrb[0].mxu0 %v11741
  %v12008 = vpop.f32.mrb[0].mxu0
  %v12009 = vadd.f32 0.0, %v12008
  %v12010 = vpop.f32.mrb[0].mxu0
  %v12011 = vpop.f32.mrb[0].mxu0
  %v12012 = vadd.f32 0.0, %v12011
  %v12013 = vpop.f32.mrb[0].mxu0
  %12014 = vmatprep.mubr.bf16.mxu0 0
  %12015 = vmatmul.mubr.bf16.gmra.mrb[0].mxu0 %v11744
  %v12016 = vpop.f32.mrb[0].mxu0
  %v12017 = vadd.f32 0.0, %v12016
  %v12018 = vpop.f32.mrb[0].mxu0
  %v12019 = vpop.f32.mrb[0].mxu0
  %v12020 = vadd.f32 0.0, %v12019
  %v12021 = vpop.f32.mrb[0].mxu0
  %12022 = vmatprep.mubr.bf16.mxu0 0
  %12023 = vmatmul.mubr.bf16.gmra.mrb[0].mxu0 %v11747
  %v12024 = vpop.f32.mrb[0].mxu0
  %v12025 = vadd.f32 0.0, %v12024
  %v12026 = vpop.f32.mrb[0].mxu0
  %v12027 = vpop.f32.mrb[0].mxu0
  %v12028 = vadd.f32 0.0, %v12027
  %v12029 = vpop.f32.mrb[0].mxu0
  %12030 = vmatprep.mubr.bf16.mxu0 0
  %12031 = vmatmul.mubr.bf16.gmra.mrb[0].mxu0 %v11750
  %v12032 = vpop.f32.mrb[0].mxu0
  %v12033 = vadd.f32 0.0, %v12032
  %v12034 = vpop.f32.mrb[0].mxu0
  %v12035 = vpop.f32.mrb[0].mxu0
  %v12036 = vadd.f32 0.0, %v12035
  %v12037 = vpop.f32.mrb[0].mxu0
  %12038 = vmatprep.mubr.bf16.mxu0 0
  %12039 = vmatmul.mubr.bf16.gmra.mrb[0].mxu0 %v11753
  %v12040 = vpop.f32.mrb[0].mxu0
  %v12041 = vadd.f32 0.0, %v12040
  %v12042 = vpop.f32.mrb[0].mxu0
  %v12043 = vpop.f32.mrb[0].mxu0
  %v12044 = vadd.f32 0.0, %v12043
  %v12045 = vpop.f32.mrb[0].mxu0
  %12046 = vdwg.mxu0
  %v12047 = vadd.f32 %v11497, %v11793
  %v12048 = vadd.f32 %v11498, %v11796
  %v12049 = vadd.f32 %v11499, %v11801
  %v12050 = vadd.f32 %v11500, %v11804
  %v12051 = vadd.f32 %v11501, %v11809
  %v12052 = vadd.f32 %v11502, %v11812
  %v12053 = vadd.f32 %v11503, %v11817
  %v12054 = vadd.f32 %v11504, %v11820
  %v12055 = vadd.f32 %v11505, %v11825
  %v12056 = vadd.f32 %v11506, %v11828
  %v12057 = vadd.f32 %v11507, %v11833
  %v12058 = vadd.f32 %v11508, %v11836
  %v12059 = vadd.f32 %v11509, %v11841
  %v12060 = vadd.f32 %v11510, %v11844
  %v12061 = vadd.f32 %v11511, %v11849
  %v12062 = vadd.f32 %v11512, %v11852
  %v12063 = vadd.f32 %v11513, %v11857
  %v12064 = vadd.f32 %v11514, %v11860
  %v12065 = vadd.f32 %v11515, %v11865
  %v12066 = vadd.f32 %v11516, %v11868
  %v12067 = vadd.f32 %v11517, %v11873
  %v12068 = vadd.f32 %v11518, %v11876
  %v12069 = vadd.f32 %v11519, %v11881
  %v12070 = vadd.f32 %v11520, %v11884
  %v12071 = vadd.f32 %v11521, %v11889
  %v12072 = vadd.f32 %v11522, %v11892
  %v12073 = vadd.f32 %v11523, %v11897
  %v12074 = vadd.f32 %v11524, %v11900
  %v12075 = vadd.f32 %v11525, %v11905
  %v12076 = vadd.f32 %v11526, %v11908
  %v12077 = vadd.f32 %v11527, %v11913
  %v12078 = vadd.f32 %v11528, %v11916
  %v12079 = vadd.f32 %v11529, %v11921
  %v12080 = vadd.f32 %v11530, %v11924
  %v12081 = vadd.f32 %v11531, %v11929
  %v12082 = vadd.f32 %v11532, %v11932
  %v12083 = vadd.f32 %v11533, %v11937
  %v12084 = vadd.f32 %v11534, %v11940
  %v12085 = vadd.f32 %v11535, %v11945
  %v12086 = vadd.f32 %v11536, %v11948
  %v12087 = vadd.f32 %v11537, %v11953
  %v12088 = vadd.f32 %v11538, %v11956
  %v12089 = vadd.f32 %v11539, %v11961
  %v12090 = vadd.f32 %v11540, %v11964
  %v12091 = vadd.f32 %v11541, %v11969
  %v12092 = vadd.f32 %v11542, %v11972
  %v12093 = vadd.f32 %v11543, %v11977
  %v12094 = vadd.f32 %v11544, %v11980
  %v12095 = vadd.f32 %v11545, %v11985
  %v12096 = vadd.f32 %v11546, %v11988
  %v12097 = vadd.f32 %v11547, %v11993
  %v12098 = vadd.f32 %v11548, %v11996
  %v12099 = vadd.f32 %v11549, %v12001
  %v12100 = vadd.f32 %v11550, %v12004
  %v12101 = vadd.f32 %v11551, %v12009
  %v12102 = vadd.f32 %v11552, %v12012
  %v12103 = vadd.f32 %v11553, %v12017
  %v12104 = vadd.f32 %v11554, %v12020
  %v12105 = vadd.f32 %v11555, %v12025
  %v12106 = vadd.f32 %v11556, %v12028
  %v12107 = vadd.f32 %v11557, %v12033
  %v12108 = vadd.f32 %v11558, %v12036
  %v12109 = vadd.f32 %v11559, %v12041
  %v12110 = vadd.f32 %v11560, %v12044
  %12111 = vst.msk [vmem:[%s8] sm:$0xff] %vm5895, %v12047
  %12112 = vst.msk [vmem:[%s8 + $0x8] sm:$0xff] %vm5895, %v12048
  %12113 = vst.msk [vmem:[%s8 + $0x10] sm:$0xff] %vm5895, %v12049
  %12114 = vst.msk [vmem:[%s8 + $0x18] sm:$0xff] %vm5895, %v12050
  %12115 = vst.msk [vmem:[%s8 + $0x20] sm:$0xff] %vm5895, %v12051
  %12116 = vst.msk [vmem:[%s8 + $0x28] sm:$0xff] %vm5895, %v12052
  %12117 = vst.msk [vmem:[%s8 + $0x30] sm:$0xff] %vm5895, %v12053
  %12118 = vst.msk [vmem:[%s8 + $0x38] sm:$0xff] %vm5895, %v12054
  %12119 = vst.msk [vmem:[%s8 + $0x40] sm:$0xff] %vm5895, %v12055
  %12120 = vst.msk [vmem:[%s8 + $0x48] sm:$0xff] %vm5895, %v12056
  %12121 = vst.msk [vmem:[%s8 + $0x50] sm:$0xff] %vm5895, %v12057
  %12122 = vst.msk [vmem:[%s8 + $0x58] sm:$0xff] %vm5895, %v12058
  %12123 = vst.msk [vmem:[%s8 + $0x60] sm:$0xff] %vm5895, %v12059
  %12124 = vst.msk [vmem:[%s8 + $0x68] sm:$0xff] %vm5895, %v12060
  %12125 = vst.msk [vmem:[%s8 + $0x70] sm:$0xff] %vm5895, %v12061
  %12126 = vst.msk [vmem:[%s8 + $0x78] sm:$0xff] %vm5895, %v12062
  %12127 = vst.msk [vmem:[%s8 + $0x80] sm:$0xff] %vm5895, %v12063
  %12128 = vst.msk [vmem:[%s8 + $0x88] sm:$0xff] %vm5895, %v12064
  %12129 = vst.msk [vmem:[%s8 + $0x90] sm:$0xff] %vm5895, %v12065
  %12130 = vst.msk [vmem:[%s8 + $0x98] sm:$0xff] %vm5895, %v12066
  %12131 = vst.msk [vmem:[%s8 + $0xa0] sm:$0xff] %vm5895, %v12067
  %12132 = vst.msk [vmem:[%s8 + $0xa8] sm:$0xff] %vm5895, %v12068
  %12133 = vst.msk [vmem:[%s8 + $0xb0] sm:$0xff] %vm5895, %v12069
  %12134 = vst.msk [vmem:[%s8 + $0xb8] sm:$0xff] %vm5895, %v12070
  %12135 = vst.msk [vmem:[%s8 + $0xc0] sm:$0xff] %vm5895, %v12071
  %12136 = vst.msk [vmem:[%s8 + $0xc8] sm:$0xff] %vm5895, %v12072
  %12137 = vst.msk [vmem:[%s8 + $0xd0] sm:$0xff] %vm5895, %v12073
  %12138 = vst.msk [vmem:[%s8 + $0xd8] sm:$0xff] %vm5895, %v12074
  %12139 = vst.msk [vmem:[%s8 + $0xe0] sm:$0xff] %vm5895, %v12075
  %12140 = vst.msk [vmem:[%s8 + $0xe8] sm:$0xff] %vm5895, %v12076
  %12141 = vst.msk [vmem:[%s8 + $0xf0] sm:$0xff] %vm5895, %v12077
  %12142 = vst.msk [vmem:[%s8 + $0xf8] sm:$0xff] %vm5895, %v12078
  %12143 = vst.msk [vmem:[%s8 + $0x100] sm:$0xff] %vm5895, %v12079
  %12144 = vst.msk [vmem:[%s8 + $0x108] sm:$0xff] %vm5895, %v12080
  %12145 = vst.msk [vmem:[%s8 + $0x110] sm:$0xff] %vm5895, %v12081
  %12146 = vst.msk [vmem:[%s8 + $0x118] sm:$0xff] %vm5895, %v12082
  %12147 = vst.msk [vmem:[%s8 + $0x120] sm:$0xff] %vm5895, %v12083
  %12148 = vst.msk [vmem:[%s8 + $0x128] sm:$0xff] %vm5895, %v12084
  %12149 = vst.msk [vmem:[%s8 + $0x130] sm:$0xff] %vm5895, %v12085
  %12150 = vst.msk [vmem:[%s8 + $0x138] sm:$0xff] %vm5895, %v12086
  %12151 = vst.msk [vmem:[%s8 + $0x140] sm:$0xff] %vm5895, %v12087
  %12152 = vst.msk [vmem:[%s8 + $0x148] sm:$0xff] %vm5895, %v12088
  %12153 = vst.msk [vmem:[%s8 + $0x150] sm:$0xff] %vm5895, %v12089
  %12154 = vst.msk [vmem:[%s8 + $0x158] sm:$0xff] %vm5895, %v12090
  %12155 = vst.msk [vmem:[%s8 + $0x160] sm:$0xff] %vm5895, %v12091
  %12156 = vst.msk [vmem:[%s8 + $0x168] sm:$0xff] %vm5895, %v12092
  %12157 = vst.msk [vmem:[%s8 + $0x170] sm:$0xff] %vm5895, %v12093
  %12158 = vst.msk [vmem:[%s8 + $0x178] sm:$0xff] %vm5895, %v12094
  %12159 = vst.msk [vmem:[%s8 + $0x180] sm:$0xff] %vm5895, %v12095
  %12160 = vst.msk [vmem:[%s8 + $0x188] sm:$0xff] %vm5895, %v12096
  %12161 = vst.msk [vmem:[%s8 + $0x190] sm:$0xff] %vm5895, %v12097
  %12162 = vst.msk [vmem:[%s8 + $0x198] sm:$0xff] %vm5895, %v12098
  %12163 = vst.msk [vmem:[%s8 + $0x1a0] sm:$0xff] %vm5895, %v12099
  %12164 = vst.msk [vmem:[%s8 + $0x1a8] sm:$0xff] %vm5895, %v12100
  %12165 = vst.msk [vmem:[%s8 + $0x1b0] sm:$0xff] %vm5895, %v12101
  %12166 = vst.msk [vmem:[%s8 + $0x1b8] sm:$0xff] %vm5895, %v12102
  %12167 = vst.msk [vmem:[%s8 + $0x1c0] sm:$0xff] %vm5895, %v12103
  %12168 = vst.msk [vmem:[%s8 + $0x1c8] sm:$0xff] %vm5895, %v12104
  %12169 = vst.msk [vmem:[%s8 + $0x1d0] sm:$0xff] %vm5895, %v12105
  %12170 = vst.msk [vmem:[%s8 + $0x1d8] sm:$0xff] %vm5895, %v12106
  %12171 = vst.msk [vmem:[%s8 + $0x1e0] sm:$0xff] %vm5895, %v12107
  %12172 = vst.msk [vmem:[%s8 + $0x1e8] sm:$0xff] %vm5895, %v12108
  %12173 = vst.msk [vmem:[%s8 + $0x1f0] sm:$0xff] %vm5895, %v12109
  %12174 = vst.msk [vmem:[%s8 + $0x1f8] sm:$0xff] %vm5895, %v12110
  // Predicated region
  $region34: #{tpu_custom_call.1} parent=0 // pred_check
    _
  $region35: #{tpu_custom_call.1} parent=0 // pred_check_branch
    %12176 = sbr.rel (0) target = $region37
  $region36: #{tpu_custom_call.1} parent=0 // pred_region
    _
  $region37: #{tpu_custom_call.1} parent=0 // pred_fallthru
    _
  // Predicated region
  $region38: #{tpu_custom_call.1} parent=0 // pred_check
    _
  $region39: #{tpu_custom_call.1} parent=0 // pred_check_branch
    %12178 = sbr.rel (0) target = $region41
  $region40: #{tpu_custom_call.1} parent=0 // pred_region
    _
  $region41: #{tpu_custom_call.1} parent=0 // pred_fallthru
    _

</llo_original>
